<compile_context>
chip_gen: v7x
topology: tpu7x:2x2x1
jax: 0.10.0
libtpu: 0.0.40
codegen_flags: <defaults>
</compile_context>

<pallas_src>
import numpy as np
import jax
import jax.numpy as jnp
from jax import lax
from jax.experimental import pallas as pl
from jax.experimental.pallas import tpu as pltpu

PARAMS = dict(maxpoolz=1, maxpoolxy=7, maxpoolpadz=0, maxpoolpadxy=2,
              convz=1, convxy=3, convsigmaxy=3, convsigmaz=1,
              convpadz=0, convpadxy=1, depth=8, resolution=112)

MP = PARAMS['maxpoolxy']         # 7
MP_PAD = PARAMS['maxpoolpadxy']  # 2
CK = PARAMS['convxy']            # 3
C_PAD = PARAMS['convpadxy']      # 1

# The -inf pool halo must never be able to win a max (every 7-window holds at
# least one real value); required for the zero-padded conv stage to see no -inf.
assert 2 * MP_PAD < MP, (MP_PAD, MP)


# ----- deterministic parameter init (mirrors get2D/3DGaussianKernel) -----
def get_2d_gaussian_kernel(ksize, sigma):
    center = ksize // 2
    xs = np.arange(ksize, dtype=np.float32) - center
    k1 = np.exp(-xs ** 2 / (2.0 * sigma ** 2))
    k = k1[:, None] @ k1[None, :]
    return k / k.sum()


def get_3d_gaussian_kernel(ksize, depth, sigma, zsigma):
    k2 = get_2d_gaussian_kernel(ksize, sigma)
    zs = np.arange(depth, dtype=np.float32) - depth // 2
    zk = np.exp(-zs ** 2 / (2.0 * zsigma ** 2))
    k3 = np.repeat(k2[None, :, :], depth, axis=0) * zk[:, None, None]
    return (k3 / k3.sum()).astype(np.float32)


# Separable 1-D factor of the 3x3 Gaussian (convz == 1 => z-kernel == [1]).
_k1d = np.exp(-(np.arange(CK, dtype=np.float32) - CK // 2) ** 2
              / (2.0 * np.float32(PARAMS['convsigmaxy']) ** 2)).astype(np.float32)
_k1d = (_k1d / _k1d.sum()).astype(np.float32)


def _conv_band_matrix(n, taps):
    """Band matrix M with (M @ v)[i] = sum_t taps[t] * v[i + t - center],
    zero padded at the edges (matches Conv3d's zero padding)."""
    m = np.zeros((n, n), dtype=np.float32)
    c = len(taps) // 2
    for i in range(n):
        for t, tap in enumerate(taps):
            j = i + t - c
            if 0 <= j < n:
                m[i, j] = np.float32(tap)
    return m


# ----- Pallas kernel -----
def _grid2image_kernel(x_ref, ka_ref, kb_ref, out_ref,
                       pad_ref, t1_ref, t2_ref, rowp_ref, s1_ref, s2_ref):
    # x_ref:    (block_b, D, H, W)   input grids
    # ka_ref:   (Ho, Ho)             banded row-conv operator (left matmul)
    # kb_ref:   (Wo, Wo)             banded col-conv operator (right matmul)
    # out_ref:  (block_b, Ho, Wo)    single-channel output image
    # pad_ref:  (H+4, W+4)           -inf-halo max-pool input (reused per slice)
    # t1/t2:    H-direction max-tree intermediates (window widths 2, 4)
    # rowp:     (Ho, W+4)            7x1-pooled rows
    # s1/s2:    W-direction max-tree intermediates (window widths 2, 4)
    block_b, depth, H, W = x_ref.shape
    Hp, Wp = H + 2 * MP_PAD, W + 2 * MP_PAD
    Ho, Wo = Hp - MP + 1, Wp - MP + 1      # == H-2, W-2

    # -inf everywhere once per grid step; the interior is rewritten per depth
    # slice while the halo stays -inf (MaxPool3d's implicit padding).
    pad_ref[...] = jnp.full((Hp, Wp), -jnp.inf, dtype=jnp.float32)

    def per_image(b, carry):
        acc = None
        for d in range(depth):                       # depth=8: keep unrolled
            # ---- 7x7 stride-1 max pool, separable + logarithmic tree ----
            # window widths per direction: 1 -> 2 -> 4 -> 7 (3 maxes, not 6).
            pad_ref[MP_PAD:MP_PAD + H, MP_PAD:MP_PAD + W] = x_ref[b, d]
            t1_ref[...] = jnp.maximum(pad_ref[0:Hp - 1, :], pad_ref[1:Hp, :])
            t2_ref[...] = jnp.maximum(t1_ref[0:Hp - 3, :], t1_ref[2:Hp - 1, :])
            rowp_ref[...] = jnp.maximum(t2_ref[0:Ho, :], t2_ref[3:Ho + 3, :])
            s1_ref[...] = jnp.maximum(rowp_ref[:, 0:Wp - 1], rowp_ref[:, 1:Wp])
            s2_ref[...] = jnp.maximum(s1_ref[:, 0:Wp - 3], s1_ref[:, 2:Wp - 1])
            p = jnp.maximum(s2_ref[:, 0:Wo], s2_ref[:, 3:Wo + 3])   # (Ho, Wo)

            # ---- 3x3 Gaussian conv on the MXU: cv = L @ p @ R (f32) ----
            cv = jnp.dot(
                jnp.dot(ka_ref[...], p,
                        preferred_element_type=jnp.float32,
                        precision=jax.lax.Precision.HIGHEST),
                kb_ref[...],
                preferred_element_type=jnp.float32,
                precision=jax.lax.Precision.HIGHEST)                # (Ho, Wo)

            # ---- squeeze depth with a running max (no (D,Ho,Wo) buffer) ----
            acc = cv if acc is None else jnp.maximum(acc, cv)

        # ---- per-image normalize (matches reference: inf/NaN on empty grid) ----
        inv = 1.0 / jnp.max(acc)
        out_ref[b] = 1.0 - acc * inv
        return carry

    lax.fori_loop(0, block_b, per_image, 0)


def _choose_blocking(batch):
    """Pick (block_b, padded_batch): block big enough to amortize the per-grid-
    step overhead, while keeping >=2 grid steps so dimension_semantics can
    shard across TensorCores (v7x megacore)."""
    if batch <= 1:
        return 1, max(batch, 1)
    if batch >= 16:
        bb = 8
    elif batch >= 8:
        bb = 4
    elif batch >= 4:
        bb = 2
    else:
        bb = 1
    padded = -(-batch // bb) * bb
    return bb, padded


def grid2image(x):
    """x: (B, D, H, W) float32 occupancy grid.  Returns (B, 3, H-2, W-2)."""
    x = x.astype(jnp.float32)
    B, D, H, W = x.shape
    Hp, Wp = H + 2 * MP_PAD, W + 2 * MP_PAD
    Ho, Wo = Hp - MP + 1, Wp - MP + 1
    assert Ho >= 1 and Wo >= 1, (H, W)

    bb, Bp = _choose_blocking(B)
    if Bp != B:
        # Pad the batch with zero grids (their garbage outputs are sliced off).
        x = jnp.concatenate([x, jnp.zeros((Bp - B, D, H, W), jnp.float32)], axis=0)

    taps = [float(v) for v in _k1d]
    ka = jnp.asarray(_conv_band_matrix(Ho, taps))        # left operator (rows)
    kb = jnp.asarray(_conv_band_matrix(Wo, taps).T)      # right operator (cols)

    img = pl.pallas_call(
        _grid2image_kernel,
        out_shape=jax.ShapeDtypeStruct((Bp, Ho, Wo), jnp.float32),
        grid_spec=pltpu.PrefetchScalarGridSpec(
            num_scalar_prefetch=0,
            grid=(Bp // bb,),
            in_specs=[
                pl.BlockSpec((bb, D, H, W), lambda i: (i, 0, 0, 0)),
                pl.BlockSpec((Ho, Ho), lambda i: (0, 0)),   # same block every step
                pl.BlockSpec((Wo, Wo), lambda i: (0, 0)),   # -> fetched once
            ],
            out_specs=pl.BlockSpec((bb, Ho, Wo), lambda i: (i, 0, 0)),
            scratch_shapes=[
                pltpu.VMEM((Hp, Wp), jnp.float32),          # -inf-halo pool input
                pltpu.VMEM((Hp - 1, Wp), jnp.float32),      # H-tree width-2 windows
                pltpu.VMEM((Hp - 3, Wp), jnp.float32),      # H-tree width-4 windows
                pltpu.VMEM((Ho, Wp), jnp.float32),          # 7x1-pooled rows
                pltpu.VMEM((Ho, Wp - 1), jnp.float32),      # W-tree width-2 windows
                pltpu.VMEM((Ho, Wp - 3), jnp.float32),      # W-tree width-4 windows
            ],
        ),
        compiler_params=pltpu.CompilerParams(
            dimension_semantics=("parallel",)),
    )(x, ka, kb)

    img = img[:B]
    # PyTorch's `img.repeat(1, 3, 1, 1)` done outside the kernel (3x less
    # kernel HBM writeback; the XLA broadcast is essentially free).
    return jnp.broadcast_to(img[:, None, :, :], (B, 3, Ho, Wo))


# ----- pure-JAX reference for validation -----
def grid2image_ref(x, kernel2d):
    B, D, H, W = x.shape
    xpool = lax.reduce_window(
        x, -jnp.inf, lax.max,
        window_dimensions=(1, 1, MP, MP), window_strides=(1, 1, 1, 1),
        padding=((0, 0), (0, 0), (MP_PAD, MP_PAD), (MP_PAD, MP_PAD)))
    Ho, Wo = xpool.shape[2], xpool.shape[3]
    y = lax.conv_general_dilated(
        xpool.reshape(B * D, 1, Ho, Wo),
        kernel2d[None, None, :, :],
        window_strides=(1, 1),
        padding=((C_PAD, C_PAD), (C_PAD, C_PAD)),
        dimension_numbers=('NCHW', 'OIHW', 'NCHW'),
        precision=jax.lax.Precision.HIGHEST)
    y = y.reshape(B, D, Ho, Wo)
    img = jnp.max(y, axis=1)
    img = 1.0 - img / jnp.max(img, axis=(1, 2), keepdims=True)
    return jnp.repeat(img[:, None, :, :], 3, axis=1)


if __name__ == "__main__":
    key = jax.random.PRNGKey(0)
    B, D, H, W = 4, 8, 16, 16   # small version of (depth=8, resolution=112)
    x = jax.random.uniform(key, (B, D, H, W), dtype=jnp.float32)

    out = jax.block_until_ready(grid2image(x))

    k3d = get_3d_gaussian_kernel(PARAMS['convxy'], PARAMS['convz'],
                                 sigma=PARAMS['convsigmaxy'],
                                 zsigma=PARAMS['convsigmaz'])
    k2d = jnp.asarray(k3d[0])   # convz == 1 -> single depth slice
    ref = grid2image_ref(x, k2d)

    assert out.shape == (B, 3, H - 2, W - 2), out.shape
    np.testing.assert_allclose(np.asarray(out), np.asarray(ref),
                               rtol=1e-5, atol=1e-5)
    print("KERNEL_OK")
</pallas_src>

<mosaic_0001>
module attributes {stable_mosaic.version = 11 : i64} {
  func.func @_grid2image_kernel(%arg0: i32, %arg1: memref<2x8x16x16xf32, #tpu.memory_space<vmem>>, %arg2: memref<14x14xf32, #tpu.memory_space<vmem>>, %arg3: memref<14x14xf32, #tpu.memory_space<vmem>>, %arg4: memref<2x14x14xf32, #tpu.memory_space<vmem>>, %arg5: memref<20x20xf32, #tpu.memory_space<vmem>>, %arg6: memref<19x20xf32, #tpu.memory_space<vmem>>, %arg7: memref<17x20xf32, #tpu.memory_space<vmem>>, %arg8: memref<14x20xf32, #tpu.memory_space<vmem>>, %arg9: memref<14x19xf32, #tpu.memory_space<vmem>>, %arg10: memref<14x17xf32, #tpu.memory_space<vmem>>) attributes {dimension_semantics = [#tpu.dimension_semantics<parallel>], iteration_bounds = array<i64: 2>, scalar_prefetch = 0 : i64, scratch_operands = 6 : i64, tpu.core_type = #tpu.core_type<tc>, window_params = [{transform_indices = @transform_0, window_bounds = array<i64: 2, 8, 16, 16>}, {pipeline_mode = #tpu.pipeline_mode<synchronous>, transform_indices = @transform_1, window_bounds = array<i64: 14, 14>}, {pipeline_mode = #tpu.pipeline_mode<synchronous>, transform_indices = @transform_2, window_bounds = array<i64: 14, 14>}, {transform_indices = @transform_3, window_bounds = array<i64: 2, 14, 14>}]} {
    %cst = arith.constant 0xFF800000 : f32
    %0 = vector.broadcast %cst : f32 to vector<20x20xf32>
    %c0 = arith.constant 0 : index
    %c0_0 = arith.constant 0 : index
    %1 = vector.load %arg5[%c0, %c0_0] : memref<20x20xf32, #tpu.memory_space<vmem>>, vector<20x20xf32>
    tpu.vector_store %arg5[%c0, %c0_0], %0 {strides = array<i32>} : memref<20x20xf32, #tpu.memory_space<vmem>>, vector<20x20xf32>,
    %c0_i32 = arith.constant 0 : i32
    %c2_i32 = arith.constant 2 : i32
    %2 = arith.addi %c0_i32, %c2_i32 : i32
    %c1_i32 = arith.constant 1 : i32
    scf.for %arg11 = %c0_i32 to %2 step %c1_i32  : i32 {
      %3 = arith.index_cast %arg11 : i32 to index
      %c0_2 = arith.constant 0 : index
      %c0_3 = arith.constant 0 : index
      %c0_4 = arith.constant 0 : index
      %4 = vector.load %arg1[%3, %c0_2, %c0_3, %c0_4] : memref<2x8x16x16xf32, #tpu.memory_space<vmem>>, vector<1x1x16x16xf32>
      %5 = vector.shape_cast %4 : vector<1x1x16x16xf32> to vector<16x16xf32>
      %c2 = arith.constant 2 : index
      %c2_5 = arith.constant 2 : index
      %6 = vector.load %arg5[%c2, %c2_5] : memref<20x20xf32, #tpu.memory_space<vmem>>, vector<16x16xf32>
      tpu.vector_store %arg5[%c2, %c2_5], %5 {strides = array<i32>} : memref<20x20xf32, #tpu.memory_space<vmem>>, vector<16x16xf32>,
      %c0_6 = arith.constant 0 : index
      %c0_7 = arith.constant 0 : index
      %7 = vector.load %arg5[%c0_6, %c0_7] : memref<20x20xf32, #tpu.memory_space<vmem>>, vector<19x20xf32>
      %c1 = arith.constant 1 : index
      %c0_8 = arith.constant 0 : index
      %8 = vector.load %arg5[%c1, %c0_8] : memref<20x20xf32, #tpu.memory_space<vmem>>, vector<19x20xf32>
      %9 = arith.maximumf %7, %8 : vector<19x20xf32>
      %c0_9 = arith.constant 0 : index
      %c0_10 = arith.constant 0 : index
      %10 = vector.load %arg6[%c0_9, %c0_10] : memref<19x20xf32, #tpu.memory_space<vmem>>, vector<19x20xf32>
      tpu.vector_store %arg6[%c0_9, %c0_10], %9 {strides = array<i32>} : memref<19x20xf32, #tpu.memory_space<vmem>>, vector<19x20xf32>,
      %c0_11 = arith.constant 0 : index
      %c0_12 = arith.constant 0 : index
      %11 = vector.load %arg6[%c0_11, %c0_12] : memref<19x20xf32, #tpu.memory_space<vmem>>, vector<17x20xf32>
      %c2_13 = arith.constant 2 : index
      %c0_14 = arith.constant 0 : index
      %12 = vector.load %arg6[%c2_13, %c0_14] : memref<19x20xf32, #tpu.memory_space<vmem>>, vector<17x20xf32>
      %13 = arith.maximumf %11, %12 : vector<17x20xf32>
      %c0_15 = arith.constant 0 : index
      %c0_16 = arith.constant 0 : index
      %14 = vector.load %arg7[%c0_15, %c0_16] : memref<17x20xf32, #tpu.memory_space<vmem>>, vector<17x20xf32>
      tpu.vector_store %arg7[%c0_15, %c0_16], %13 {strides = array<i32>} : memref<17x20xf32, #tpu.memory_space<vmem>>, vector<17x20xf32>,
      %c0_17 = arith.constant 0 : index
      %c0_18 = arith.constant 0 : index
      %15 = vector.load %arg7[%c0_17, %c0_18] : memref<17x20xf32, #tpu.memory_space<vmem>>, vector<14x20xf32>
      %c3 = arith.constant 3 : index
      %c0_19 = arith.constant 0 : index
      %16 = vector.load %arg7[%c3, %c0_19] : memref<17x20xf32, #tpu.memory_space<vmem>>, vector<14x20xf32>
      %17 = arith.maximumf %15, %16 : vector<14x20xf32>
      %c0_20 = arith.constant 0 : index
      %c0_21 = arith.constant 0 : index
      %18 = vector.load %arg8[%c0_20, %c0_21] : memref<14x20xf32, #tpu.memory_space<vmem>>, vector<14x20xf32>
      tpu.vector_store %arg8[%c0_20, %c0_21], %17 {strides = array<i32>} : memref<14x20xf32, #tpu.memory_space<vmem>>, vector<14x20xf32>,
      %c0_22 = arith.constant 0 : index
      %c0_23 = arith.constant 0 : index
      %19 = vector.load %arg8[%c0_22, %c0_23] : memref<14x20xf32, #tpu.memory_space<vmem>>, vector<14x19xf32>
      %c0_24 = arith.constant 0 : index
      %c1_25 = arith.constant 1 : index
      %20 = vector.load %arg8[%c0_24, %c1_25] : memref<14x20xf32, #tpu.memory_space<vmem>>, vector<14x19xf32>
      %21 = arith.maximumf %19, %20 : vector<14x19xf32>
      %c0_26 = arith.constant 0 : index
      %c0_27 = arith.constant 0 : index
      %22 = vector.load %arg9[%c0_26, %c0_27] : memref<14x19xf32, #tpu.memory_space<vmem>>, vector<14x19xf32>
      tpu.vector_store %arg9[%c0_26, %c0_27], %21 {strides = array<i32>} : memref<14x19xf32, #tpu.memory_space<vmem>>, vector<14x19xf32>,
      %c0_28 = arith.constant 0 : index
      %c0_29 = arith.constant 0 : index
      %23 = vector.load %arg9[%c0_28, %c0_29] : memref<14x19xf32, #tpu.memory_space<vmem>>, vector<14x17xf32>
      %c0_30 = arith.constant 0 : index
      %c2_31 = arith.constant 2 : index
      %24 = vector.load %arg9[%c0_30, %c2_31] : memref<14x19xf32, #tpu.memory_space<vmem>>, vector<14x17xf32>
      %25 = arith.maximumf %23, %24 : vector<14x17xf32>
      %c0_32 = arith.constant 0 : index
      %c0_33 = arith.constant 0 : index
      %26 = vector.load %arg10[%c0_32, %c0_33] : memref<14x17xf32, #tpu.memory_space<vmem>>, vector<14x17xf32>
      tpu.vector_store %arg10[%c0_32, %c0_33], %25 {strides = array<i32>} : memref<14x17xf32, #tpu.memory_space<vmem>>, vector<14x17xf32>,
      %c0_34 = arith.constant 0 : index
      %c0_35 = arith.constant 0 : index
      %27 = vector.load %arg10[%c0_34, %c0_35] : memref<14x17xf32, #tpu.memory_space<vmem>>, vector<14x14xf32>
      %c0_36 = arith.constant 0 : index
      %c3_37 = arith.constant 3 : index
      %28 = vector.load %arg10[%c0_36, %c3_37] : memref<14x17xf32, #tpu.memory_space<vmem>>, vector<14x14xf32>
      %29 = arith.maximumf %27, %28 : vector<14x14xf32>
      %c0_38 = arith.constant 0 : index
      %c0_39 = arith.constant 0 : index
      %30 = vector.load %arg2[%c0_38, %c0_39] : memref<14x14xf32, #tpu.memory_space<vmem>>, vector<14x14xf32>
      %cst_40 = arith.constant dense<0.000000e+00> : vector<14x14xf32>
      %31 = tpu.matmul %30, %29, %cst_40 {dimension_numbers = #tpu.dot_dimension_numbers<[1], [0], [0], [1], [0, 0, 1, 1], [], []>, precision = #tpu.contract_precision<fp32>} : vector<14x14xf32>, vector<14x14xf32>, vector<14x14xf32> -> vector<14x14xf32>
      %c0_41 = arith.constant 0 : index
      %c0_42 = arith.constant 0 : index
      %32 = vector.load %arg3[%c0_41, %c0_42] : memref<14x14xf32, #tpu.memory_space<vmem>>, vector<14x14xf32>
      %cst_43 = arith.constant dense<0.000000e+00> : vector<14x14xf32>
      %33 = tpu.matmul %31, %32, %cst_43 {dimension_numbers = #tpu.dot_dimension_numbers<[1], [0], [0], [1], [0, 0, 1, 1], [], []>, precision = #tpu.contract_precision<fp32>} : vector<14x14xf32>, vector<14x14xf32>, vector<14x14xf32> -> vector<14x14xf32>
      %34 = arith.index_cast %arg11 : i32 to index
      %c1_44 = arith.constant 1 : index
      %c0_45 = arith.constant 0 : index
      %c0_46 = arith.constant 0 : index
      %35 = vector.load %arg1[%34, %c1_44, %c0_45, %c0_46] : memref<2x8x16x16xf32, #tpu.memory_space<vmem>>, vector<1x1x16x16xf32>
      %36 = vector.shape_cast %35 : vector<1x1x16x16xf32> to vector<16x16xf32>
      %c2_47 = arith.constant 2 : index
      %c2_48 = arith.constant 2 : index
      %37 = vector.load %arg5[%c2_47, %c2_48] : memref<20x20xf32, #tpu.memory_space<vmem>>, vector<16x16xf32>
      tpu.vector_store %arg5[%c2_47, %c2_48], %36 {strides = array<i32>} : memref<20x20xf32, #tpu.memory_space<vmem>>, vector<16x16xf32>,
      %c0_49 = arith.constant 0 : index
      %c0_50 = arith.constant 0 : index
      %38 = vector.load %arg5[%c0_49, %c0_50] : memref<20x20xf32, #tpu.memory_space<vmem>>, vector<19x20xf32>
      %c1_51 = arith.constant 1 : index
      %c0_52 = arith.constant 0 : index
      %39 = vector.load %arg5[%c1_51, %c0_52] : memref<20x20xf32, #tpu.memory_space<vmem>>, vector<19x20xf32>
      %40 = arith.maximumf %38, %39 : vector<19x20xf32>
      %c0_53 = arith.constant 0 : index
      %c0_54 = arith.constant 0 : index
      %41 = vector.load %arg6[%c0_53, %c0_54] : memref<19x20xf32, #tpu.memory_space<vmem>>, vector<19x20xf32>
      tpu.vector_store %arg6[%c0_53, %c0_54], %40 {strides = array<i32>} : memref<19x20xf32, #tpu.memory_space<vmem>>, vector<19x20xf32>,
      %c0_55 = arith.constant 0 : index
      %c0_56 = arith.constant 0 : index
      %42 = vector.load %arg6[%c0_55, %c0_56] : memref<19x20xf32, #tpu.memory_space<vmem>>, vector<17x20xf32>
      %c2_57 = arith.constant 2 : index
      %c0_58 = arith.constant 0 : index
      %43 = vector.load %arg6[%c2_57, %c0_58] : memref<19x20xf32, #tpu.memory_space<vmem>>, vector<17x20xf32>
      %44 = arith.maximumf %42, %43 : vector<17x20xf32>
      %c0_59 = arith.constant 0 : index
      %c0_60 = arith.constant 0 : index
      %45 = vector.load %arg7[%c0_59, %c0_60] : memref<17x20xf32, #tpu.memory_space<vmem>>, vector<17x20xf32>
      tpu.vector_store %arg7[%c0_59, %c0_60], %44 {strides = array<i32>} : memref<17x20xf32, #tpu.memory_space<vmem>>, vector<17x20xf32>,
      %c0_61 = arith.constant 0 : index
      %c0_62 = arith.constant 0 : index
      %46 = vector.load %arg7[%c0_61, %c0_62] : memref<17x20xf32, #tpu.memory_space<vmem>>, vector<14x20xf32>
      %c3_63 = arith.constant 3 : index
      %c0_64 = arith.constant 0 : index
      %47 = vector.load %arg7[%c3_63, %c0_64] : memref<17x20xf32, #tpu.memory_space<vmem>>, vector<14x20xf32>
      %48 = arith.maximumf %46, %47 : vector<14x20xf32>
      %c0_65 = arith.constant 0 : index
      %c0_66 = arith.constant 0 : index
      %49 = vector.load %arg8[%c0_65, %c0_66] : memref<14x20xf32, #tpu.memory_space<vmem>>, vector<14x20xf32>
      tpu.vector_store %arg8[%c0_65, %c0_66], %48 {strides = array<i32>} : memref<14x20xf32, #tpu.memory_space<vmem>>, vector<14x20xf32>,
      %c0_67 = arith.constant 0 : index
      %c0_68 = arith.constant 0 : index
      %50 = vector.load %arg8[%c0_67, %c0_68] : memref<14x20xf32, #tpu.memory_space<vmem>>, vector<14x19xf32>
      %c0_69 = arith.constant 0 : index
      %c1_70 = arith.constant 1 : index
      %51 = vector.load %arg8[%c0_69, %c1_70] : memref<14x20xf32, #tpu.memory_space<vmem>>, vector<14x19xf32>
      %52 = arith.maximumf %50, %51 : vector<14x19xf32>
      %c0_71 = arith.constant 0 : index
      %c0_72 = arith.constant 0 : index
      %53 = vector.load %arg9[%c0_71, %c0_72] : memref<14x19xf32, #tpu.memory_space<vmem>>, vector<14x19xf32>
      tpu.vector_store %arg9[%c0_71, %c0_72], %52 {strides = array<i32>} : memref<14x19xf32, #tpu.memory_space<vmem>>, vector<14x19xf32>,
      %c0_73 = arith.constant 0 : index
      %c0_74 = arith.constant 0 : index
      %54 = vector.load %arg9[%c0_73, %c0_74] : memref<14x19xf32, #tpu.memory_space<vmem>>, vector<14x17xf32>
      %c0_75 = arith.constant 0 : index
      %c2_76 = arith.constant 2 : index
      %55 = vector.load %arg9[%c0_75, %c2_76] : memref<14x19xf32, #tpu.memory_space<vmem>>, vector<14x17xf32>
      %56 = arith.maximumf %54, %55 : vector<14x17xf32>
      %c0_77 = arith.constant 0 : index
      %c0_78 = arith.constant 0 : index
      %57 = vector.load %arg10[%c0_77, %c0_78] : memref<14x17xf32, #tpu.memory_space<vmem>>, vector<14x17xf32>
      tpu.vector_store %arg10[%c0_77, %c0_78], %56 {strides = array<i32>} : memref<14x17xf32, #tpu.memory_space<vmem>>, vector<14x17xf32>,
      %c0_79 = arith.constant 0 : index
      %c0_80 = arith.constant 0 : index
      %58 = vector.load %arg10[%c0_79, %c0_80] : memref<14x17xf32, #tpu.memory_space<vmem>>, vector<14x14xf32>
      %c0_81 = arith.constant 0 : index
      %c3_82 = arith.constant 3 : index
      %59 = vector.load %arg10[%c0_81, %c3_82] : memref<14x17xf32, #tpu.memory_space<vmem>>, vector<14x14xf32>
      %60 = arith.maximumf %58, %59 : vector<14x14xf32>
      %c0_83 = arith.constant 0 : index
      %c0_84 = arith.constant 0 : index
      %61 = vector.load %arg2[%c0_83, %c0_84] : memref<14x14xf32, #tpu.memory_space<vmem>>, vector<14x14xf32>
      %cst_85 = arith.constant dense<0.000000e+00> : vector<14x14xf32>
      %62 = tpu.matmul %61, %60, %cst_85 {dimension_numbers = #tpu.dot_dimension_numbers<[1], [0], [0], [1], [0, 0, 1, 1], [], []>, precision = #tpu.contract_precision<fp32>} : vector<14x14xf32>, vector<14x14xf32>, vector<14x14xf32> -> vector<14x14xf32>
      %c0_86 = arith.constant 0 : index
      %c0_87 = arith.constant 0 : index
      %63 = vector.load %arg3[%c0_86, %c0_87] : memref<14x14xf32, #tpu.memory_space<vmem>>, vector<14x14xf32>
      %cst_88 = arith.constant dense<0.000000e+00> : vector<14x14xf32>
      %64 = tpu.matmul %62, %63, %cst_88 {dimension_numbers = #tpu.dot_dimension_numbers<[1], [0], [0], [1], [0, 0, 1, 1], [], []>, precision = #tpu.contract_precision<fp32>} : vector<14x14xf32>, vector<14x14xf32>, vector<14x14xf32> -> vector<14x14xf32>
      %65 = arith.maximumf %33, %64 : vector<14x14xf32>
      %66 = arith.index_cast %arg11 : i32 to index
      %c2_89 = arith.constant 2 : index
      %c0_90 = arith.constant 0 : index
      %c0_91 = arith.constant 0 : index
      %67 = vector.load %arg1[%66, %c2_89, %c0_90, %c0_91] : memref<2x8x16x16xf32, #tpu.memory_space<vmem>>, vector<1x1x16x16xf32>
      %68 = vector.shape_cast %67 : vector<1x1x16x16xf32> to vector<16x16xf32>
      %c2_92 = arith.constant 2 : index
      %c2_93 = arith.constant 2 : index
      %69 = vector.load %arg5[%c2_92, %c2_93] : memref<20x20xf32, #tpu.memory_space<vmem>>, vector<16x16xf32>
      tpu.vector_store %arg5[%c2_92, %c2_93], %68 {strides = array<i32>} : memref<20x20xf32, #tpu.memory_space<vmem>>, vector<16x16xf32>,
      %c0_94 = arith.constant 0 : index
      %c0_95 = arith.constant 0 : index
      %70 = vector.load %arg5[%c0_94, %c0_95] : memref<20x20xf32, #tpu.memory_space<vmem>>, vector<19x20xf32>
      %c1_96 = arith.constant 1 : index
      %c0_97 = arith.constant 0 : index
      %71 = vector.load %arg5[%c1_96, %c0_97] : memref<20x20xf32, #tpu.memory_space<vmem>>, vector<19x20xf32>
      %72 = arith.maximumf %70, %71 : vector<19x20xf32>
      %c0_98 = arith.constant 0 : index
      %c0_99 = arith.constant 0 : index
      %73 = vector.load %arg6[%c0_98, %c0_99] : memref<19x20xf32, #tpu.memory_space<vmem>>, vector<19x20xf32>
      tpu.vector_store %arg6[%c0_98, %c0_99], %72 {strides = array<i32>} : memref<19x20xf32, #tpu.memory_space<vmem>>, vector<19x20xf32>,
      %c0_100 = arith.constant 0 : index
      %c0_101 = arith.constant 0 : index
      %74 = vector.load %arg6[%c0_100, %c0_101] : memref<19x20xf32, #tpu.memory_space<vmem>>, vector<17x20xf32>
      %c2_102 = arith.constant 2 : index
      %c0_103 = arith.constant 0 : index
      %75 = vector.load %arg6[%c2_102, %c0_103] : memref<19x20xf32, #tpu.memory_space<vmem>>, vector<17x20xf32>
      %76 = arith.maximumf %74, %75 : vector<17x20xf32>
      %c0_104 = arith.constant 0 : index
      %c0_105 = arith.constant 0 : index
      %77 = vector.load %arg7[%c0_104, %c0_105] : memref<17x20xf32, #tpu.memory_space<vmem>>, vector<17x20xf32>
      tpu.vector_store %arg7[%c0_104, %c0_105], %76 {strides = array<i32>} : memref<17x20xf32, #tpu.memory_space<vmem>>, vector<17x20xf32>,
      %c0_106 = arith.constant 0 : index
      %c0_107 = arith.constant 0 : index
      %78 = vector.load %arg7[%c0_106, %c0_107] : memref<17x20xf32, #tpu.memory_space<vmem>>, vector<14x20xf32>
      %c3_108 = arith.constant 3 : index
      %c0_109 = arith.constant 0 : index
      %79 = vector.load %arg7[%c3_108, %c0_109] : memref<17x20xf32, #tpu.memory_space<vmem>>, vector<14x20xf32>
      %80 = arith.maximumf %78, %79 : vector<14x20xf32>
      %c0_110 = arith.constant 0 : index
      %c0_111 = arith.constant 0 : index
      %81 = vector.load %arg8[%c0_110, %c0_111] : memref<14x20xf32, #tpu.memory_space<vmem>>, vector<14x20xf32>
      tpu.vector_store %arg8[%c0_110, %c0_111], %80 {strides = array<i32>} : memref<14x20xf32, #tpu.memory_space<vmem>>, vector<14x20xf32>,
      %c0_112 = arith.constant 0 : index
      %c0_113 = arith.constant 0 : index
      %82 = vector.load %arg8[%c0_112, %c0_113] : memref<14x20xf32, #tpu.memory_space<vmem>>, vector<14x19xf32>
      %c0_114 = arith.constant 0 : index
      %c1_115 = arith.constant 1 : index
      %83 = vector.load %arg8[%c0_114, %c1_115] : memref<14x20xf32, #tpu.memory_space<vmem>>, vector<14x19xf32>
      %84 = arith.maximumf %82, %83 : vector<14x19xf32>
      %c0_116 = arith.constant 0 : index
      %c0_117 = arith.constant 0 : index
      %85 = vector.load %arg9[%c0_116, %c0_117] : memref<14x19xf32, #tpu.memory_space<vmem>>, vector<14x19xf32>
      tpu.vector_store %arg9[%c0_116, %c0_117], %84 {strides = array<i32>} : memref<14x19xf32, #tpu.memory_space<vmem>>, vector<14x19xf32>,
      %c0_118 = arith.constant 0 : index
      %c0_119 = arith.constant 0 : index
      %86 = vector.load %arg9[%c0_118, %c0_119] : memref<14x19xf32, #tpu.memory_space<vmem>>, vector<14x17xf32>
      %c0_120 = arith.constant 0 : index
      %c2_121 = arith.constant 2 : index
      %87 = vector.load %arg9[%c0_120, %c2_121] : memref<14x19xf32, #tpu.memory_space<vmem>>, vector<14x17xf32>
      %88 = arith.maximumf %86, %87 : vector<14x17xf32>
      %c0_122 = arith.constant 0 : index
      %c0_123 = arith.constant 0 : index
      %89 = vector.load %arg10[%c0_122, %c0_123] : memref<14x17xf32, #tpu.memory_space<vmem>>, vector<14x17xf32>
      tpu.vector_store %arg10[%c0_122, %c0_123], %88 {strides = array<i32>} : memref<14x17xf32, #tpu.memory_space<vmem>>, vector<14x17xf32>,
      %c0_124 = arith.constant 0 : index
      %c0_125 = arith.constant 0 : index
      %90 = vector.load %arg10[%c0_124, %c0_125] : memref<14x17xf32, #tpu.memory_space<vmem>>, vector<14x14xf32>
      %c0_126 = arith.constant 0 : index
      %c3_127 = arith.constant 3 : index
      %91 = vector.load %arg10[%c0_126, %c3_127] : memref<14x17xf32, #tpu.memory_space<vmem>>, vector<14x14xf32>
      %92 = arith.maximumf %90, %91 : vector<14x14xf32>
      %c0_128 = arith.constant 0 : index
      %c0_129 = arith.constant 0 : index
      %93 = vector.load %arg2[%c0_128, %c0_129] : memref<14x14xf32, #tpu.memory_space<vmem>>, vector<14x14xf32>
      %cst_130 = arith.constant dense<0.000000e+00> : vector<14x14xf32>
      %94 = tpu.matmul %93, %92, %cst_130 {dimension_numbers = #tpu.dot_dimension_numbers<[1], [0], [0], [1], [0, 0, 1, 1], [], []>, precision = #tpu.contract_precision<fp32>} : vector<14x14xf32>, vector<14x14xf32>, vector<14x14xf32> -> vector<14x14xf32>
      %c0_131 = arith.constant 0 : index
      %c0_132 = arith.constant 0 : index
      %95 = vector.load %arg3[%c0_131, %c0_132] : memref<14x14xf32, #tpu.memory_space<vmem>>, vector<14x14xf32>
      %cst_133 = arith.constant dense<0.000000e+00> : vector<14x14xf32>
      %96 = tpu.matmul %94, %95, %cst_133 {dimension_numbers = #tpu.dot_dimension_numbers<[1], [0], [0], [1], [0, 0, 1, 1], [], []>, precision = #tpu.contract_precision<fp32>} : vector<14x14xf32>, vector<14x14xf32>, vector<14x14xf32> -> vector<14x14xf32>
      %97 = arith.maximumf %65, %96 : vector<14x14xf32>
      %98 = arith.index_cast %arg11 : i32 to index
      %c3_134 = arith.constant 3 : index
      %c0_135 = arith.constant 0 : index
      %c0_136 = arith.constant 0 : index
      %99 = vector.load %arg1[%98, %c3_134, %c0_135, %c0_136] : memref<2x8x16x16xf32, #tpu.memory_space<vmem>>, vector<1x1x16x16xf32>
      %100 = vector.shape_cast %99 : vector<1x1x16x16xf32> to vector<16x16xf32>
      %c2_137 = arith.constant 2 : index
      %c2_138 = arith.constant 2 : index
      %101 = vector.load %arg5[%c2_137, %c2_138] : memref<20x20xf32, #tpu.memory_space<vmem>>, vector<16x16xf32>
      tpu.vector_store %arg5[%c2_137, %c2_138], %100 {strides = array<i32>} : memref<20x20xf32, #tpu.memory_space<vmem>>, vector<16x16xf32>,
      %c0_139 = arith.constant 0 : index
      %c0_140 = arith.constant 0 : index
      %102 = vector.load %arg5[%c0_139, %c0_140] : memref<20x20xf32, #tpu.memory_space<vmem>>, vector<19x20xf32>
      %c1_141 = arith.constant 1 : index
      %c0_142 = arith.constant 0 : index
      %103 = vector.load %arg5[%c1_141, %c0_142] : memref<20x20xf32, #tpu.memory_space<vmem>>, vector<19x20xf32>
      %104 = arith.maximumf %102, %103 : vector<19x20xf32>
      %c0_143 = arith.constant 0 : index
      %c0_144 = arith.constant 0 : index
      %105 = vector.load %arg6[%c0_143, %c0_144] : memref<19x20xf32, #tpu.memory_space<vmem>>, vector<19x20xf32>
      tpu.vector_store %arg6[%c0_143, %c0_144], %104 {strides = array<i32>} : memref<19x20xf32, #tpu.memory_space<vmem>>, vector<19x20xf32>,
      %c0_145 = arith.constant 0 : index
      %c0_146 = arith.constant 0 : index
      %106 = vector.load %arg6[%c0_145, %c0_146] : memref<19x20xf32, #tpu.memory_space<vmem>>, vector<17x20xf32>
      %c2_147 = arith.constant 2 : index
      %c0_148 = arith.constant 0 : index
      %107 = vector.load %arg6[%c2_147, %c0_148] : memref<19x20xf32, #tpu.memory_space<vmem>>, vector<17x20xf32>
      %108 = arith.maximumf %106, %107 : vector<17x20xf32>
      %c0_149 = arith.constant 0 : index
      %c0_150 = arith.constant 0 : index
      %109 = vector.load %arg7[%c0_149, %c0_150] : memref<17x20xf32, #tpu.memory_space<vmem>>, vector<17x20xf32>
      tpu.vector_store %arg7[%c0_149, %c0_150], %108 {strides = array<i32>} : memref<17x20xf32, #tpu.memory_space<vmem>>, vector<17x20xf32>,
      %c0_151 = arith.constant 0 : index
      %c0_152 = arith.constant 0 : index
      %110 = vector.load %arg7[%c0_151, %c0_152] : memref<17x20xf32, #tpu.memory_space<vmem>>, vector<14x20xf32>
      %c3_153 = arith.constant 3 : index
      %c0_154 = arith.constant 0 : index
      %111 = vector.load %arg7[%c3_153, %c0_154] : memref<17x20xf32, #tpu.memory_space<vmem>>, vector<14x20xf32>
      %112 = arith.maximumf %110, %111 : vector<14x20xf32>
      %c0_155 = arith.constant 0 : index
      %c0_156 = arith.constant 0 : index
      %113 = vector.load %arg8[%c0_155, %c0_156] : memref<14x20xf32, #tpu.memory_space<vmem>>, vector<14x20xf32>
      tpu.vector_store %arg8[%c0_155, %c0_156], %112 {strides = array<i32>} : memref<14x20xf32, #tpu.memory_space<vmem>>, vector<14x20xf32>,
      %c0_157 = arith.constant 0 : index
      %c0_158 = arith.constant 0 : index
      %114 = vector.load %arg8[%c0_157, %c0_158] : memref<14x20xf32, #tpu.memory_space<vmem>>, vector<14x19xf32>
      %c0_159 = arith.constant 0 : index
      %c1_160 = arith.constant 1 : index
      %115 = vector.load %arg8[%c0_159, %c1_160] : memref<14x20xf32, #tpu.memory_space<vmem>>, vector<14x19xf32>
      %116 = arith.maximumf %114, %115 : vector<14x19xf32>
      %c0_161 = arith.constant 0 : index
      %c0_162 = arith.constant 0 : index
      %117 = vector.load %arg9[%c0_161, %c0_162] : memref<14x19xf32, #tpu.memory_space<vmem>>, vector<14x19xf32>
      tpu.vector_store %arg9[%c0_161, %c0_162], %116 {strides = array<i32>} : memref<14x19xf32, #tpu.memory_space<vmem>>, vector<14x19xf32>,
      %c0_163 = arith.constant 0 : index
      %c0_164 = arith.constant 0 : index
      %118 = vector.load %arg9[%c0_163, %c0_164] : memref<14x19xf32, #tpu.memory_space<vmem>>, vector<14x17xf32>
      %c0_165 = arith.constant 0 : index
      %c2_166 = arith.constant 2 : index
      %119 = vector.load %arg9[%c0_165, %c2_166] : memref<14x19xf32, #tpu.memory_space<vmem>>, vector<14x17xf32>
      %120 = arith.maximumf %118, %119 : vector<14x17xf32>
      %c0_167 = arith.constant 0 : index
      %c0_168 = arith.constant 0 : index
      %121 = vector.load %arg10[%c0_167, %c0_168] : memref<14x17xf32, #tpu.memory_space<vmem>>, vector<14x17xf32>
      tpu.vector_store %arg10[%c0_167, %c0_168], %120 {strides = array<i32>} : memref<14x17xf32, #tpu.memory_space<vmem>>, vector<14x17xf32>,
      %c0_169 = arith.constant 0 : index
      %c0_170 = arith.constant 0 : index
      %122 = vector.load %arg10[%c0_169, %c0_170] : memref<14x17xf32, #tpu.memory_space<vmem>>, vector<14x14xf32>
      %c0_171 = arith.constant 0 : index
      %c3_172 = arith.constant 3 : index
      %123 = vector.load %arg10[%c0_171, %c3_172] : memref<14x17xf32, #tpu.memory_space<vmem>>, vector<14x14xf32>
      %124 = arith.maximumf %122, %123 : vector<14x14xf32>
      %c0_173 = arith.constant 0 : index
      %c0_174 = arith.constant 0 : index
      %125 = vector.load %arg2[%c0_173, %c0_174] : memref<14x14xf32, #tpu.memory_space<vmem>>, vector<14x14xf32>
      %cst_175 = arith.constant dense<0.000000e+00> : vector<14x14xf32>
      %126 = tpu.matmul %125, %124, %cst_175 {dimension_numbers = #tpu.dot_dimension_numbers<[1], [0], [0], [1], [0, 0, 1, 1], [], []>, precision = #tpu.contract_precision<fp32>} : vector<14x14xf32>, vector<14x14xf32>, vector<14x14xf32> -> vector<14x14xf32>
      %c0_176 = arith.constant 0 : index
      %c0_177 = arith.constant 0 : index
      %127 = vector.load %arg3[%c0_176, %c0_177] : memref<14x14xf32, #tpu.memory_space<vmem>>, vector<14x14xf32>
      %cst_178 = arith.constant dense<0.000000e+00> : vector<14x14xf32>
      %128 = tpu.matmul %126, %127, %cst_178 {dimension_numbers = #tpu.dot_dimension_numbers<[1], [0], [0], [1], [0, 0, 1, 1], [], []>, precision = #tpu.contract_precision<fp32>} : vector<14x14xf32>, vector<14x14xf32>, vector<14x14xf32> -> vector<14x14xf32>
      %129 = arith.maximumf %97, %128 : vector<14x14xf32>
      %130 = arith.index_cast %arg11 : i32 to index
      %c4 = arith.constant 4 : index
      %c0_179 = arith.constant 0 : index
      %c0_180 = arith.constant 0 : index
      %131 = vector.load %arg1[%130, %c4, %c0_179, %c0_180] : memref<2x8x16x16xf32, #tpu.memory_space<vmem>>, vector<1x1x16x16xf32>
      %132 = vector.shape_cast %131 : vector<1x1x16x16xf32> to vector<16x16xf32>
      %c2_181 = arith.constant 2 : index
      %c2_182 = arith.constant 2 : index
      %133 = vector.load %arg5[%c2_181, %c2_182] : memref<20x20xf32, #tpu.memory_space<vmem>>, vector<16x16xf32>
      tpu.vector_store %arg5[%c2_181, %c2_182], %132 {strides = array<i32>} : memref<20x20xf32, #tpu.memory_space<vmem>>, vector<16x16xf32>,
      %c0_183 = arith.constant 0 : index
      %c0_184 = arith.constant 0 : index
      %134 = vector.load %arg5[%c0_183, %c0_184] : memref<20x20xf32, #tpu.memory_space<vmem>>, vector<19x20xf32>
      %c1_185 = arith.constant 1 : index
      %c0_186 = arith.constant 0 : index
      %135 = vector.load %arg5[%c1_185, %c0_186] : memref<20x20xf32, #tpu.memory_space<vmem>>, vector<19x20xf32>
      %136 = arith.maximumf %134, %135 : vector<19x20xf32>
      %c0_187 = arith.constant 0 : index
      %c0_188 = arith.constant 0 : index
      %137 = vector.load %arg6[%c0_187, %c0_188] : memref<19x20xf32, #tpu.memory_space<vmem>>, vector<19x20xf32>
      tpu.vector_store %arg6[%c0_187, %c0_188], %136 {strides = array<i32>} : memref<19x20xf32, #tpu.memory_space<vmem>>, vector<19x20xf32>,
      %c0_189 = arith.constant 0 : index
      %c0_190 = arith.constant 0 : index
      %138 = vector.load %arg6[%c0_189, %c0_190] : memref<19x20xf32, #tpu.memory_space<vmem>>, vector<17x20xf32>
      %c2_191 = arith.constant 2 : index
      %c0_192 = arith.constant 0 : index
      %139 = vector.load %arg6[%c2_191, %c0_192] : memref<19x20xf32, #tpu.memory_space<vmem>>, vector<17x20xf32>
      %140 = arith.maximumf %138, %139 : vector<17x20xf32>
      %c0_193 = arith.constant 0 : index
      %c0_194 = arith.constant 0 : index
      %141 = vector.load %arg7[%c0_193, %c0_194] : memref<17x20xf32, #tpu.memory_space<vmem>>, vector<17x20xf32>
      tpu.vector_store %arg7[%c0_193, %c0_194], %140 {strides = array<i32>} : memref<17x20xf32, #tpu.memory_space<vmem>>, vector<17x20xf32>,
      %c0_195 = arith.constant 0 : index
      %c0_196 = arith.constant 0 : index
      %142 = vector.load %arg7[%c0_195, %c0_196] : memref<17x20xf32, #tpu.memory_space<vmem>>, vector<14x20xf32>
      %c3_197 = arith.constant 3 : index
      %c0_198 = arith.constant 0 : index
      %143 = vector.load %arg7[%c3_197, %c0_198] : memref<17x20xf32, #tpu.memory_space<vmem>>, vector<14x20xf32>
      %144 = arith.maximumf %142, %143 : vector<14x20xf32>
      %c0_199 = arith.constant 0 : index
      %c0_200 = arith.constant 0 : index
      %145 = vector.load %arg8[%c0_199, %c0_200] : memref<14x20xf32, #tpu.memory_space<vmem>>, vector<14x20xf32>
      tpu.vector_store %arg8[%c0_199, %c0_200], %144 {strides = array<i32>} : memref<14x20xf32, #tpu.memory_space<vmem>>, vector<14x20xf32>,
      %c0_201 = arith.constant 0 : index
      %c0_202 = arith.constant 0 : index
      %146 = vector.load %arg8[%c0_201, %c0_202] : memref<14x20xf32, #tpu.memory_space<vmem>>, vector<14x19xf32>
      %c0_203 = arith.constant 0 : index
      %c1_204 = arith.constant 1 : index
      %147 = vector.load %arg8[%c0_203, %c1_204] : memref<14x20xf32, #tpu.memory_space<vmem>>, vector<14x19xf32>
      %148 = arith.maximumf %146, %147 : vector<14x19xf32>
      %c0_205 = arith.constant 0 : index
      %c0_206 = arith.constant 0 : index
      %149 = vector.load %arg9[%c0_205, %c0_206] : memref<14x19xf32, #tpu.memory_space<vmem>>, vector<14x19xf32>
      tpu.vector_store %arg9[%c0_205, %c0_206], %148 {strides = array<i32>} : memref<14x19xf32, #tpu.memory_space<vmem>>, vector<14x19xf32>,
      %c0_207 = arith.constant 0 : index
      %c0_208 = arith.constant 0 : index
      %150 = vector.load %arg9[%c0_207, %c0_208] : memref<14x19xf32, #tpu.memory_space<vmem>>, vector<14x17xf32>
      %c0_209 = arith.constant 0 : index
      %c2_210 = arith.constant 2 : index
      %151 = vector.load %arg9[%c0_209, %c2_210] : memref<14x19xf32, #tpu.memory_space<vmem>>, vector<14x17xf32>
      %152 = arith.maximumf %150, %151 : vector<14x17xf32>
      %c0_211 = arith.constant 0 : index
      %c0_212 = arith.constant 0 : index
      %153 = vector.load %arg10[%c0_211, %c0_212] : memref<14x17xf32, #tpu.memory_space<vmem>>, vector<14x17xf32>
      tpu.vector_store %arg10[%c0_211, %c0_212], %152 {strides = array<i32>} : memref<14x17xf32, #tpu.memory_space<vmem>>, vector<14x17xf32>,
      %c0_213 = arith.constant 0 : index
      %c0_214 = arith.constant 0 : index
      %154 = vector.load %arg10[%c0_213, %c0_214] : memref<14x17xf32, #tpu.memory_space<vmem>>, vector<14x14xf32>
      %c0_215 = arith.constant 0 : index
      %c3_216 = arith.constant 3 : index
      %155 = vector.load %arg10[%c0_215, %c3_216] : memref<14x17xf32, #tpu.memory_space<vmem>>, vector<14x14xf32>
      %156 = arith.maximumf %154, %155 : vector<14x14xf32>
      %c0_217 = arith.constant 0 : index
      %c0_218 = arith.constant 0 : index
      %157 = vector.load %arg2[%c0_217, %c0_218] : memref<14x14xf32, #tpu.memory_space<vmem>>, vector<14x14xf32>
      %cst_219 = arith.constant dense<0.000000e+00> : vector<14x14xf32>
      %158 = tpu.matmul %157, %156, %cst_219 {dimension_numbers = #tpu.dot_dimension_numbers<[1], [0], [0], [1], [0, 0, 1, 1], [], []>, precision = #tpu.contract_precision<fp32>} : vector<14x14xf32>, vector<14x14xf32>, vector<14x14xf32> -> vector<14x14xf32>
      %c0_220 = arith.constant 0 : index
      %c0_221 = arith.constant 0 : index
      %159 = vector.load %arg3[%c0_220, %c0_221] : memref<14x14xf32, #tpu.memory_space<vmem>>, vector<14x14xf32>
      %cst_222 = arith.constant dense<0.000000e+00> : vector<14x14xf32>
      %160 = tpu.matmul %158, %159, %cst_222 {dimension_numbers = #tpu.dot_dimension_numbers<[1], [0], [0], [1], [0, 0, 1, 1], [], []>, precision = #tpu.contract_precision<fp32>} : vector<14x14xf32>, vector<14x14xf32>, vector<14x14xf32> -> vector<14x14xf32>
      %161 = arith.maximumf %129, %160 : vector<14x14xf32>
      %162 = arith.index_cast %arg11 : i32 to index
      %c5 = arith.constant 5 : index
      %c0_223 = arith.constant 0 : index
      %c0_224 = arith.constant 0 : index
      %163 = vector.load %arg1[%162, %c5, %c0_223, %c0_224] : memref<2x8x16x16xf32, #tpu.memory_space<vmem>>, vector<1x1x16x16xf32>
      %164 = vector.shape_cast %163 : vector<1x1x16x16xf32> to vector<16x16xf32>
      %c2_225 = arith.constant 2 : index
      %c2_226 = arith.constant 2 : index
      %165 = vector.load %arg5[%c2_225, %c2_226] : memref<20x20xf32, #tpu.memory_space<vmem>>, vector<16x16xf32>
      tpu.vector_store %arg5[%c2_225, %c2_226], %164 {strides = array<i32>} : memref<20x20xf32, #tpu.memory_space<vmem>>, vector<16x16xf32>,
      %c0_227 = arith.constant 0 : index
      %c0_228 = arith.constant 0 : index
      %166 = vector.load %arg5[%c0_227, %c0_228] : memref<20x20xf32, #tpu.memory_space<vmem>>, vector<19x20xf32>
      %c1_229 = arith.constant 1 : index
      %c0_230 = arith.constant 0 : index
      %167 = vector.load %arg5[%c1_229, %c0_230] : memref<20x20xf32, #tpu.memory_space<vmem>>, vector<19x20xf32>
      %168 = arith.maximumf %166, %167 : vector<19x20xf32>
      %c0_231 = arith.constant 0 : index
      %c0_232 = arith.constant 0 : index
      %169 = vector.load %arg6[%c0_231, %c0_232] : memref<19x20xf32, #tpu.memory_space<vmem>>, vector<19x20xf32>
      tpu.vector_store %arg6[%c0_231, %c0_232], %168 {strides = array<i32>} : memref<19x20xf32, #tpu.memory_space<vmem>>, vector<19x20xf32>,
      %c0_233 = arith.constant 0 : index
      %c0_234 = arith.constant 0 : index
      %170 = vector.load %arg6[%c0_233, %c0_234] : memref<19x20xf32, #tpu.memory_space<vmem>>, vector<17x20xf32>
      %c2_235 = arith.constant 2 : index
      %c0_236 = arith.constant 0 : index
      %171 = vector.load %arg6[%c2_235, %c0_236] : memref<19x20xf32, #tpu.memory_space<vmem>>, vector<17x20xf32>
      %172 = arith.maximumf %170, %171 : vector<17x20xf32>
      %c0_237 = arith.constant 0 : index
      %c0_238 = arith.constant 0 : index
      %173 = vector.load %arg7[%c0_237, %c0_238] : memref<17x20xf32, #tpu.memory_space<vmem>>, vector<17x20xf32>
      tpu.vector_store %arg7[%c0_237, %c0_238], %172 {strides = array<i32>} : memref<17x20xf32, #tpu.memory_space<vmem>>, vector<17x20xf32>,
      %c0_239 = arith.constant 0 : index
      %c0_240 = arith.constant 0 : index
      %174 = vector.load %arg7[%c0_239, %c0_240] : memref<17x20xf32, #tpu.memory_space<vmem>>, vector<14x20xf32>
      %c3_241 = arith.constant 3 : index
      %c0_242 = arith.constant 0 : index
      %175 = vector.load %arg7[%c3_241, %c0_242] : memref<17x20xf32, #tpu.memory_space<vmem>>, vector<14x20xf32>
      %176 = arith.maximumf %174, %175 : vector<14x20xf32>
      %c0_243 = arith.constant 0 : index
      %c0_244 = arith.constant 0 : index
      %177 = vector.load %arg8[%c0_243, %c0_244] : memref<14x20xf32, #tpu.memory_space<vmem>>, vector<14x20xf32>
      tpu.vector_store %arg8[%c0_243, %c0_244], %176 {strides = array<i32>} : memref<14x20xf32, #tpu.memory_space<vmem>>, vector<14x20xf32>,
      %c0_245 = arith.constant 0 : index
      %c0_246 = arith.constant 0 : index
      %178 = vector.load %arg8[%c0_245, %c0_246] : memref<14x20xf32, #tpu.memory_space<vmem>>, vector<14x19xf32>
      %c0_247 = arith.constant 0 : index
      %c1_248 = arith.constant 1 : index
      %179 = vector.load %arg8[%c0_247, %c1_248] : memref<14x20xf32, #tpu.memory_space<vmem>>, vector<14x19xf32>
      %180 = arith.maximumf %178, %179 : vector<14x19xf32>
      %c0_249 = arith.constant 0 : index
      %c0_250 = arith.constant 0 : index
      %181 = vector.load %arg9[%c0_249, %c0_250] : memref<14x19xf32, #tpu.memory_space<vmem>>, vector<14x19xf32>
      tpu.vector_store %arg9[%c0_249, %c0_250], %180 {strides = array<i32>} : memref<14x19xf32, #tpu.memory_space<vmem>>, vector<14x19xf32>,
      %c0_251 = arith.constant 0 : index
      %c0_252 = arith.constant 0 : index
      %182 = vector.load %arg9[%c0_251, %c0_252] : memref<14x19xf32, #tpu.memory_space<vmem>>, vector<14x17xf32>
      %c0_253 = arith.constant 0 : index
      %c2_254 = arith.constant 2 : index
      %183 = vector.load %arg9[%c0_253, %c2_254] : memref<14x19xf32, #tpu.memory_space<vmem>>, vector<14x17xf32>
      %184 = arith.maximumf %182, %183 : vector<14x17xf32>
      %c0_255 = arith.constant 0 : index
      %c0_256 = arith.constant 0 : index
      %185 = vector.load %arg10[%c0_255, %c0_256] : memref<14x17xf32, #tpu.memory_space<vmem>>, vector<14x17xf32>
      tpu.vector_store %arg10[%c0_255, %c0_256], %184 {strides = array<i32>} : memref<14x17xf32, #tpu.memory_space<vmem>>, vector<14x17xf32>,
      %c0_257 = arith.constant 0 : index
      %c0_258 = arith.constant 0 : index
      %186 = vector.load %arg10[%c0_257, %c0_258] : memref<14x17xf32, #tpu.memory_space<vmem>>, vector<14x14xf32>
      %c0_259 = arith.constant 0 : index
      %c3_260 = arith.constant 3 : index
      %187 = vector.load %arg10[%c0_259, %c3_260] : memref<14x17xf32, #tpu.memory_space<vmem>>, vector<14x14xf32>
      %188 = arith.maximumf %186, %187 : vector<14x14xf32>
      %c0_261 = arith.constant 0 : index
      %c0_262 = arith.constant 0 : index
      %189 = vector.load %arg2[%c0_261, %c0_262] : memref<14x14xf32, #tpu.memory_space<vmem>>, vector<14x14xf32>
      %cst_263 = arith.constant dense<0.000000e+00> : vector<14x14xf32>
      %190 = tpu.matmul %189, %188, %cst_263 {dimension_numbers = #tpu.dot_dimension_numbers<[1], [0], [0], [1], [0, 0, 1, 1], [], []>, precision = #tpu.contract_precision<fp32>} : vector<14x14xf32>, vector<14x14xf32>, vector<14x14xf32> -> vector<14x14xf32>
      %c0_264 = arith.constant 0 : index
      %c0_265 = arith.constant 0 : index
      %191 = vector.load %arg3[%c0_264, %c0_265] : memref<14x14xf32, #tpu.memory_space<vmem>>, vector<14x14xf32>
      %cst_266 = arith.constant dense<0.000000e+00> : vector<14x14xf32>
      %192 = tpu.matmul %190, %191, %cst_266 {dimension_numbers = #tpu.dot_dimension_numbers<[1], [0], [0], [1], [0, 0, 1, 1], [], []>, precision = #tpu.contract_precision<fp32>} : vector<14x14xf32>, vector<14x14xf32>, vector<14x14xf32> -> vector<14x14xf32>
      %193 = arith.maximumf %161, %192 : vector<14x14xf32>
      %194 = arith.index_cast %arg11 : i32 to index
      %c6 = arith.constant 6 : index
      %c0_267 = arith.constant 0 : index
      %c0_268 = arith.constant 0 : index
      %195 = vector.load %arg1[%194, %c6, %c0_267, %c0_268] : memref<2x8x16x16xf32, #tpu.memory_space<vmem>>, vector<1x1x16x16xf32>
      %196 = vector.shape_cast %195 : vector<1x1x16x16xf32> to vector<16x16xf32>
      %c2_269 = arith.constant 2 : index
      %c2_270 = arith.constant 2 : index
      %197 = vector.load %arg5[%c2_269, %c2_270] : memref<20x20xf32, #tpu.memory_space<vmem>>, vector<16x16xf32>
      tpu.vector_store %arg5[%c2_269, %c2_270], %196 {strides = array<i32>} : memref<20x20xf32, #tpu.memory_space<vmem>>, vector<16x16xf32>,
      %c0_271 = arith.constant 0 : index
      %c0_272 = arith.constant 0 : index
      %198 = vector.load %arg5[%c0_271, %c0_272] : memref<20x20xf32, #tpu.memory_space<vmem>>, vector<19x20xf32>
      %c1_273 = arith.constant 1 : index
      %c0_274 = arith.constant 0 : index
      %199 = vector.load %arg5[%c1_273, %c0_274] : memref<20x20xf32, #tpu.memory_space<vmem>>, vector<19x20xf32>
      %200 = arith.maximumf %198, %199 : vector<19x20xf32>
      %c0_275 = arith.constant 0 : index
      %c0_276 = arith.constant 0 : index
      %201 = vector.load %arg6[%c0_275, %c0_276] : memref<19x20xf32, #tpu.memory_space<vmem>>, vector<19x20xf32>
      tpu.vector_store %arg6[%c0_275, %c0_276], %200 {strides = array<i32>} : memref<19x20xf32, #tpu.memory_space<vmem>>, vector<19x20xf32>,
      %c0_277 = arith.constant 0 : index
      %c0_278 = arith.constant 0 : index
      %202 = vector.load %arg6[%c0_277, %c0_278] : memref<19x20xf32, #tpu.memory_space<vmem>>, vector<17x20xf32>
      %c2_279 = arith.constant 2 : index
      %c0_280 = arith.constant 0 : index
      %203 = vector.load %arg6[%c2_279, %c0_280] : memref<19x20xf32, #tpu.memory_space<vmem>>, vector<17x20xf32>
      %204 = arith.maximumf %202, %203 : vector<17x20xf32>
      %c0_281 = arith.constant 0 : index
      %c0_282 = arith.constant 0 : index
      %205 = vector.load %arg7[%c0_281, %c0_282] : memref<17x20xf32, #tpu.memory_space<vmem>>, vector<17x20xf32>
      tpu.vector_store %arg7[%c0_281, %c0_282], %204 {strides = array<i32>} : memref<17x20xf32, #tpu.memory_space<vmem>>, vector<17x20xf32>,
      %c0_283 = arith.constant 0 : index
      %c0_284 = arith.constant 0 : index
      %206 = vector.load %arg7[%c0_283, %c0_284] : memref<17x20xf32, #tpu.memory_space<vmem>>, vector<14x20xf32>
      %c3_285 = arith.constant 3 : index
      %c0_286 = arith.constant 0 : index
      %207 = vector.load %arg7[%c3_285, %c0_286] : memref<17x20xf32, #tpu.memory_space<vmem>>, vector<14x20xf32>
      %208 = arith.maximumf %206, %207 : vector<14x20xf32>
      %c0_287 = arith.constant 0 : index
      %c0_288 = arith.constant 0 : index
      %209 = vector.load %arg8[%c0_287, %c0_288] : memref<14x20xf32, #tpu.memory_space<vmem>>, vector<14x20xf32>
      tpu.vector_store %arg8[%c0_287, %c0_288], %208 {strides = array<i32>} : memref<14x20xf32, #tpu.memory_space<vmem>>, vector<14x20xf32>,
      %c0_289 = arith.constant 0 : index
      %c0_290 = arith.constant 0 : index
      %210 = vector.load %arg8[%c0_289, %c0_290] : memref<14x20xf32, #tpu.memory_space<vmem>>, vector<14x19xf32>
      %c0_291 = arith.constant 0 : index
      %c1_292 = arith.constant 1 : index
      %211 = vector.load %arg8[%c0_291, %c1_292] : memref<14x20xf32, #tpu.memory_space<vmem>>, vector<14x19xf32>
      %212 = arith.maximumf %210, %211 : vector<14x19xf32>
      %c0_293 = arith.constant 0 : index
      %c0_294 = arith.constant 0 : index
      %213 = vector.load %arg9[%c0_293, %c0_294] : memref<14x19xf32, #tpu.memory_space<vmem>>, vector<14x19xf32>
      tpu.vector_store %arg9[%c0_293, %c0_294], %212 {strides = array<i32>} : memref<14x19xf32, #tpu.memory_space<vmem>>, vector<14x19xf32>,
      %c0_295 = arith.constant 0 : index
      %c0_296 = arith.constant 0 : index
      %214 = vector.load %arg9[%c0_295, %c0_296] : memref<14x19xf32, #tpu.memory_space<vmem>>, vector<14x17xf32>
      %c0_297 = arith.constant 0 : index
      %c2_298 = arith.constant 2 : index
      %215 = vector.load %arg9[%c0_297, %c2_298] : memref<14x19xf32, #tpu.memory_space<vmem>>, vector<14x17xf32>
      %216 = arith.maximumf %214, %215 : vector<14x17xf32>
      %c0_299 = arith.constant 0 : index
      %c0_300 = arith.constant 0 : index
      %217 = vector.load %arg10[%c0_299, %c0_300] : memref<14x17xf32, #tpu.memory_space<vmem>>, vector<14x17xf32>
      tpu.vector_store %arg10[%c0_299, %c0_300], %216 {strides = array<i32>} : memref<14x17xf32, #tpu.memory_space<vmem>>, vector<14x17xf32>,
      %c0_301 = arith.constant 0 : index
      %c0_302 = arith.constant 0 : index
      %218 = vector.load %arg10[%c0_301, %c0_302] : memref<14x17xf32, #tpu.memory_space<vmem>>, vector<14x14xf32>
      %c0_303 = arith.constant 0 : index
      %c3_304 = arith.constant 3 : index
      %219 = vector.load %arg10[%c0_303, %c3_304] : memref<14x17xf32, #tpu.memory_space<vmem>>, vector<14x14xf32>
      %220 = arith.maximumf %218, %219 : vector<14x14xf32>
      %c0_305 = arith.constant 0 : index
      %c0_306 = arith.constant 0 : index
      %221 = vector.load %arg2[%c0_305, %c0_306] : memref<14x14xf32, #tpu.memory_space<vmem>>, vector<14x14xf32>
      %cst_307 = arith.constant dense<0.000000e+00> : vector<14x14xf32>
      %222 = tpu.matmul %221, %220, %cst_307 {dimension_numbers = #tpu.dot_dimension_numbers<[1], [0], [0], [1], [0, 0, 1, 1], [], []>, precision = #tpu.contract_precision<fp32>} : vector<14x14xf32>, vector<14x14xf32>, vector<14x14xf32> -> vector<14x14xf32>
      %c0_308 = arith.constant 0 : index
      %c0_309 = arith.constant 0 : index
      %223 = vector.load %arg3[%c0_308, %c0_309] : memref<14x14xf32, #tpu.memory_space<vmem>>, vector<14x14xf32>
      %cst_310 = arith.constant dense<0.000000e+00> : vector<14x14xf32>
      %224 = tpu.matmul %222, %223, %cst_310 {dimension_numbers = #tpu.dot_dimension_numbers<[1], [0], [0], [1], [0, 0, 1, 1], [], []>, precision = #tpu.contract_precision<fp32>} : vector<14x14xf32>, vector<14x14xf32>, vector<14x14xf32> -> vector<14x14xf32>
      %225 = arith.maximumf %193, %224 : vector<14x14xf32>
      %226 = arith.index_cast %arg11 : i32 to index
      %c7 = arith.constant 7 : index
      %c0_311 = arith.constant 0 : index
      %c0_312 = arith.constant 0 : index
      %227 = vector.load %arg1[%226, %c7, %c0_311, %c0_312] : memref<2x8x16x16xf32, #tpu.memory_space<vmem>>, vector<1x1x16x16xf32>
      %228 = vector.shape_cast %227 : vector<1x1x16x16xf32> to vector<16x16xf32>
      %c2_313 = arith.constant 2 : index
      %c2_314 = arith.constant 2 : index
      %229 = vector.load %arg5[%c2_313, %c2_314] : memref<20x20xf32, #tpu.memory_space<vmem>>, vector<16x16xf32>
      tpu.vector_store %arg5[%c2_313, %c2_314], %228 {strides = array<i32>} : memref<20x20xf32, #tpu.memory_space<vmem>>, vector<16x16xf32>,
      %c0_315 = arith.constant 0 : index
      %c0_316 = arith.constant 0 : index
      %230 = vector.load %arg5[%c0_315, %c0_316] : memref<20x20xf32, #tpu.memory_space<vmem>>, vector<19x20xf32>
      %c1_317 = arith.constant 1 : index
      %c0_318 = arith.constant 0 : index
      %231 = vector.load %arg5[%c1_317, %c0_318] : memref<20x20xf32, #tpu.memory_space<vmem>>, vector<19x20xf32>
      %232 = arith.maximumf %230, %231 : vector<19x20xf32>
      %c0_319 = arith.constant 0 : index
      %c0_320 = arith.constant 0 : index
      %233 = vector.load %arg6[%c0_319, %c0_320] : memref<19x20xf32, #tpu.memory_space<vmem>>, vector<19x20xf32>
      tpu.vector_store %arg6[%c0_319, %c0_320], %232 {strides = array<i32>} : memref<19x20xf32, #tpu.memory_space<vmem>>, vector<19x20xf32>,
      %c0_321 = arith.constant 0 : index
      %c0_322 = arith.constant 0 : index
      %234 = vector.load %arg6[%c0_321, %c0_322] : memref<19x20xf32, #tpu.memory_space<vmem>>, vector<17x20xf32>
      %c2_323 = arith.constant 2 : index
      %c0_324 = arith.constant 0 : index
      %235 = vector.load %arg6[%c2_323, %c0_324] : memref<19x20xf32, #tpu.memory_space<vmem>>, vector<17x20xf32>
      %236 = arith.maximumf %234, %235 : vector<17x20xf32>
      %c0_325 = arith.constant 0 : index
      %c0_326 = arith.constant 0 : index
      %237 = vector.load %arg7[%c0_325, %c0_326] : memref<17x20xf32, #tpu.memory_space<vmem>>, vector<17x20xf32>
      tpu.vector_store %arg7[%c0_325, %c0_326], %236 {strides = array<i32>} : memref<17x20xf32, #tpu.memory_space<vmem>>, vector<17x20xf32>,
      %c0_327 = arith.constant 0 : index
      %c0_328 = arith.constant 0 : index
      %238 = vector.load %arg7[%c0_327, %c0_328] : memref<17x20xf32, #tpu.memory_space<vmem>>, vector<14x20xf32>
      %c3_329 = arith.constant 3 : index
      %c0_330 = arith.constant 0 : index
      %239 = vector.load %arg7[%c3_329, %c0_330] : memref<17x20xf32, #tpu.memory_space<vmem>>, vector<14x20xf32>
      %240 = arith.maximumf %238, %239 : vector<14x20xf32>
      %c0_331 = arith.constant 0 : index
      %c0_332 = arith.constant 0 : index
      %241 = vector.load %arg8[%c0_331, %c0_332] : memref<14x20xf32, #tpu.memory_space<vmem>>, vector<14x20xf32>
      tpu.vector_store %arg8[%c0_331, %c0_332], %240 {strides = array<i32>} : memref<14x20xf32, #tpu.memory_space<vmem>>, vector<14x20xf32>,
      %c0_333 = arith.constant 0 : index
      %c0_334 = arith.constant 0 : index
      %242 = vector.load %arg8[%c0_333, %c0_334] : memref<14x20xf32, #tpu.memory_space<vmem>>, vector<14x19xf32>
      %c0_335 = arith.constant 0 : index
      %c1_336 = arith.constant 1 : index
      %243 = vector.load %arg8[%c0_335, %c1_336] : memref<14x20xf32, #tpu.memory_space<vmem>>, vector<14x19xf32>
      %244 = arith.maximumf %242, %243 : vector<14x19xf32>
      %c0_337 = arith.constant 0 : index
      %c0_338 = arith.constant 0 : index
      %245 = vector.load %arg9[%c0_337, %c0_338] : memref<14x19xf32, #tpu.memory_space<vmem>>, vector<14x19xf32>
      tpu.vector_store %arg9[%c0_337, %c0_338], %244 {strides = array<i32>} : memref<14x19xf32, #tpu.memory_space<vmem>>, vector<14x19xf32>,
      %c0_339 = arith.constant 0 : index
      %c0_340 = arith.constant 0 : index
      %246 = vector.load %arg9[%c0_339, %c0_340] : memref<14x19xf32, #tpu.memory_space<vmem>>, vector<14x17xf32>
      %c0_341 = arith.constant 0 : index
      %c2_342 = arith.constant 2 : index
      %247 = vector.load %arg9[%c0_341, %c2_342] : memref<14x19xf32, #tpu.memory_space<vmem>>, vector<14x17xf32>
      %248 = arith.maximumf %246, %247 : vector<14x17xf32>
      %c0_343 = arith.constant 0 : index
      %c0_344 = arith.constant 0 : index
      %249 = vector.load %arg10[%c0_343, %c0_344] : memref<14x17xf32, #tpu.memory_space<vmem>>, vector<14x17xf32>
      tpu.vector_store %arg10[%c0_343, %c0_344], %248 {strides = array<i32>} : memref<14x17xf32, #tpu.memory_space<vmem>>, vector<14x17xf32>,
      %c0_345 = arith.constant 0 : index
      %c0_346 = arith.constant 0 : index
      %250 = vector.load %arg10[%c0_345, %c0_346] : memref<14x17xf32, #tpu.memory_space<vmem>>, vector<14x14xf32>
      %c0_347 = arith.constant 0 : index
      %c3_348 = arith.constant 3 : index
      %251 = vector.load %arg10[%c0_347, %c3_348] : memref<14x17xf32, #tpu.memory_space<vmem>>, vector<14x14xf32>
      %252 = arith.maximumf %250, %251 : vector<14x14xf32>
      %c0_349 = arith.constant 0 : index
      %c0_350 = arith.constant 0 : index
      %253 = vector.load %arg2[%c0_349, %c0_350] : memref<14x14xf32, #tpu.memory_space<vmem>>, vector<14x14xf32>
      %cst_351 = arith.constant dense<0.000000e+00> : vector<14x14xf32>
      %254 = tpu.matmul %253, %252, %cst_351 {dimension_numbers = #tpu.dot_dimension_numbers<[1], [0], [0], [1], [0, 0, 1, 1], [], []>, precision = #tpu.contract_precision<fp32>} : vector<14x14xf32>, vector<14x14xf32>, vector<14x14xf32> -> vector<14x14xf32>
      %c0_352 = arith.constant 0 : index
      %c0_353 = arith.constant 0 : index
      %255 = vector.load %arg3[%c0_352, %c0_353] : memref<14x14xf32, #tpu.memory_space<vmem>>, vector<14x14xf32>
      %cst_354 = arith.constant dense<0.000000e+00> : vector<14x14xf32>
      %256 = tpu.matmul %254, %255, %cst_354 {dimension_numbers = #tpu.dot_dimension_numbers<[1], [0], [0], [1], [0, 0, 1, 1], [], []>, precision = #tpu.contract_precision<fp32>} : vector<14x14xf32>, vector<14x14xf32>, vector<14x14xf32> -> vector<14x14xf32>
      %257 = arith.maximumf %225, %256 : vector<14x14xf32>
      %258 = vector.shape_cast %257 : vector<14x14xf32> to vector<1x14x14xf32>
      %cst_355 = arith.constant dense<0xFF800000> : vector<1xf32>
      %259 = vector.multi_reduction <maximumf>, %258, %cst_355 [1, 2] : vector<1x14x14xf32> to vector<1xf32>
      %260 = vector.shape_cast %259 : vector<1xf32> to vector<1x1x1xf32>
      %261 = vector.extract %260[0, 0, 0] : f32 from vector<1x1x1xf32>
      %cst_356 = arith.constant 1.000000e+00 : f32
      %262 = arith.divf %cst_356, %261 : f32
      %263 = vector.broadcast %262 : f32 to vector<14x14xf32>
      %264 = arith.mulf %257, %263 : vector<14x14xf32>
      %cst_357 = arith.constant 1.000000e+00 : f32
      %265 = vector.broadcast %cst_357 : f32 to vector<14x14xf32>
      %266 = arith.subf %265, %264 : vector<14x14xf32>
      %267 = arith.index_cast %arg11 : i32 to index
      %c0_358 = arith.constant 0 : index
      %c0_359 = arith.constant 0 : index
      %268 = vector.load %arg4[%267, %c0_358, %c0_359] : memref<2x14x14xf32, #tpu.memory_space<vmem>>, vector<1x14x14xf32>
      %269 = vector.shape_cast %268 : vector<1x14x14xf32> to vector<14x14xf32>
      %270 = vector.shape_cast %266 : vector<14x14xf32> to vector<1x14x14xf32>
      tpu.vector_store %arg4[%267, %c0_358, %c0_359], %270 {strides = array<i32>} : memref<2x14x14xf32, #tpu.memory_space<vmem>>, vector<1x14x14xf32>,
    }
    %c2_i32_1 = arith.constant 2 : i32
    return
  }
  func.func @transform_0(%arg0: i32) -> (i32, i32, i32, i32) {
    %c0_i32 = arith.constant 0 : i32
    %c0_i32_0 = arith.constant 0 : i32
    %c0_i32_1 = arith.constant 0 : i32
    %c0_i32_2 = arith.constant 0 : i32
    return %arg0, %c0_i32, %c0_i32_0, %c0_i32_1 : i32, i32, i32, i32
  }
  func.func @transform_1(%arg0: i32) -> (i32, i32) {
    %c0_i32 = arith.constant 0 : i32
    %c0_i32_0 = arith.constant 0 : i32
    %c0_i32_1 = arith.constant 0 : i32
    return %c0_i32, %c0_i32_0 : i32, i32
  }
  func.func @transform_2(%arg0: i32) -> (i32, i32) {
    %c0_i32 = arith.constant 0 : i32
    %c0_i32_0 = arith.constant 0 : i32
    %c0_i32_1 = arith.constant 0 : i32
    return %c0_i32, %c0_i32_0 : i32, i32
  }
  func.func @transform_3(%arg0: i32) -> (i32, i32, i32) {
    %c0_i32 = arith.constant 0 : i32
    %c0_i32_0 = arith.constant 0 : i32
    %c0_i32_1 = arith.constant 0 : i32
    return %arg0, %c0_i32, %c0_i32_0 : i32, i32, i32
  }
}

</mosaic_0001>

<llo_original>
// kernel: tpu_custom_call.1
$region0: #{tpu_custom_call.1}
  #allocation0 [shape = 'u32[]', space=smem, size = 0x4, offset = 0x4, fixed_abs, tag = 'smem constant byte address 0x4 - core index']
  #allocation1 [shape = 'u32[144,128]{1,0:T(1,128)}', space=vmem, size = 0x12000, scoped, tag = 'internal scratch']
  #allocation2 [shape = 'f32[20,20]{1,0:T(8,128)}', space=vmem, size = 0x3000, scoped, tag = 'scratch operand']
  #allocation3 [shape = 'f32[19,20]{1,0:T(8,128)}', space=vmem, size = 0x3000, scoped, tag = 'scratch operand']
  #allocation4 [shape = 'f32[17,20]{1,0:T(8,128)}', space=vmem, size = 0x3000, scoped, tag = 'scratch operand']
  #allocation5 [shape = 'f32[14,20]{1,0:T(8,128)}', space=vmem, size = 0x2000, scoped, tag = 'scratch operand']
  #allocation6 [shape = 'f32[14,19]{1,0:T(8,128)}', space=vmem, size = 0x2000, scoped, tag = 'scratch operand']
  #allocation7 [shape = 'f32[14,17]{1,0:T(8,128)}', space=vmem, size = 0x2000, scoped, tag = 'scratch operand']
  %s0 = inlined_call_operand.hbm [shape: f32[4,8,16,16], index: 0, kind: input, shape index: {}]
  %s1 = inlined_call_operand.hbm [shape: f32[14,14], index: 1, kind: input, shape index: {}]
  %s2 = inlined_call_operand.hbm [shape: f32[14,14], index: 2, kind: input, shape index: {}]
  %s3 = inlined_call_operand.vmem [shape: f32[4,14,14], index: 3, kind: output, shape index: {}]
  %s4 = sld [smem:[#allocation0]]
  $region64: #{tpu_custom_call.1} parent=0
    _
  %s6 = ssub.s32 1, %s4
  %s7 = scalar_select 0, %s6, %s4
  $region1: #{tpu_custom_call.1} parent=0
    #allocation8 [shape = 'u8[262144]{0}', space=vmem, size = 0x40000, scoped, tag = 'input window, operand 0']
    #allocation9 [shape = 's32[2]{0}', space=sflag, size = 0x8, scoped, tag = 'scoped memory for tpu_custom_call.1']
    #allocation10 [shape = 'u8[8192]{0}', space=vmem, size = 0x2000, scoped, tag = 'input window, operand 1, single buffered']
    #allocation11 [shape = 's32[1]{0}', space=sflag, size = 0x4, scoped, tag = 'scoped memory for tpu_custom_call.1']
    #allocation12 [shape = 'u8[8192]{0}', space=vmem, size = 0x2000, scoped, tag = 'input window, operand 2, single buffered']
    %8 = vsyncpa [#allocation9], 0
    %s9 = scalar_lea.sflag [#allocation9], 1
    %10 = vsyncpa %s9, 0
    %11 = vsyncpa [#allocation11], 0
    loop: start=0, step=1, limit=4
    $region2: #{tpu_custom_call.1} parent=1 // loop_pre_header
      _
    $region3: #{tpu_custom_call.1} parent=1 // loop_header
      %s13 = sphi 0, %s17
      %p14 = scmp.ge.s32.totalorder %s13, 4
      %s23 = sphi 0, %s25
      %s26 = sphi 0, %s23
      %s27 = sphi 0, %s26
      %s43 = sphi 0, %s27
      %s47 = sphi 0, %s47
      %s49 = sphi 0, %s47
      %s50 = sphi 0, %s49
      %s64 = sphi 0, %s50
      %s68 = sphi 0, %s68
      %s70 = sphi 0, %s68
      %s71 = sphi 0, %s70
      %s85 = sphi 0, %s71
      %s91 = sphi 0, %s93
      %s94 = sphi 0, %s91
      %s95 = sphi 0, %s94
      %s111 = sphi 0, %s95
    $region4: #{tpu_custom_call.1} parent=1 // loop_header_branch
      %16 = sbr.rel (%p14) target = $region8
    $region5: #{tpu_custom_call.1} parent=1 // loop_body
      %s18 = ssub.s32 %s13, 1
      %s19 = ssub.s32 %s13, 2
      %s20 = sadd.s32 %s13, 1
      %s21 = ssub.s32 %s13, %s20
      %p22 = scmp.eq.s32.totalorder %s21, 0
      %s24 = sadd.s32 %s23, 1
      %s25 = scalar_select %p22, %s23, %s24
      %p28 = pneg %p22
      %p29 = scmp.eq.s32.totalorder %s13, 1
      %p30 = por %p28, %p29
      %p31 = scmp.ne.s32.totalorder %s23, %s26
      %p32 = scmp.eq.s32.totalorder %s13, 0
      %p33 = por %p31, %p32
      %p34 = scmp.ne.s32.totalorder %s23, %s26
      %p35 = scmp.eq.s32.totalorder %s18, 1
      %p36 = por %p34, %p35
      %p37 = scmp.ne.s32.totalorder %s26, %s27
      %p38 = scmp.eq.s32.totalorder %s18, 0
      %p39 = por %p37, %p38
      %p40 = scmp.ne.s32.totalorder %s26, %s27
      %p41 = scmp.eq.s32.totalorder %s19, 1
      %p42 = por %p40, %p41
      %p44 = scmp.ne.s32.totalorder %s27, %s43
      %p45 = scmp.eq.s32.totalorder %s19, 0
      %p46 = por %p44, %p45
      %s48 = sadd.s32 %s47, 1
      %p51 = scmp.eq.s32.totalorder %s13, 1
      %p52 = scmp.ne.s32.totalorder %s47, %s49
      %p53 = scmp.eq.s32.totalorder %s13, 0
      %p54 = por %p52, %p53
      %p55 = scmp.ne.s32.totalorder %s47, %s49
      %p56 = scmp.eq.s32.totalorder %s18, 1
      %p57 = por %p55, %p56
      %p58 = scmp.ne.s32.totalorder %s49, %s50
      %p59 = scmp.eq.s32.totalorder %s18, 0
      %p60 = por %p58, %p59
      %p61 = scmp.ne.s32.totalorder %s49, %s50
      %p62 = scmp.eq.s32.totalorder %s19, 1
      %p63 = por %p61, %p62
      %p65 = scmp.ne.s32.totalorder %s50, %s64
      %p66 = scmp.eq.s32.totalorder %s19, 0
      %p67 = por %p65, %p66
      %s69 = sadd.s32 %s68, 1
      %p72 = scmp.eq.s32.totalorder %s13, 1
      %p73 = scmp.ne.s32.totalorder %s68, %s70
      %p74 = scmp.eq.s32.totalorder %s13, 0
      %p75 = por %p73, %p74
      %p76 = scmp.ne.s32.totalorder %s68, %s70
      %p77 = scmp.eq.s32.totalorder %s18, 1
      %p78 = por %p76, %p77
      %p79 = scmp.ne.s32.totalorder %s70, %s71
      %p80 = scmp.eq.s32.totalorder %s18, 0
      %p81 = por %p79, %p80
      %p82 = scmp.ne.s32.totalorder %s70, %s71
      %p83 = scmp.eq.s32.totalorder %s19, 1
      %p84 = por %p82, %p83
      %p86 = scmp.ne.s32.totalorder %s71, %s85
      %p87 = scmp.eq.s32.totalorder %s19, 0
      %p88 = por %p86, %p87
      %s89 = ssub.s32 %s13, %s20
      %p90 = scmp.eq.s32.totalorder %s89, 0
      %s92 = sadd.s32 %s91, 1
      %s93 = scalar_select %p90, %s91, %s92
      %p96 = pneg %p90
      %p97 = scmp.eq.s32.totalorder %s13, 1
      %p98 = por %p96, %p97
      %p99 = scmp.ne.s32.totalorder %s91, %s94
      %p100 = scmp.eq.s32.totalorder %s13, 0
      %p101 = por %p99, %p100
      %p102 = scmp.ne.s32.totalorder %s91, %s94
      %p103 = scmp.eq.s32.totalorder %s18, 1
      %p104 = por %p102, %p103
      %p105 = scmp.ne.s32.totalorder %s94, %s95
      %p106 = scmp.eq.s32.totalorder %s18, 0
      %p107 = por %p105, %p106
      %p108 = scmp.ne.s32.totalorder %s94, %s95
      %p109 = scmp.eq.s32.totalorder %s19, 1
      %p110 = por %p108, %p109
      %p112 = scmp.ne.s32.totalorder %s95, %s111
      %p113 = scmp.eq.s32.totalorder %s19, 0
      %p114 = por %p112, %p113
      %p115 = scmp.le.s32.totalorder 1, %s13
      %p116 = scmp.lt.s32.totalorder %s13, 3
      %p117 = pnand %p115, %p116
      %p118 = pneg %p117
      // Predicated region
      $region9: #{tpu_custom_call.1} parent=5 // pred_check
        _
      $region10: #{tpu_custom_call.1} parent=5 // pred_check_branch
        %120 = sbr.rel (%p117) target = $region12
      $region11: #{tpu_custom_call.1} parent=5 // pred_region
        %s121 = ssub.s32 %s13, 1
        // Predicated region
        $region13: #{tpu_custom_call.1} parent=11 // pred_check
          %p122 = pneg %p60
        $region14: #{tpu_custom_call.1} parent=11 // pred_check_branch
          %124 = sbr.rel (%p122) target = $region16
        $region15: #{tpu_custom_call.1} parent=11 // pred_region
          %s126 = ssub.s32 256, 256
          %127 = vsyncadd [#allocation11], %s126
          %s128 = sshll.u32 [#allocation10], 4
          %s129 = int_to_ptr.vmem [resolvable:$true] %s128
          %134 = dma.hbm_to_vmem [thread:$0]  %s1, 256, %s129, [#allocation11], 128, 128, 8
        $region16: #{tpu_custom_call.1} parent=11 // pred_fallthru
          _
        // Predicated region
        $region17: #{tpu_custom_call.1} parent=11 // pred_check
          %p135 = pneg %p81
        $region18: #{tpu_custom_call.1} parent=11 // pred_check_branch
          %137 = sbr.rel (%p135) target = $region20
        $region19: #{tpu_custom_call.1} parent=11 // pred_region
          %s139 = ssub.s32 256, 256
          %140 = vsyncadd [#allocation11], %s139
          %s141 = sshll.u32 [#allocation12], 4
          %s142 = int_to_ptr.vmem [resolvable:$true] %s141
          %147 = dma.hbm_to_vmem [thread:$0]  %s2, 256, %s142, [#allocation11], 128, 128, 8
        $region20: #{tpu_custom_call.1} parent=11 // pred_fallthru
          _
      $region12: #{tpu_custom_call.1} parent=5 // pred_fallthru
        _
      %p148 = scmp.lt.s32.totalorder %s13, 2
      // Predicated region
      $region21: #{tpu_custom_call.1} parent=5 // pred_check
        %p149 = pneg %p148
      $region22: #{tpu_custom_call.1} parent=5 // pred_check_branch
        %151 = sbr.rel (%p149) target = $region24
      $region23: #{tpu_custom_call.1} parent=5 // pred_region
        // Predicated region
        $region25: #{tpu_custom_call.1} parent=23 // pred_check
          %p152 = pneg %p33
        $region26: #{tpu_custom_call.1} parent=23 // pred_check_branch
          %154 = sbr.rel (%p152) target = $region28
        $region27: #{tpu_custom_call.1} parent=23 // pred_region
          %s155 = sand.u32 %s23, 1
          %s156 = scalar_lea.sflag [#allocation9], %s155
          %s157 = sand.u32 %s23, 1
          %s158 = smul.addr %s157, 256
          %s159 = scalar_lea.vmem [#allocation8], %s158
          %s160 = smul.u32 2, %s13
          %s162 = ssub.s32 4096, 4096
          %163 = vsyncadd %s156, %s162
          %s164 = smul.addr %s160, 16
          %s165 = smul.addr %s164, 128
          %s166 = scalar_lea.hbm %s0, %s165
          %s167 = sshll.u32 %s159, 4
          %s168 = int_to_ptr.vmem [resolvable:$true] %s167
          %173 = dma.hbm_to_vmem [thread:$0]  %s166, 4096, %s168, %s156, 128, 128, 8
        $region28: #{tpu_custom_call.1} parent=23 // pred_fallthru
          _
      $region24: #{tpu_custom_call.1} parent=5 // pred_fallthru
        _
      %p174 = scmp.le.s32.totalorder 1, %s13
      %p175 = scmp.lt.s32.totalorder %s13, 3
      %p176 = pnand %p174, %p175
      %p177 = pneg %p176
      // Predicated region
      $region29: #{tpu_custom_call.1} parent=5 // pred_check
        _
      $region30: #{tpu_custom_call.1} parent=5 // pred_check_branch
        %179 = sbr.rel (%p176) target = $region32
      $region31: #{tpu_custom_call.1} parent=5 // pred_region
        %s180 = ssub.s32 %s13, 1
        %s181 = sand.u32 %s26, 1
        %s182 = scalar_lea.sflag [#allocation9], %s181
        %s183 = sand.u32 %s26, 1
        %s184 = smul.addr %s183, 256
        %s185 = scalar_lea.vmem [#allocation8], %s184
        // Predicated region
        $region33: #{tpu_custom_call.1} parent=31 // pred_check
          %p186 = pneg %p39
        $region34: #{tpu_custom_call.1} parent=31 // pred_check_branch
          %188 = sbr.rel (%p186) target = $region36
        $region35: #{tpu_custom_call.1} parent=31 // pred_region
          %189 = dma.done %s182, 4096
        $region36: #{tpu_custom_call.1} parent=31 // pred_fallthru
          _
        // Predicated region
        $region37: #{tpu_custom_call.1} parent=31 // pred_check
          %p190 = pneg %p60
        $region38: #{tpu_custom_call.1} parent=31 // pred_check_branch
          %192 = sbr.rel (%p190) target = $region40
        $region39: #{tpu_custom_call.1} parent=31 // pred_region
          %193 = dma.done [#allocation11], 256
        $region40: #{tpu_custom_call.1} parent=31 // pred_fallthru
          _
        // Predicated region
        $region41: #{tpu_custom_call.1} parent=31 // pred_check
          %p194 = pneg %p81
        $region42: #{tpu_custom_call.1} parent=31 // pred_check_branch
          %196 = sbr.rel (%p194) target = $region44
        $region43: #{tpu_custom_call.1} parent=31 // pred_region
          %197 = dma.done [#allocation11], 256
        $region44: #{tpu_custom_call.1} parent=31 // pred_fallthru
          _
        %s198 = sand.u32 %s26, 1
        %s199 = scalar_lea.sflag [#allocation9], %s198
        %s200 = sand.u32 %s26, 1
        %s201 = smul.addr %s200, 256
        %s202 = scalar_lea.vmem [#allocation8], %s201
        %p203 = pneg %p39
        %p204 = pneg %p36
        %p205 = pneg %p60
        %p206 = pneg %p57
        %p207 = pneg %p81
        %p208 = pneg %p78
        %p209 = pneg %p107
        %p210 = pneg %p104
        %s211 = smul.u32 2, %s18
        %p212 = scmp.lt.s32.totalorder %s211, 3
        %s213 = scalar_select %p212, %s211, 3
        %s214 = smul.addr %s213, 2
        %s215 = smul.addr %s214, 8
        %s216 = scalar_lea.vmem %s3, %s215
        %s217 = smul.u32 2, %s18
        %s218 = smul.u32 2, %s18
        %p219 = scmp.lt.s32.totalorder %s218, 3
        %s220 = scalar_select %p219, %s218, 3
        %s221 = smul.addr %s220, 2
        %s222 = smul.addr %s221, 8
        %s223 = scalar_lea.vmem %s3, %s222
        %s224 = smul.u32 2, %s18
        %vm225 = vcmask 162816
        %226 = vst.msk [vmem:[#allocation2] sm:$0xff] %vm225, -inf
        %227 = vst.msk [vmem:[#allocation2 + $0x8] sm:$0xff] %vm225, -inf
        %vm228 = vcmask 158720
        %229 = vst.msk [vmem:[#allocation2 + $0x10] sm:$0xf] %vm228, -inf
        loop: start=0, step=1, limit=2
        $region45: #{tpu_custom_call.1} parent=31 // loop_pre_header
          _
        $region46: #{tpu_custom_call.1} parent=31 // loop_header
          %s231 = sphi 0, %s235
          %p232 = scmp.ge.s32.totalorder %s231, 2
        $region47: #{tpu_custom_call.1} parent=31 // loop_header_branch
          %234 = sbr.rel (%p232) target = $region51
        $region48: #{tpu_custom_call.1} parent=31 // loop_body
          %s236 = smul.u32 %s231, 128
          %s237 = scalar_lea.vmem %s185, %s236 [#allocation8]
          %v238 = vld [vmem:[%s237] sm:$0xff]
          %v239 = vld [vmem:[%s237 + $0x8] sm:$0xff]
          %242 = vrot.lane.b32.xlu0 %v238, 2
          %v243 = vpop.permute.xlu0 %242
          %244 = vrot.lane.b32.xlu0 %v239, 2
          %v245 = vpop.permute.xlu0 %244
          %vm248 = vcmask 146448
          %249 = vst.msk [vmem:[#allocation2 + $0x2] sm:$0xff] %vm248, %v243
          %250 = vst.msk [vmem:[#allocation2 + $0xa] sm:$0xff] %vm248, %v245
          %v251 = vld [vmem:[#allocation2] sm:$0xff]
          %v252 = vld [vmem:[#allocation2 + $0x8] sm:$0xff]
          %v253 = vld [vmem:[#allocation2 + $0x10] sm:$0x7]
          %v254 = vld [vmem:[#allocation2 + $0x1] sm:$0xff]
          %v255 = vld [vmem:[#allocation2 + $0x9] sm:$0xff]
          %v256 = vld [vmem:[#allocation2 + $0x11] sm:$0x7]
          %v257 = vmax.f32 %v251, %v254
          %v258 = vmax.f32 %v252, %v255
          %v259 = vmax.f32 %v253, %v256
          %260 = vst.msk [vmem:[#allocation3] sm:$0xff] %vm225, %v257
          %261 = vst.msk [vmem:[#allocation3 + $0x8] sm:$0xff] %vm225, %v258
          %vm262 = vcmask 157696
          %263 = vst.msk [vmem:[#allocation3 + $0x10] sm:$0x7] %vm262, %v259
          %v264 = vld [vmem:[#allocation3] sm:$0xff]
          %v265 = vld [vmem:[#allocation3 + $0x8] sm:$0xff]
          %v266 = vld [vmem:[#allocation3 + $0x10] sm:$0x1]
          %v267 = vld [vmem:[#allocation3 + $0x2] sm:$0xff]
          %v268 = vld [vmem:[#allocation3 + $0xa] sm:$0xff]
          %v269 = vld [vmem:[#allocation3 + $0x12] sm:$0x1]
          %v270 = vmax.f32 %v264, %v267
          %v271 = vmax.f32 %v265, %v268
          %v272 = vmax.f32 %v266, %v269
          %273 = vst.msk [vmem:[#allocation4] sm:$0xff] %vm225, %v270
          %274 = vst.msk [vmem:[#allocation4 + $0x8] sm:$0xff] %vm225, %v271
          %vm275 = vcmask 155648
          %276 = vst.msk [vmem:[#allocation4 + $0x10] sm:$0x1] %vm275, %v272
          %v277 = vld [vmem:[#allocation4] sm:$0xff]
          %v278 = vld [vmem:[#allocation4 + $0x8] sm:$0x3f]
          %v279 = vld [vmem:[#allocation4 + $0x3] sm:$0xff]
          %v280 = vld [vmem:[#allocation4 + $0xb] sm:$0x3f]
          %v281 = vmax.f32 %v277, %v279
          %v282 = vmax.f32 %v278, %v280
          %283 = vst.msk [vmem:[#allocation5] sm:$0xff] %vm225, %v281
          %vm284 = vcmask 160768
          %285 = vst.msk [vmem:[#allocation5 + $0x8] sm:$0x3f] %vm284, %v282
          %v286 = vld [vmem:[#allocation5] sm:$0xff]
          %v287 = vld [vmem:[#allocation5 + $0x8] sm:$0x3f]
          %290 = vrot.lane.b32.xlu0 %v286, 127
          %v291 = vpop.permute.xlu0 %290
          %292 = vrot.lane.b32.xlu0 %v287, 127
          %v293 = vpop.permute.xlu0 %292
          %v296 = vmax.f32 %v286, %v291
          %v297 = vmax.f32 %v287, %v293
          %vm298 = vcmask 154624
          %299 = vst.msk [vmem:[#allocation6] sm:$0xff] %vm298, %v296
          %vm300 = vcmask 152576
          %301 = vst.msk [vmem:[#allocation6 + $0x8] sm:$0x3f] %vm300, %v297
          %v302 = vld [vmem:[#allocation6] sm:$0xff]
          %v303 = vld [vmem:[#allocation6 + $0x8] sm:$0x3f]
          %306 = vrot.lane.b32.xlu0 %v302, 126
          %v307 = vpop.permute.xlu0 %306
          %308 = vrot.lane.b32.xlu0 %v303, 126
          %v309 = vpop.permute.xlu0 %308
          %v312 = vmax.f32 %v302, %v307
          %v313 = vmax.f32 %v303, %v309
          %vm314 = vcmask 138240
          %315 = vst.msk [vmem:[#allocation7] sm:$0xff] %vm314, %v312
          %vm316 = vcmask 136192
          %317 = vst.msk [vmem:[#allocation7 + $0x8] sm:$0x3f] %vm316, %v313
          %v318 = vld [vmem:[#allocation7] sm:$0xff]
          %v319 = vld [vmem:[#allocation7 + $0x8] sm:$0x3f]
          %322 = vrot.lane.b32.xlu0 %v318, 125
          %v323 = vpop.permute.xlu0 %322
          %324 = vrot.lane.b32.xlu0 %v319, 125
          %v325 = vpop.permute.xlu0 %324
          %v328 = vmax.f32 %v318, %v323
          %v329 = vmax.f32 %v319, %v325
          %v330 = vld [vmem:[#allocation10] sm:$0xff]
          %v331 = vld [vmem:[#allocation10 + $0x8] sm:$0x3f]
          %vm332 = vcmask 113664
          %v334 = vsel %vm332, %v330, 0
          %v337 = vsel %vm332, %v331, 0
          %vm339 = vcmask 1045504
          %v341 = vsel %vm339, %v329, 0
          %343 = vmatprep.subr.mxu0 0.0
          %v344 = vand.u32 %v328, 4294901760
          %345 = vmatpush1.msra.mxu0 %v344
          %346 = vmatprep.subr.mxu0 0.0
          %v347 = vand.u32 %v341, 4294901760
          %348 = vmatpush1.msra.mxu0 %v347
          %349 = vmatprep.subr.mxu0 0.0
          %350 = vmatpush1.msra.mxu0 0.0
          %351 = vmatprep.subr.mxu0 0.0
          %352 = vmatpush1.msra.mxu0 0.0
          %353 = vmatprep.subr.mxu0 0.0
          %354 = vmatpush1.msra.mxu0 0.0
          %355 = vmatprep.subr.mxu0 0.0
          %356 = vmatpush1.msra.mxu0 0.0
          %357 = vmatprep.subr.mxu0 0.0
          %358 = vmatpush1.msra.mxu0 0.0
          %359 = vmatprep.subr.mxu0 0.0
          %360 = vmatpush1.msra.mxu0 0.0
          %361 = vmatprep.subr.mxu0 0.0
          %362 = vmatpush1.msra.mxu0 0.0
          %363 = vmatprep.subr.mxu0 0.0
          %364 = vmatpush1.msra.mxu0 0.0
          %365 = vmatprep.subr.mxu0 0.0
          %366 = vmatpush1.msra.mxu0 0.0
          %367 = vmatprep.subr.mxu0 0.0
          %368 = vmatpush1.msra.mxu0 0.0
          %369 = vmatprep.subr.mxu0 0.0
          %370 = vmatpush1.msra.mxu0 0.0
          %371 = vmatprep.subr.mxu0 0.0
          %372 = vmatpush1.msra.mxu0 0.0
          %373 = vmatprep.subr.mxu0 0.0
          %374 = vmatpush1.msra.mxu0 0.0
          %375 = vmatprep.subr.mxu0 0.0
          %376 = vmatpush1.msra.mxu0 0.0
          %377 = vmatprep.subr.mxu0 0.0
          %378 = vmatpush1.msra.mxu0 0.0
          %379 = vmatprep.subr.mxu0 0.0
          %380 = vmatpush1.msra.mxu0 0.0
          %381 = vmatprep.subr.mxu0 0.0
          %382 = vmatpush1.msra.mxu0 0.0
          %383 = vmatprep.subr.mxu0 0.0
          %384 = vmatpush1.msra.mxu0 0.0
          %385 = vmatprep.subr.mxu0 0.0
          %386 = vmatpush1.msra.mxu0 0.0
          %387 = vmatprep.subr.mxu0 0.0
          %388 = vmatpush1.msra.mxu0 0.0
          %389 = vmatprep.subr.mxu0 0.0
          %390 = vmatpush1.msra.mxu0 0.0
          %391 = vmatprep.subr.mxu0 0.0
          %392 = vmatpush1.msra.mxu0 0.0
          %393 = vmatprep.subr.mxu0 0.0
          %394 = vmatpush1.msra.mxu0 0.0
          %395 = vmatprep.subr.mxu0 0.0
          %396 = vmatpush1.msra.mxu0 0.0
          %397 = vmatprep.subr.mxu0 0.0
          %398 = vmatpush1.msra.mxu0 0.0
          %399 = vmatprep.subr.mxu0 0.0
          %400 = vmatpush1.msra.mxu0 0.0
          %401 = vmatprep.subr.mxu0 0.0
          %402 = vmatpush1.msra.mxu0 0.0
          %403 = vmatprep.subr.mxu0 0.0
          %404 = vmatpush1.msra.mxu0 0.0
          %405 = vmatprep.subr.mxu0 0.0
          %406 = vmatpush1.msra.mxu0 0.0
          %407 = vmatprep.subr.mxu0 0.0
          %408 = vmatpush1.msra.mxu0 0.0
          %409 = vmatprep.mubr.f32.mxu0 0.0
          %v410 = vand.u32 %v334, 4294901760
          %v411 = vsub.f32 %v334, %v410
          %v412 = vand.u32 %v411, 4294901760
          %v413 = vsub.f32 %v411, %v412
          %v414 = vand.u32 %v413, 4294901760
          %415 = vmatmul.mubr.f32.gmra.mrb[0].mxu0 %v414
          %v416 = vpop.f32.mrb[0].mxu0
          %v417 = vadd.f32 0.0, %v416
          %v418 = vpop.f32.mrb[0].mxu0
          %419 = vmatprep.mubr.f32.mxu0 0.0
          %v420 = vand.u32 %v337, 4294901760
          %v421 = vsub.f32 %v337, %v420
          %v422 = vand.u32 %v421, 4294901760
          %v423 = vsub.f32 %v421, %v422
          %v424 = vand.u32 %v423, 4294901760
          %425 = vmatmul.mubr.f32.gmra.mrb[0].mxu0 %v424
          %v426 = vpop.f32.mrb[0].mxu0
          %v427 = vadd.f32 0.0, %v426
          %v428 = vpop.f32.mrb[0].mxu0
          %429 = vdwg.mxu0
          %430 = vmatprep.subr.mxu0 0.0
          %v431 = vand.u32 %v328, 4294901760
          %v432 = vsub.f32 %v328, %v431
          %v433 = vand.u32 %v432, 4294901760
          %v434 = vsub.f32 %v432, %v433
          %v435 = vand.u32 %v434, 4294901760
          %436 = vmatpush1.msra.mxu0 %v435
          %437 = vmatprep.subr.mxu0 0.0
          %v438 = vand.u32 %v341, 4294901760
          %v439 = vsub.f32 %v341, %v438
          %v440 = vand.u32 %v439, 4294901760
          %v441 = vsub.f32 %v439, %v440
          %v442 = vand.u32 %v441, 4294901760
          %443 = vmatpush1.msra.mxu0 %v442
          %444 = vmatprep.subr.mxu0 0.0
          %445 = vmatpush1.msra.mxu0 0.0
          %446 = vmatprep.subr.mxu0 0.0
          %447 = vmatpush1.msra.mxu0 0.0
          %448 = vmatprep.subr.mxu0 0.0
          %449 = vmatpush1.msra.mxu0 0.0
          %450 = vmatprep.subr.mxu0 0.0
          %451 = vmatpush1.msra.mxu0 0.0
          %452 = vmatprep.subr.mxu0 0.0
          %453 = vmatpush1.msra.mxu0 0.0
          %454 = vmatprep.subr.mxu0 0.0
          %455 = vmatpush1.msra.mxu0 0.0
          %456 = vmatprep.subr.mxu0 0.0
          %457 = vmatpush1.msra.mxu0 0.0
          %458 = vmatprep.subr.mxu0 0.0
          %459 = vmatpush1.msra.mxu0 0.0
          %460 = vmatprep.subr.mxu0 0.0
          %461 = vmatpush1.msra.mxu0 0.0
          %462 = vmatprep.subr.mxu0 0.0
          %463 = vmatpush1.msra.mxu0 0.0
          %464 = vmatprep.subr.mxu0 0.0
          %465 = vmatpush1.msra.mxu0 0.0
          %466 = vmatprep.subr.mxu0 0.0
          %467 = vmatpush1.msra.mxu0 0.0
          %468 = vmatprep.subr.mxu0 0.0
          %469 = vmatpush1.msra.mxu0 0.0
          %470 = vmatprep.subr.mxu0 0.0
          %471 = vmatpush1.msra.mxu0 0.0
          %472 = vmatprep.subr.mxu0 0.0
          %473 = vmatpush1.msra.mxu0 0.0
          %474 = vmatprep.subr.mxu0 0.0
          %475 = vmatpush1.msra.mxu0 0.0
          %476 = vmatprep.subr.mxu0 0.0
          %477 = vmatpush1.msra.mxu0 0.0
          %478 = vmatprep.subr.mxu0 0.0
          %479 = vmatpush1.msra.mxu0 0.0
          %480 = vmatprep.subr.mxu0 0.0
          %481 = vmatpush1.msra.mxu0 0.0
          %482 = vmatprep.subr.mxu0 0.0
          %483 = vmatpush1.msra.mxu0 0.0
          %484 = vmatprep.subr.mxu0 0.0
          %485 = vmatpush1.msra.mxu0 0.0
          %486 = vmatprep.subr.mxu0 0.0
          %487 = vmatpush1.msra.mxu0 0.0
          %488 = vmatprep.subr.mxu0 0.0
          %489 = vmatpush1.msra.mxu0 0.0
          %490 = vmatprep.subr.mxu0 0.0
          %491 = vmatpush1.msra.mxu0 0.0
          %492 = vmatprep.subr.mxu0 0.0
          %493 = vmatpush1.msra.mxu0 0.0
          %494 = vmatprep.subr.mxu0 0.0
          %495 = vmatpush1.msra.mxu0 0.0
          %496 = vmatprep.subr.mxu0 0.0
          %497 = vmatpush1.msra.mxu0 0.0
          %498 = vmatprep.subr.mxu0 0.0
          %499 = vmatpush1.msra.mxu0 0.0
          %500 = vmatprep.subr.mxu0 0.0
          %501 = vmatpush1.msra.mxu0 0.0
          %502 = vmatprep.subr.mxu0 0.0
          %503 = vmatpush1.msra.mxu0 0.0
          %504 = vmatprep.mubr.f32.mxu0 0.0
          %v505 = vand.u32 %v334, 4294901760
          %506 = vmatmul.mubr.f32.gmra.mrb[0].mxu0 %v505
          %v507 = vpop.f32.mrb[0].mxu0
          %v508 = vadd.f32 %v417, %v507
          %v509 = vpop.f32.mrb[0].mxu0
          %510 = vmatprep.mubr.f32.mxu0 0.0
          %v511 = vand.u32 %v337, 4294901760
          %512 = vmatmul.mubr.f32.gmra.mrb[0].mxu0 %v511
          %v513 = vpop.f32.mrb[0].mxu0
          %v514 = vadd.f32 %v427, %v513
          %v515 = vpop.f32.mrb[0].mxu0
          %516 = vdwg.mxu0
          %517 = vmatprep.subr.mxu0 0.0
          %v518 = vand.u32 %v328, 4294901760
          %v519 = vsub.f32 %v328, %v518
          %520 = vmatpush1.msra.mxu0 %v519
          %521 = vmatprep.subr.mxu0 0.0
          %v522 = vand.u32 %v341, 4294901760
          %v523 = vsub.f32 %v341, %v522
          %524 = vmatpush1.msra.mxu0 %v523
          %525 = vmatprep.subr.mxu0 0.0
          %526 = vmatpush1.msra.mxu0 0.0
          %527 = vmatprep.subr.mxu0 0.0
          %528 = vmatpush1.msra.mxu0 0.0
          %529 = vmatprep.subr.mxu0 0.0
          %530 = vmatpush1.msra.mxu0 0.0
          %531 = vmatprep.subr.mxu0 0.0
          %532 = vmatpush1.msra.mxu0 0.0
          %533 = vmatprep.subr.mxu0 0.0
          %534 = vmatpush1.msra.mxu0 0.0
          %535 = vmatprep.subr.mxu0 0.0
          %536 = vmatpush1.msra.mxu0 0.0
          %537 = vmatprep.subr.mxu0 0.0
          %538 = vmatpush1.msra.mxu0 0.0
          %539 = vmatprep.subr.mxu0 0.0
          %540 = vmatpush1.msra.mxu0 0.0
          %541 = vmatprep.subr.mxu0 0.0
          %542 = vmatpush1.msra.mxu0 0.0
          %543 = vmatprep.subr.mxu0 0.0
          %544 = vmatpush1.msra.mxu0 0.0
          %545 = vmatprep.subr.mxu0 0.0
          %546 = vmatpush1.msra.mxu0 0.0
          %547 = vmatprep.subr.mxu0 0.0
          %548 = vmatpush1.msra.mxu0 0.0
          %549 = vmatprep.subr.mxu0 0.0
          %550 = vmatpush1.msra.mxu0 0.0
          %551 = vmatprep.subr.mxu0 0.0
          %552 = vmatpush1.msra.mxu0 0.0
          %553 = vmatprep.subr.mxu0 0.0
          %554 = vmatpush1.msra.mxu0 0.0
          %555 = vmatprep.subr.mxu0 0.0
          %556 = vmatpush1.msra.mxu0 0.0
          %557 = vmatprep.subr.mxu0 0.0
          %558 = vmatpush1.msra.mxu0 0.0
          %559 = vmatprep.subr.mxu0 0.0
          %560 = vmatpush1.msra.mxu0 0.0
          %561 = vmatprep.subr.mxu0 0.0
          %562 = vmatpush1.msra.mxu0 0.0
          %563 = vmatprep.subr.mxu0 0.0
          %564 = vmatpush1.msra.mxu0 0.0
          %565 = vmatprep.subr.mxu0 0.0
          %566 = vmatpush1.msra.mxu0 0.0
          %567 = vmatprep.subr.mxu0 0.0
          %568 = vmatpush1.msra.mxu0 0.0
          %569 = vmatprep.subr.mxu0 0.0
          %570 = vmatpush1.msra.mxu0 0.0
          %571 = vmatprep.subr.mxu0 0.0
          %572 = vmatpush1.msra.mxu0 0.0
          %573 = vmatprep.subr.mxu0 0.0
          %574 = vmatpush1.msra.mxu0 0.0
          %575 = vmatprep.subr.mxu0 0.0
          %576 = vmatpush1.msra.mxu0 0.0
          %577 = vmatprep.subr.mxu0 0.0
          %578 = vmatpush1.msra.mxu0 0.0
          %579 = vmatprep.subr.mxu0 0.0
          %580 = vmatpush1.msra.mxu0 0.0
          %581 = vmatprep.subr.mxu0 0.0
          %582 = vmatpush1.msra.mxu0 0.0
          %583 = vmatprep.subr.mxu0 0.0
          %584 = vmatpush1.msra.mxu0 0.0
          %585 = vmatprep.mubr.f32.mxu0 0.0
          %v586 = vand.u32 %v334, 4294901760
          %v587 = vsub.f32 %v334, %v586
          %588 = vmatmul.mubr.f32.gmra.mrb[0].mxu0 %v587
          %v589 = vpop.f32.mrb[0].mxu0
          %v590 = vadd.f32 %v508, %v589
          %v591 = vpop.f32.mrb[0].mxu0
          %592 = vmatprep.mubr.f32.mxu0 0.0
          %v593 = vand.u32 %v337, 4294901760
          %v594 = vsub.f32 %v337, %v593
          %595 = vmatmul.mubr.f32.gmra.mrb[0].mxu0 %v594
          %v596 = vpop.f32.mrb[0].mxu0
          %v597 = vadd.f32 %v514, %v596
          %v598 = vpop.f32.mrb[0].mxu0
          %599 = vdwg.mxu0
          %600 = vmatprep.subr.mxu0 0.0
          %v601 = vand.u32 %v328, 4294901760
          %602 = vmatpush1.msra.mxu0 %v601
          %603 = vmatprep.subr.mxu0 0.0
          %v604 = vand.u32 %v341, 4294901760
          %605 = vmatpush1.msra.mxu0 %v604
          %606 = vmatprep.subr.mxu0 0.0
          %607 = vmatpush1.msra.mxu0 0.0
          %608 = vmatprep.subr.mxu0 0.0
          %609 = vmatpush1.msra.mxu0 0.0
          %610 = vmatprep.subr.mxu0 0.0
          %611 = vmatpush1.msra.mxu0 0.0
          %612 = vmatprep.subr.mxu0 0.0
          %613 = vmatpush1.msra.mxu0 0.0
          %614 = vmatprep.subr.mxu0 0.0
          %615 = vmatpush1.msra.mxu0 0.0
          %616 = vmatprep.subr.mxu0 0.0
          %617 = vmatpush1.msra.mxu0 0.0
          %618 = vmatprep.subr.mxu0 0.0
          %619 = vmatpush1.msra.mxu0 0.0
          %620 = vmatprep.subr.mxu0 0.0
          %621 = vmatpush1.msra.mxu0 0.0
          %622 = vmatprep.subr.mxu0 0.0
          %623 = vmatpush1.msra.mxu0 0.0
          %624 = vmatprep.subr.mxu0 0.0
          %625 = vmatpush1.msra.mxu0 0.0
          %626 = vmatprep.subr.mxu0 0.0
          %627 = vmatpush1.msra.mxu0 0.0
          %628 = vmatprep.subr.mxu0 0.0
          %629 = vmatpush1.msra.mxu0 0.0
          %630 = vmatprep.subr.mxu0 0.0
          %631 = vmatpush1.msra.mxu0 0.0
          %632 = vmatprep.subr.mxu0 0.0
          %633 = vmatpush1.msra.mxu0 0.0
          %634 = vmatprep.subr.mxu0 0.0
          %635 = vmatpush1.msra.mxu0 0.0
          %636 = vmatprep.subr.mxu0 0.0
          %637 = vmatpush1.msra.mxu0 0.0
          %638 = vmatprep.subr.mxu0 0.0
          %639 = vmatpush1.msra.mxu0 0.0
          %640 = vmatprep.subr.mxu0 0.0
          %641 = vmatpush1.msra.mxu0 0.0
          %642 = vmatprep.subr.mxu0 0.0
          %643 = vmatpush1.msra.mxu0 0.0
          %644 = vmatprep.subr.mxu0 0.0
          %645 = vmatpush1.msra.mxu0 0.0
          %646 = vmatprep.subr.mxu0 0.0
          %647 = vmatpush1.msra.mxu0 0.0
          %648 = vmatprep.subr.mxu0 0.0
          %649 = vmatpush1.msra.mxu0 0.0
          %650 = vmatprep.subr.mxu0 0.0
          %651 = vmatpush1.msra.mxu0 0.0
          %652 = vmatprep.subr.mxu0 0.0
          %653 = vmatpush1.msra.mxu0 0.0
          %654 = vmatprep.subr.mxu0 0.0
          %655 = vmatpush1.msra.mxu0 0.0
          %656 = vmatprep.subr.mxu0 0.0
          %657 = vmatpush1.msra.mxu0 0.0
          %658 = vmatprep.subr.mxu0 0.0
          %659 = vmatpush1.msra.mxu0 0.0
          %660 = vmatprep.subr.mxu0 0.0
          %661 = vmatpush1.msra.mxu0 0.0
          %662 = vmatprep.subr.mxu0 0.0
          %663 = vmatpush1.msra.mxu0 0.0
          %664 = vmatprep.subr.mxu0 0.0
          %665 = vmatpush1.msra.mxu0 0.0
          %666 = vmatprep.mubr.f32.mxu0 0.0
          %v667 = vand.u32 %v334, 4294901760
          %v668 = vsub.f32 %v334, %v667
          %v669 = vand.u32 %v668, 4294901760
          %670 = vmatmul.mubr.f32.gmra.mrb[0].mxu0 %v669
          %v671 = vpop.f32.mrb[0].mxu0
          %v672 = vadd.f32 %v590, %v671
          %v673 = vpop.f32.mrb[0].mxu0
          %674 = vmatprep.mubr.f32.mxu0 0.0
          %v675 = vand.u32 %v337, 4294901760
          %v676 = vsub.f32 %v337, %v675
          %v677 = vand.u32 %v676, 4294901760
          %678 = vmatmul.mubr.f32.gmra.mrb[0].mxu0 %v677
          %v679 = vpop.f32.mrb[0].mxu0
          %v680 = vadd.f32 %v597, %v679
          %v681 = vpop.f32.mrb[0].mxu0
          %682 = vdwg.mxu0
          %683 = vmatprep.subr.mxu0 0.0
          %v684 = vand.u32 %v328, 4294901760
          %v685 = vsub.f32 %v328, %v684
          %v686 = vand.u32 %v685, 4294901760
          %687 = vmatpush1.msra.mxu0 %v686
          %688 = vmatprep.subr.mxu0 0.0
          %v689 = vand.u32 %v341, 4294901760
          %v690 = vsub.f32 %v341, %v689
          %v691 = vand.u32 %v690, 4294901760
          %692 = vmatpush1.msra.mxu0 %v691
          %693 = vmatprep.subr.mxu0 0.0
          %694 = vmatpush1.msra.mxu0 0.0
          %695 = vmatprep.subr.mxu0 0.0
          %696 = vmatpush1.msra.mxu0 0.0
          %697 = vmatprep.subr.mxu0 0.0
          %698 = vmatpush1.msra.mxu0 0.0
          %699 = vmatprep.subr.mxu0 0.0
          %700 = vmatpush1.msra.mxu0 0.0
          %701 = vmatprep.subr.mxu0 0.0
          %702 = vmatpush1.msra.mxu0 0.0
          %703 = vmatprep.subr.mxu0 0.0
          %704 = vmatpush1.msra.mxu0 0.0
          %705 = vmatprep.subr.mxu0 0.0
          %706 = vmatpush1.msra.mxu0 0.0
          %707 = vmatprep.subr.mxu0 0.0
          %708 = vmatpush1.msra.mxu0 0.0
          %709 = vmatprep.subr.mxu0 0.0
          %710 = vmatpush1.msra.mxu0 0.0
          %711 = vmatprep.subr.mxu0 0.0
          %712 = vmatpush1.msra.mxu0 0.0
          %713 = vmatprep.subr.mxu0 0.0
          %714 = vmatpush1.msra.mxu0 0.0
          %715 = vmatprep.subr.mxu0 0.0
          %716 = vmatpush1.msra.mxu0 0.0
          %717 = vmatprep.subr.mxu0 0.0
          %718 = vmatpush1.msra.mxu0 0.0
          %719 = vmatprep.subr.mxu0 0.0
          %720 = vmatpush1.msra.mxu0 0.0
          %721 = vmatprep.subr.mxu0 0.0
          %722 = vmatpush1.msra.mxu0 0.0
          %723 = vmatprep.subr.mxu0 0.0
          %724 = vmatpush1.msra.mxu0 0.0
          %725 = vmatprep.subr.mxu0 0.0
          %726 = vmatpush1.msra.mxu0 0.0
          %727 = vmatprep.subr.mxu0 0.0
          %728 = vmatpush1.msra.mxu0 0.0
          %729 = vmatprep.subr.mxu0 0.0
          %730 = vmatpush1.msra.mxu0 0.0
          %731 = vmatprep.subr.mxu0 0.0
          %732 = vmatpush1.msra.mxu0 0.0
          %733 = vmatprep.subr.mxu0 0.0
          %734 = vmatpush1.msra.mxu0 0.0
          %735 = vmatprep.subr.mxu0 0.0
          %736 = vmatpush1.msra.mxu0 0.0
          %737 = vmatprep.subr.mxu0 0.0
          %738 = vmatpush1.msra.mxu0 0.0
          %739 = vmatprep.subr.mxu0 0.0
          %740 = vmatpush1.msra.mxu0 0.0
          %741 = vmatprep.subr.mxu0 0.0
          %742 = vmatpush1.msra.mxu0 0.0
          %743 = vmatprep.subr.mxu0 0.0
          %744 = vmatpush1.msra.mxu0 0.0
          %745 = vmatprep.subr.mxu0 0.0
          %746 = vmatpush1.msra.mxu0 0.0
          %747 = vmatprep.subr.mxu0 0.0
          %748 = vmatpush1.msra.mxu0 0.0
          %749 = vmatprep.subr.mxu0 0.0
          %750 = vmatpush1.msra.mxu0 0.0
          %751 = vmatprep.subr.mxu0 0.0
          %752 = vmatpush1.msra.mxu0 0.0
          %753 = vmatprep.mubr.f32.mxu0 0.0
          %v754 = vand.u32 %v334, 4294901760
          %755 = vmatmul.mubr.f32.gmra.mrb[0].mxu0 %v754
          %v756 = vpop.f32.mrb[0].mxu0
          %v757 = vadd.f32 %v672, %v756
          %v758 = vpop.f32.mrb[0].mxu0
          %759 = vmatprep.mubr.f32.mxu0 0.0
          %v760 = vand.u32 %v337, 4294901760
          %761 = vmatmul.mubr.f32.gmra.mrb[0].mxu0 %v760
          %v762 = vpop.f32.mrb[0].mxu0
          %v763 = vadd.f32 %v680, %v762
          %v764 = vpop.f32.mrb[0].mxu0
          %765 = vdwg.mxu0
          %766 = vmatprep.subr.mxu0 0.0
          %v767 = vand.u32 %v328, 4294901760
          %768 = vmatpush1.msra.mxu0 %v767
          %769 = vmatprep.subr.mxu0 0.0
          %v770 = vand.u32 %v341, 4294901760
          %771 = vmatpush1.msra.mxu0 %v770
          %772 = vmatprep.subr.mxu0 0.0
          %773 = vmatpush1.msra.mxu0 0.0
          %774 = vmatprep.subr.mxu0 0.0
          %775 = vmatpush1.msra.mxu0 0.0
          %776 = vmatprep.subr.mxu0 0.0
          %777 = vmatpush1.msra.mxu0 0.0
          %778 = vmatprep.subr.mxu0 0.0
          %779 = vmatpush1.msra.mxu0 0.0
          %780 = vmatprep.subr.mxu0 0.0
          %781 = vmatpush1.msra.mxu0 0.0
          %782 = vmatprep.subr.mxu0 0.0
          %783 = vmatpush1.msra.mxu0 0.0
          %784 = vmatprep.subr.mxu0 0.0
          %785 = vmatpush1.msra.mxu0 0.0
          %786 = vmatprep.subr.mxu0 0.0
          %787 = vmatpush1.msra.mxu0 0.0
          %788 = vmatprep.subr.mxu0 0.0
          %789 = vmatpush1.msra.mxu0 0.0
          %790 = vmatprep.subr.mxu0 0.0
          %791 = vmatpush1.msra.mxu0 0.0
          %792 = vmatprep.subr.mxu0 0.0
          %793 = vmatpush1.msra.mxu0 0.0
          %794 = vmatprep.subr.mxu0 0.0
          %795 = vmatpush1.msra.mxu0 0.0
          %796 = vmatprep.subr.mxu0 0.0
          %797 = vmatpush1.msra.mxu0 0.0
          %798 = vmatprep.subr.mxu0 0.0
          %799 = vmatpush1.msra.mxu0 0.0
          %800 = vmatprep.subr.mxu0 0.0
          %801 = vmatpush1.msra.mxu0 0.0
          %802 = vmatprep.subr.mxu0 0.0
          %803 = vmatpush1.msra.mxu0 0.0
          %804 = vmatprep.subr.mxu0 0.0
          %805 = vmatpush1.msra.mxu0 0.0
          %806 = vmatprep.subr.mxu0 0.0
          %807 = vmatpush1.msra.mxu0 0.0
          %808 = vmatprep.subr.mxu0 0.0
          %809 = vmatpush1.msra.mxu0 0.0
          %810 = vmatprep.subr.mxu0 0.0
          %811 = vmatpush1.msra.mxu0 0.0
          %812 = vmatprep.subr.mxu0 0.0
          %813 = vmatpush1.msra.mxu0 0.0
          %814 = vmatprep.subr.mxu0 0.0
          %815 = vmatpush1.msra.mxu0 0.0
          %816 = vmatprep.subr.mxu0 0.0
          %817 = vmatpush1.msra.mxu0 0.0
          %818 = vmatprep.subr.mxu0 0.0
          %819 = vmatpush1.msra.mxu0 0.0
          %820 = vmatprep.subr.mxu0 0.0
          %821 = vmatpush1.msra.mxu0 0.0
          %822 = vmatprep.subr.mxu0 0.0
          %823 = vmatpush1.msra.mxu0 0.0
          %824 = vmatprep.subr.mxu0 0.0
          %825 = vmatpush1.msra.mxu0 0.0
          %826 = vmatprep.subr.mxu0 0.0
          %827 = vmatpush1.msra.mxu0 0.0
          %828 = vmatprep.subr.mxu0 0.0
          %829 = vmatpush1.msra.mxu0 0.0
          %830 = vmatprep.subr.mxu0 0.0
          %831 = vmatpush1.msra.mxu0 0.0
          %832 = vmatprep.mubr.f32.mxu0 0.0
          %v833 = vand.u32 %v334, 4294901760
          %834 = vmatmul.mubr.f32.gmra.mrb[0].mxu0 %v833
          %v835 = vpop.f32.mrb[0].mxu0
          %v836 = vadd.f32 %v757, %v835
          %v837 = vpop.f32.mrb[0].mxu0
          %838 = vmatprep.mubr.f32.mxu0 0.0
          %v839 = vand.u32 %v337, 4294901760
          %840 = vmatmul.mubr.f32.gmra.mrb[0].mxu0 %v839
          %v841 = vpop.f32.mrb[0].mxu0
          %v842 = vadd.f32 %v763, %v841
          %v843 = vpop.f32.mrb[0].mxu0
          %844 = vdwg.mxu0
          %v845 = vld [vmem:[#allocation12] sm:$0xff]
          %v846 = vld [vmem:[#allocation12 + $0x8] sm:$0x3f]
          %v848 = vsel %vm332, %v836, 0
          %v851 = vsel %vm332, %v842, 0
          %v854 = vsel %vm339, %v846, 0
          %856 = vmatprep.subr.mxu0 0.0
          %v857 = vand.u32 %v845, 4294901760
          %858 = vmatpush1.msra.mxu0 %v857
          %859 = vmatprep.subr.mxu0 0.0
          %v860 = vand.u32 %v854, 4294901760
          %861 = vmatpush1.msra.mxu0 %v860
          %862 = vmatprep.subr.mxu0 0.0
          %863 = vmatpush1.msra.mxu0 0.0
          %864 = vmatprep.subr.mxu0 0.0
          %865 = vmatpush1.msra.mxu0 0.0
          %866 = vmatprep.subr.mxu0 0.0
          %867 = vmatpush1.msra.mxu0 0.0
          %868 = vmatprep.subr.mxu0 0.0
          %869 = vmatpush1.msra.mxu0 0.0
          %870 = vmatprep.subr.mxu0 0.0
          %871 = vmatpush1.msra.mxu0 0.0
          %872 = vmatprep.subr.mxu0 0.0
          %873 = vmatpush1.msra.mxu0 0.0
          %874 = vmatprep.subr.mxu0 0.0
          %875 = vmatpush1.msra.mxu0 0.0
          %876 = vmatprep.subr.mxu0 0.0
          %877 = vmatpush1.msra.mxu0 0.0
          %878 = vmatprep.subr.mxu0 0.0
          %879 = vmatpush1.msra.mxu0 0.0
          %880 = vmatprep.subr.mxu0 0.0
          %881 = vmatpush1.msra.mxu0 0.0
          %882 = vmatprep.subr.mxu0 0.0
          %883 = vmatpush1.msra.mxu0 0.0
          %884 = vmatprep.subr.mxu0 0.0
          %885 = vmatpush1.msra.mxu0 0.0
          %886 = vmatprep.subr.mxu0 0.0
          %887 = vmatpush1.msra.mxu0 0.0
          %888 = vmatprep.subr.mxu0 0.0
          %889 = vmatpush1.msra.mxu0 0.0
          %890 = vmatprep.subr.mxu0 0.0
          %891 = vmatpush1.msra.mxu0 0.0
          %892 = vmatprep.subr.mxu0 0.0
          %893 = vmatpush1.msra.mxu0 0.0
          %894 = vmatprep.subr.mxu0 0.0
          %895 = vmatpush1.msra.mxu0 0.0
          %896 = vmatprep.subr.mxu0 0.0
          %897 = vmatpush1.msra.mxu0 0.0
          %898 = vmatprep.subr.mxu0 0.0
          %899 = vmatpush1.msra.mxu0 0.0
          %900 = vmatprep.subr.mxu0 0.0
          %901 = vmatpush1.msra.mxu0 0.0
          %902 = vmatprep.subr.mxu0 0.0
          %903 = vmatpush1.msra.mxu0 0.0
          %904 = vmatprep.subr.mxu0 0.0
          %905 = vmatpush1.msra.mxu0 0.0
          %906 = vmatprep.subr.mxu0 0.0
          %907 = vmatpush1.msra.mxu0 0.0
          %908 = vmatprep.subr.mxu0 0.0
          %909 = vmatpush1.msra.mxu0 0.0
          %910 = vmatprep.subr.mxu0 0.0
          %911 = vmatpush1.msra.mxu0 0.0
          %912 = vmatprep.subr.mxu0 0.0
          %913 = vmatpush1.msra.mxu0 0.0
          %914 = vmatprep.subr.mxu0 0.0
          %915 = vmatpush1.msra.mxu0 0.0
          %916 = vmatprep.subr.mxu0 0.0
          %917 = vmatpush1.msra.mxu0 0.0
          %918 = vmatprep.subr.mxu0 0.0
          %919 = vmatpush1.msra.mxu0 0.0
          %920 = vmatprep.subr.mxu0 0.0
          %921 = vmatpush1.msra.mxu0 0.0
          %922 = vmatprep.mubr.f32.mxu0 0.0
          %v923 = vand.u32 %v848, 4294901760
          %v924 = vsub.f32 %v848, %v923
          %v925 = vand.u32 %v924, 4294901760
          %v926 = vsub.f32 %v924, %v925
          %v927 = vand.u32 %v926, 4294901760
          %928 = vmatmul.mubr.f32.gmra.mrb[0].mxu0 %v927
          %v929 = vpop.f32.mrb[0].mxu0
          %v930 = vadd.f32 0.0, %v929
          %v931 = vpop.f32.mrb[0].mxu0
          %932 = vmatprep.mubr.f32.mxu0 0.0
          %v933 = vand.u32 %v851, 4294901760
          %v934 = vsub.f32 %v851, %v933
          %v935 = vand.u32 %v934, 4294901760
          %v936 = vsub.f32 %v934, %v935
          %v937 = vand.u32 %v936, 4294901760
          %938 = vmatmul.mubr.f32.gmra.mrb[0].mxu0 %v937
          %v939 = vpop.f32.mrb[0].mxu0
          %v940 = vadd.f32 0.0, %v939
          %v941 = vpop.f32.mrb[0].mxu0
          %942 = vdwg.mxu0
          %943 = vmatprep.subr.mxu0 0.0
          %v944 = vand.u32 %v845, 4294901760
          %v945 = vsub.f32 %v845, %v944
          %v946 = vand.u32 %v945, 4294901760
          %v947 = vsub.f32 %v945, %v946
          %v948 = vand.u32 %v947, 4294901760
          %949 = vmatpush1.msra.mxu0 %v948
          %950 = vmatprep.subr.mxu0 0.0
          %v951 = vand.u32 %v854, 4294901760
          %v952 = vsub.f32 %v854, %v951
          %v953 = vand.u32 %v952, 4294901760
          %v954 = vsub.f32 %v952, %v953
          %v955 = vand.u32 %v954, 4294901760
          %956 = vmatpush1.msra.mxu0 %v955
          %957 = vmatprep.subr.mxu0 0.0
          %958 = vmatpush1.msra.mxu0 0.0
          %959 = vmatprep.subr.mxu0 0.0
          %960 = vmatpush1.msra.mxu0 0.0
          %961 = vmatprep.subr.mxu0 0.0
          %962 = vmatpush1.msra.mxu0 0.0
          %963 = vmatprep.subr.mxu0 0.0
          %964 = vmatpush1.msra.mxu0 0.0
          %965 = vmatprep.subr.mxu0 0.0
          %966 = vmatpush1.msra.mxu0 0.0
          %967 = vmatprep.subr.mxu0 0.0
          %968 = vmatpush1.msra.mxu0 0.0
          %969 = vmatprep.subr.mxu0 0.0
          %970 = vmatpush1.msra.mxu0 0.0
          %971 = vmatprep.subr.mxu0 0.0
          %972 = vmatpush1.msra.mxu0 0.0
          %973 = vmatprep.subr.mxu0 0.0
          %974 = vmatpush1.msra.mxu0 0.0
          %975 = vmatprep.subr.mxu0 0.0
          %976 = vmatpush1.msra.mxu0 0.0
          %977 = vmatprep.subr.mxu0 0.0
          %978 = vmatpush1.msra.mxu0 0.0
          %979 = vmatprep.subr.mxu0 0.0
          %980 = vmatpush1.msra.mxu0 0.0
          %981 = vmatprep.subr.mxu0 0.0
          %982 = vmatpush1.msra.mxu0 0.0
          %983 = vmatprep.subr.mxu0 0.0
          %984 = vmatpush1.msra.mxu0 0.0
          %985 = vmatprep.subr.mxu0 0.0
          %986 = vmatpush1.msra.mxu0 0.0
          %987 = vmatprep.subr.mxu0 0.0
          %988 = vmatpush1.msra.mxu0 0.0
          %989 = vmatprep.subr.mxu0 0.0
          %990 = vmatpush1.msra.mxu0 0.0
          %991 = vmatprep.subr.mxu0 0.0
          %992 = vmatpush1.msra.mxu0 0.0
          %993 = vmatprep.subr.mxu0 0.0
          %994 = vmatpush1.msra.mxu0 0.0
          %995 = vmatprep.subr.mxu0 0.0
          %996 = vmatpush1.msra.mxu0 0.0
          %997 = vmatprep.subr.mxu0 0.0
          %998 = vmatpush1.msra.mxu0 0.0
          %999 = vmatprep.subr.mxu0 0.0
          %1000 = vmatpush1.msra.mxu0 0.0
          %1001 = vmatprep.subr.mxu0 0.0
          %1002 = vmatpush1.msra.mxu0 0.0
          %1003 = vmatprep.subr.mxu0 0.0
          %1004 = vmatpush1.msra.mxu0 0.0
          %1005 = vmatprep.subr.mxu0 0.0
          %1006 = vmatpush1.msra.mxu0 0.0
          %1007 = vmatprep.subr.mxu0 0.0
          %1008 = vmatpush1.msra.mxu0 0.0
          %1009 = vmatprep.subr.mxu0 0.0
          %1010 = vmatpush1.msra.mxu0 0.0
          %1011 = vmatprep.subr.mxu0 0.0
          %1012 = vmatpush1.msra.mxu0 0.0
          %1013 = vmatprep.subr.mxu0 0.0
          %1014 = vmatpush1.msra.mxu0 0.0
          %1015 = vmatprep.subr.mxu0 0.0
          %1016 = vmatpush1.msra.mxu0 0.0
          %1017 = vmatprep.mubr.f32.mxu0 0.0
          %v1018 = vand.u32 %v848, 4294901760
          %1019 = vmatmul.mubr.f32.gmra.mrb[0].mxu0 %v1018
          %v1020 = vpop.f32.mrb[0].mxu0
          %v1021 = vadd.f32 %v930, %v1020
          %v1022 = vpop.f32.mrb[0].mxu0
          %1023 = vmatprep.mubr.f32.mxu0 0.0
          %v1024 = vand.u32 %v851, 4294901760
          %1025 = vmatmul.mubr.f32.gmra.mrb[0].mxu0 %v1024
          %v1026 = vpop.f32.mrb[0].mxu0
          %v1027 = vadd.f32 %v940, %v1026
          %v1028 = vpop.f32.mrb[0].mxu0
          %1029 = vdwg.mxu0
          %1030 = vmatprep.subr.mxu0 0.0
          %v1031 = vand.u32 %v845, 4294901760
          %v1032 = vsub.f32 %v845, %v1031
          %1033 = vmatpush1.msra.mxu0 %v1032
          %1034 = vmatprep.subr.mxu0 0.0
          %v1035 = vand.u32 %v854, 4294901760
          %v1036 = vsub.f32 %v854, %v1035
          %1037 = vmatpush1.msra.mxu0 %v1036
          %1038 = vmatprep.subr.mxu0 0.0
          %1039 = vmatpush1.msra.mxu0 0.0
          %1040 = vmatprep.subr.mxu0 0.0
          %1041 = vmatpush1.msra.mxu0 0.0
          %1042 = vmatprep.subr.mxu0 0.0
          %1043 = vmatpush1.msra.mxu0 0.0
          %1044 = vmatprep.subr.mxu0 0.0
          %1045 = vmatpush1.msra.mxu0 0.0
          %1046 = vmatprep.subr.mxu0 0.0
          %1047 = vmatpush1.msra.mxu0 0.0
          %1048 = vmatprep.subr.mxu0 0.0
          %1049 = vmatpush1.msra.mxu0 0.0
          %1050 = vmatprep.subr.mxu0 0.0
          %1051 = vmatpush1.msra.mxu0 0.0
          %1052 = vmatprep.subr.mxu0 0.0
          %1053 = vmatpush1.msra.mxu0 0.0
          %1054 = vmatprep.subr.mxu0 0.0
          %1055 = vmatpush1.msra.mxu0 0.0
          %1056 = vmatprep.subr.mxu0 0.0
          %1057 = vmatpush1.msra.mxu0 0.0
          %1058 = vmatprep.subr.mxu0 0.0
          %1059 = vmatpush1.msra.mxu0 0.0
          %1060 = vmatprep.subr.mxu0 0.0
          %1061 = vmatpush1.msra.mxu0 0.0
          %1062 = vmatprep.subr.mxu0 0.0
          %1063 = vmatpush1.msra.mxu0 0.0
          %1064 = vmatprep.subr.mxu0 0.0
          %1065 = vmatpush1.msra.mxu0 0.0
          %1066 = vmatprep.subr.mxu0 0.0
          %1067 = vmatpush1.msra.mxu0 0.0
          %1068 = vmatprep.subr.mxu0 0.0
          %1069 = vmatpush1.msra.mxu0 0.0
          %1070 = vmatprep.subr.mxu0 0.0
          %1071 = vmatpush1.msra.mxu0 0.0
          %1072 = vmatprep.subr.mxu0 0.0
          %1073 = vmatpush1.msra.mxu0 0.0
          %1074 = vmatprep.subr.mxu0 0.0
          %1075 = vmatpush1.msra.mxu0 0.0
          %1076 = vmatprep.subr.mxu0 0.0
          %1077 = vmatpush1.msra.mxu0 0.0
          %1078 = vmatprep.subr.mxu0 0.0
          %1079 = vmatpush1.msra.mxu0 0.0
          %1080 = vmatprep.subr.mxu0 0.0
          %1081 = vmatpush1.msra.mxu0 0.0
          %1082 = vmatprep.subr.mxu0 0.0
          %1083 = vmatpush1.msra.mxu0 0.0
          %1084 = vmatprep.subr.mxu0 0.0
          %1085 = vmatpush1.msra.mxu0 0.0
          %1086 = vmatprep.subr.mxu0 0.0
          %1087 = vmatpush1.msra.mxu0 0.0
          %1088 = vmatprep.subr.mxu0 0.0
          %1089 = vmatpush1.msra.mxu0 0.0
          %1090 = vmatprep.subr.mxu0 0.0
          %1091 = vmatpush1.msra.mxu0 0.0
          %1092 = vmatprep.subr.mxu0 0.0
          %1093 = vmatpush1.msra.mxu0 0.0
          %1094 = vmatprep.subr.mxu0 0.0
          %1095 = vmatpush1.msra.mxu0 0.0
          %1096 = vmatprep.subr.mxu0 0.0
          %1097 = vmatpush1.msra.mxu0 0.0
          %1098 = vmatprep.mubr.f32.mxu0 0.0
          %v1099 = vand.u32 %v848, 4294901760
          %v1100 = vsub.f32 %v848, %v1099
          %1101 = vmatmul.mubr.f32.gmra.mrb[0].mxu0 %v1100
          %v1102 = vpop.f32.mrb[0].mxu0
          %v1103 = vadd.f32 %v1021, %v1102
          %v1104 = vpop.f32.mrb[0].mxu0
          %1105 = vmatprep.mubr.f32.mxu0 0.0
          %v1106 = vand.u32 %v851, 4294901760
          %v1107 = vsub.f32 %v851, %v1106
          %1108 = vmatmul.mubr.f32.gmra.mrb[0].mxu0 %v1107
          %v1109 = vpop.f32.mrb[0].mxu0
          %v1110 = vadd.f32 %v1027, %v1109
          %v1111 = vpop.f32.mrb[0].mxu0
          %1112 = vdwg.mxu0
          %1113 = vmatprep.subr.mxu0 0.0
          %v1114 = vand.u32 %v845, 4294901760
          %1115 = vmatpush1.msra.mxu0 %v1114
          %1116 = vmatprep.subr.mxu0 0.0
          %v1117 = vand.u32 %v854, 4294901760
          %1118 = vmatpush1.msra.mxu0 %v1117
          %1119 = vmatprep.subr.mxu0 0.0
          %1120 = vmatpush1.msra.mxu0 0.0
          %1121 = vmatprep.subr.mxu0 0.0
          %1122 = vmatpush1.msra.mxu0 0.0
          %1123 = vmatprep.subr.mxu0 0.0
          %1124 = vmatpush1.msra.mxu0 0.0
          %1125 = vmatprep.subr.mxu0 0.0
          %1126 = vmatpush1.msra.mxu0 0.0
          %1127 = vmatprep.subr.mxu0 0.0
          %1128 = vmatpush1.msra.mxu0 0.0
          %1129 = vmatprep.subr.mxu0 0.0
          %1130 = vmatpush1.msra.mxu0 0.0
          %1131 = vmatprep.subr.mxu0 0.0
          %1132 = vmatpush1.msra.mxu0 0.0
          %1133 = vmatprep.subr.mxu0 0.0
          %1134 = vmatpush1.msra.mxu0 0.0
          %1135 = vmatprep.subr.mxu0 0.0
          %1136 = vmatpush1.msra.mxu0 0.0
          %1137 = vmatprep.subr.mxu0 0.0
          %1138 = vmatpush1.msra.mxu0 0.0
          %1139 = vmatprep.subr.mxu0 0.0
          %1140 = vmatpush1.msra.mxu0 0.0
          %1141 = vmatprep.subr.mxu0 0.0
          %1142 = vmatpush1.msra.mxu0 0.0
          %1143 = vmatprep.subr.mxu0 0.0
          %1144 = vmatpush1.msra.mxu0 0.0
          %1145 = vmatprep.subr.mxu0 0.0
          %1146 = vmatpush1.msra.mxu0 0.0
          %1147 = vmatprep.subr.mxu0 0.0
          %1148 = vmatpush1.msra.mxu0 0.0
          %1149 = vmatprep.subr.mxu0 0.0
          %1150 = vmatpush1.msra.mxu0 0.0
          %1151 = vmatprep.subr.mxu0 0.0
          %1152 = vmatpush1.msra.mxu0 0.0
          %1153 = vmatprep.subr.mxu0 0.0
          %1154 = vmatpush1.msra.mxu0 0.0
          %1155 = vmatprep.subr.mxu0 0.0
          %1156 = vmatpush1.msra.mxu0 0.0
          %1157 = vmatprep.subr.mxu0 0.0
          %1158 = vmatpush1.msra.mxu0 0.0
          %1159 = vmatprep.subr.mxu0 0.0
          %1160 = vmatpush1.msra.mxu0 0.0
          %1161 = vmatprep.subr.mxu0 0.0
          %1162 = vmatpush1.msra.mxu0 0.0
          %1163 = vmatprep.subr.mxu0 0.0
          %1164 = vmatpush1.msra.mxu0 0.0
          %1165 = vmatprep.subr.mxu0 0.0
          %1166 = vmatpush1.msra.mxu0 0.0
          %1167 = vmatprep.subr.mxu0 0.0
          %1168 = vmatpush1.msra.mxu0 0.0
          %1169 = vmatprep.subr.mxu0 0.0
          %1170 = vmatpush1.msra.mxu0 0.0
          %1171 = vmatprep.subr.mxu0 0.0
          %1172 = vmatpush1.msra.mxu0 0.0
          %1173 = vmatprep.subr.mxu0 0.0
          %1174 = vmatpush1.msra.mxu0 0.0
          %1175 = vmatprep.subr.mxu0 0.0
          %1176 = vmatpush1.msra.mxu0 0.0
          %1177 = vmatprep.subr.mxu0 0.0
          %1178 = vmatpush1.msra.mxu0 0.0
          %1179 = vmatprep.mubr.f32.mxu0 0.0
          %v1180 = vand.u32 %v848, 4294901760
          %v1181 = vsub.f32 %v848, %v1180
          %v1182 = vand.u32 %v1181, 4294901760
          %1183 = vmatmul.mubr.f32.gmra.mrb[0].mxu0 %v1182
          %v1184 = vpop.f32.mrb[0].mxu0
          %v1185 = vadd.f32 %v1103, %v1184
          %v1186 = vpop.f32.mrb[0].mxu0
          %1187 = vmatprep.mubr.f32.mxu0 0.0
          %v1188 = vand.u32 %v851, 4294901760
          %v1189 = vsub.f32 %v851, %v1188
          %v1190 = vand.u32 %v1189, 4294901760
          %1191 = vmatmul.mubr.f32.gmra.mrb[0].mxu0 %v1190
          %v1192 = vpop.f32.mrb[0].mxu0
          %v1193 = vadd.f32 %v1110, %v1192
          %v1194 = vpop.f32.mrb[0].mxu0
          %1195 = vdwg.mxu0
          %1196 = vmatprep.subr.mxu0 0.0
          %v1197 = vand.u32 %v845, 4294901760
          %v1198 = vsub.f32 %v845, %v1197
          %v1199 = vand.u32 %v1198, 4294901760
          %1200 = vmatpush1.msra.mxu0 %v1199
          %1201 = vmatprep.subr.mxu0 0.0
          %v1202 = vand.u32 %v854, 4294901760
          %v1203 = vsub.f32 %v854, %v1202
          %v1204 = vand.u32 %v1203, 4294901760
          %1205 = vmatpush1.msra.mxu0 %v1204
          %1206 = vmatprep.subr.mxu0 0.0
          %1207 = vmatpush1.msra.mxu0 0.0
          %1208 = vmatprep.subr.mxu0 0.0
          %1209 = vmatpush1.msra.mxu0 0.0
          %1210 = vmatprep.subr.mxu0 0.0
          %1211 = vmatpush1.msra.mxu0 0.0
          %1212 = vmatprep.subr.mxu0 0.0
          %1213 = vmatpush1.msra.mxu0 0.0
          %1214 = vmatprep.subr.mxu0 0.0
          %1215 = vmatpush1.msra.mxu0 0.0
          %1216 = vmatprep.subr.mxu0 0.0
          %1217 = vmatpush1.msra.mxu0 0.0
          %1218 = vmatprep.subr.mxu0 0.0
          %1219 = vmatpush1.msra.mxu0 0.0
          %1220 = vmatprep.subr.mxu0 0.0
          %1221 = vmatpush1.msra.mxu0 0.0
          %1222 = vmatprep.subr.mxu0 0.0
          %1223 = vmatpush1.msra.mxu0 0.0
          %1224 = vmatprep.subr.mxu0 0.0
          %1225 = vmatpush1.msra.mxu0 0.0
          %1226 = vmatprep.subr.mxu0 0.0
          %1227 = vmatpush1.msra.mxu0 0.0
          %1228 = vmatprep.subr.mxu0 0.0
          %1229 = vmatpush1.msra.mxu0 0.0
          %1230 = vmatprep.subr.mxu0 0.0
          %1231 = vmatpush1.msra.mxu0 0.0
          %1232 = vmatprep.subr.mxu0 0.0
          %1233 = vmatpush1.msra.mxu0 0.0
          %1234 = vmatprep.subr.mxu0 0.0
          %1235 = vmatpush1.msra.mxu0 0.0
          %1236 = vmatprep.subr.mxu0 0.0
          %1237 = vmatpush1.msra.mxu0 0.0
          %1238 = vmatprep.subr.mxu0 0.0
          %1239 = vmatpush1.msra.mxu0 0.0
          %1240 = vmatprep.subr.mxu0 0.0
          %1241 = vmatpush1.msra.mxu0 0.0
          %1242 = vmatprep.subr.mxu0 0.0
          %1243 = vmatpush1.msra.mxu0 0.0
          %1244 = vmatprep.subr.mxu0 0.0
          %1245 = vmatpush1.msra.mxu0 0.0
          %1246 = vmatprep.subr.mxu0 0.0
          %1247 = vmatpush1.msra.mxu0 0.0
          %1248 = vmatprep.subr.mxu0 0.0
          %1249 = vmatpush1.msra.mxu0 0.0
          %1250 = vmatprep.subr.mxu0 0.0
          %1251 = vmatpush1.msra.mxu0 0.0
          %1252 = vmatprep.subr.mxu0 0.0
          %1253 = vmatpush1.msra.mxu0 0.0
          %1254 = vmatprep.subr.mxu0 0.0
          %1255 = vmatpush1.msra.mxu0 0.0
          %1256 = vmatprep.subr.mxu0 0.0
          %1257 = vmatpush1.msra.mxu0 0.0
          %1258 = vmatprep.subr.mxu0 0.0
          %1259 = vmatpush1.msra.mxu0 0.0
          %1260 = vmatprep.subr.mxu0 0.0
          %1261 = vmatpush1.msra.mxu0 0.0
          %1262 = vmatprep.subr.mxu0 0.0
          %1263 = vmatpush1.msra.mxu0 0.0
          %1264 = vmatprep.subr.mxu0 0.0
          %1265 = vmatpush1.msra.mxu0 0.0
          %1266 = vmatprep.mubr.f32.mxu0 0.0
          %v1267 = vand.u32 %v848, 4294901760
          %1268 = vmatmul.mubr.f32.gmra.mrb[0].mxu0 %v1267
          %v1269 = vpop.f32.mrb[0].mxu0
          %v1270 = vadd.f32 %v1185, %v1269
          %v1271 = vpop.f32.mrb[0].mxu0
          %1272 = vmatprep.mubr.f32.mxu0 0.0
          %v1273 = vand.u32 %v851, 4294901760
          %1274 = vmatmul.mubr.f32.gmra.mrb[0].mxu0 %v1273
          %v1275 = vpop.f32.mrb[0].mxu0
          %v1276 = vadd.f32 %v1193, %v1275
          %v1277 = vpop.f32.mrb[0].mxu0
          %1278 = vdwg.mxu0
          %1279 = vmatprep.subr.mxu0 0.0
          %v1280 = vand.u32 %v845, 4294901760
          %1281 = vmatpush1.msra.mxu0 %v1280
          %1282 = vmatprep.subr.mxu0 0.0
          %v1283 = vand.u32 %v854, 4294901760
          %1284 = vmatpush1.msra.mxu0 %v1283
          %1285 = vmatprep.subr.mxu0 0.0
          %1286 = vmatpush1.msra.mxu0 0.0
          %1287 = vmatprep.subr.mxu0 0.0
          %1288 = vmatpush1.msra.mxu0 0.0
          %1289 = vmatprep.subr.mxu0 0.0
          %1290 = vmatpush1.msra.mxu0 0.0
          %1291 = vmatprep.subr.mxu0 0.0
          %1292 = vmatpush1.msra.mxu0 0.0
          %1293 = vmatprep.subr.mxu0 0.0
          %1294 = vmatpush1.msra.mxu0 0.0
          %1295 = vmatprep.subr.mxu0 0.0
          %1296 = vmatpush1.msra.mxu0 0.0
          %1297 = vmatprep.subr.mxu0 0.0
          %1298 = vmatpush1.msra.mxu0 0.0
          %1299 = vmatprep.subr.mxu0 0.0
          %1300 = vmatpush1.msra.mxu0 0.0
          %1301 = vmatprep.subr.mxu0 0.0
          %1302 = vmatpush1.msra.mxu0 0.0
          %1303 = vmatprep.subr.mxu0 0.0
          %1304 = vmatpush1.msra.mxu0 0.0
          %1305 = vmatprep.subr.mxu0 0.0
          %1306 = vmatpush1.msra.mxu0 0.0
          %1307 = vmatprep.subr.mxu0 0.0
          %1308 = vmatpush1.msra.mxu0 0.0
          %1309 = vmatprep.subr.mxu0 0.0
          %1310 = vmatpush1.msra.mxu0 0.0
          %1311 = vmatprep.subr.mxu0 0.0
          %1312 = vmatpush1.msra.mxu0 0.0
          %1313 = vmatprep.subr.mxu0 0.0
          %1314 = vmatpush1.msra.mxu0 0.0
          %1315 = vmatprep.subr.mxu0 0.0
          %1316 = vmatpush1.msra.mxu0 0.0
          %1317 = vmatprep.subr.mxu0 0.0
          %1318 = vmatpush1.msra.mxu0 0.0
          %1319 = vmatprep.subr.mxu0 0.0
          %1320 = vmatpush1.msra.mxu0 0.0
          %1321 = vmatprep.subr.mxu0 0.0
          %1322 = vmatpush1.msra.mxu0 0.0
          %1323 = vmatprep.subr.mxu0 0.0
          %1324 = vmatpush1.msra.mxu0 0.0
          %1325 = vmatprep.subr.mxu0 0.0
          %1326 = vmatpush1.msra.mxu0 0.0
          %1327 = vmatprep.subr.mxu0 0.0
          %1328 = vmatpush1.msra.mxu0 0.0
          %1329 = vmatprep.subr.mxu0 0.0
          %1330 = vmatpush1.msra.mxu0 0.0
          %1331 = vmatprep.subr.mxu0 0.0
          %1332 = vmatpush1.msra.mxu0 0.0
          %1333 = vmatprep.subr.mxu0 0.0
          %1334 = vmatpush1.msra.mxu0 0.0
          %1335 = vmatprep.subr.mxu0 0.0
          %1336 = vmatpush1.msra.mxu0 0.0
          %1337 = vmatprep.subr.mxu0 0.0
          %1338 = vmatpush1.msra.mxu0 0.0
          %1339 = vmatprep.subr.mxu0 0.0
          %1340 = vmatpush1.msra.mxu0 0.0
          %1341 = vmatprep.subr.mxu0 0.0
          %1342 = vmatpush1.msra.mxu0 0.0
          %1343 = vmatprep.subr.mxu0 0.0
          %1344 = vmatpush1.msra.mxu0 0.0
          %1345 = vmatprep.mubr.f32.mxu0 0.0
          %v1346 = vand.u32 %v848, 4294901760
          %1347 = vmatmul.mubr.f32.gmra.mrb[0].mxu0 %v1346
          %v1348 = vpop.f32.mrb[0].mxu0
          %v1349 = vadd.f32 %v1270, %v1348
          %v1350 = vpop.f32.mrb[0].mxu0
          %1351 = vmatprep.mubr.f32.mxu0 0.0
          %v1352 = vand.u32 %v851, 4294901760
          %1353 = vmatmul.mubr.f32.gmra.mrb[0].mxu0 %v1352
          %v1354 = vpop.f32.mrb[0].mxu0
          %v1355 = vadd.f32 %v1276, %v1354
          %v1356 = vpop.f32.mrb[0].mxu0
          %1357 = vdwg.mxu0
          %s1358 = sadd.s32 16, %s236
          %s1359 = scalar_lea.vmem %s185, %s1358 [#allocation8]
          %v1360 = vld [vmem:[%s1359] sm:$0xff]
          %v1361 = vld [vmem:[%s1359 + $0x8] sm:$0xff]
          %1364 = vrot.lane.b32.xlu0 %v1360, 2
          %v1365 = vpop.permute.xlu0 %1364
          %1366 = vrot.lane.b32.xlu0 %v1361, 2
          %v1367 = vpop.permute.xlu0 %1366
          %1370 = vst.msk [vmem:[#allocation2 + $0x2] sm:$0xff] %vm248, %v1365
          %1371 = vst.msk [vmem:[#allocation2 + $0xa] sm:$0xff] %vm248, %v1367
          %v1372 = vld [vmem:[#allocation2] sm:$0xff]
          %v1373 = vld [vmem:[#allocation2 + $0x8] sm:$0xff]
          %v1374 = vld [vmem:[#allocation2 + $0x10] sm:$0x7]
          %v1375 = vld [vmem:[#allocation2 + $0x1] sm:$0xff]
          %v1376 = vld [vmem:[#allocation2 + $0x9] sm:$0xff]
          %v1377 = vld [vmem:[#allocation2 + $0x11] sm:$0x7]
          %v1378 = vmax.f32 %v1372, %v1375
          %v1379 = vmax.f32 %v1373, %v1376
          %v1380 = vmax.f32 %v1374, %v1377
          %1381 = vst.msk [vmem:[#allocation3] sm:$0xff] %vm225, %v1378
          %1382 = vst.msk [vmem:[#allocation3 + $0x8] sm:$0xff] %vm225, %v1379
          %1383 = vst.msk [vmem:[#allocation3 + $0x10] sm:$0x7] %vm262, %v1380
          %v1384 = vld [vmem:[#allocation3] sm:$0xff]
          %v1385 = vld [vmem:[#allocation3 + $0x8] sm:$0xff]
          %v1386 = vld [vmem:[#allocation3 + $0x10] sm:$0x1]
          %v1387 = vld [vmem:[#allocation3 + $0x2] sm:$0xff]
          %v1388 = vld [vmem:[#allocation3 + $0xa] sm:$0xff]
          %v1389 = vld [vmem:[#allocation3 + $0x12] sm:$0x1]
          %v1390 = vmax.f32 %v1384, %v1387
          %v1391 = vmax.f32 %v1385, %v1388
          %v1392 = vmax.f32 %v1386, %v1389
          %1393 = vst.msk [vmem:[#allocation4] sm:$0xff] %vm225, %v1390
          %1394 = vst.msk [vmem:[#allocation4 + $0x8] sm:$0xff] %vm225, %v1391
          %1395 = vst.msk [vmem:[#allocation4 + $0x10] sm:$0x1] %vm275, %v1392
          %v1396 = vld [vmem:[#allocation4] sm:$0xff]
          %v1397 = vld [vmem:[#allocation4 + $0x8] sm:$0x3f]
          %v1398 = vld [vmem:[#allocation4 + $0x3] sm:$0xff]
          %v1399 = vld [vmem:[#allocation4 + $0xb] sm:$0x3f]
          %v1400 = vmax.f32 %v1396, %v1398
          %v1401 = vmax.f32 %v1397, %v1399
          %1402 = vst.msk [vmem:[#allocation5] sm:$0xff] %vm225, %v1400
          %1403 = vst.msk [vmem:[#allocation5 + $0x8] sm:$0x3f] %vm284, %v1401
          %v1404 = vld [vmem:[#allocation5] sm:$0xff]
          %v1405 = vld [vmem:[#allocation5 + $0x8] sm:$0x3f]
          %1408 = vrot.lane.b32.xlu0 %v1404, 127
          %v1409 = vpop.permute.xlu0 %1408
          %1410 = vrot.lane.b32.xlu0 %v1405, 127
          %v1411 = vpop.permute.xlu0 %1410
          %v1414 = vmax.f32 %v1404, %v1409
          %v1415 = vmax.f32 %v1405, %v1411
          %1416 = vst.msk [vmem:[#allocation6] sm:$0xff] %vm298, %v1414
          %1417 = vst.msk [vmem:[#allocation6 + $0x8] sm:$0x3f] %vm300, %v1415
          %v1418 = vld [vmem:[#allocation6] sm:$0xff]
          %v1419 = vld [vmem:[#allocation6 + $0x8] sm:$0x3f]
          %1422 = vrot.lane.b32.xlu0 %v1418, 126
          %v1423 = vpop.permute.xlu0 %1422
          %1424 = vrot.lane.b32.xlu0 %v1419, 126
          %v1425 = vpop.permute.xlu0 %1424
          %v1428 = vmax.f32 %v1418, %v1423
          %v1429 = vmax.f32 %v1419, %v1425
          %1430 = vst.msk [vmem:[#allocation7] sm:$0xff] %vm314, %v1428
          %1431 = vst.msk [vmem:[#allocation7 + $0x8] sm:$0x3f] %vm316, %v1429
          %v1432 = vld [vmem:[#allocation7] sm:$0xff]
          %v1433 = vld [vmem:[#allocation7 + $0x8] sm:$0x3f]
          %1436 = vrot.lane.b32.xlu0 %v1432, 125
          %v1437 = vpop.permute.xlu0 %1436
          %1438 = vrot.lane.b32.xlu0 %v1433, 125
          %v1439 = vpop.permute.xlu0 %1438
          %v1442 = vmax.f32 %v1432, %v1437
          %v1443 = vmax.f32 %v1433, %v1439
          %v1444 = vld [vmem:[#allocation10] sm:$0xff]
          %v1445 = vld [vmem:[#allocation10 + $0x8] sm:$0x3f]
          %v1447 = vsel %vm332, %v1444, 0
          %v1450 = vsel %vm332, %v1445, 0
          %v1453 = vsel %vm339, %v1443, 0
          %1455 = vmatprep.subr.mxu0 0.0
          %v1456 = vand.u32 %v1442, 4294901760
          %1457 = vmatpush1.msra.mxu0 %v1456
          %1458 = vmatprep.subr.mxu0 0.0
          %v1459 = vand.u32 %v1453, 4294901760
          %1460 = vmatpush1.msra.mxu0 %v1459
          %1461 = vmatprep.subr.mxu0 0.0
          %1462 = vmatpush1.msra.mxu0 0.0
          %1463 = vmatprep.subr.mxu0 0.0
          %1464 = vmatpush1.msra.mxu0 0.0
          %1465 = vmatprep.subr.mxu0 0.0
          %1466 = vmatpush1.msra.mxu0 0.0
          %1467 = vmatprep.subr.mxu0 0.0
          %1468 = vmatpush1.msra.mxu0 0.0
          %1469 = vmatprep.subr.mxu0 0.0
          %1470 = vmatpush1.msra.mxu0 0.0
          %1471 = vmatprep.subr.mxu0 0.0
          %1472 = vmatpush1.msra.mxu0 0.0
          %1473 = vmatprep.subr.mxu0 0.0
          %1474 = vmatpush1.msra.mxu0 0.0
          %1475 = vmatprep.subr.mxu0 0.0
          %1476 = vmatpush1.msra.mxu0 0.0
          %1477 = vmatprep.subr.mxu0 0.0
          %1478 = vmatpush1.msra.mxu0 0.0
          %1479 = vmatprep.subr.mxu0 0.0
          %1480 = vmatpush1.msra.mxu0 0.0
          %1481 = vmatprep.subr.mxu0 0.0
          %1482 = vmatpush1.msra.mxu0 0.0
          %1483 = vmatprep.subr.mxu0 0.0
          %1484 = vmatpush1.msra.mxu0 0.0
          %1485 = vmatprep.subr.mxu0 0.0
          %1486 = vmatpush1.msra.mxu0 0.0
          %1487 = vmatprep.subr.mxu0 0.0
          %1488 = vmatpush1.msra.mxu0 0.0
          %1489 = vmatprep.subr.mxu0 0.0
          %1490 = vmatpush1.msra.mxu0 0.0
          %1491 = vmatprep.subr.mxu0 0.0
          %1492 = vmatpush1.msra.mxu0 0.0
          %1493 = vmatprep.subr.mxu0 0.0
          %1494 = vmatpush1.msra.mxu0 0.0
          %1495 = vmatprep.subr.mxu0 0.0
          %1496 = vmatpush1.msra.mxu0 0.0
          %1497 = vmatprep.subr.mxu0 0.0
          %1498 = vmatpush1.msra.mxu0 0.0
          %1499 = vmatprep.subr.mxu0 0.0
          %1500 = vmatpush1.msra.mxu0 0.0
          %1501 = vmatprep.subr.mxu0 0.0
          %1502 = vmatpush1.msra.mxu0 0.0
          %1503 = vmatprep.subr.mxu0 0.0
          %1504 = vmatpush1.msra.mxu0 0.0
          %1505 = vmatprep.subr.mxu0 0.0
          %1506 = vmatpush1.msra.mxu0 0.0
          %1507 = vmatprep.subr.mxu0 0.0
          %1508 = vmatpush1.msra.mxu0 0.0
          %1509 = vmatprep.subr.mxu0 0.0
          %1510 = vmatpush1.msra.mxu0 0.0
          %1511 = vmatprep.subr.mxu0 0.0
          %1512 = vmatpush1.msra.mxu0 0.0
          %1513 = vmatprep.subr.mxu0 0.0
          %1514 = vmatpush1.msra.mxu0 0.0
          %1515 = vmatprep.subr.mxu0 0.0
          %1516 = vmatpush1.msra.mxu0 0.0
          %1517 = vmatprep.subr.mxu0 0.0
          %1518 = vmatpush1.msra.mxu0 0.0
          %1519 = vmatprep.subr.mxu0 0.0
          %1520 = vmatpush1.msra.mxu0 0.0
          %1521 = vmatprep.mubr.f32.mxu0 0.0
          %v1522 = vand.u32 %v1447, 4294901760
          %v1523 = vsub.f32 %v1447, %v1522
          %v1524 = vand.u32 %v1523, 4294901760
          %v1525 = vsub.f32 %v1523, %v1524
          %v1526 = vand.u32 %v1525, 4294901760
          %1527 = vmatmul.mubr.f32.gmra.mrb[0].mxu0 %v1526
          %v1528 = vpop.f32.mrb[0].mxu0
          %v1529 = vadd.f32 0.0, %v1528
          %v1530 = vpop.f32.mrb[0].mxu0
          %1531 = vmatprep.mubr.f32.mxu0 0.0
          %v1532 = vand.u32 %v1450, 4294901760
          %v1533 = vsub.f32 %v1450, %v1532
          %v1534 = vand.u32 %v1533, 4294901760
          %v1535 = vsub.f32 %v1533, %v1534
          %v1536 = vand.u32 %v1535, 4294901760
          %1537 = vmatmul.mubr.f32.gmra.mrb[0].mxu0 %v1536
          %v1538 = vpop.f32.mrb[0].mxu0
          %v1539 = vadd.f32 0.0, %v1538
          %v1540 = vpop.f32.mrb[0].mxu0
          %1541 = vdwg.mxu0
          %1542 = vmatprep.subr.mxu0 0.0
          %v1543 = vand.u32 %v1442, 4294901760
          %v1544 = vsub.f32 %v1442, %v1543
          %v1545 = vand.u32 %v1544, 4294901760
          %v1546 = vsub.f32 %v1544, %v1545
          %v1547 = vand.u32 %v1546, 4294901760
          %1548 = vmatpush1.msra.mxu0 %v1547
          %1549 = vmatprep.subr.mxu0 0.0
          %v1550 = vand.u32 %v1453, 4294901760
          %v1551 = vsub.f32 %v1453, %v1550
          %v1552 = vand.u32 %v1551, 4294901760
          %v1553 = vsub.f32 %v1551, %v1552
          %v1554 = vand.u32 %v1553, 4294901760
          %1555 = vmatpush1.msra.mxu0 %v1554
          %1556 = vmatprep.subr.mxu0 0.0
          %1557 = vmatpush1.msra.mxu0 0.0
          %1558 = vmatprep.subr.mxu0 0.0
          %1559 = vmatpush1.msra.mxu0 0.0
          %1560 = vmatprep.subr.mxu0 0.0
          %1561 = vmatpush1.msra.mxu0 0.0
          %1562 = vmatprep.subr.mxu0 0.0
          %1563 = vmatpush1.msra.mxu0 0.0
          %1564 = vmatprep.subr.mxu0 0.0
          %1565 = vmatpush1.msra.mxu0 0.0
          %1566 = vmatprep.subr.mxu0 0.0
          %1567 = vmatpush1.msra.mxu0 0.0
          %1568 = vmatprep.subr.mxu0 0.0
          %1569 = vmatpush1.msra.mxu0 0.0
          %1570 = vmatprep.subr.mxu0 0.0
          %1571 = vmatpush1.msra.mxu0 0.0
          %1572 = vmatprep.subr.mxu0 0.0
          %1573 = vmatpush1.msra.mxu0 0.0
          %1574 = vmatprep.subr.mxu0 0.0
          %1575 = vmatpush1.msra.mxu0 0.0
          %1576 = vmatprep.subr.mxu0 0.0
          %1577 = vmatpush1.msra.mxu0 0.0
          %1578 = vmatprep.subr.mxu0 0.0
          %1579 = vmatpush1.msra.mxu0 0.0
          %1580 = vmatprep.subr.mxu0 0.0
          %1581 = vmatpush1.msra.mxu0 0.0
          %1582 = vmatprep.subr.mxu0 0.0
          %1583 = vmatpush1.msra.mxu0 0.0
          %1584 = vmatprep.subr.mxu0 0.0
          %1585 = vmatpush1.msra.mxu0 0.0
          %1586 = vmatprep.subr.mxu0 0.0
          %1587 = vmatpush1.msra.mxu0 0.0
          %1588 = vmatprep.subr.mxu0 0.0
          %1589 = vmatpush1.msra.mxu0 0.0
          %1590 = vmatprep.subr.mxu0 0.0
          %1591 = vmatpush1.msra.mxu0 0.0
          %1592 = vmatprep.subr.mxu0 0.0
          %1593 = vmatpush1.msra.mxu0 0.0
          %1594 = vmatprep.subr.mxu0 0.0
          %1595 = vmatpush1.msra.mxu0 0.0
          %1596 = vmatprep.subr.mxu0 0.0
          %1597 = vmatpush1.msra.mxu0 0.0
          %1598 = vmatprep.subr.mxu0 0.0
          %1599 = vmatpush1.msra.mxu0 0.0
          %1600 = vmatprep.subr.mxu0 0.0
          %1601 = vmatpush1.msra.mxu0 0.0
          %1602 = vmatprep.subr.mxu0 0.0
          %1603 = vmatpush1.msra.mxu0 0.0
          %1604 = vmatprep.subr.mxu0 0.0
          %1605 = vmatpush1.msra.mxu0 0.0
          %1606 = vmatprep.subr.mxu0 0.0
          %1607 = vmatpush1.msra.mxu0 0.0
          %1608 = vmatprep.subr.mxu0 0.0
          %1609 = vmatpush1.msra.mxu0 0.0
          %1610 = vmatprep.subr.mxu0 0.0
          %1611 = vmatpush1.msra.mxu0 0.0
          %1612 = vmatprep.subr.mxu0 0.0
          %1613 = vmatpush1.msra.mxu0 0.0
          %1614 = vmatprep.subr.mxu0 0.0
          %1615 = vmatpush1.msra.mxu0 0.0
          %1616 = vmatprep.mubr.f32.mxu0 0.0
          %v1617 = vand.u32 %v1447, 4294901760
          %1618 = vmatmul.mubr.f32.gmra.mrb[0].mxu0 %v1617
          %v1619 = vpop.f32.mrb[0].mxu0
          %v1620 = vadd.f32 %v1529, %v1619
          %v1621 = vpop.f32.mrb[0].mxu0
          %1622 = vmatprep.mubr.f32.mxu0 0.0
          %v1623 = vand.u32 %v1450, 4294901760
          %1624 = vmatmul.mubr.f32.gmra.mrb[0].mxu0 %v1623
          %v1625 = vpop.f32.mrb[0].mxu0
          %v1626 = vadd.f32 %v1539, %v1625
          %v1627 = vpop.f32.mrb[0].mxu0
          %1628 = vdwg.mxu0
          %1629 = vmatprep.subr.mxu0 0.0
          %v1630 = vand.u32 %v1442, 4294901760
          %v1631 = vsub.f32 %v1442, %v1630
          %1632 = vmatpush1.msra.mxu0 %v1631
          %1633 = vmatprep.subr.mxu0 0.0
          %v1634 = vand.u32 %v1453, 4294901760
          %v1635 = vsub.f32 %v1453, %v1634
          %1636 = vmatpush1.msra.mxu0 %v1635
          %1637 = vmatprep.subr.mxu0 0.0
          %1638 = vmatpush1.msra.mxu0 0.0
          %1639 = vmatprep.subr.mxu0 0.0
          %1640 = vmatpush1.msra.mxu0 0.0
          %1641 = vmatprep.subr.mxu0 0.0
          %1642 = vmatpush1.msra.mxu0 0.0
          %1643 = vmatprep.subr.mxu0 0.0
          %1644 = vmatpush1.msra.mxu0 0.0
          %1645 = vmatprep.subr.mxu0 0.0
          %1646 = vmatpush1.msra.mxu0 0.0
          %1647 = vmatprep.subr.mxu0 0.0
          %1648 = vmatpush1.msra.mxu0 0.0
          %1649 = vmatprep.subr.mxu0 0.0
          %1650 = vmatpush1.msra.mxu0 0.0
          %1651 = vmatprep.subr.mxu0 0.0
          %1652 = vmatpush1.msra.mxu0 0.0
          %1653 = vmatprep.subr.mxu0 0.0
          %1654 = vmatpush1.msra.mxu0 0.0
          %1655 = vmatprep.subr.mxu0 0.0
          %1656 = vmatpush1.msra.mxu0 0.0
          %1657 = vmatprep.subr.mxu0 0.0
          %1658 = vmatpush1.msra.mxu0 0.0
          %1659 = vmatprep.subr.mxu0 0.0
          %1660 = vmatpush1.msra.mxu0 0.0
          %1661 = vmatprep.subr.mxu0 0.0
          %1662 = vmatpush1.msra.mxu0 0.0
          %1663 = vmatprep.subr.mxu0 0.0
          %1664 = vmatpush1.msra.mxu0 0.0
          %1665 = vmatprep.subr.mxu0 0.0
          %1666 = vmatpush1.msra.mxu0 0.0
          %1667 = vmatprep.subr.mxu0 0.0
          %1668 = vmatpush1.msra.mxu0 0.0
          %1669 = vmatprep.subr.mxu0 0.0
          %1670 = vmatpush1.msra.mxu0 0.0
          %1671 = vmatprep.subr.mxu0 0.0
          %1672 = vmatpush1.msra.mxu0 0.0
          %1673 = vmatprep.subr.mxu0 0.0
          %1674 = vmatpush1.msra.mxu0 0.0
          %1675 = vmatprep.subr.mxu0 0.0
          %1676 = vmatpush1.msra.mxu0 0.0
          %1677 = vmatprep.subr.mxu0 0.0
          %1678 = vmatpush1.msra.mxu0 0.0
          %1679 = vmatprep.subr.mxu0 0.0
          %1680 = vmatpush1.msra.mxu0 0.0
          %1681 = vmatprep.subr.mxu0 0.0
          %1682 = vmatpush1.msra.mxu0 0.0
          %1683 = vmatprep.subr.mxu0 0.0
          %1684 = vmatpush1.msra.mxu0 0.0
          %1685 = vmatprep.subr.mxu0 0.0
          %1686 = vmatpush1.msra.mxu0 0.0
          %1687 = vmatprep.subr.mxu0 0.0
          %1688 = vmatpush1.msra.mxu0 0.0
          %1689 = vmatprep.subr.mxu0 0.0
          %1690 = vmatpush1.msra.mxu0 0.0
          %1691 = vmatprep.subr.mxu0 0.0
          %1692 = vmatpush1.msra.mxu0 0.0
          %1693 = vmatprep.subr.mxu0 0.0
          %1694 = vmatpush1.msra.mxu0 0.0
          %1695 = vmatprep.subr.mxu0 0.0
          %1696 = vmatpush1.msra.mxu0 0.0
          %1697 = vmatprep.mubr.f32.mxu0 0.0
          %v1698 = vand.u32 %v1447, 4294901760
          %v1699 = vsub.f32 %v1447, %v1698
          %1700 = vmatmul.mubr.f32.gmra.mrb[0].mxu0 %v1699
          %v1701 = vpop.f32.mrb[0].mxu0
          %v1702 = vadd.f32 %v1620, %v1701
          %v1703 = vpop.f32.mrb[0].mxu0
          %1704 = vmatprep.mubr.f32.mxu0 0.0
          %v1705 = vand.u32 %v1450, 4294901760
          %v1706 = vsub.f32 %v1450, %v1705
          %1707 = vmatmul.mubr.f32.gmra.mrb[0].mxu0 %v1706
          %v1708 = vpop.f32.mrb[0].mxu0
          %v1709 = vadd.f32 %v1626, %v1708
          %v1710 = vpop.f32.mrb[0].mxu0
          %1711 = vdwg.mxu0
          %1712 = vmatprep.subr.mxu0 0.0
          %v1713 = vand.u32 %v1442, 4294901760
          %1714 = vmatpush1.msra.mxu0 %v1713
          %1715 = vmatprep.subr.mxu0 0.0
          %v1716 = vand.u32 %v1453, 4294901760
          %1717 = vmatpush1.msra.mxu0 %v1716
          %1718 = vmatprep.subr.mxu0 0.0
          %1719 = vmatpush1.msra.mxu0 0.0
          %1720 = vmatprep.subr.mxu0 0.0
          %1721 = vmatpush1.msra.mxu0 0.0
          %1722 = vmatprep.subr.mxu0 0.0
          %1723 = vmatpush1.msra.mxu0 0.0
          %1724 = vmatprep.subr.mxu0 0.0
          %1725 = vmatpush1.msra.mxu0 0.0
          %1726 = vmatprep.subr.mxu0 0.0
          %1727 = vmatpush1.msra.mxu0 0.0
          %1728 = vmatprep.subr.mxu0 0.0
          %1729 = vmatpush1.msra.mxu0 0.0
          %1730 = vmatprep.subr.mxu0 0.0
          %1731 = vmatpush1.msra.mxu0 0.0
          %1732 = vmatprep.subr.mxu0 0.0
          %1733 = vmatpush1.msra.mxu0 0.0
          %1734 = vmatprep.subr.mxu0 0.0
          %1735 = vmatpush1.msra.mxu0 0.0
          %1736 = vmatprep.subr.mxu0 0.0
          %1737 = vmatpush1.msra.mxu0 0.0
          %1738 = vmatprep.subr.mxu0 0.0
          %1739 = vmatpush1.msra.mxu0 0.0
          %1740 = vmatprep.subr.mxu0 0.0
          %1741 = vmatpush1.msra.mxu0 0.0
          %1742 = vmatprep.subr.mxu0 0.0
          %1743 = vmatpush1.msra.mxu0 0.0
          %1744 = vmatprep.subr.mxu0 0.0
          %1745 = vmatpush1.msra.mxu0 0.0
          %1746 = vmatprep.subr.mxu0 0.0
          %1747 = vmatpush1.msra.mxu0 0.0
          %1748 = vmatprep.subr.mxu0 0.0
          %1749 = vmatpush1.msra.mxu0 0.0
          %1750 = vmatprep.subr.mxu0 0.0
          %1751 = vmatpush1.msra.mxu0 0.0
          %1752 = vmatprep.subr.mxu0 0.0
          %1753 = vmatpush1.msra.mxu0 0.0
          %1754 = vmatprep.subr.mxu0 0.0
          %1755 = vmatpush1.msra.mxu0 0.0
          %1756 = vmatprep.subr.mxu0 0.0
          %1757 = vmatpush1.msra.mxu0 0.0
          %1758 = vmatprep.subr.mxu0 0.0
          %1759 = vmatpush1.msra.mxu0 0.0
          %1760 = vmatprep.subr.mxu0 0.0
          %1761 = vmatpush1.msra.mxu0 0.0
          %1762 = vmatprep.subr.mxu0 0.0
          %1763 = vmatpush1.msra.mxu0 0.0
          %1764 = vmatprep.subr.mxu0 0.0
          %1765 = vmatpush1.msra.mxu0 0.0
          %1766 = vmatprep.subr.mxu0 0.0
          %1767 = vmatpush1.msra.mxu0 0.0
          %1768 = vmatprep.subr.mxu0 0.0
          %1769 = vmatpush1.msra.mxu0 0.0
          %1770 = vmatprep.subr.mxu0 0.0
          %1771 = vmatpush1.msra.mxu0 0.0
          %1772 = vmatprep.subr.mxu0 0.0
          %1773 = vmatpush1.msra.mxu0 0.0
          %1774 = vmatprep.subr.mxu0 0.0
          %1775 = vmatpush1.msra.mxu0 0.0
          %1776 = vmatprep.subr.mxu0 0.0
          %1777 = vmatpush1.msra.mxu0 0.0
          %1778 = vmatprep.mubr.f32.mxu0 0.0
          %v1779 = vand.u32 %v1447, 4294901760
          %v1780 = vsub.f32 %v1447, %v1779
          %v1781 = vand.u32 %v1780, 4294901760
          %1782 = vmatmul.mubr.f32.gmra.mrb[0].mxu0 %v1781
          %v1783 = vpop.f32.mrb[0].mxu0
          %v1784 = vadd.f32 %v1702, %v1783
          %v1785 = vpop.f32.mrb[0].mxu0
          %1786 = vmatprep.mubr.f32.mxu0 0.0
          %v1787 = vand.u32 %v1450, 4294901760
          %v1788 = vsub.f32 %v1450, %v1787
          %v1789 = vand.u32 %v1788, 4294901760
          %1790 = vmatmul.mubr.f32.gmra.mrb[0].mxu0 %v1789
          %v1791 = vpop.f32.mrb[0].mxu0
          %v1792 = vadd.f32 %v1709, %v1791
          %v1793 = vpop.f32.mrb[0].mxu0
          %1794 = vdwg.mxu0
          %1795 = vmatprep.subr.mxu0 0.0
          %v1796 = vand.u32 %v1442, 4294901760
          %v1797 = vsub.f32 %v1442, %v1796
          %v1798 = vand.u32 %v1797, 4294901760
          %1799 = vmatpush1.msra.mxu0 %v1798
          %1800 = vmatprep.subr.mxu0 0.0
          %v1801 = vand.u32 %v1453, 4294901760
          %v1802 = vsub.f32 %v1453, %v1801
          %v1803 = vand.u32 %v1802, 4294901760
          %1804 = vmatpush1.msra.mxu0 %v1803
          %1805 = vmatprep.subr.mxu0 0.0
          %1806 = vmatpush1.msra.mxu0 0.0
          %1807 = vmatprep.subr.mxu0 0.0
          %1808 = vmatpush1.msra.mxu0 0.0
          %1809 = vmatprep.subr.mxu0 0.0
          %1810 = vmatpush1.msra.mxu0 0.0
          %1811 = vmatprep.subr.mxu0 0.0
          %1812 = vmatpush1.msra.mxu0 0.0
          %1813 = vmatprep.subr.mxu0 0.0
          %1814 = vmatpush1.msra.mxu0 0.0
          %1815 = vmatprep.subr.mxu0 0.0
          %1816 = vmatpush1.msra.mxu0 0.0
          %1817 = vmatprep.subr.mxu0 0.0
          %1818 = vmatpush1.msra.mxu0 0.0
          %1819 = vmatprep.subr.mxu0 0.0
          %1820 = vmatpush1.msra.mxu0 0.0
          %1821 = vmatprep.subr.mxu0 0.0
          %1822 = vmatpush1.msra.mxu0 0.0
          %1823 = vmatprep.subr.mxu0 0.0
          %1824 = vmatpush1.msra.mxu0 0.0
          %1825 = vmatprep.subr.mxu0 0.0
          %1826 = vmatpush1.msra.mxu0 0.0
          %1827 = vmatprep.subr.mxu0 0.0
          %1828 = vmatpush1.msra.mxu0 0.0
          %1829 = vmatprep.subr.mxu0 0.0
          %1830 = vmatpush1.msra.mxu0 0.0
          %1831 = vmatprep.subr.mxu0 0.0
          %1832 = vmatpush1.msra.mxu0 0.0
          %1833 = vmatprep.subr.mxu0 0.0
          %1834 = vmatpush1.msra.mxu0 0.0
          %1835 = vmatprep.subr.mxu0 0.0
          %1836 = vmatpush1.msra.mxu0 0.0
          %1837 = vmatprep.subr.mxu0 0.0
          %1838 = vmatpush1.msra.mxu0 0.0
          %1839 = vmatprep.subr.mxu0 0.0
          %1840 = vmatpush1.msra.mxu0 0.0
          %1841 = vmatprep.subr.mxu0 0.0
          %1842 = vmatpush1.msra.mxu0 0.0
          %1843 = vmatprep.subr.mxu0 0.0
          %1844 = vmatpush1.msra.mxu0 0.0
          %1845 = vmatprep.subr.mxu0 0.0
          %1846 = vmatpush1.msra.mxu0 0.0
          %1847 = vmatprep.subr.mxu0 0.0
          %1848 = vmatpush1.msra.mxu0 0.0
          %1849 = vmatprep.subr.mxu0 0.0
          %1850 = vmatpush1.msra.mxu0 0.0
          %1851 = vmatprep.subr.mxu0 0.0
          %1852 = vmatpush1.msra.mxu0 0.0
          %1853 = vmatprep.subr.mxu0 0.0
          %1854 = vmatpush1.msra.mxu0 0.0
          %1855 = vmatprep.subr.mxu0 0.0
          %1856 = vmatpush1.msra.mxu0 0.0
          %1857 = vmatprep.subr.mxu0 0.0
          %1858 = vmatpush1.msra.mxu0 0.0
          %1859 = vmatprep.subr.mxu0 0.0
          %1860 = vmatpush1.msra.mxu0 0.0
          %1861 = vmatprep.subr.mxu0 0.0
          %1862 = vmatpush1.msra.mxu0 0.0
          %1863 = vmatprep.subr.mxu0 0.0
          %1864 = vmatpush1.msra.mxu0 0.0
          %1865 = vmatprep.mubr.f32.mxu0 0.0
          %v1866 = vand.u32 %v1447, 4294901760
          %1867 = vmatmul.mubr.f32.gmra.mrb[0].mxu0 %v1866
          %v1868 = vpop.f32.mrb[0].mxu0
          %v1869 = vadd.f32 %v1784, %v1868
          %v1870 = vpop.f32.mrb[0].mxu0
          %1871 = vmatprep.mubr.f32.mxu0 0.0
          %v1872 = vand.u32 %v1450, 4294901760
          %1873 = vmatmul.mubr.f32.gmra.mrb[0].mxu0 %v1872
          %v1874 = vpop.f32.mrb[0].mxu0
          %v1875 = vadd.f32 %v1792, %v1874
          %v1876 = vpop.f32.mrb[0].mxu0
          %1877 = vdwg.mxu0
          %1878 = vmatprep.subr.mxu0 0.0
          %v1879 = vand.u32 %v1442, 4294901760
          %1880 = vmatpush1.msra.mxu0 %v1879
          %1881 = vmatprep.subr.mxu0 0.0
          %v1882 = vand.u32 %v1453, 4294901760
          %1883 = vmatpush1.msra.mxu0 %v1882
          %1884 = vmatprep.subr.mxu0 0.0
          %1885 = vmatpush1.msra.mxu0 0.0
          %1886 = vmatprep.subr.mxu0 0.0
          %1887 = vmatpush1.msra.mxu0 0.0
          %1888 = vmatprep.subr.mxu0 0.0
          %1889 = vmatpush1.msra.mxu0 0.0
          %1890 = vmatprep.subr.mxu0 0.0
          %1891 = vmatpush1.msra.mxu0 0.0
          %1892 = vmatprep.subr.mxu0 0.0
          %1893 = vmatpush1.msra.mxu0 0.0
          %1894 = vmatprep.subr.mxu0 0.0
          %1895 = vmatpush1.msra.mxu0 0.0
          %1896 = vmatprep.subr.mxu0 0.0
          %1897 = vmatpush1.msra.mxu0 0.0
          %1898 = vmatprep.subr.mxu0 0.0
          %1899 = vmatpush1.msra.mxu0 0.0
          %1900 = vmatprep.subr.mxu0 0.0
          %1901 = vmatpush1.msra.mxu0 0.0
          %1902 = vmatprep.subr.mxu0 0.0
          %1903 = vmatpush1.msra.mxu0 0.0
          %1904 = vmatprep.subr.mxu0 0.0
          %1905 = vmatpush1.msra.mxu0 0.0
          %1906 = vmatprep.subr.mxu0 0.0
          %1907 = vmatpush1.msra.mxu0 0.0
          %1908 = vmatprep.subr.mxu0 0.0
          %1909 = vmatpush1.msra.mxu0 0.0
          %1910 = vmatprep.subr.mxu0 0.0
          %1911 = vmatpush1.msra.mxu0 0.0
          %1912 = vmatprep.subr.mxu0 0.0
          %1913 = vmatpush1.msra.mxu0 0.0
          %1914 = vmatprep.subr.mxu0 0.0
          %1915 = vmatpush1.msra.mxu0 0.0
          %1916 = vmatprep.subr.mxu0 0.0
          %1917 = vmatpush1.msra.mxu0 0.0
          %1918 = vmatprep.subr.mxu0 0.0
          %1919 = vmatpush1.msra.mxu0 0.0
          %1920 = vmatprep.subr.mxu0 0.0
          %1921 = vmatpush1.msra.mxu0 0.0
          %1922 = vmatprep.subr.mxu0 0.0
          %1923 = vmatpush1.msra.mxu0 0.0
          %1924 = vmatprep.subr.mxu0 0.0
          %1925 = vmatpush1.msra.mxu0 0.0
          %1926 = vmatprep.subr.mxu0 0.0
          %1927 = vmatpush1.msra.mxu0 0.0
          %1928 = vmatprep.subr.mxu0 0.0
          %1929 = vmatpush1.msra.mxu0 0.0
          %1930 = vmatprep.subr.mxu0 0.0
          %1931 = vmatpush1.msra.mxu0 0.0
          %1932 = vmatprep.subr.mxu0 0.0
          %1933 = vmatpush1.msra.mxu0 0.0
          %1934 = vmatprep.subr.mxu0 0.0
          %1935 = vmatpush1.msra.mxu0 0.0
          %1936 = vmatprep.subr.mxu0 0.0
          %1937 = vmatpush1.msra.mxu0 0.0
          %1938 = vmatprep.subr.mxu0 0.0
          %1939 = vmatpush1.msra.mxu0 0.0
          %1940 = vmatprep.subr.mxu0 0.0
          %1941 = vmatpush1.msra.mxu0 0.0
          %1942 = vmatprep.subr.mxu0 0.0
          %1943 = vmatpush1.msra.mxu0 0.0
          %1944 = vmatprep.mubr.f32.mxu0 0.0
          %v1945 = vand.u32 %v1447, 4294901760
          %1946 = vmatmul.mubr.f32.gmra.mrb[0].mxu0 %v1945
          %v1947 = vpop.f32.mrb[0].mxu0
          %v1948 = vadd.f32 %v1869, %v1947
          %v1949 = vpop.f32.mrb[0].mxu0
          %1950 = vmatprep.mubr.f32.mxu0 0.0
          %v1951 = vand.u32 %v1450, 4294901760
          %1952 = vmatmul.mubr.f32.gmra.mrb[0].mxu0 %v1951
          %v1953 = vpop.f32.mrb[0].mxu0
          %v1954 = vadd.f32 %v1875, %v1953
          %v1955 = vpop.f32.mrb[0].mxu0
          %1956 = vdwg.mxu0
          %v1957 = vld [vmem:[#allocation12] sm:$0xff]
          %v1958 = vld [vmem:[#allocation12 + $0x8] sm:$0x3f]
          %v1960 = vsel %vm332, %v1948, 0
          %v1963 = vsel %vm332, %v1954, 0
          %v1966 = vsel %vm339, %v1958, 0
          %1968 = vmatprep.subr.mxu0 0.0
          %v1969 = vand.u32 %v1957, 4294901760
          %1970 = vmatpush1.msra.mxu0 %v1969
          %1971 = vmatprep.subr.mxu0 0.0
          %v1972 = vand.u32 %v1966, 4294901760
          %1973 = vmatpush1.msra.mxu0 %v1972
          %1974 = vmatprep.subr.mxu0 0.0
          %1975 = vmatpush1.msra.mxu0 0.0
          %1976 = vmatprep.subr.mxu0 0.0
          %1977 = vmatpush1.msra.mxu0 0.0
          %1978 = vmatprep.subr.mxu0 0.0
          %1979 = vmatpush1.msra.mxu0 0.0
          %1980 = vmatprep.subr.mxu0 0.0
          %1981 = vmatpush1.msra.mxu0 0.0
          %1982 = vmatprep.subr.mxu0 0.0
          %1983 = vmatpush1.msra.mxu0 0.0
          %1984 = vmatprep.subr.mxu0 0.0
          %1985 = vmatpush1.msra.mxu0 0.0
          %1986 = vmatprep.subr.mxu0 0.0
          %1987 = vmatpush1.msra.mxu0 0.0
          %1988 = vmatprep.subr.mxu0 0.0
          %1989 = vmatpush1.msra.mxu0 0.0
          %1990 = vmatprep.subr.mxu0 0.0
          %1991 = vmatpush1.msra.mxu0 0.0
          %1992 = vmatprep.subr.mxu0 0.0
          %1993 = vmatpush1.msra.mxu0 0.0
          %1994 = vmatprep.subr.mxu0 0.0
          %1995 = vmatpush1.msra.mxu0 0.0
          %1996 = vmatprep.subr.mxu0 0.0
          %1997 = vmatpush1.msra.mxu0 0.0
          %1998 = vmatprep.subr.mxu0 0.0
          %1999 = vmatpush1.msra.mxu0 0.0
          %2000 = vmatprep.subr.mxu0 0.0
          %2001 = vmatpush1.msra.mxu0 0.0
          %2002 = vmatprep.subr.mxu0 0.0
          %2003 = vmatpush1.msra.mxu0 0.0
          %2004 = vmatprep.subr.mxu0 0.0
          %2005 = vmatpush1.msra.mxu0 0.0
          %2006 = vmatprep.subr.mxu0 0.0
          %2007 = vmatpush1.msra.mxu0 0.0
          %2008 = vmatprep.subr.mxu0 0.0
          %2009 = vmatpush1.msra.mxu0 0.0
          %2010 = vmatprep.subr.mxu0 0.0
          %2011 = vmatpush1.msra.mxu0 0.0
          %2012 = vmatprep.subr.mxu0 0.0
          %2013 = vmatpush1.msra.mxu0 0.0
          %2014 = vmatprep.subr.mxu0 0.0
          %2015 = vmatpush1.msra.mxu0 0.0
          %2016 = vmatprep.subr.mxu0 0.0
          %2017 = vmatpush1.msra.mxu0 0.0
          %2018 = vmatprep.subr.mxu0 0.0
          %2019 = vmatpush1.msra.mxu0 0.0
          %2020 = vmatprep.subr.mxu0 0.0
          %2021 = vmatpush1.msra.mxu0 0.0
          %2022 = vmatprep.subr.mxu0 0.0
          %2023 = vmatpush1.msra.mxu0 0.0
          %2024 = vmatprep.subr.mxu0 0.0
          %2025 = vmatpush1.msra.mxu0 0.0
          %2026 = vmatprep.subr.mxu0 0.0
          %2027 = vmatpush1.msra.mxu0 0.0
          %2028 = vmatprep.subr.mxu0 0.0
          %2029 = vmatpush1.msra.mxu0 0.0
          %2030 = vmatprep.subr.mxu0 0.0
          %2031 = vmatpush1.msra.mxu0 0.0
          %2032 = vmatprep.subr.mxu0 0.0
          %2033 = vmatpush1.msra.mxu0 0.0
          %2034 = vmatprep.mubr.f32.mxu0 0.0
          %v2035 = vand.u32 %v1960, 4294901760
          %v2036 = vsub.f32 %v1960, %v2035
          %v2037 = vand.u32 %v2036, 4294901760
          %v2038 = vsub.f32 %v2036, %v2037
          %v2039 = vand.u32 %v2038, 4294901760
          %2040 = vmatmul.mubr.f32.gmra.mrb[0].mxu0 %v2039
          %v2041 = vpop.f32.mrb[0].mxu0
          %v2042 = vadd.f32 0.0, %v2041
          %v2043 = vpop.f32.mrb[0].mxu0
          %2044 = vmatprep.mubr.f32.mxu0 0.0
          %v2045 = vand.u32 %v1963, 4294901760
          %v2046 = vsub.f32 %v1963, %v2045
          %v2047 = vand.u32 %v2046, 4294901760
          %v2048 = vsub.f32 %v2046, %v2047
          %v2049 = vand.u32 %v2048, 4294901760
          %2050 = vmatmul.mubr.f32.gmra.mrb[0].mxu0 %v2049
          %v2051 = vpop.f32.mrb[0].mxu0
          %v2052 = vadd.f32 0.0, %v2051
          %v2053 = vpop.f32.mrb[0].mxu0
          %2054 = vdwg.mxu0
          %2055 = vmatprep.subr.mxu0 0.0
          %v2056 = vand.u32 %v1957, 4294901760
          %v2057 = vsub.f32 %v1957, %v2056
          %v2058 = vand.u32 %v2057, 4294901760
          %v2059 = vsub.f32 %v2057, %v2058
          %v2060 = vand.u32 %v2059, 4294901760
          %2061 = vmatpush1.msra.mxu0 %v2060
          %2062 = vmatprep.subr.mxu0 0.0
          %v2063 = vand.u32 %v1966, 4294901760
          %v2064 = vsub.f32 %v1966, %v2063
          %v2065 = vand.u32 %v2064, 4294901760
          %v2066 = vsub.f32 %v2064, %v2065
          %v2067 = vand.u32 %v2066, 4294901760
          %2068 = vmatpush1.msra.mxu0 %v2067
          %2069 = vmatprep.subr.mxu0 0.0
          %2070 = vmatpush1.msra.mxu0 0.0
          %2071 = vmatprep.subr.mxu0 0.0
          %2072 = vmatpush1.msra.mxu0 0.0
          %2073 = vmatprep.subr.mxu0 0.0
          %2074 = vmatpush1.msra.mxu0 0.0
          %2075 = vmatprep.subr.mxu0 0.0
          %2076 = vmatpush1.msra.mxu0 0.0
          %2077 = vmatprep.subr.mxu0 0.0
          %2078 = vmatpush1.msra.mxu0 0.0
          %2079 = vmatprep.subr.mxu0 0.0
          %2080 = vmatpush1.msra.mxu0 0.0
          %2081 = vmatprep.subr.mxu0 0.0
          %2082 = vmatpush1.msra.mxu0 0.0
          %2083 = vmatprep.subr.mxu0 0.0
          %2084 = vmatpush1.msra.mxu0 0.0
          %2085 = vmatprep.subr.mxu0 0.0
          %2086 = vmatpush1.msra.mxu0 0.0
          %2087 = vmatprep.subr.mxu0 0.0
          %2088 = vmatpush1.msra.mxu0 0.0
          %2089 = vmatprep.subr.mxu0 0.0
          %2090 = vmatpush1.msra.mxu0 0.0
          %2091 = vmatprep.subr.mxu0 0.0
          %2092 = vmatpush1.msra.mxu0 0.0
          %2093 = vmatprep.subr.mxu0 0.0
          %2094 = vmatpush1.msra.mxu0 0.0
          %2095 = vmatprep.subr.mxu0 0.0
          %2096 = vmatpush1.msra.mxu0 0.0
          %2097 = vmatprep.subr.mxu0 0.0
          %2098 = vmatpush1.msra.mxu0 0.0
          %2099 = vmatprep.subr.mxu0 0.0
          %2100 = vmatpush1.msra.mxu0 0.0
          %2101 = vmatprep.subr.mxu0 0.0
          %2102 = vmatpush1.msra.mxu0 0.0
          %2103 = vmatprep.subr.mxu0 0.0
          %2104 = vmatpush1.msra.mxu0 0.0
          %2105 = vmatprep.subr.mxu0 0.0
          %2106 = vmatpush1.msra.mxu0 0.0
          %2107 = vmatprep.subr.mxu0 0.0
          %2108 = vmatpush1.msra.mxu0 0.0
          %2109 = vmatprep.subr.mxu0 0.0
          %2110 = vmatpush1.msra.mxu0 0.0
          %2111 = vmatprep.subr.mxu0 0.0
          %2112 = vmatpush1.msra.mxu0 0.0
          %2113 = vmatprep.subr.mxu0 0.0
          %2114 = vmatpush1.msra.mxu0 0.0
          %2115 = vmatprep.subr.mxu0 0.0
          %2116 = vmatpush1.msra.mxu0 0.0
          %2117 = vmatprep.subr.mxu0 0.0
          %2118 = vmatpush1.msra.mxu0 0.0
          %2119 = vmatprep.subr.mxu0 0.0
          %2120 = vmatpush1.msra.mxu0 0.0
          %2121 = vmatprep.subr.mxu0 0.0
          %2122 = vmatpush1.msra.mxu0 0.0
          %2123 = vmatprep.subr.mxu0 0.0
          %2124 = vmatpush1.msra.mxu0 0.0
          %2125 = vmatprep.subr.mxu0 0.0
          %2126 = vmatpush1.msra.mxu0 0.0
          %2127 = vmatprep.subr.mxu0 0.0
          %2128 = vmatpush1.msra.mxu0 0.0
          %2129 = vmatprep.mubr.f32.mxu0 0.0
          %v2130 = vand.u32 %v1960, 4294901760
          %2131 = vmatmul.mubr.f32.gmra.mrb[0].mxu0 %v2130
          %v2132 = vpop.f32.mrb[0].mxu0
          %v2133 = vadd.f32 %v2042, %v2132
          %v2134 = vpop.f32.mrb[0].mxu0
          %2135 = vmatprep.mubr.f32.mxu0 0.0
          %v2136 = vand.u32 %v1963, 4294901760
          %2137 = vmatmul.mubr.f32.gmra.mrb[0].mxu0 %v2136
          %v2138 = vpop.f32.mrb[0].mxu0
          %v2139 = vadd.f32 %v2052, %v2138
          %v2140 = vpop.f32.mrb[0].mxu0
          %2141 = vdwg.mxu0
          %2142 = vmatprep.subr.mxu0 0.0
          %v2143 = vand.u32 %v1957, 4294901760
          %v2144 = vsub.f32 %v1957, %v2143
          %2145 = vmatpush1.msra.mxu0 %v2144
          %2146 = vmatprep.subr.mxu0 0.0
          %v2147 = vand.u32 %v1966, 4294901760
          %v2148 = vsub.f32 %v1966, %v2147
          %2149 = vmatpush1.msra.mxu0 %v2148
          %2150 = vmatprep.subr.mxu0 0.0
          %2151 = vmatpush1.msra.mxu0 0.0
          %2152 = vmatprep.subr.mxu0 0.0
          %2153 = vmatpush1.msra.mxu0 0.0
          %2154 = vmatprep.subr.mxu0 0.0
          %2155 = vmatpush1.msra.mxu0 0.0
          %2156 = vmatprep.subr.mxu0 0.0
          %2157 = vmatpush1.msra.mxu0 0.0
          %2158 = vmatprep.subr.mxu0 0.0
          %2159 = vmatpush1.msra.mxu0 0.0
          %2160 = vmatprep.subr.mxu0 0.0
          %2161 = vmatpush1.msra.mxu0 0.0
          %2162 = vmatprep.subr.mxu0 0.0
          %2163 = vmatpush1.msra.mxu0 0.0
          %2164 = vmatprep.subr.mxu0 0.0
          %2165 = vmatpush1.msra.mxu0 0.0
          %2166 = vmatprep.subr.mxu0 0.0
          %2167 = vmatpush1.msra.mxu0 0.0
          %2168 = vmatprep.subr.mxu0 0.0
          %2169 = vmatpush1.msra.mxu0 0.0
          %2170 = vmatprep.subr.mxu0 0.0
          %2171 = vmatpush1.msra.mxu0 0.0
          %2172 = vmatprep.subr.mxu0 0.0
          %2173 = vmatpush1.msra.mxu0 0.0
          %2174 = vmatprep.subr.mxu0 0.0
          %2175 = vmatpush1.msra.mxu0 0.0
          %2176 = vmatprep.subr.mxu0 0.0
          %2177 = vmatpush1.msra.mxu0 0.0
          %2178 = vmatprep.subr.mxu0 0.0
          %2179 = vmatpush1.msra.mxu0 0.0
          %2180 = vmatprep.subr.mxu0 0.0
          %2181 = vmatpush1.msra.mxu0 0.0
          %2182 = vmatprep.subr.mxu0 0.0
          %2183 = vmatpush1.msra.mxu0 0.0
          %2184 = vmatprep.subr.mxu0 0.0
          %2185 = vmatpush1.msra.mxu0 0.0
          %2186 = vmatprep.subr.mxu0 0.0
          %2187 = vmatpush1.msra.mxu0 0.0
          %2188 = vmatprep.subr.mxu0 0.0
          %2189 = vmatpush1.msra.mxu0 0.0
          %2190 = vmatprep.subr.mxu0 0.0
          %2191 = vmatpush1.msra.mxu0 0.0
          %2192 = vmatprep.subr.mxu0 0.0
          %2193 = vmatpush1.msra.mxu0 0.0
          %2194 = vmatprep.subr.mxu0 0.0
          %2195 = vmatpush1.msra.mxu0 0.0
          %2196 = vmatprep.subr.mxu0 0.0
          %2197 = vmatpush1.msra.mxu0 0.0
          %2198 = vmatprep.subr.mxu0 0.0
          %2199 = vmatpush1.msra.mxu0 0.0
          %2200 = vmatprep.subr.mxu0 0.0
          %2201 = vmatpush1.msra.mxu0 0.0
          %2202 = vmatprep.subr.mxu0 0.0
          %2203 = vmatpush1.msra.mxu0 0.0
          %2204 = vmatprep.subr.mxu0 0.0
          %2205 = vmatpush1.msra.mxu0 0.0
          %2206 = vmatprep.subr.mxu0 0.0
          %2207 = vmatpush1.msra.mxu0 0.0
          %2208 = vmatprep.subr.mxu0 0.0
          %2209 = vmatpush1.msra.mxu0 0.0
          %2210 = vmatprep.mubr.f32.mxu0 0.0
          %v2211 = vand.u32 %v1960, 4294901760
          %v2212 = vsub.f32 %v1960, %v2211
          %2213 = vmatmul.mubr.f32.gmra.mrb[0].mxu0 %v2212
          %v2214 = vpop.f32.mrb[0].mxu0
          %v2215 = vadd.f32 %v2133, %v2214
          %v2216 = vpop.f32.mrb[0].mxu0
          %2217 = vmatprep.mubr.f32.mxu0 0.0
          %v2218 = vand.u32 %v1963, 4294901760
          %v2219 = vsub.f32 %v1963, %v2218
          %2220 = vmatmul.mubr.f32.gmra.mrb[0].mxu0 %v2219
          %v2221 = vpop.f32.mrb[0].mxu0
          %v2222 = vadd.f32 %v2139, %v2221
          %v2223 = vpop.f32.mrb[0].mxu0
          %2224 = vdwg.mxu0
          %2225 = vmatprep.subr.mxu0 0.0
          %v2226 = vand.u32 %v1957, 4294901760
          %2227 = vmatpush1.msra.mxu0 %v2226
          %2228 = vmatprep.subr.mxu0 0.0
          %v2229 = vand.u32 %v1966, 4294901760
          %2230 = vmatpush1.msra.mxu0 %v2229
          %2231 = vmatprep.subr.mxu0 0.0
          %2232 = vmatpush1.msra.mxu0 0.0
          %2233 = vmatprep.subr.mxu0 0.0
          %2234 = vmatpush1.msra.mxu0 0.0
          %2235 = vmatprep.subr.mxu0 0.0
          %2236 = vmatpush1.msra.mxu0 0.0
          %2237 = vmatprep.subr.mxu0 0.0
          %2238 = vmatpush1.msra.mxu0 0.0
          %2239 = vmatprep.subr.mxu0 0.0
          %2240 = vmatpush1.msra.mxu0 0.0
          %2241 = vmatprep.subr.mxu0 0.0
          %2242 = vmatpush1.msra.mxu0 0.0
          %2243 = vmatprep.subr.mxu0 0.0
          %2244 = vmatpush1.msra.mxu0 0.0
          %2245 = vmatprep.subr.mxu0 0.0
          %2246 = vmatpush1.msra.mxu0 0.0
          %2247 = vmatprep.subr.mxu0 0.0
          %2248 = vmatpush1.msra.mxu0 0.0
          %2249 = vmatprep.subr.mxu0 0.0
          %2250 = vmatpush1.msra.mxu0 0.0
          %2251 = vmatprep.subr.mxu0 0.0
          %2252 = vmatpush1.msra.mxu0 0.0
          %2253 = vmatprep.subr.mxu0 0.0
          %2254 = vmatpush1.msra.mxu0 0.0
          %2255 = vmatprep.subr.mxu0 0.0
          %2256 = vmatpush1.msra.mxu0 0.0
          %2257 = vmatprep.subr.mxu0 0.0
          %2258 = vmatpush1.msra.mxu0 0.0
          %2259 = vmatprep.subr.mxu0 0.0
          %2260 = vmatpush1.msra.mxu0 0.0
          %2261 = vmatprep.subr.mxu0 0.0
          %2262 = vmatpush1.msra.mxu0 0.0
          %2263 = vmatprep.subr.mxu0 0.0
          %2264 = vmatpush1.msra.mxu0 0.0
          %2265 = vmatprep.subr.mxu0 0.0
          %2266 = vmatpush1.msra.mxu0 0.0
          %2267 = vmatprep.subr.mxu0 0.0
          %2268 = vmatpush1.msra.mxu0 0.0
          %2269 = vmatprep.subr.mxu0 0.0
          %2270 = vmatpush1.msra.mxu0 0.0
          %2271 = vmatprep.subr.mxu0 0.0
          %2272 = vmatpush1.msra.mxu0 0.0
          %2273 = vmatprep.subr.mxu0 0.0
          %2274 = vmatpush1.msra.mxu0 0.0
          %2275 = vmatprep.subr.mxu0 0.0
          %2276 = vmatpush1.msra.mxu0 0.0
          %2277 = vmatprep.subr.mxu0 0.0
          %2278 = vmatpush1.msra.mxu0 0.0
          %2279 = vmatprep.subr.mxu0 0.0
          %2280 = vmatpush1.msra.mxu0 0.0
          %2281 = vmatprep.subr.mxu0 0.0
          %2282 = vmatpush1.msra.mxu0 0.0
          %2283 = vmatprep.subr.mxu0 0.0
          %2284 = vmatpush1.msra.mxu0 0.0
          %2285 = vmatprep.subr.mxu0 0.0
          %2286 = vmatpush1.msra.mxu0 0.0
          %2287 = vmatprep.subr.mxu0 0.0
          %2288 = vmatpush1.msra.mxu0 0.0
          %2289 = vmatprep.subr.mxu0 0.0
          %2290 = vmatpush1.msra.mxu0 0.0
          %2291 = vmatprep.mubr.f32.mxu0 0.0
          %v2292 = vand.u32 %v1960, 4294901760
          %v2293 = vsub.f32 %v1960, %v2292
          %v2294 = vand.u32 %v2293, 4294901760
          %2295 = vmatmul.mubr.f32.gmra.mrb[0].mxu0 %v2294
          %v2296 = vpop.f32.mrb[0].mxu0
          %v2297 = vadd.f32 %v2215, %v2296
          %v2298 = vpop.f32.mrb[0].mxu0
          %2299 = vmatprep.mubr.f32.mxu0 0.0
          %v2300 = vand.u32 %v1963, 4294901760
          %v2301 = vsub.f32 %v1963, %v2300
          %v2302 = vand.u32 %v2301, 4294901760
          %2303 = vmatmul.mubr.f32.gmra.mrb[0].mxu0 %v2302
          %v2304 = vpop.f32.mrb[0].mxu0
          %v2305 = vadd.f32 %v2222, %v2304
          %v2306 = vpop.f32.mrb[0].mxu0
          %2307 = vdwg.mxu0
          %2308 = vmatprep.subr.mxu0 0.0
          %v2309 = vand.u32 %v1957, 4294901760
          %v2310 = vsub.f32 %v1957, %v2309
          %v2311 = vand.u32 %v2310, 4294901760
          %2312 = vmatpush1.msra.mxu0 %v2311
          %2313 = vmatprep.subr.mxu0 0.0
          %v2314 = vand.u32 %v1966, 4294901760
          %v2315 = vsub.f32 %v1966, %v2314
          %v2316 = vand.u32 %v2315, 4294901760
          %2317 = vmatpush1.msra.mxu0 %v2316
          %2318 = vmatprep.subr.mxu0 0.0
          %2319 = vmatpush1.msra.mxu0 0.0
          %2320 = vmatprep.subr.mxu0 0.0
          %2321 = vmatpush1.msra.mxu0 0.0
          %2322 = vmatprep.subr.mxu0 0.0
          %2323 = vmatpush1.msra.mxu0 0.0
          %2324 = vmatprep.subr.mxu0 0.0
          %2325 = vmatpush1.msra.mxu0 0.0
          %2326 = vmatprep.subr.mxu0 0.0
          %2327 = vmatpush1.msra.mxu0 0.0
          %2328 = vmatprep.subr.mxu0 0.0
          %2329 = vmatpush1.msra.mxu0 0.0
          %2330 = vmatprep.subr.mxu0 0.0
          %2331 = vmatpush1.msra.mxu0 0.0
          %2332 = vmatprep.subr.mxu0 0.0
          %2333 = vmatpush1.msra.mxu0 0.0
          %2334 = vmatprep.subr.mxu0 0.0
          %2335 = vmatpush1.msra.mxu0 0.0
          %2336 = vmatprep.subr.mxu0 0.0
          %2337 = vmatpush1.msra.mxu0 0.0
          %2338 = vmatprep.subr.mxu0 0.0
          %2339 = vmatpush1.msra.mxu0 0.0
          %2340 = vmatprep.subr.mxu0 0.0
          %2341 = vmatpush1.msra.mxu0 0.0
          %2342 = vmatprep.subr.mxu0 0.0
          %2343 = vmatpush1.msra.mxu0 0.0
          %2344 = vmatprep.subr.mxu0 0.0
          %2345 = vmatpush1.msra.mxu0 0.0
          %2346 = vmatprep.subr.mxu0 0.0
          %2347 = vmatpush1.msra.mxu0 0.0
          %2348 = vmatprep.subr.mxu0 0.0
          %2349 = vmatpush1.msra.mxu0 0.0
          %2350 = vmatprep.subr.mxu0 0.0
          %2351 = vmatpush1.msra.mxu0 0.0
          %2352 = vmatprep.subr.mxu0 0.0
          %2353 = vmatpush1.msra.mxu0 0.0
          %2354 = vmatprep.subr.mxu0 0.0
          %2355 = vmatpush1.msra.mxu0 0.0
          %2356 = vmatprep.subr.mxu0 0.0
          %2357 = vmatpush1.msra.mxu0 0.0
          %2358 = vmatprep.subr.mxu0 0.0
          %2359 = vmatpush1.msra.mxu0 0.0
          %2360 = vmatprep.subr.mxu0 0.0
          %2361 = vmatpush1.msra.mxu0 0.0
          %2362 = vmatprep.subr.mxu0 0.0
          %2363 = vmatpush1.msra.mxu0 0.0
          %2364 = vmatprep.subr.mxu0 0.0
          %2365 = vmatpush1.msra.mxu0 0.0
          %2366 = vmatprep.subr.mxu0 0.0
          %2367 = vmatpush1.msra.mxu0 0.0
          %2368 = vmatprep.subr.mxu0 0.0
          %2369 = vmatpush1.msra.mxu0 0.0
          %2370 = vmatprep.subr.mxu0 0.0
          %2371 = vmatpush1.msra.mxu0 0.0
          %2372 = vmatprep.subr.mxu0 0.0
          %2373 = vmatpush1.msra.mxu0 0.0
          %2374 = vmatprep.subr.mxu0 0.0
          %2375 = vmatpush1.msra.mxu0 0.0
          %2376 = vmatprep.subr.mxu0 0.0
          %2377 = vmatpush1.msra.mxu0 0.0
          %2378 = vmatprep.mubr.f32.mxu0 0.0
          %v2379 = vand.u32 %v1960, 4294901760
          %2380 = vmatmul.mubr.f32.gmra.mrb[0].mxu0 %v2379
          %v2381 = vpop.f32.mrb[0].mxu0
          %v2382 = vadd.f32 %v2297, %v2381
          %v2383 = vpop.f32.mrb[0].mxu0
          %2384 = vmatprep.mubr.f32.mxu0 0.0
          %v2385 = vand.u32 %v1963, 4294901760
          %2386 = vmatmul.mubr.f32.gmra.mrb[0].mxu0 %v2385
          %v2387 = vpop.f32.mrb[0].mxu0
          %v2388 = vadd.f32 %v2305, %v2387
          %v2389 = vpop.f32.mrb[0].mxu0
          %2390 = vdwg.mxu0
          %2391 = vmatprep.subr.mxu0 0.0
          %v2392 = vand.u32 %v1957, 4294901760
          %2393 = vmatpush1.msra.mxu0 %v2392
          %2394 = vmatprep.subr.mxu0 0.0
          %v2395 = vand.u32 %v1966, 4294901760
          %2396 = vmatpush1.msra.mxu0 %v2395
          %2397 = vmatprep.subr.mxu0 0.0
          %2398 = vmatpush1.msra.mxu0 0.0
          %2399 = vmatprep.subr.mxu0 0.0
          %2400 = vmatpush1.msra.mxu0 0.0
          %2401 = vmatprep.subr.mxu0 0.0
          %2402 = vmatpush1.msra.mxu0 0.0
          %2403 = vmatprep.subr.mxu0 0.0
          %2404 = vmatpush1.msra.mxu0 0.0
          %2405 = vmatprep.subr.mxu0 0.0
          %2406 = vmatpush1.msra.mxu0 0.0
          %2407 = vmatprep.subr.mxu0 0.0
          %2408 = vmatpush1.msra.mxu0 0.0
          %2409 = vmatprep.subr.mxu0 0.0
          %2410 = vmatpush1.msra.mxu0 0.0
          %2411 = vmatprep.subr.mxu0 0.0
          %2412 = vmatpush1.msra.mxu0 0.0
          %2413 = vmatprep.subr.mxu0 0.0
          %2414 = vmatpush1.msra.mxu0 0.0
          %2415 = vmatprep.subr.mxu0 0.0
          %2416 = vmatpush1.msra.mxu0 0.0
          %2417 = vmatprep.subr.mxu0 0.0
          %2418 = vmatpush1.msra.mxu0 0.0
          %2419 = vmatprep.subr.mxu0 0.0
          %2420 = vmatpush1.msra.mxu0 0.0
          %2421 = vmatprep.subr.mxu0 0.0
          %2422 = vmatpush1.msra.mxu0 0.0
          %2423 = vmatprep.subr.mxu0 0.0
          %2424 = vmatpush1.msra.mxu0 0.0
          %2425 = vmatprep.subr.mxu0 0.0
          %2426 = vmatpush1.msra.mxu0 0.0
          %2427 = vmatprep.subr.mxu0 0.0
          %2428 = vmatpush1.msra.mxu0 0.0
          %2429 = vmatprep.subr.mxu0 0.0
          %2430 = vmatpush1.msra.mxu0 0.0
          %2431 = vmatprep.subr.mxu0 0.0
          %2432 = vmatpush1.msra.mxu0 0.0
          %2433 = vmatprep.subr.mxu0 0.0
          %2434 = vmatpush1.msra.mxu0 0.0
          %2435 = vmatprep.subr.mxu0 0.0
          %2436 = vmatpush1.msra.mxu0 0.0
          %2437 = vmatprep.subr.mxu0 0.0
          %2438 = vmatpush1.msra.mxu0 0.0
          %2439 = vmatprep.subr.mxu0 0.0
          %2440 = vmatpush1.msra.mxu0 0.0
          %2441 = vmatprep.subr.mxu0 0.0
          %2442 = vmatpush1.msra.mxu0 0.0
          %2443 = vmatprep.subr.mxu0 0.0
          %2444 = vmatpush1.msra.mxu0 0.0
          %2445 = vmatprep.subr.mxu0 0.0
          %2446 = vmatpush1.msra.mxu0 0.0
          %2447 = vmatprep.subr.mxu0 0.0
          %2448 = vmatpush1.msra.mxu0 0.0
          %2449 = vmatprep.subr.mxu0 0.0
          %2450 = vmatpush1.msra.mxu0 0.0
          %2451 = vmatprep.subr.mxu0 0.0
          %2452 = vmatpush1.msra.mxu0 0.0
          %2453 = vmatprep.subr.mxu0 0.0
          %2454 = vmatpush1.msra.mxu0 0.0
          %2455 = vmatprep.subr.mxu0 0.0
          %2456 = vmatpush1.msra.mxu0 0.0
          %2457 = vmatprep.mubr.f32.mxu0 0.0
          %v2458 = vand.u32 %v1960, 4294901760
          %2459 = vmatmul.mubr.f32.gmra.mrb[0].mxu0 %v2458
          %v2460 = vpop.f32.mrb[0].mxu0
          %v2461 = vadd.f32 %v2382, %v2460
          %v2462 = vpop.f32.mrb[0].mxu0
          %2463 = vmatprep.mubr.f32.mxu0 0.0
          %v2464 = vand.u32 %v1963, 4294901760
          %2465 = vmatmul.mubr.f32.gmra.mrb[0].mxu0 %v2464
          %v2466 = vpop.f32.mrb[0].mxu0
          %v2467 = vadd.f32 %v2388, %v2466
          %v2468 = vpop.f32.mrb[0].mxu0
          %2469 = vdwg.mxu0
          %v2470 = vmax.f32 %v1349, %v2461
          %v2471 = vmax.f32 %v1355, %v2467
          %s2472 = sadd.s32 32, %s236
          %s2473 = scalar_lea.vmem %s185, %s2472 [#allocation8]
          %v2474 = vld [vmem:[%s2473] sm:$0xff]
          %v2475 = vld [vmem:[%s2473 + $0x8] sm:$0xff]
          %2478 = vrot.lane.b32.xlu0 %v2474, 2
          %v2479 = vpop.permute.xlu0 %2478
          %2480 = vrot.lane.b32.xlu0 %v2475, 2
          %v2481 = vpop.permute.xlu0 %2480
          %2484 = vst.msk [vmem:[#allocation2 + $0x2] sm:$0xff] %vm248, %v2479
          %2485 = vst.msk [vmem:[#allocation2 + $0xa] sm:$0xff] %vm248, %v2481
          %v2486 = vld [vmem:[#allocation2] sm:$0xff]
          %v2487 = vld [vmem:[#allocation2 + $0x8] sm:$0xff]
          %v2488 = vld [vmem:[#allocation2 + $0x10] sm:$0x7]
          %v2489 = vld [vmem:[#allocation2 + $0x1] sm:$0xff]
          %v2490 = vld [vmem:[#allocation2 + $0x9] sm:$0xff]
          %v2491 = vld [vmem:[#allocation2 + $0x11] sm:$0x7]
          %v2492 = vmax.f32 %v2486, %v2489
          %v2493 = vmax.f32 %v2487, %v2490
          %v2494 = vmax.f32 %v2488, %v2491
          %2495 = vst.msk [vmem:[#allocation3] sm:$0xff] %vm225, %v2492
          %2496 = vst.msk [vmem:[#allocation3 + $0x8] sm:$0xff] %vm225, %v2493
          %2497 = vst.msk [vmem:[#allocation3 + $0x10] sm:$0x7] %vm262, %v2494
          %v2498 = vld [vmem:[#allocation3] sm:$0xff]
          %v2499 = vld [vmem:[#allocation3 + $0x8] sm:$0xff]
          %v2500 = vld [vmem:[#allocation3 + $0x10] sm:$0x1]
          %v2501 = vld [vmem:[#allocation3 + $0x2] sm:$0xff]
          %v2502 = vld [vmem:[#allocation3 + $0xa] sm:$0xff]
          %v2503 = vld [vmem:[#allocation3 + $0x12] sm:$0x1]
          %v2504 = vmax.f32 %v2498, %v2501
          %v2505 = vmax.f32 %v2499, %v2502
          %v2506 = vmax.f32 %v2500, %v2503
          %2507 = vst.msk [vmem:[#allocation4] sm:$0xff] %vm225, %v2504
          %2508 = vst.msk [vmem:[#allocation4 + $0x8] sm:$0xff] %vm225, %v2505
          %2509 = vst.msk [vmem:[#allocation4 + $0x10] sm:$0x1] %vm275, %v2506
          %v2510 = vld [vmem:[#allocation4] sm:$0xff]
          %v2511 = vld [vmem:[#allocation4 + $0x8] sm:$0x3f]
          %v2512 = vld [vmem:[#allocation4 + $0x3] sm:$0xff]
          %v2513 = vld [vmem:[#allocation4 + $0xb] sm:$0x3f]
          %v2514 = vmax.f32 %v2510, %v2512
          %v2515 = vmax.f32 %v2511, %v2513
          %2516 = vst.msk [vmem:[#allocation5] sm:$0xff] %vm225, %v2514
          %2517 = vst.msk [vmem:[#allocation5 + $0x8] sm:$0x3f] %vm284, %v2515
          %v2518 = vld [vmem:[#allocation5] sm:$0xff]
          %v2519 = vld [vmem:[#allocation5 + $0x8] sm:$0x3f]
          %2522 = vrot.lane.b32.xlu0 %v2518, 127
          %v2523 = vpop.permute.xlu0 %2522
          %2524 = vrot.lane.b32.xlu0 %v2519, 127
          %v2525 = vpop.permute.xlu0 %2524
          %v2528 = vmax.f32 %v2518, %v2523
          %v2529 = vmax.f32 %v2519, %v2525
          %2530 = vst.msk [vmem:[#allocation6] sm:$0xff] %vm298, %v2528
          %2531 = vst.msk [vmem:[#allocation6 + $0x8] sm:$0x3f] %vm300, %v2529
          %v2532 = vld [vmem:[#allocation6] sm:$0xff]
          %v2533 = vld [vmem:[#allocation6 + $0x8] sm:$0x3f]
          %2536 = vrot.lane.b32.xlu0 %v2532, 126
          %v2537 = vpop.permute.xlu0 %2536
          %2538 = vrot.lane.b32.xlu0 %v2533, 126
          %v2539 = vpop.permute.xlu0 %2538
          %v2542 = vmax.f32 %v2532, %v2537
          %v2543 = vmax.f32 %v2533, %v2539
          %2544 = vst.msk [vmem:[#allocation7] sm:$0xff] %vm314, %v2542
          %2545 = vst.msk [vmem:[#allocation7 + $0x8] sm:$0x3f] %vm316, %v2543
          %v2546 = vld [vmem:[#allocation7] sm:$0xff]
          %v2547 = vld [vmem:[#allocation7 + $0x8] sm:$0x3f]
          %2550 = vrot.lane.b32.xlu0 %v2546, 125
          %v2551 = vpop.permute.xlu0 %2550
          %2552 = vrot.lane.b32.xlu0 %v2547, 125
          %v2553 = vpop.permute.xlu0 %2552
          %v2556 = vmax.f32 %v2546, %v2551
          %v2557 = vmax.f32 %v2547, %v2553
          %v2558 = vld [vmem:[#allocation10] sm:$0xff]
          %v2559 = vld [vmem:[#allocation10 + $0x8] sm:$0x3f]
          %v2561 = vsel %vm332, %v2558, 0
          %v2564 = vsel %vm332, %v2559, 0
          %v2567 = vsel %vm339, %v2557, 0
          %2569 = vmatprep.subr.mxu0 0.0
          %v2570 = vand.u32 %v2556, 4294901760
          %2571 = vmatpush1.msra.mxu0 %v2570
          %2572 = vmatprep.subr.mxu0 0.0
          %v2573 = vand.u32 %v2567, 4294901760
          %2574 = vmatpush1.msra.mxu0 %v2573
          %2575 = vmatprep.subr.mxu0 0.0
          %2576 = vmatpush1.msra.mxu0 0.0
          %2577 = vmatprep.subr.mxu0 0.0
          %2578 = vmatpush1.msra.mxu0 0.0
          %2579 = vmatprep.subr.mxu0 0.0
          %2580 = vmatpush1.msra.mxu0 0.0
          %2581 = vmatprep.subr.mxu0 0.0
          %2582 = vmatpush1.msra.mxu0 0.0
          %2583 = vmatprep.subr.mxu0 0.0
          %2584 = vmatpush1.msra.mxu0 0.0
          %2585 = vmatprep.subr.mxu0 0.0
          %2586 = vmatpush1.msra.mxu0 0.0
          %2587 = vmatprep.subr.mxu0 0.0
          %2588 = vmatpush1.msra.mxu0 0.0
          %2589 = vmatprep.subr.mxu0 0.0
          %2590 = vmatpush1.msra.mxu0 0.0
          %2591 = vmatprep.subr.mxu0 0.0
          %2592 = vmatpush1.msra.mxu0 0.0
          %2593 = vmatprep.subr.mxu0 0.0
          %2594 = vmatpush1.msra.mxu0 0.0
          %2595 = vmatprep.subr.mxu0 0.0
          %2596 = vmatpush1.msra.mxu0 0.0
          %2597 = vmatprep.subr.mxu0 0.0
          %2598 = vmatpush1.msra.mxu0 0.0
          %2599 = vmatprep.subr.mxu0 0.0
          %2600 = vmatpush1.msra.mxu0 0.0
          %2601 = vmatprep.subr.mxu0 0.0
          %2602 = vmatpush1.msra.mxu0 0.0
          %2603 = vmatprep.subr.mxu0 0.0
          %2604 = vmatpush1.msra.mxu0 0.0
          %2605 = vmatprep.subr.mxu0 0.0
          %2606 = vmatpush1.msra.mxu0 0.0
          %2607 = vmatprep.subr.mxu0 0.0
          %2608 = vmatpush1.msra.mxu0 0.0
          %2609 = vmatprep.subr.mxu0 0.0
          %2610 = vmatpush1.msra.mxu0 0.0
          %2611 = vmatprep.subr.mxu0 0.0
          %2612 = vmatpush1.msra.mxu0 0.0
          %2613 = vmatprep.subr.mxu0 0.0
          %2614 = vmatpush1.msra.mxu0 0.0
          %2615 = vmatprep.subr.mxu0 0.0
          %2616 = vmatpush1.msra.mxu0 0.0
          %2617 = vmatprep.subr.mxu0 0.0
          %2618 = vmatpush1.msra.mxu0 0.0
          %2619 = vmatprep.subr.mxu0 0.0
          %2620 = vmatpush1.msra.mxu0 0.0
          %2621 = vmatprep.subr.mxu0 0.0
          %2622 = vmatpush1.msra.mxu0 0.0
          %2623 = vmatprep.subr.mxu0 0.0
          %2624 = vmatpush1.msra.mxu0 0.0
          %2625 = vmatprep.subr.mxu0 0.0
          %2626 = vmatpush1.msra.mxu0 0.0
          %2627 = vmatprep.subr.mxu0 0.0
          %2628 = vmatpush1.msra.mxu0 0.0
          %2629 = vmatprep.subr.mxu0 0.0
          %2630 = vmatpush1.msra.mxu0 0.0
          %2631 = vmatprep.subr.mxu0 0.0
          %2632 = vmatpush1.msra.mxu0 0.0
          %2633 = vmatprep.subr.mxu0 0.0
          %2634 = vmatpush1.msra.mxu0 0.0
          %2635 = vmatprep.mubr.f32.mxu0 0.0
          %v2636 = vand.u32 %v2561, 4294901760
          %v2637 = vsub.f32 %v2561, %v2636
          %v2638 = vand.u32 %v2637, 4294901760
          %v2639 = vsub.f32 %v2637, %v2638
          %v2640 = vand.u32 %v2639, 4294901760
          %2641 = vmatmul.mubr.f32.gmra.mrb[0].mxu0 %v2640
          %v2642 = vpop.f32.mrb[0].mxu0
          %v2643 = vadd.f32 0.0, %v2642
          %v2644 = vpop.f32.mrb[0].mxu0
          %2645 = vmatprep.mubr.f32.mxu0 0.0
          %v2646 = vand.u32 %v2564, 4294901760
          %v2647 = vsub.f32 %v2564, %v2646
          %v2648 = vand.u32 %v2647, 4294901760
          %v2649 = vsub.f32 %v2647, %v2648
          %v2650 = vand.u32 %v2649, 4294901760
          %2651 = vmatmul.mubr.f32.gmra.mrb[0].mxu0 %v2650
          %v2652 = vpop.f32.mrb[0].mxu0
          %v2653 = vadd.f32 0.0, %v2652
          %v2654 = vpop.f32.mrb[0].mxu0
          %2655 = vdwg.mxu0
          %2656 = vmatprep.subr.mxu0 0.0
          %v2657 = vand.u32 %v2556, 4294901760
          %v2658 = vsub.f32 %v2556, %v2657
          %v2659 = vand.u32 %v2658, 4294901760
          %v2660 = vsub.f32 %v2658, %v2659
          %v2661 = vand.u32 %v2660, 4294901760
          %2662 = vmatpush1.msra.mxu0 %v2661
          %2663 = vmatprep.subr.mxu0 0.0
          %v2664 = vand.u32 %v2567, 4294901760
          %v2665 = vsub.f32 %v2567, %v2664
          %v2666 = vand.u32 %v2665, 4294901760
          %v2667 = vsub.f32 %v2665, %v2666
          %v2668 = vand.u32 %v2667, 4294901760
          %2669 = vmatpush1.msra.mxu0 %v2668
          %2670 = vmatprep.subr.mxu0 0.0
          %2671 = vmatpush1.msra.mxu0 0.0
          %2672 = vmatprep.subr.mxu0 0.0
          %2673 = vmatpush1.msra.mxu0 0.0
          %2674 = vmatprep.subr.mxu0 0.0
          %2675 = vmatpush1.msra.mxu0 0.0
          %2676 = vmatprep.subr.mxu0 0.0
          %2677 = vmatpush1.msra.mxu0 0.0
          %2678 = vmatprep.subr.mxu0 0.0
          %2679 = vmatpush1.msra.mxu0 0.0
          %2680 = vmatprep.subr.mxu0 0.0
          %2681 = vmatpush1.msra.mxu0 0.0
          %2682 = vmatprep.subr.mxu0 0.0
          %2683 = vmatpush1.msra.mxu0 0.0
          %2684 = vmatprep.subr.mxu0 0.0
          %2685 = vmatpush1.msra.mxu0 0.0
          %2686 = vmatprep.subr.mxu0 0.0
          %2687 = vmatpush1.msra.mxu0 0.0
          %2688 = vmatprep.subr.mxu0 0.0
          %2689 = vmatpush1.msra.mxu0 0.0
          %2690 = vmatprep.subr.mxu0 0.0
          %2691 = vmatpush1.msra.mxu0 0.0
          %2692 = vmatprep.subr.mxu0 0.0
          %2693 = vmatpush1.msra.mxu0 0.0
          %2694 = vmatprep.subr.mxu0 0.0
          %2695 = vmatpush1.msra.mxu0 0.0
          %2696 = vmatprep.subr.mxu0 0.0
          %2697 = vmatpush1.msra.mxu0 0.0
          %2698 = vmatprep.subr.mxu0 0.0
          %2699 = vmatpush1.msra.mxu0 0.0
          %2700 = vmatprep.subr.mxu0 0.0
          %2701 = vmatpush1.msra.mxu0 0.0
          %2702 = vmatprep.subr.mxu0 0.0
          %2703 = vmatpush1.msra.mxu0 0.0
          %2704 = vmatprep.subr.mxu0 0.0
          %2705 = vmatpush1.msra.mxu0 0.0
          %2706 = vmatprep.subr.mxu0 0.0
          %2707 = vmatpush1.msra.mxu0 0.0
          %2708 = vmatprep.subr.mxu0 0.0
          %2709 = vmatpush1.msra.mxu0 0.0
          %2710 = vmatprep.subr.mxu0 0.0
          %2711 = vmatpush1.msra.mxu0 0.0
          %2712 = vmatprep.subr.mxu0 0.0
          %2713 = vmatpush1.msra.mxu0 0.0
          %2714 = vmatprep.subr.mxu0 0.0
          %2715 = vmatpush1.msra.mxu0 0.0
          %2716 = vmatprep.subr.mxu0 0.0
          %2717 = vmatpush1.msra.mxu0 0.0
          %2718 = vmatprep.subr.mxu0 0.0
          %2719 = vmatpush1.msra.mxu0 0.0
          %2720 = vmatprep.subr.mxu0 0.0
          %2721 = vmatpush1.msra.mxu0 0.0
          %2722 = vmatprep.subr.mxu0 0.0
          %2723 = vmatpush1.msra.mxu0 0.0
          %2724 = vmatprep.subr.mxu0 0.0
          %2725 = vmatpush1.msra.mxu0 0.0
          %2726 = vmatprep.subr.mxu0 0.0
          %2727 = vmatpush1.msra.mxu0 0.0
          %2728 = vmatprep.subr.mxu0 0.0
          %2729 = vmatpush1.msra.mxu0 0.0
          %2730 = vmatprep.mubr.f32.mxu0 0.0
          %v2731 = vand.u32 %v2561, 4294901760
          %2732 = vmatmul.mubr.f32.gmra.mrb[0].mxu0 %v2731
          %v2733 = vpop.f32.mrb[0].mxu0
          %v2734 = vadd.f32 %v2643, %v2733
          %v2735 = vpop.f32.mrb[0].mxu0
          %2736 = vmatprep.mubr.f32.mxu0 0.0
          %v2737 = vand.u32 %v2564, 4294901760
          %2738 = vmatmul.mubr.f32.gmra.mrb[0].mxu0 %v2737
          %v2739 = vpop.f32.mrb[0].mxu0
          %v2740 = vadd.f32 %v2653, %v2739
          %v2741 = vpop.f32.mrb[0].mxu0
          %2742 = vdwg.mxu0
          %2743 = vmatprep.subr.mxu0 0.0
          %v2744 = vand.u32 %v2556, 4294901760
          %v2745 = vsub.f32 %v2556, %v2744
          %2746 = vmatpush1.msra.mxu0 %v2745
          %2747 = vmatprep.subr.mxu0 0.0
          %v2748 = vand.u32 %v2567, 4294901760
          %v2749 = vsub.f32 %v2567, %v2748
          %2750 = vmatpush1.msra.mxu0 %v2749
          %2751 = vmatprep.subr.mxu0 0.0
          %2752 = vmatpush1.msra.mxu0 0.0
          %2753 = vmatprep.subr.mxu0 0.0
          %2754 = vmatpush1.msra.mxu0 0.0
          %2755 = vmatprep.subr.mxu0 0.0
          %2756 = vmatpush1.msra.mxu0 0.0
          %2757 = vmatprep.subr.mxu0 0.0
          %2758 = vmatpush1.msra.mxu0 0.0
          %2759 = vmatprep.subr.mxu0 0.0
          %2760 = vmatpush1.msra.mxu0 0.0
          %2761 = vmatprep.subr.mxu0 0.0
          %2762 = vmatpush1.msra.mxu0 0.0
          %2763 = vmatprep.subr.mxu0 0.0
          %2764 = vmatpush1.msra.mxu0 0.0
          %2765 = vmatprep.subr.mxu0 0.0
          %2766 = vmatpush1.msra.mxu0 0.0
          %2767 = vmatprep.subr.mxu0 0.0
          %2768 = vmatpush1.msra.mxu0 0.0
          %2769 = vmatprep.subr.mxu0 0.0
          %2770 = vmatpush1.msra.mxu0 0.0
          %2771 = vmatprep.subr.mxu0 0.0
          %2772 = vmatpush1.msra.mxu0 0.0
          %2773 = vmatprep.subr.mxu0 0.0
          %2774 = vmatpush1.msra.mxu0 0.0
          %2775 = vmatprep.subr.mxu0 0.0
          %2776 = vmatpush1.msra.mxu0 0.0
          %2777 = vmatprep.subr.mxu0 0.0
          %2778 = vmatpush1.msra.mxu0 0.0
          %2779 = vmatprep.subr.mxu0 0.0
          %2780 = vmatpush1.msra.mxu0 0.0
          %2781 = vmatprep.subr.mxu0 0.0
          %2782 = vmatpush1.msra.mxu0 0.0
          %2783 = vmatprep.subr.mxu0 0.0
          %2784 = vmatpush1.msra.mxu0 0.0
          %2785 = vmatprep.subr.mxu0 0.0
          %2786 = vmatpush1.msra.mxu0 0.0
          %2787 = vmatprep.subr.mxu0 0.0
          %2788 = vmatpush1.msra.mxu0 0.0
          %2789 = vmatprep.subr.mxu0 0.0
          %2790 = vmatpush1.msra.mxu0 0.0
          %2791 = vmatprep.subr.mxu0 0.0
          %2792 = vmatpush1.msra.mxu0 0.0
          %2793 = vmatprep.subr.mxu0 0.0
          %2794 = vmatpush1.msra.mxu0 0.0
          %2795 = vmatprep.subr.mxu0 0.0
          %2796 = vmatpush1.msra.mxu0 0.0
          %2797 = vmatprep.subr.mxu0 0.0
          %2798 = vmatpush1.msra.mxu0 0.0
          %2799 = vmatprep.subr.mxu0 0.0
          %2800 = vmatpush1.msra.mxu0 0.0
          %2801 = vmatprep.subr.mxu0 0.0
          %2802 = vmatpush1.msra.mxu0 0.0
          %2803 = vmatprep.subr.mxu0 0.0
          %2804 = vmatpush1.msra.mxu0 0.0
          %2805 = vmatprep.subr.mxu0 0.0
          %2806 = vmatpush1.msra.mxu0 0.0
          %2807 = vmatprep.subr.mxu0 0.0
          %2808 = vmatpush1.msra.mxu0 0.0
          %2809 = vmatprep.subr.mxu0 0.0
          %2810 = vmatpush1.msra.mxu0 0.0
          %2811 = vmatprep.mubr.f32.mxu0 0.0
          %v2812 = vand.u32 %v2561, 4294901760
          %v2813 = vsub.f32 %v2561, %v2812
          %2814 = vmatmul.mubr.f32.gmra.mrb[0].mxu0 %v2813
          %v2815 = vpop.f32.mrb[0].mxu0
          %v2816 = vadd.f32 %v2734, %v2815
          %v2817 = vpop.f32.mrb[0].mxu0
          %2818 = vmatprep.mubr.f32.mxu0 0.0
          %v2819 = vand.u32 %v2564, 4294901760
          %v2820 = vsub.f32 %v2564, %v2819
          %2821 = vmatmul.mubr.f32.gmra.mrb[0].mxu0 %v2820
          %v2822 = vpop.f32.mrb[0].mxu0
          %v2823 = vadd.f32 %v2740, %v2822
          %v2824 = vpop.f32.mrb[0].mxu0
          %2825 = vdwg.mxu0
          %2826 = vmatprep.subr.mxu0 0.0
          %v2827 = vand.u32 %v2556, 4294901760
          %2828 = vmatpush1.msra.mxu0 %v2827
          %2829 = vmatprep.subr.mxu0 0.0
          %v2830 = vand.u32 %v2567, 4294901760
          %2831 = vmatpush1.msra.mxu0 %v2830
          %2832 = vmatprep.subr.mxu0 0.0
          %2833 = vmatpush1.msra.mxu0 0.0
          %2834 = vmatprep.subr.mxu0 0.0
          %2835 = vmatpush1.msra.mxu0 0.0
          %2836 = vmatprep.subr.mxu0 0.0
          %2837 = vmatpush1.msra.mxu0 0.0
          %2838 = vmatprep.subr.mxu0 0.0
          %2839 = vmatpush1.msra.mxu0 0.0
          %2840 = vmatprep.subr.mxu0 0.0
          %2841 = vmatpush1.msra.mxu0 0.0
          %2842 = vmatprep.subr.mxu0 0.0
          %2843 = vmatpush1.msra.mxu0 0.0
          %2844 = vmatprep.subr.mxu0 0.0
          %2845 = vmatpush1.msra.mxu0 0.0
          %2846 = vmatprep.subr.mxu0 0.0
          %2847 = vmatpush1.msra.mxu0 0.0
          %2848 = vmatprep.subr.mxu0 0.0
          %2849 = vmatpush1.msra.mxu0 0.0
          %2850 = vmatprep.subr.mxu0 0.0
          %2851 = vmatpush1.msra.mxu0 0.0
          %2852 = vmatprep.subr.mxu0 0.0
          %2853 = vmatpush1.msra.mxu0 0.0
          %2854 = vmatprep.subr.mxu0 0.0
          %2855 = vmatpush1.msra.mxu0 0.0
          %2856 = vmatprep.subr.mxu0 0.0
          %2857 = vmatpush1.msra.mxu0 0.0
          %2858 = vmatprep.subr.mxu0 0.0
          %2859 = vmatpush1.msra.mxu0 0.0
          %2860 = vmatprep.subr.mxu0 0.0
          %2861 = vmatpush1.msra.mxu0 0.0
          %2862 = vmatprep.subr.mxu0 0.0
          %2863 = vmatpush1.msra.mxu0 0.0
          %2864 = vmatprep.subr.mxu0 0.0
          %2865 = vmatpush1.msra.mxu0 0.0
          %2866 = vmatprep.subr.mxu0 0.0
          %2867 = vmatpush1.msra.mxu0 0.0
          %2868 = vmatprep.subr.mxu0 0.0
          %2869 = vmatpush1.msra.mxu0 0.0
          %2870 = vmatprep.subr.mxu0 0.0
          %2871 = vmatpush1.msra.mxu0 0.0
          %2872 = vmatprep.subr.mxu0 0.0
          %2873 = vmatpush1.msra.mxu0 0.0
          %2874 = vmatprep.subr.mxu0 0.0
          %2875 = vmatpush1.msra.mxu0 0.0
          %2876 = vmatprep.subr.mxu0 0.0
          %2877 = vmatpush1.msra.mxu0 0.0
          %2878 = vmatprep.subr.mxu0 0.0
          %2879 = vmatpush1.msra.mxu0 0.0
          %2880 = vmatprep.subr.mxu0 0.0
          %2881 = vmatpush1.msra.mxu0 0.0
          %2882 = vmatprep.subr.mxu0 0.0
          %2883 = vmatpush1.msra.mxu0 0.0
          %2884 = vmatprep.subr.mxu0 0.0
          %2885 = vmatpush1.msra.mxu0 0.0
          %2886 = vmatprep.subr.mxu0 0.0
          %2887 = vmatpush1.msra.mxu0 0.0
          %2888 = vmatprep.subr.mxu0 0.0
          %2889 = vmatpush1.msra.mxu0 0.0
          %2890 = vmatprep.subr.mxu0 0.0
          %2891 = vmatpush1.msra.mxu0 0.0
          %2892 = vmatprep.mubr.f32.mxu0 0.0
          %v2893 = vand.u32 %v2561, 4294901760
          %v2894 = vsub.f32 %v2561, %v2893
          %v2895 = vand.u32 %v2894, 4294901760
          %2896 = vmatmul.mubr.f32.gmra.mrb[0].mxu0 %v2895
          %v2897 = vpop.f32.mrb[0].mxu0
          %v2898 = vadd.f32 %v2816, %v2897
          %v2899 = vpop.f32.mrb[0].mxu0
          %2900 = vmatprep.mubr.f32.mxu0 0.0
          %v2901 = vand.u32 %v2564, 4294901760
          %v2902 = vsub.f32 %v2564, %v2901
          %v2903 = vand.u32 %v2902, 4294901760
          %2904 = vmatmul.mubr.f32.gmra.mrb[0].mxu0 %v2903
          %v2905 = vpop.f32.mrb[0].mxu0
          %v2906 = vadd.f32 %v2823, %v2905
          %v2907 = vpop.f32.mrb[0].mxu0
          %2908 = vdwg.mxu0
          %2909 = vmatprep.subr.mxu0 0.0
          %v2910 = vand.u32 %v2556, 4294901760
          %v2911 = vsub.f32 %v2556, %v2910
          %v2912 = vand.u32 %v2911, 4294901760
          %2913 = vmatpush1.msra.mxu0 %v2912
          %2914 = vmatprep.subr.mxu0 0.0
          %v2915 = vand.u32 %v2567, 4294901760
          %v2916 = vsub.f32 %v2567, %v2915
          %v2917 = vand.u32 %v2916, 4294901760
          %2918 = vmatpush1.msra.mxu0 %v2917
          %2919 = vmatprep.subr.mxu0 0.0
          %2920 = vmatpush1.msra.mxu0 0.0
          %2921 = vmatprep.subr.mxu0 0.0
          %2922 = vmatpush1.msra.mxu0 0.0
          %2923 = vmatprep.subr.mxu0 0.0
          %2924 = vmatpush1.msra.mxu0 0.0
          %2925 = vmatprep.subr.mxu0 0.0
          %2926 = vmatpush1.msra.mxu0 0.0
          %2927 = vmatprep.subr.mxu0 0.0
          %2928 = vmatpush1.msra.mxu0 0.0
          %2929 = vmatprep.subr.mxu0 0.0
          %2930 = vmatpush1.msra.mxu0 0.0
          %2931 = vmatprep.subr.mxu0 0.0
          %2932 = vmatpush1.msra.mxu0 0.0
          %2933 = vmatprep.subr.mxu0 0.0
          %2934 = vmatpush1.msra.mxu0 0.0
          %2935 = vmatprep.subr.mxu0 0.0
          %2936 = vmatpush1.msra.mxu0 0.0
          %2937 = vmatprep.subr.mxu0 0.0
          %2938 = vmatpush1.msra.mxu0 0.0
          %2939 = vmatprep.subr.mxu0 0.0
          %2940 = vmatpush1.msra.mxu0 0.0
          %2941 = vmatprep.subr.mxu0 0.0
          %2942 = vmatpush1.msra.mxu0 0.0
          %2943 = vmatprep.subr.mxu0 0.0
          %2944 = vmatpush1.msra.mxu0 0.0
          %2945 = vmatprep.subr.mxu0 0.0
          %2946 = vmatpush1.msra.mxu0 0.0
          %2947 = vmatprep.subr.mxu0 0.0
          %2948 = vmatpush1.msra.mxu0 0.0
          %2949 = vmatprep.subr.mxu0 0.0
          %2950 = vmatpush1.msra.mxu0 0.0
          %2951 = vmatprep.subr.mxu0 0.0
          %2952 = vmatpush1.msra.mxu0 0.0
          %2953 = vmatprep.subr.mxu0 0.0
          %2954 = vmatpush1.msra.mxu0 0.0
          %2955 = vmatprep.subr.mxu0 0.0
          %2956 = vmatpush1.msra.mxu0 0.0
          %2957 = vmatprep.subr.mxu0 0.0
          %2958 = vmatpush1.msra.mxu0 0.0
          %2959 = vmatprep.subr.mxu0 0.0
          %2960 = vmatpush1.msra.mxu0 0.0
          %2961 = vmatprep.subr.mxu0 0.0
          %2962 = vmatpush1.msra.mxu0 0.0
          %2963 = vmatprep.subr.mxu0 0.0
          %2964 = vmatpush1.msra.mxu0 0.0
          %2965 = vmatprep.subr.mxu0 0.0
          %2966 = vmatpush1.msra.mxu0 0.0
          %2967 = vmatprep.subr.mxu0 0.0
          %2968 = vmatpush1.msra.mxu0 0.0
          %2969 = vmatprep.subr.mxu0 0.0
          %2970 = vmatpush1.msra.mxu0 0.0
          %2971 = vmatprep.subr.mxu0 0.0
          %2972 = vmatpush1.msra.mxu0 0.0
          %2973 = vmatprep.subr.mxu0 0.0
          %2974 = vmatpush1.msra.mxu0 0.0
          %2975 = vmatprep.subr.mxu0 0.0
          %2976 = vmatpush1.msra.mxu0 0.0
          %2977 = vmatprep.subr.mxu0 0.0
          %2978 = vmatpush1.msra.mxu0 0.0
          %2979 = vmatprep.mubr.f32.mxu0 0.0
          %v2980 = vand.u32 %v2561, 4294901760
          %2981 = vmatmul.mubr.f32.gmra.mrb[0].mxu0 %v2980
          %v2982 = vpop.f32.mrb[0].mxu0
          %v2983 = vadd.f32 %v2898, %v2982
          %v2984 = vpop.f32.mrb[0].mxu0
          %2985 = vmatprep.mubr.f32.mxu0 0.0
          %v2986 = vand.u32 %v2564, 4294901760
          %2987 = vmatmul.mubr.f32.gmra.mrb[0].mxu0 %v2986
          %v2988 = vpop.f32.mrb[0].mxu0
          %v2989 = vadd.f32 %v2906, %v2988
          %v2990 = vpop.f32.mrb[0].mxu0
          %2991 = vdwg.mxu0
          %2992 = vmatprep.subr.mxu0 0.0
          %v2993 = vand.u32 %v2556, 4294901760
          %2994 = vmatpush1.msra.mxu0 %v2993
          %2995 = vmatprep.subr.mxu0 0.0
          %v2996 = vand.u32 %v2567, 4294901760
          %2997 = vmatpush1.msra.mxu0 %v2996
          %2998 = vmatprep.subr.mxu0 0.0
          %2999 = vmatpush1.msra.mxu0 0.0
          %3000 = vmatprep.subr.mxu0 0.0
          %3001 = vmatpush1.msra.mxu0 0.0
          %3002 = vmatprep.subr.mxu0 0.0
          %3003 = vmatpush1.msra.mxu0 0.0
          %3004 = vmatprep.subr.mxu0 0.0
          %3005 = vmatpush1.msra.mxu0 0.0
          %3006 = vmatprep.subr.mxu0 0.0
          %3007 = vmatpush1.msra.mxu0 0.0
          %3008 = vmatprep.subr.mxu0 0.0
          %3009 = vmatpush1.msra.mxu0 0.0
          %3010 = vmatprep.subr.mxu0 0.0
          %3011 = vmatpush1.msra.mxu0 0.0
          %3012 = vmatprep.subr.mxu0 0.0
          %3013 = vmatpush1.msra.mxu0 0.0
          %3014 = vmatprep.subr.mxu0 0.0
          %3015 = vmatpush1.msra.mxu0 0.0
          %3016 = vmatprep.subr.mxu0 0.0
          %3017 = vmatpush1.msra.mxu0 0.0
          %3018 = vmatprep.subr.mxu0 0.0
          %3019 = vmatpush1.msra.mxu0 0.0
          %3020 = vmatprep.subr.mxu0 0.0
          %3021 = vmatpush1.msra.mxu0 0.0
          %3022 = vmatprep.subr.mxu0 0.0
          %3023 = vmatpush1.msra.mxu0 0.0
          %3024 = vmatprep.subr.mxu0 0.0
          %3025 = vmatpush1.msra.mxu0 0.0
          %3026 = vmatprep.subr.mxu0 0.0
          %3027 = vmatpush1.msra.mxu0 0.0
          %3028 = vmatprep.subr.mxu0 0.0
          %3029 = vmatpush1.msra.mxu0 0.0
          %3030 = vmatprep.subr.mxu0 0.0
          %3031 = vmatpush1.msra.mxu0 0.0
          %3032 = vmatprep.subr.mxu0 0.0
          %3033 = vmatpush1.msra.mxu0 0.0
          %3034 = vmatprep.subr.mxu0 0.0
          %3035 = vmatpush1.msra.mxu0 0.0
          %3036 = vmatprep.subr.mxu0 0.0
          %3037 = vmatpush1.msra.mxu0 0.0
          %3038 = vmatprep.subr.mxu0 0.0
          %3039 = vmatpush1.msra.mxu0 0.0
          %3040 = vmatprep.subr.mxu0 0.0
          %3041 = vmatpush1.msra.mxu0 0.0
          %3042 = vmatprep.subr.mxu0 0.0
          %3043 = vmatpush1.msra.mxu0 0.0
          %3044 = vmatprep.subr.mxu0 0.0
          %3045 = vmatpush1.msra.mxu0 0.0
          %3046 = vmatprep.subr.mxu0 0.0
          %3047 = vmatpush1.msra.mxu0 0.0
          %3048 = vmatprep.subr.mxu0 0.0
          %3049 = vmatpush1.msra.mxu0 0.0
          %3050 = vmatprep.subr.mxu0 0.0
          %3051 = vmatpush1.msra.mxu0 0.0
          %3052 = vmatprep.subr.mxu0 0.0
          %3053 = vmatpush1.msra.mxu0 0.0
          %3054 = vmatprep.subr.mxu0 0.0
          %3055 = vmatpush1.msra.mxu0 0.0
          %3056 = vmatprep.subr.mxu0 0.0
          %3057 = vmatpush1.msra.mxu0 0.0
          %3058 = vmatprep.mubr.f32.mxu0 0.0
          %v3059 = vand.u32 %v2561, 4294901760
          %3060 = vmatmul.mubr.f32.gmra.mrb[0].mxu0 %v3059
          %v3061 = vpop.f32.mrb[0].mxu0
          %v3062 = vadd.f32 %v2983, %v3061
          %v3063 = vpop.f32.mrb[0].mxu0
          %3064 = vmatprep.mubr.f32.mxu0 0.0
          %v3065 = vand.u32 %v2564, 4294901760
          %3066 = vmatmul.mubr.f32.gmra.mrb[0].mxu0 %v3065
          %v3067 = vpop.f32.mrb[0].mxu0
          %v3068 = vadd.f32 %v2989, %v3067
          %v3069 = vpop.f32.mrb[0].mxu0
          %3070 = vdwg.mxu0
          %v3071 = vld [vmem:[#allocation12] sm:$0xff]
          %v3072 = vld [vmem:[#allocation12 + $0x8] sm:$0x3f]
          %v3074 = vsel %vm332, %v3062, 0
          %v3077 = vsel %vm332, %v3068, 0
          %v3080 = vsel %vm339, %v3072, 0
          %3082 = vmatprep.subr.mxu0 0.0
          %v3083 = vand.u32 %v3071, 4294901760
          %3084 = vmatpush1.msra.mxu0 %v3083
          %3085 = vmatprep.subr.mxu0 0.0
          %v3086 = vand.u32 %v3080, 4294901760
          %3087 = vmatpush1.msra.mxu0 %v3086
          %3088 = vmatprep.subr.mxu0 0.0
          %3089 = vmatpush1.msra.mxu0 0.0
          %3090 = vmatprep.subr.mxu0 0.0
          %3091 = vmatpush1.msra.mxu0 0.0
          %3092 = vmatprep.subr.mxu0 0.0
          %3093 = vmatpush1.msra.mxu0 0.0
          %3094 = vmatprep.subr.mxu0 0.0
          %3095 = vmatpush1.msra.mxu0 0.0
          %3096 = vmatprep.subr.mxu0 0.0
          %3097 = vmatpush1.msra.mxu0 0.0
          %3098 = vmatprep.subr.mxu0 0.0
          %3099 = vmatpush1.msra.mxu0 0.0
          %3100 = vmatprep.subr.mxu0 0.0
          %3101 = vmatpush1.msra.mxu0 0.0
          %3102 = vmatprep.subr.mxu0 0.0
          %3103 = vmatpush1.msra.mxu0 0.0
          %3104 = vmatprep.subr.mxu0 0.0
          %3105 = vmatpush1.msra.mxu0 0.0
          %3106 = vmatprep.subr.mxu0 0.0
          %3107 = vmatpush1.msra.mxu0 0.0
          %3108 = vmatprep.subr.mxu0 0.0
          %3109 = vmatpush1.msra.mxu0 0.0
          %3110 = vmatprep.subr.mxu0 0.0
          %3111 = vmatpush1.msra.mxu0 0.0
          %3112 = vmatprep.subr.mxu0 0.0
          %3113 = vmatpush1.msra.mxu0 0.0
          %3114 = vmatprep.subr.mxu0 0.0
          %3115 = vmatpush1.msra.mxu0 0.0
          %3116 = vmatprep.subr.mxu0 0.0
          %3117 = vmatpush1.msra.mxu0 0.0
          %3118 = vmatprep.subr.mxu0 0.0
          %3119 = vmatpush1.msra.mxu0 0.0
          %3120 = vmatprep.subr.mxu0 0.0
          %3121 = vmatpush1.msra.mxu0 0.0
          %3122 = vmatprep.subr.mxu0 0.0
          %3123 = vmatpush1.msra.mxu0 0.0
          %3124 = vmatprep.subr.mxu0 0.0
          %3125 = vmatpush1.msra.mxu0 0.0
          %3126 = vmatprep.subr.mxu0 0.0
          %3127 = vmatpush1.msra.mxu0 0.0
          %3128 = vmatprep.subr.mxu0 0.0
          %3129 = vmatpush1.msra.mxu0 0.0
          %3130 = vmatprep.subr.mxu0 0.0
          %3131 = vmatpush1.msra.mxu0 0.0
          %3132 = vmatprep.subr.mxu0 0.0
          %3133 = vmatpush1.msra.mxu0 0.0
          %3134 = vmatprep.subr.mxu0 0.0
          %3135 = vmatpush1.msra.mxu0 0.0
          %3136 = vmatprep.subr.mxu0 0.0
          %3137 = vmatpush1.msra.mxu0 0.0
          %3138 = vmatprep.subr.mxu0 0.0
          %3139 = vmatpush1.msra.mxu0 0.0
          %3140 = vmatprep.subr.mxu0 0.0
          %3141 = vmatpush1.msra.mxu0 0.0
          %3142 = vmatprep.subr.mxu0 0.0
          %3143 = vmatpush1.msra.mxu0 0.0
          %3144 = vmatprep.subr.mxu0 0.0
          %3145 = vmatpush1.msra.mxu0 0.0
          %3146 = vmatprep.subr.mxu0 0.0
          %3147 = vmatpush1.msra.mxu0 0.0
          %3148 = vmatprep.mubr.f32.mxu0 0.0
          %v3149 = vand.u32 %v3074, 4294901760
          %v3150 = vsub.f32 %v3074, %v3149
          %v3151 = vand.u32 %v3150, 4294901760
          %v3152 = vsub.f32 %v3150, %v3151
          %v3153 = vand.u32 %v3152, 4294901760
          %3154 = vmatmul.mubr.f32.gmra.mrb[0].mxu0 %v3153
          %v3155 = vpop.f32.mrb[0].mxu0
          %v3156 = vadd.f32 0.0, %v3155
          %v3157 = vpop.f32.mrb[0].mxu0
          %3158 = vmatprep.mubr.f32.mxu0 0.0
          %v3159 = vand.u32 %v3077, 4294901760
          %v3160 = vsub.f32 %v3077, %v3159
          %v3161 = vand.u32 %v3160, 4294901760
          %v3162 = vsub.f32 %v3160, %v3161
          %v3163 = vand.u32 %v3162, 4294901760
          %3164 = vmatmul.mubr.f32.gmra.mrb[0].mxu0 %v3163
          %v3165 = vpop.f32.mrb[0].mxu0
          %v3166 = vadd.f32 0.0, %v3165
          %v3167 = vpop.f32.mrb[0].mxu0
          %3168 = vdwg.mxu0
          %3169 = vmatprep.subr.mxu0 0.0
          %v3170 = vand.u32 %v3071, 4294901760
          %v3171 = vsub.f32 %v3071, %v3170
          %v3172 = vand.u32 %v3171, 4294901760
          %v3173 = vsub.f32 %v3171, %v3172
          %v3174 = vand.u32 %v3173, 4294901760
          %3175 = vmatpush1.msra.mxu0 %v3174
          %3176 = vmatprep.subr.mxu0 0.0
          %v3177 = vand.u32 %v3080, 4294901760
          %v3178 = vsub.f32 %v3080, %v3177
          %v3179 = vand.u32 %v3178, 4294901760
          %v3180 = vsub.f32 %v3178, %v3179
          %v3181 = vand.u32 %v3180, 4294901760
          %3182 = vmatpush1.msra.mxu0 %v3181
          %3183 = vmatprep.subr.mxu0 0.0
          %3184 = vmatpush1.msra.mxu0 0.0
          %3185 = vmatprep.subr.mxu0 0.0
          %3186 = vmatpush1.msra.mxu0 0.0
          %3187 = vmatprep.subr.mxu0 0.0
          %3188 = vmatpush1.msra.mxu0 0.0
          %3189 = vmatprep.subr.mxu0 0.0
          %3190 = vmatpush1.msra.mxu0 0.0
          %3191 = vmatprep.subr.mxu0 0.0
          %3192 = vmatpush1.msra.mxu0 0.0
          %3193 = vmatprep.subr.mxu0 0.0
          %3194 = vmatpush1.msra.mxu0 0.0
          %3195 = vmatprep.subr.mxu0 0.0
          %3196 = vmatpush1.msra.mxu0 0.0
          %3197 = vmatprep.subr.mxu0 0.0
          %3198 = vmatpush1.msra.mxu0 0.0
          %3199 = vmatprep.subr.mxu0 0.0
          %3200 = vmatpush1.msra.mxu0 0.0
          %3201 = vmatprep.subr.mxu0 0.0
          %3202 = vmatpush1.msra.mxu0 0.0
          %3203 = vmatprep.subr.mxu0 0.0
          %3204 = vmatpush1.msra.mxu0 0.0
          %3205 = vmatprep.subr.mxu0 0.0
          %3206 = vmatpush1.msra.mxu0 0.0
          %3207 = vmatprep.subr.mxu0 0.0
          %3208 = vmatpush1.msra.mxu0 0.0
          %3209 = vmatprep.subr.mxu0 0.0
          %3210 = vmatpush1.msra.mxu0 0.0
          %3211 = vmatprep.subr.mxu0 0.0
          %3212 = vmatpush1.msra.mxu0 0.0
          %3213 = vmatprep.subr.mxu0 0.0
          %3214 = vmatpush1.msra.mxu0 0.0
          %3215 = vmatprep.subr.mxu0 0.0
          %3216 = vmatpush1.msra.mxu0 0.0
          %3217 = vmatprep.subr.mxu0 0.0
          %3218 = vmatpush1.msra.mxu0 0.0
          %3219 = vmatprep.subr.mxu0 0.0
          %3220 = vmatpush1.msra.mxu0 0.0
          %3221 = vmatprep.subr.mxu0 0.0
          %3222 = vmatpush1.msra.mxu0 0.0
          %3223 = vmatprep.subr.mxu0 0.0
          %3224 = vmatpush1.msra.mxu0 0.0
          %3225 = vmatprep.subr.mxu0 0.0
          %3226 = vmatpush1.msra.mxu0 0.0
          %3227 = vmatprep.subr.mxu0 0.0
          %3228 = vmatpush1.msra.mxu0 0.0
          %3229 = vmatprep.subr.mxu0 0.0
          %3230 = vmatpush1.msra.mxu0 0.0
          %3231 = vmatprep.subr.mxu0 0.0
          %3232 = vmatpush1.msra.mxu0 0.0
          %3233 = vmatprep.subr.mxu0 0.0
          %3234 = vmatpush1.msra.mxu0 0.0
          %3235 = vmatprep.subr.mxu0 0.0
          %3236 = vmatpush1.msra.mxu0 0.0
          %3237 = vmatprep.subr.mxu0 0.0
          %3238 = vmatpush1.msra.mxu0 0.0
          %3239 = vmatprep.subr.mxu0 0.0
          %3240 = vmatpush1.msra.mxu0 0.0
          %3241 = vmatprep.subr.mxu0 0.0
          %3242 = vmatpush1.msra.mxu0 0.0
          %3243 = vmatprep.mubr.f32.mxu0 0.0
          %v3244 = vand.u32 %v3074, 4294901760
          %3245 = vmatmul.mubr.f32.gmra.mrb[0].mxu0 %v3244
          %v3246 = vpop.f32.mrb[0].mxu0
          %v3247 = vadd.f32 %v3156, %v3246
          %v3248 = vpop.f32.mrb[0].mxu0
          %3249 = vmatprep.mubr.f32.mxu0 0.0
          %v3250 = vand.u32 %v3077, 4294901760
          %3251 = vmatmul.mubr.f32.gmra.mrb[0].mxu0 %v3250
          %v3252 = vpop.f32.mrb[0].mxu0
          %v3253 = vadd.f32 %v3166, %v3252
          %v3254 = vpop.f32.mrb[0].mxu0
          %3255 = vdwg.mxu0
          %3256 = vmatprep.subr.mxu0 0.0
          %v3257 = vand.u32 %v3071, 4294901760
          %v3258 = vsub.f32 %v3071, %v3257
          %3259 = vmatpush1.msra.mxu0 %v3258
          %3260 = vmatprep.subr.mxu0 0.0
          %v3261 = vand.u32 %v3080, 4294901760
          %v3262 = vsub.f32 %v3080, %v3261
          %3263 = vmatpush1.msra.mxu0 %v3262
          %3264 = vmatprep.subr.mxu0 0.0
          %3265 = vmatpush1.msra.mxu0 0.0
          %3266 = vmatprep.subr.mxu0 0.0
          %3267 = vmatpush1.msra.mxu0 0.0
          %3268 = vmatprep.subr.mxu0 0.0
          %3269 = vmatpush1.msra.mxu0 0.0
          %3270 = vmatprep.subr.mxu0 0.0
          %3271 = vmatpush1.msra.mxu0 0.0
          %3272 = vmatprep.subr.mxu0 0.0
          %3273 = vmatpush1.msra.mxu0 0.0
          %3274 = vmatprep.subr.mxu0 0.0
          %3275 = vmatpush1.msra.mxu0 0.0
          %3276 = vmatprep.subr.mxu0 0.0
          %3277 = vmatpush1.msra.mxu0 0.0
          %3278 = vmatprep.subr.mxu0 0.0
          %3279 = vmatpush1.msra.mxu0 0.0
          %3280 = vmatprep.subr.mxu0 0.0
          %3281 = vmatpush1.msra.mxu0 0.0
          %3282 = vmatprep.subr.mxu0 0.0
          %3283 = vmatpush1.msra.mxu0 0.0
          %3284 = vmatprep.subr.mxu0 0.0
          %3285 = vmatpush1.msra.mxu0 0.0
          %3286 = vmatprep.subr.mxu0 0.0
          %3287 = vmatpush1.msra.mxu0 0.0
          %3288 = vmatprep.subr.mxu0 0.0
          %3289 = vmatpush1.msra.mxu0 0.0
          %3290 = vmatprep.subr.mxu0 0.0
          %3291 = vmatpush1.msra.mxu0 0.0
          %3292 = vmatprep.subr.mxu0 0.0
          %3293 = vmatpush1.msra.mxu0 0.0
          %3294 = vmatprep.subr.mxu0 0.0
          %3295 = vmatpush1.msra.mxu0 0.0
          %3296 = vmatprep.subr.mxu0 0.0
          %3297 = vmatpush1.msra.mxu0 0.0
          %3298 = vmatprep.subr.mxu0 0.0
          %3299 = vmatpush1.msra.mxu0 0.0
          %3300 = vmatprep.subr.mxu0 0.0
          %3301 = vmatpush1.msra.mxu0 0.0
          %3302 = vmatprep.subr.mxu0 0.0
          %3303 = vmatpush1.msra.mxu0 0.0
          %3304 = vmatprep.subr.mxu0 0.0
          %3305 = vmatpush1.msra.mxu0 0.0
          %3306 = vmatprep.subr.mxu0 0.0
          %3307 = vmatpush1.msra.mxu0 0.0
          %3308 = vmatprep.subr.mxu0 0.0
          %3309 = vmatpush1.msra.mxu0 0.0
          %3310 = vmatprep.subr.mxu0 0.0
          %3311 = vmatpush1.msra.mxu0 0.0
          %3312 = vmatprep.subr.mxu0 0.0
          %3313 = vmatpush1.msra.mxu0 0.0
          %3314 = vmatprep.subr.mxu0 0.0
          %3315 = vmatpush1.msra.mxu0 0.0
          %3316 = vmatprep.subr.mxu0 0.0
          %3317 = vmatpush1.msra.mxu0 0.0
          %3318 = vmatprep.subr.mxu0 0.0
          %3319 = vmatpush1.msra.mxu0 0.0
          %3320 = vmatprep.subr.mxu0 0.0
          %3321 = vmatpush1.msra.mxu0 0.0
          %3322 = vmatprep.subr.mxu0 0.0
          %3323 = vmatpush1.msra.mxu0 0.0
          %3324 = vmatprep.mubr.f32.mxu0 0.0
          %v3325 = vand.u32 %v3074, 4294901760
          %v3326 = vsub.f32 %v3074, %v3325
          %3327 = vmatmul.mubr.f32.gmra.mrb[0].mxu0 %v3326
          %v3328 = vpop.f32.mrb[0].mxu0
          %v3329 = vadd.f32 %v3247, %v3328
          %v3330 = vpop.f32.mrb[0].mxu0
          %3331 = vmatprep.mubr.f32.mxu0 0.0
          %v3332 = vand.u32 %v3077, 4294901760
          %v3333 = vsub.f32 %v3077, %v3332
          %3334 = vmatmul.mubr.f32.gmra.mrb[0].mxu0 %v3333
          %v3335 = vpop.f32.mrb[0].mxu0
          %v3336 = vadd.f32 %v3253, %v3335
          %v3337 = vpop.f32.mrb[0].mxu0
          %3338 = vdwg.mxu0
          %3339 = vmatprep.subr.mxu0 0.0
          %v3340 = vand.u32 %v3071, 4294901760
          %3341 = vmatpush1.msra.mxu0 %v3340
          %3342 = vmatprep.subr.mxu0 0.0
          %v3343 = vand.u32 %v3080, 4294901760
          %3344 = vmatpush1.msra.mxu0 %v3343
          %3345 = vmatprep.subr.mxu0 0.0
          %3346 = vmatpush1.msra.mxu0 0.0
          %3347 = vmatprep.subr.mxu0 0.0
          %3348 = vmatpush1.msra.mxu0 0.0
          %3349 = vmatprep.subr.mxu0 0.0
          %3350 = vmatpush1.msra.mxu0 0.0
          %3351 = vmatprep.subr.mxu0 0.0
          %3352 = vmatpush1.msra.mxu0 0.0
          %3353 = vmatprep.subr.mxu0 0.0
          %3354 = vmatpush1.msra.mxu0 0.0
          %3355 = vmatprep.subr.mxu0 0.0
          %3356 = vmatpush1.msra.mxu0 0.0
          %3357 = vmatprep.subr.mxu0 0.0
          %3358 = vmatpush1.msra.mxu0 0.0
          %3359 = vmatprep.subr.mxu0 0.0
          %3360 = vmatpush1.msra.mxu0 0.0
          %3361 = vmatprep.subr.mxu0 0.0
          %3362 = vmatpush1.msra.mxu0 0.0
          %3363 = vmatprep.subr.mxu0 0.0
          %3364 = vmatpush1.msra.mxu0 0.0
          %3365 = vmatprep.subr.mxu0 0.0
          %3366 = vmatpush1.msra.mxu0 0.0
          %3367 = vmatprep.subr.mxu0 0.0
          %3368 = vmatpush1.msra.mxu0 0.0
          %3369 = vmatprep.subr.mxu0 0.0
          %3370 = vmatpush1.msra.mxu0 0.0
          %3371 = vmatprep.subr.mxu0 0.0
          %3372 = vmatpush1.msra.mxu0 0.0
          %3373 = vmatprep.subr.mxu0 0.0
          %3374 = vmatpush1.msra.mxu0 0.0
          %3375 = vmatprep.subr.mxu0 0.0
          %3376 = vmatpush1.msra.mxu0 0.0
          %3377 = vmatprep.subr.mxu0 0.0
          %3378 = vmatpush1.msra.mxu0 0.0
          %3379 = vmatprep.subr.mxu0 0.0
          %3380 = vmatpush1.msra.mxu0 0.0
          %3381 = vmatprep.subr.mxu0 0.0
          %3382 = vmatpush1.msra.mxu0 0.0
          %3383 = vmatprep.subr.mxu0 0.0
          %3384 = vmatpush1.msra.mxu0 0.0
          %3385 = vmatprep.subr.mxu0 0.0
          %3386 = vmatpush1.msra.mxu0 0.0
          %3387 = vmatprep.subr.mxu0 0.0
          %3388 = vmatpush1.msra.mxu0 0.0
          %3389 = vmatprep.subr.mxu0 0.0
          %3390 = vmatpush1.msra.mxu0 0.0
          %3391 = vmatprep.subr.mxu0 0.0
          %3392 = vmatpush1.msra.mxu0 0.0
          %3393 = vmatprep.subr.mxu0 0.0
          %3394 = vmatpush1.msra.mxu0 0.0
          %3395 = vmatprep.subr.mxu0 0.0
          %3396 = vmatpush1.msra.mxu0 0.0
          %3397 = vmatprep.subr.mxu0 0.0
          %3398 = vmatpush1.msra.mxu0 0.0
          %3399 = vmatprep.subr.mxu0 0.0
          %3400 = vmatpush1.msra.mxu0 0.0
          %3401 = vmatprep.subr.mxu0 0.0
          %3402 = vmatpush1.msra.mxu0 0.0
          %3403 = vmatprep.subr.mxu0 0.0
          %3404 = vmatpush1.msra.mxu0 0.0
          %3405 = vmatprep.mubr.f32.mxu0 0.0
          %v3406 = vand.u32 %v3074, 4294901760
          %v3407 = vsub.f32 %v3074, %v3406
          %v3408 = vand.u32 %v3407, 4294901760
          %3409 = vmatmul.mubr.f32.gmra.mrb[0].mxu0 %v3408
          %v3410 = vpop.f32.mrb[0].mxu0
          %v3411 = vadd.f32 %v3329, %v3410
          %v3412 = vpop.f32.mrb[0].mxu0
          %3413 = vmatprep.mubr.f32.mxu0 0.0
          %v3414 = vand.u32 %v3077, 4294901760
          %v3415 = vsub.f32 %v3077, %v3414
          %v3416 = vand.u32 %v3415, 4294901760
          %3417 = vmatmul.mubr.f32.gmra.mrb[0].mxu0 %v3416
          %v3418 = vpop.f32.mrb[0].mxu0
          %v3419 = vadd.f32 %v3336, %v3418
          %v3420 = vpop.f32.mrb[0].mxu0
          %3421 = vdwg.mxu0
          %3422 = vmatprep.subr.mxu0 0.0
          %v3423 = vand.u32 %v3071, 4294901760
          %v3424 = vsub.f32 %v3071, %v3423
          %v3425 = vand.u32 %v3424, 4294901760
          %3426 = vmatpush1.msra.mxu0 %v3425
          %3427 = vmatprep.subr.mxu0 0.0
          %v3428 = vand.u32 %v3080, 4294901760
          %v3429 = vsub.f32 %v3080, %v3428
          %v3430 = vand.u32 %v3429, 4294901760
          %3431 = vmatpush1.msra.mxu0 %v3430
          %3432 = vmatprep.subr.mxu0 0.0
          %3433 = vmatpush1.msra.mxu0 0.0
          %3434 = vmatprep.subr.mxu0 0.0
          %3435 = vmatpush1.msra.mxu0 0.0
          %3436 = vmatprep.subr.mxu0 0.0
          %3437 = vmatpush1.msra.mxu0 0.0
          %3438 = vmatprep.subr.mxu0 0.0
          %3439 = vmatpush1.msra.mxu0 0.0
          %3440 = vmatprep.subr.mxu0 0.0
          %3441 = vmatpush1.msra.mxu0 0.0
          %3442 = vmatprep.subr.mxu0 0.0
          %3443 = vmatpush1.msra.mxu0 0.0
          %3444 = vmatprep.subr.mxu0 0.0
          %3445 = vmatpush1.msra.mxu0 0.0
          %3446 = vmatprep.subr.mxu0 0.0
          %3447 = vmatpush1.msra.mxu0 0.0
          %3448 = vmatprep.subr.mxu0 0.0
          %3449 = vmatpush1.msra.mxu0 0.0
          %3450 = vmatprep.subr.mxu0 0.0
          %3451 = vmatpush1.msra.mxu0 0.0
          %3452 = vmatprep.subr.mxu0 0.0
          %3453 = vmatpush1.msra.mxu0 0.0
          %3454 = vmatprep.subr.mxu0 0.0
          %3455 = vmatpush1.msra.mxu0 0.0
          %3456 = vmatprep.subr.mxu0 0.0
          %3457 = vmatpush1.msra.mxu0 0.0
          %3458 = vmatprep.subr.mxu0 0.0
          %3459 = vmatpush1.msra.mxu0 0.0
          %3460 = vmatprep.subr.mxu0 0.0
          %3461 = vmatpush1.msra.mxu0 0.0
          %3462 = vmatprep.subr.mxu0 0.0
          %3463 = vmatpush1.msra.mxu0 0.0
          %3464 = vmatprep.subr.mxu0 0.0
          %3465 = vmatpush1.msra.mxu0 0.0
          %3466 = vmatprep.subr.mxu0 0.0
          %3467 = vmatpush1.msra.mxu0 0.0
          %3468 = vmatprep.subr.mxu0 0.0
          %3469 = vmatpush1.msra.mxu0 0.0
          %3470 = vmatprep.subr.mxu0 0.0
          %3471 = vmatpush1.msra.mxu0 0.0
          %3472 = vmatprep.subr.mxu0 0.0
          %3473 = vmatpush1.msra.mxu0 0.0
          %3474 = vmatprep.subr.mxu0 0.0
          %3475 = vmatpush1.msra.mxu0 0.0
          %3476 = vmatprep.subr.mxu0 0.0
          %3477 = vmatpush1.msra.mxu0 0.0
          %3478 = vmatprep.subr.mxu0 0.0
          %3479 = vmatpush1.msra.mxu0 0.0
          %3480 = vmatprep.subr.mxu0 0.0
          %3481 = vmatpush1.msra.mxu0 0.0
          %3482 = vmatprep.subr.mxu0 0.0
          %3483 = vmatpush1.msra.mxu0 0.0
          %3484 = vmatprep.subr.mxu0 0.0
          %3485 = vmatpush1.msra.mxu0 0.0
          %3486 = vmatprep.subr.mxu0 0.0
          %3487 = vmatpush1.msra.mxu0 0.0
          %3488 = vmatprep.subr.mxu0 0.0
          %3489 = vmatpush1.msra.mxu0 0.0
          %3490 = vmatprep.subr.mxu0 0.0
          %3491 = vmatpush1.msra.mxu0 0.0
          %3492 = vmatprep.mubr.f32.mxu0 0.0
          %v3493 = vand.u32 %v3074, 4294901760
          %3494 = vmatmul.mubr.f32.gmra.mrb[0].mxu0 %v3493
          %v3495 = vpop.f32.mrb[0].mxu0
          %v3496 = vadd.f32 %v3411, %v3495
          %v3497 = vpop.f32.mrb[0].mxu0
          %3498 = vmatprep.mubr.f32.mxu0 0.0
          %v3499 = vand.u32 %v3077, 4294901760
          %3500 = vmatmul.mubr.f32.gmra.mrb[0].mxu0 %v3499
          %v3501 = vpop.f32.mrb[0].mxu0
          %v3502 = vadd.f32 %v3419, %v3501
          %v3503 = vpop.f32.mrb[0].mxu0
          %3504 = vdwg.mxu0
          %3505 = vmatprep.subr.mxu0 0.0
          %v3506 = vand.u32 %v3071, 4294901760
          %3507 = vmatpush1.msra.mxu0 %v3506
          %3508 = vmatprep.subr.mxu0 0.0
          %v3509 = vand.u32 %v3080, 4294901760
          %3510 = vmatpush1.msra.mxu0 %v3509
          %3511 = vmatprep.subr.mxu0 0.0
          %3512 = vmatpush1.msra.mxu0 0.0
          %3513 = vmatprep.subr.mxu0 0.0
          %3514 = vmatpush1.msra.mxu0 0.0
          %3515 = vmatprep.subr.mxu0 0.0
          %3516 = vmatpush1.msra.mxu0 0.0
          %3517 = vmatprep.subr.mxu0 0.0
          %3518 = vmatpush1.msra.mxu0 0.0
          %3519 = vmatprep.subr.mxu0 0.0
          %3520 = vmatpush1.msra.mxu0 0.0
          %3521 = vmatprep.subr.mxu0 0.0
          %3522 = vmatpush1.msra.mxu0 0.0
          %3523 = vmatprep.subr.mxu0 0.0
          %3524 = vmatpush1.msra.mxu0 0.0
          %3525 = vmatprep.subr.mxu0 0.0
          %3526 = vmatpush1.msra.mxu0 0.0
          %3527 = vmatprep.subr.mxu0 0.0
          %3528 = vmatpush1.msra.mxu0 0.0
          %3529 = vmatprep.subr.mxu0 0.0
          %3530 = vmatpush1.msra.mxu0 0.0
          %3531 = vmatprep.subr.mxu0 0.0
          %3532 = vmatpush1.msra.mxu0 0.0
          %3533 = vmatprep.subr.mxu0 0.0
          %3534 = vmatpush1.msra.mxu0 0.0
          %3535 = vmatprep.subr.mxu0 0.0
          %3536 = vmatpush1.msra.mxu0 0.0
          %3537 = vmatprep.subr.mxu0 0.0
          %3538 = vmatpush1.msra.mxu0 0.0
          %3539 = vmatprep.subr.mxu0 0.0
          %3540 = vmatpush1.msra.mxu0 0.0
          %3541 = vmatprep.subr.mxu0 0.0
          %3542 = vmatpush1.msra.mxu0 0.0
          %3543 = vmatprep.subr.mxu0 0.0
          %3544 = vmatpush1.msra.mxu0 0.0
          %3545 = vmatprep.subr.mxu0 0.0
          %3546 = vmatpush1.msra.mxu0 0.0
          %3547 = vmatprep.subr.mxu0 0.0
          %3548 = vmatpush1.msra.mxu0 0.0
          %3549 = vmatprep.subr.mxu0 0.0
          %3550 = vmatpush1.msra.mxu0 0.0
          %3551 = vmatprep.subr.mxu0 0.0
          %3552 = vmatpush1.msra.mxu0 0.0
          %3553 = vmatprep.subr.mxu0 0.0
          %3554 = vmatpush1.msra.mxu0 0.0
          %3555 = vmatprep.subr.mxu0 0.0
          %3556 = vmatpush1.msra.mxu0 0.0
          %3557 = vmatprep.subr.mxu0 0.0
          %3558 = vmatpush1.msra.mxu0 0.0
          %3559 = vmatprep.subr.mxu0 0.0
          %3560 = vmatpush1.msra.mxu0 0.0
          %3561 = vmatprep.subr.mxu0 0.0
          %3562 = vmatpush1.msra.mxu0 0.0
          %3563 = vmatprep.subr.mxu0 0.0
          %3564 = vmatpush1.msra.mxu0 0.0
          %3565 = vmatprep.subr.mxu0 0.0
          %3566 = vmatpush1.msra.mxu0 0.0
          %3567 = vmatprep.subr.mxu0 0.0
          %3568 = vmatpush1.msra.mxu0 0.0
          %3569 = vmatprep.subr.mxu0 0.0
          %3570 = vmatpush1.msra.mxu0 0.0
          %3571 = vmatprep.mubr.f32.mxu0 0.0
          %v3572 = vand.u32 %v3074, 4294901760
          %3573 = vmatmul.mubr.f32.gmra.mrb[0].mxu0 %v3572
          %v3574 = vpop.f32.mrb[0].mxu0
          %v3575 = vadd.f32 %v3496, %v3574
          %v3576 = vpop.f32.mrb[0].mxu0
          %3577 = vmatprep.mubr.f32.mxu0 0.0
          %v3578 = vand.u32 %v3077, 4294901760
          %3579 = vmatmul.mubr.f32.gmra.mrb[0].mxu0 %v3578
          %v3580 = vpop.f32.mrb[0].mxu0
          %v3581 = vadd.f32 %v3502, %v3580
          %v3582 = vpop.f32.mrb[0].mxu0
          %3583 = vdwg.mxu0
          %v3584 = vmax.f32 %v2470, %v3575
          %v3585 = vmax.f32 %v2471, %v3581
          %s3586 = sadd.s32 48, %s236
          %s3587 = scalar_lea.vmem %s185, %s3586 [#allocation8]
          %v3588 = vld [vmem:[%s3587] sm:$0xff]
          %v3589 = vld [vmem:[%s3587 + $0x8] sm:$0xff]
          %3592 = vrot.lane.b32.xlu0 %v3588, 2
          %v3593 = vpop.permute.xlu0 %3592
          %3594 = vrot.lane.b32.xlu0 %v3589, 2
          %v3595 = vpop.permute.xlu0 %3594
          %3598 = vst.msk [vmem:[#allocation2 + $0x2] sm:$0xff] %vm248, %v3593
          %3599 = vst.msk [vmem:[#allocation2 + $0xa] sm:$0xff] %vm248, %v3595
          %v3600 = vld [vmem:[#allocation2] sm:$0xff]
          %v3601 = vld [vmem:[#allocation2 + $0x8] sm:$0xff]
          %v3602 = vld [vmem:[#allocation2 + $0x10] sm:$0x7]
          %v3603 = vld [vmem:[#allocation2 + $0x1] sm:$0xff]
          %v3604 = vld [vmem:[#allocation2 + $0x9] sm:$0xff]
          %v3605 = vld [vmem:[#allocation2 + $0x11] sm:$0x7]
          %v3606 = vmax.f32 %v3600, %v3603
          %v3607 = vmax.f32 %v3601, %v3604
          %v3608 = vmax.f32 %v3602, %v3605
          %3609 = vst.msk [vmem:[#allocation3] sm:$0xff] %vm225, %v3606
          %3610 = vst.msk [vmem:[#allocation3 + $0x8] sm:$0xff] %vm225, %v3607
          %3611 = vst.msk [vmem:[#allocation3 + $0x10] sm:$0x7] %vm262, %v3608
          %v3612 = vld [vmem:[#allocation3] sm:$0xff]
          %v3613 = vld [vmem:[#allocation3 + $0x8] sm:$0xff]
          %v3614 = vld [vmem:[#allocation3 + $0x10] sm:$0x1]
          %v3615 = vld [vmem:[#allocation3 + $0x2] sm:$0xff]
          %v3616 = vld [vmem:[#allocation3 + $0xa] sm:$0xff]
          %v3617 = vld [vmem:[#allocation3 + $0x12] sm:$0x1]
          %v3618 = vmax.f32 %v3612, %v3615
          %v3619 = vmax.f32 %v3613, %v3616
          %v3620 = vmax.f32 %v3614, %v3617
          %3621 = vst.msk [vmem:[#allocation4] sm:$0xff] %vm225, %v3618
          %3622 = vst.msk [vmem:[#allocation4 + $0x8] sm:$0xff] %vm225, %v3619
          %3623 = vst.msk [vmem:[#allocation4 + $0x10] sm:$0x1] %vm275, %v3620
          %v3624 = vld [vmem:[#allocation4] sm:$0xff]
          %v3625 = vld [vmem:[#allocation4 + $0x8] sm:$0x3f]
          %v3626 = vld [vmem:[#allocation4 + $0x3] sm:$0xff]
          %v3627 = vld [vmem:[#allocation4 + $0xb] sm:$0x3f]
          %v3628 = vmax.f32 %v3624, %v3626
          %v3629 = vmax.f32 %v3625, %v3627
          %3630 = vst.msk [vmem:[#allocation5] sm:$0xff] %vm225, %v3628
          %3631 = vst.msk [vmem:[#allocation5 + $0x8] sm:$0x3f] %vm284, %v3629
          %v3632 = vld [vmem:[#allocation5] sm:$0xff]
          %v3633 = vld [vmem:[#allocation5 + $0x8] sm:$0x3f]
          %3636 = vrot.lane.b32.xlu0 %v3632, 127
          %v3637 = vpop.permute.xlu0 %3636
          %3638 = vrot.lane.b32.xlu0 %v3633, 127
          %v3639 = vpop.permute.xlu0 %3638
          %v3642 = vmax.f32 %v3632, %v3637
          %v3643 = vmax.f32 %v3633, %v3639
          %3644 = vst.msk [vmem:[#allocation6] sm:$0xff] %vm298, %v3642
          %3645 = vst.msk [vmem:[#allocation6 + $0x8] sm:$0x3f] %vm300, %v3643
          %v3646 = vld [vmem:[#allocation6] sm:$0xff]
          %v3647 = vld [vmem:[#allocation6 + $0x8] sm:$0x3f]
          %3650 = vrot.lane.b32.xlu0 %v3646, 126
          %v3651 = vpop.permute.xlu0 %3650
          %3652 = vrot.lane.b32.xlu0 %v3647, 126
          %v3653 = vpop.permute.xlu0 %3652
          %v3656 = vmax.f32 %v3646, %v3651
          %v3657 = vmax.f32 %v3647, %v3653
          %3658 = vst.msk [vmem:[#allocation7] sm:$0xff] %vm314, %v3656
          %3659 = vst.msk [vmem:[#allocation7 + $0x8] sm:$0x3f] %vm316, %v3657
          %v3660 = vld [vmem:[#allocation7] sm:$0xff]
          %v3661 = vld [vmem:[#allocation7 + $0x8] sm:$0x3f]
          %3664 = vrot.lane.b32.xlu0 %v3660, 125
          %v3665 = vpop.permute.xlu0 %3664
          %3666 = vrot.lane.b32.xlu0 %v3661, 125
          %v3667 = vpop.permute.xlu0 %3666
          %v3670 = vmax.f32 %v3660, %v3665
          %v3671 = vmax.f32 %v3661, %v3667
          %v3672 = vld [vmem:[#allocation10] sm:$0xff]
          %v3673 = vld [vmem:[#allocation10 + $0x8] sm:$0x3f]
          %v3675 = vsel %vm332, %v3672, 0
          %v3678 = vsel %vm332, %v3673, 0
          %v3681 = vsel %vm339, %v3671, 0
          %3683 = vmatprep.subr.mxu0 0.0
          %v3684 = vand.u32 %v3670, 4294901760
          %3685 = vmatpush1.msra.mxu0 %v3684
          %3686 = vmatprep.subr.mxu0 0.0
          %v3687 = vand.u32 %v3681, 4294901760
          %3688 = vmatpush1.msra.mxu0 %v3687
          %3689 = vmatprep.subr.mxu0 0.0
          %3690 = vmatpush1.msra.mxu0 0.0
          %3691 = vmatprep.subr.mxu0 0.0
          %3692 = vmatpush1.msra.mxu0 0.0
          %3693 = vmatprep.subr.mxu0 0.0
          %3694 = vmatpush1.msra.mxu0 0.0
          %3695 = vmatprep.subr.mxu0 0.0
          %3696 = vmatpush1.msra.mxu0 0.0
          %3697 = vmatprep.subr.mxu0 0.0
          %3698 = vmatpush1.msra.mxu0 0.0
          %3699 = vmatprep.subr.mxu0 0.0
          %3700 = vmatpush1.msra.mxu0 0.0
          %3701 = vmatprep.subr.mxu0 0.0
          %3702 = vmatpush1.msra.mxu0 0.0
          %3703 = vmatprep.subr.mxu0 0.0
          %3704 = vmatpush1.msra.mxu0 0.0
          %3705 = vmatprep.subr.mxu0 0.0
          %3706 = vmatpush1.msra.mxu0 0.0
          %3707 = vmatprep.subr.mxu0 0.0
          %3708 = vmatpush1.msra.mxu0 0.0
          %3709 = vmatprep.subr.mxu0 0.0
          %3710 = vmatpush1.msra.mxu0 0.0
          %3711 = vmatprep.subr.mxu0 0.0
          %3712 = vmatpush1.msra.mxu0 0.0
          %3713 = vmatprep.subr.mxu0 0.0
          %3714 = vmatpush1.msra.mxu0 0.0
          %3715 = vmatprep.subr.mxu0 0.0
          %3716 = vmatpush1.msra.mxu0 0.0
          %3717 = vmatprep.subr.mxu0 0.0
          %3718 = vmatpush1.msra.mxu0 0.0
          %3719 = vmatprep.subr.mxu0 0.0
          %3720 = vmatpush1.msra.mxu0 0.0
          %3721 = vmatprep.subr.mxu0 0.0
          %3722 = vmatpush1.msra.mxu0 0.0
          %3723 = vmatprep.subr.mxu0 0.0
          %3724 = vmatpush1.msra.mxu0 0.0
          %3725 = vmatprep.subr.mxu0 0.0
          %3726 = vmatpush1.msra.mxu0 0.0
          %3727 = vmatprep.subr.mxu0 0.0
          %3728 = vmatpush1.msra.mxu0 0.0
          %3729 = vmatprep.subr.mxu0 0.0
          %3730 = vmatpush1.msra.mxu0 0.0
          %3731 = vmatprep.subr.mxu0 0.0
          %3732 = vmatpush1.msra.mxu0 0.0
          %3733 = vmatprep.subr.mxu0 0.0
          %3734 = vmatpush1.msra.mxu0 0.0
          %3735 = vmatprep.subr.mxu0 0.0
          %3736 = vmatpush1.msra.mxu0 0.0
          %3737 = vmatprep.subr.mxu0 0.0
          %3738 = vmatpush1.msra.mxu0 0.0
          %3739 = vmatprep.subr.mxu0 0.0
          %3740 = vmatpush1.msra.mxu0 0.0
          %3741 = vmatprep.subr.mxu0 0.0
          %3742 = vmatpush1.msra.mxu0 0.0
          %3743 = vmatprep.subr.mxu0 0.0
          %3744 = vmatpush1.msra.mxu0 0.0
          %3745 = vmatprep.subr.mxu0 0.0
          %3746 = vmatpush1.msra.mxu0 0.0
          %3747 = vmatprep.subr.mxu0 0.0
          %3748 = vmatpush1.msra.mxu0 0.0
          %3749 = vmatprep.mubr.f32.mxu0 0.0
          %v3750 = vand.u32 %v3675, 4294901760
          %v3751 = vsub.f32 %v3675, %v3750
          %v3752 = vand.u32 %v3751, 4294901760
          %v3753 = vsub.f32 %v3751, %v3752
          %v3754 = vand.u32 %v3753, 4294901760
          %3755 = vmatmul.mubr.f32.gmra.mrb[0].mxu0 %v3754
          %v3756 = vpop.f32.mrb[0].mxu0
          %v3757 = vadd.f32 0.0, %v3756
          %v3758 = vpop.f32.mrb[0].mxu0
          %3759 = vmatprep.mubr.f32.mxu0 0.0
          %v3760 = vand.u32 %v3678, 4294901760
          %v3761 = vsub.f32 %v3678, %v3760
          %v3762 = vand.u32 %v3761, 4294901760
          %v3763 = vsub.f32 %v3761, %v3762
          %v3764 = vand.u32 %v3763, 4294901760
          %3765 = vmatmul.mubr.f32.gmra.mrb[0].mxu0 %v3764
          %v3766 = vpop.f32.mrb[0].mxu0
          %v3767 = vadd.f32 0.0, %v3766
          %v3768 = vpop.f32.mrb[0].mxu0
          %3769 = vdwg.mxu0
          %3770 = vmatprep.subr.mxu0 0.0
          %v3771 = vand.u32 %v3670, 4294901760
          %v3772 = vsub.f32 %v3670, %v3771
          %v3773 = vand.u32 %v3772, 4294901760
          %v3774 = vsub.f32 %v3772, %v3773
          %v3775 = vand.u32 %v3774, 4294901760
          %3776 = vmatpush1.msra.mxu0 %v3775
          %3777 = vmatprep.subr.mxu0 0.0
          %v3778 = vand.u32 %v3681, 4294901760
          %v3779 = vsub.f32 %v3681, %v3778
          %v3780 = vand.u32 %v3779, 4294901760
          %v3781 = vsub.f32 %v3779, %v3780
          %v3782 = vand.u32 %v3781, 4294901760
          %3783 = vmatpush1.msra.mxu0 %v3782
          %3784 = vmatprep.subr.mxu0 0.0
          %3785 = vmatpush1.msra.mxu0 0.0
          %3786 = vmatprep.subr.mxu0 0.0
          %3787 = vmatpush1.msra.mxu0 0.0
          %3788 = vmatprep.subr.mxu0 0.0
          %3789 = vmatpush1.msra.mxu0 0.0
          %3790 = vmatprep.subr.mxu0 0.0
          %3791 = vmatpush1.msra.mxu0 0.0
          %3792 = vmatprep.subr.mxu0 0.0
          %3793 = vmatpush1.msra.mxu0 0.0
          %3794 = vmatprep.subr.mxu0 0.0
          %3795 = vmatpush1.msra.mxu0 0.0
          %3796 = vmatprep.subr.mxu0 0.0
          %3797 = vmatpush1.msra.mxu0 0.0
          %3798 = vmatprep.subr.mxu0 0.0
          %3799 = vmatpush1.msra.mxu0 0.0
          %3800 = vmatprep.subr.mxu0 0.0
          %3801 = vmatpush1.msra.mxu0 0.0
          %3802 = vmatprep.subr.mxu0 0.0
          %3803 = vmatpush1.msra.mxu0 0.0
          %3804 = vmatprep.subr.mxu0 0.0
          %3805 = vmatpush1.msra.mxu0 0.0
          %3806 = vmatprep.subr.mxu0 0.0
          %3807 = vmatpush1.msra.mxu0 0.0
          %3808 = vmatprep.subr.mxu0 0.0
          %3809 = vmatpush1.msra.mxu0 0.0
          %3810 = vmatprep.subr.mxu0 0.0
          %3811 = vmatpush1.msra.mxu0 0.0
          %3812 = vmatprep.subr.mxu0 0.0
          %3813 = vmatpush1.msra.mxu0 0.0
          %3814 = vmatprep.subr.mxu0 0.0
          %3815 = vmatpush1.msra.mxu0 0.0
          %3816 = vmatprep.subr.mxu0 0.0
          %3817 = vmatpush1.msra.mxu0 0.0
          %3818 = vmatprep.subr.mxu0 0.0
          %3819 = vmatpush1.msra.mxu0 0.0
          %3820 = vmatprep.subr.mxu0 0.0
          %3821 = vmatpush1.msra.mxu0 0.0
          %3822 = vmatprep.subr.mxu0 0.0
          %3823 = vmatpush1.msra.mxu0 0.0
          %3824 = vmatprep.subr.mxu0 0.0
          %3825 = vmatpush1.msra.mxu0 0.0
          %3826 = vmatprep.subr.mxu0 0.0
          %3827 = vmatpush1.msra.mxu0 0.0
          %3828 = vmatprep.subr.mxu0 0.0
          %3829 = vmatpush1.msra.mxu0 0.0
          %3830 = vmatprep.subr.mxu0 0.0
          %3831 = vmatpush1.msra.mxu0 0.0
          %3832 = vmatprep.subr.mxu0 0.0
          %3833 = vmatpush1.msra.mxu0 0.0
          %3834 = vmatprep.subr.mxu0 0.0
          %3835 = vmatpush1.msra.mxu0 0.0
          %3836 = vmatprep.subr.mxu0 0.0
          %3837 = vmatpush1.msra.mxu0 0.0
          %3838 = vmatprep.subr.mxu0 0.0
          %3839 = vmatpush1.msra.mxu0 0.0
          %3840 = vmatprep.subr.mxu0 0.0
          %3841 = vmatpush1.msra.mxu0 0.0
          %3842 = vmatprep.subr.mxu0 0.0
          %3843 = vmatpush1.msra.mxu0 0.0
          %3844 = vmatprep.mubr.f32.mxu0 0.0
          %v3845 = vand.u32 %v3675, 4294901760
          %3846 = vmatmul.mubr.f32.gmra.mrb[0].mxu0 %v3845
          %v3847 = vpop.f32.mrb[0].mxu0
          %v3848 = vadd.f32 %v3757, %v3847
          %v3849 = vpop.f32.mrb[0].mxu0
          %3850 = vmatprep.mubr.f32.mxu0 0.0
          %v3851 = vand.u32 %v3678, 4294901760
          %3852 = vmatmul.mubr.f32.gmra.mrb[0].mxu0 %v3851
          %v3853 = vpop.f32.mrb[0].mxu0
          %v3854 = vadd.f32 %v3767, %v3853
          %v3855 = vpop.f32.mrb[0].mxu0
          %3856 = vdwg.mxu0
          %3857 = vmatprep.subr.mxu0 0.0
          %v3858 = vand.u32 %v3670, 4294901760
          %v3859 = vsub.f32 %v3670, %v3858
          %3860 = vmatpush1.msra.mxu0 %v3859
          %3861 = vmatprep.subr.mxu0 0.0
          %v3862 = vand.u32 %v3681, 4294901760
          %v3863 = vsub.f32 %v3681, %v3862
          %3864 = vmatpush1.msra.mxu0 %v3863
          %3865 = vmatprep.subr.mxu0 0.0
          %3866 = vmatpush1.msra.mxu0 0.0
          %3867 = vmatprep.subr.mxu0 0.0
          %3868 = vmatpush1.msra.mxu0 0.0
          %3869 = vmatprep.subr.mxu0 0.0
          %3870 = vmatpush1.msra.mxu0 0.0
          %3871 = vmatprep.subr.mxu0 0.0
          %3872 = vmatpush1.msra.mxu0 0.0
          %3873 = vmatprep.subr.mxu0 0.0
          %3874 = vmatpush1.msra.mxu0 0.0
          %3875 = vmatprep.subr.mxu0 0.0
          %3876 = vmatpush1.msra.mxu0 0.0
          %3877 = vmatprep.subr.mxu0 0.0
          %3878 = vmatpush1.msra.mxu0 0.0
          %3879 = vmatprep.subr.mxu0 0.0
          %3880 = vmatpush1.msra.mxu0 0.0
          %3881 = vmatprep.subr.mxu0 0.0
          %3882 = vmatpush1.msra.mxu0 0.0
          %3883 = vmatprep.subr.mxu0 0.0
          %3884 = vmatpush1.msra.mxu0 0.0
          %3885 = vmatprep.subr.mxu0 0.0
          %3886 = vmatpush1.msra.mxu0 0.0
          %3887 = vmatprep.subr.mxu0 0.0
          %3888 = vmatpush1.msra.mxu0 0.0
          %3889 = vmatprep.subr.mxu0 0.0
          %3890 = vmatpush1.msra.mxu0 0.0
          %3891 = vmatprep.subr.mxu0 0.0
          %3892 = vmatpush1.msra.mxu0 0.0
          %3893 = vmatprep.subr.mxu0 0.0
          %3894 = vmatpush1.msra.mxu0 0.0
          %3895 = vmatprep.subr.mxu0 0.0
          %3896 = vmatpush1.msra.mxu0 0.0
          %3897 = vmatprep.subr.mxu0 0.0
          %3898 = vmatpush1.msra.mxu0 0.0
          %3899 = vmatprep.subr.mxu0 0.0
          %3900 = vmatpush1.msra.mxu0 0.0
          %3901 = vmatprep.subr.mxu0 0.0
          %3902 = vmatpush1.msra.mxu0 0.0
          %3903 = vmatprep.subr.mxu0 0.0
          %3904 = vmatpush1.msra.mxu0 0.0
          %3905 = vmatprep.subr.mxu0 0.0
          %3906 = vmatpush1.msra.mxu0 0.0
          %3907 = vmatprep.subr.mxu0 0.0
          %3908 = vmatpush1.msra.mxu0 0.0
          %3909 = vmatprep.subr.mxu0 0.0
          %3910 = vmatpush1.msra.mxu0 0.0
          %3911 = vmatprep.subr.mxu0 0.0
          %3912 = vmatpush1.msra.mxu0 0.0
          %3913 = vmatprep.subr.mxu0 0.0
          %3914 = vmatpush1.msra.mxu0 0.0
          %3915 = vmatprep.subr.mxu0 0.0
          %3916 = vmatpush1.msra.mxu0 0.0
          %3917 = vmatprep.subr.mxu0 0.0
          %3918 = vmatpush1.msra.mxu0 0.0
          %3919 = vmatprep.subr.mxu0 0.0
          %3920 = vmatpush1.msra.mxu0 0.0
          %3921 = vmatprep.subr.mxu0 0.0
          %3922 = vmatpush1.msra.mxu0 0.0
          %3923 = vmatprep.subr.mxu0 0.0
          %3924 = vmatpush1.msra.mxu0 0.0
          %3925 = vmatprep.mubr.f32.mxu0 0.0
          %v3926 = vand.u32 %v3675, 4294901760
          %v3927 = vsub.f32 %v3675, %v3926
          %3928 = vmatmul.mubr.f32.gmra.mrb[0].mxu0 %v3927
          %v3929 = vpop.f32.mrb[0].mxu0
          %v3930 = vadd.f32 %v3848, %v3929
          %v3931 = vpop.f32.mrb[0].mxu0
          %3932 = vmatprep.mubr.f32.mxu0 0.0
          %v3933 = vand.u32 %v3678, 4294901760
          %v3934 = vsub.f32 %v3678, %v3933
          %3935 = vmatmul.mubr.f32.gmra.mrb[0].mxu0 %v3934
          %v3936 = vpop.f32.mrb[0].mxu0
          %v3937 = vadd.f32 %v3854, %v3936
          %v3938 = vpop.f32.mrb[0].mxu0
          %3939 = vdwg.mxu0
          %3940 = vmatprep.subr.mxu0 0.0
          %v3941 = vand.u32 %v3670, 4294901760
          %3942 = vmatpush1.msra.mxu0 %v3941
          %3943 = vmatprep.subr.mxu0 0.0
          %v3944 = vand.u32 %v3681, 4294901760
          %3945 = vmatpush1.msra.mxu0 %v3944
          %3946 = vmatprep.subr.mxu0 0.0
          %3947 = vmatpush1.msra.mxu0 0.0
          %3948 = vmatprep.subr.mxu0 0.0
          %3949 = vmatpush1.msra.mxu0 0.0
          %3950 = vmatprep.subr.mxu0 0.0
          %3951 = vmatpush1.msra.mxu0 0.0
          %3952 = vmatprep.subr.mxu0 0.0
          %3953 = vmatpush1.msra.mxu0 0.0
          %3954 = vmatprep.subr.mxu0 0.0
          %3955 = vmatpush1.msra.mxu0 0.0
          %3956 = vmatprep.subr.mxu0 0.0
          %3957 = vmatpush1.msra.mxu0 0.0
          %3958 = vmatprep.subr.mxu0 0.0
          %3959 = vmatpush1.msra.mxu0 0.0
          %3960 = vmatprep.subr.mxu0 0.0
          %3961 = vmatpush1.msra.mxu0 0.0
          %3962 = vmatprep.subr.mxu0 0.0
          %3963 = vmatpush1.msra.mxu0 0.0
          %3964 = vmatprep.subr.mxu0 0.0
          %3965 = vmatpush1.msra.mxu0 0.0
          %3966 = vmatprep.subr.mxu0 0.0
          %3967 = vmatpush1.msra.mxu0 0.0
          %3968 = vmatprep.subr.mxu0 0.0
          %3969 = vmatpush1.msra.mxu0 0.0
          %3970 = vmatprep.subr.mxu0 0.0
          %3971 = vmatpush1.msra.mxu0 0.0
          %3972 = vmatprep.subr.mxu0 0.0
          %3973 = vmatpush1.msra.mxu0 0.0
          %3974 = vmatprep.subr.mxu0 0.0
          %3975 = vmatpush1.msra.mxu0 0.0
          %3976 = vmatprep.subr.mxu0 0.0
          %3977 = vmatpush1.msra.mxu0 0.0
          %3978 = vmatprep.subr.mxu0 0.0
          %3979 = vmatpush1.msra.mxu0 0.0
          %3980 = vmatprep.subr.mxu0 0.0
          %3981 = vmatpush1.msra.mxu0 0.0
          %3982 = vmatprep.subr.mxu0 0.0
          %3983 = vmatpush1.msra.mxu0 0.0
          %3984 = vmatprep.subr.mxu0 0.0
          %3985 = vmatpush1.msra.mxu0 0.0
          %3986 = vmatprep.subr.mxu0 0.0
          %3987 = vmatpush1.msra.mxu0 0.0
          %3988 = vmatprep.subr.mxu0 0.0
          %3989 = vmatpush1.msra.mxu0 0.0
          %3990 = vmatprep.subr.mxu0 0.0
          %3991 = vmatpush1.msra.mxu0 0.0
          %3992 = vmatprep.subr.mxu0 0.0
          %3993 = vmatpush1.msra.mxu0 0.0
          %3994 = vmatprep.subr.mxu0 0.0
          %3995 = vmatpush1.msra.mxu0 0.0
          %3996 = vmatprep.subr.mxu0 0.0
          %3997 = vmatpush1.msra.mxu0 0.0
          %3998 = vmatprep.subr.mxu0 0.0
          %3999 = vmatpush1.msra.mxu0 0.0
          %4000 = vmatprep.subr.mxu0 0.0
          %4001 = vmatpush1.msra.mxu0 0.0
          %4002 = vmatprep.subr.mxu0 0.0
          %4003 = vmatpush1.msra.mxu0 0.0
          %4004 = vmatprep.subr.mxu0 0.0
          %4005 = vmatpush1.msra.mxu0 0.0
          %4006 = vmatprep.mubr.f32.mxu0 0.0
          %v4007 = vand.u32 %v3675, 4294901760
          %v4008 = vsub.f32 %v3675, %v4007
          %v4009 = vand.u32 %v4008, 4294901760
          %4010 = vmatmul.mubr.f32.gmra.mrb[0].mxu0 %v4009
          %v4011 = vpop.f32.mrb[0].mxu0
          %v4012 = vadd.f32 %v3930, %v4011
          %v4013 = vpop.f32.mrb[0].mxu0
          %4014 = vmatprep.mubr.f32.mxu0 0.0
          %v4015 = vand.u32 %v3678, 4294901760
          %v4016 = vsub.f32 %v3678, %v4015
          %v4017 = vand.u32 %v4016, 4294901760
          %4018 = vmatmul.mubr.f32.gmra.mrb[0].mxu0 %v4017
          %v4019 = vpop.f32.mrb[0].mxu0
          %v4020 = vadd.f32 %v3937, %v4019
          %v4021 = vpop.f32.mrb[0].mxu0
          %4022 = vdwg.mxu0
          %4023 = vmatprep.subr.mxu0 0.0
          %v4024 = vand.u32 %v3670, 4294901760
          %v4025 = vsub.f32 %v3670, %v4024
          %v4026 = vand.u32 %v4025, 4294901760
          %4027 = vmatpush1.msra.mxu0 %v4026
          %4028 = vmatprep.subr.mxu0 0.0
          %v4029 = vand.u32 %v3681, 4294901760
          %v4030 = vsub.f32 %v3681, %v4029
          %v4031 = vand.u32 %v4030, 4294901760
          %4032 = vmatpush1.msra.mxu0 %v4031
          %4033 = vmatprep.subr.mxu0 0.0
          %4034 = vmatpush1.msra.mxu0 0.0
          %4035 = vmatprep.subr.mxu0 0.0
          %4036 = vmatpush1.msra.mxu0 0.0
          %4037 = vmatprep.subr.mxu0 0.0
          %4038 = vmatpush1.msra.mxu0 0.0
          %4039 = vmatprep.subr.mxu0 0.0
          %4040 = vmatpush1.msra.mxu0 0.0
          %4041 = vmatprep.subr.mxu0 0.0
          %4042 = vmatpush1.msra.mxu0 0.0
          %4043 = vmatprep.subr.mxu0 0.0
          %4044 = vmatpush1.msra.mxu0 0.0
          %4045 = vmatprep.subr.mxu0 0.0
          %4046 = vmatpush1.msra.mxu0 0.0
          %4047 = vmatprep.subr.mxu0 0.0
          %4048 = vmatpush1.msra.mxu0 0.0
          %4049 = vmatprep.subr.mxu0 0.0
          %4050 = vmatpush1.msra.mxu0 0.0
          %4051 = vmatprep.subr.mxu0 0.0
          %4052 = vmatpush1.msra.mxu0 0.0
          %4053 = vmatprep.subr.mxu0 0.0
          %4054 = vmatpush1.msra.mxu0 0.0
          %4055 = vmatprep.subr.mxu0 0.0
          %4056 = vmatpush1.msra.mxu0 0.0
          %4057 = vmatprep.subr.mxu0 0.0
          %4058 = vmatpush1.msra.mxu0 0.0
          %4059 = vmatprep.subr.mxu0 0.0
          %4060 = vmatpush1.msra.mxu0 0.0
          %4061 = vmatprep.subr.mxu0 0.0
          %4062 = vmatpush1.msra.mxu0 0.0
          %4063 = vmatprep.subr.mxu0 0.0
          %4064 = vmatpush1.msra.mxu0 0.0
          %4065 = vmatprep.subr.mxu0 0.0
          %4066 = vmatpush1.msra.mxu0 0.0
          %4067 = vmatprep.subr.mxu0 0.0
          %4068 = vmatpush1.msra.mxu0 0.0
          %4069 = vmatprep.subr.mxu0 0.0
          %4070 = vmatpush1.msra.mxu0 0.0
          %4071 = vmatprep.subr.mxu0 0.0
          %4072 = vmatpush1.msra.mxu0 0.0
          %4073 = vmatprep.subr.mxu0 0.0
          %4074 = vmatpush1.msra.mxu0 0.0
          %4075 = vmatprep.subr.mxu0 0.0
          %4076 = vmatpush1.msra.mxu0 0.0
          %4077 = vmatprep.subr.mxu0 0.0
          %4078 = vmatpush1.msra.mxu0 0.0
          %4079 = vmatprep.subr.mxu0 0.0
          %4080 = vmatpush1.msra.mxu0 0.0
          %4081 = vmatprep.subr.mxu0 0.0
          %4082 = vmatpush1.msra.mxu0 0.0
          %4083 = vmatprep.subr.mxu0 0.0
          %4084 = vmatpush1.msra.mxu0 0.0
          %4085 = vmatprep.subr.mxu0 0.0
          %4086 = vmatpush1.msra.mxu0 0.0
          %4087 = vmatprep.subr.mxu0 0.0
          %4088 = vmatpush1.msra.mxu0 0.0
          %4089 = vmatprep.subr.mxu0 0.0
          %4090 = vmatpush1.msra.mxu0 0.0
          %4091 = vmatprep.subr.mxu0 0.0
          %4092 = vmatpush1.msra.mxu0 0.0
          %4093 = vmatprep.mubr.f32.mxu0 0.0
          %v4094 = vand.u32 %v3675, 4294901760
          %4095 = vmatmul.mubr.f32.gmra.mrb[0].mxu0 %v4094
          %v4096 = vpop.f32.mrb[0].mxu0
          %v4097 = vadd.f32 %v4012, %v4096
          %v4098 = vpop.f32.mrb[0].mxu0
          %4099 = vmatprep.mubr.f32.mxu0 0.0
          %v4100 = vand.u32 %v3678, 4294901760
          %4101 = vmatmul.mubr.f32.gmra.mrb[0].mxu0 %v4100
          %v4102 = vpop.f32.mrb[0].mxu0
          %v4103 = vadd.f32 %v4020, %v4102
          %v4104 = vpop.f32.mrb[0].mxu0
          %4105 = vdwg.mxu0
          %4106 = vmatprep.subr.mxu0 0.0
          %v4107 = vand.u32 %v3670, 4294901760
          %4108 = vmatpush1.msra.mxu0 %v4107
          %4109 = vmatprep.subr.mxu0 0.0
          %v4110 = vand.u32 %v3681, 4294901760
          %4111 = vmatpush1.msra.mxu0 %v4110
          %4112 = vmatprep.subr.mxu0 0.0
          %4113 = vmatpush1.msra.mxu0 0.0
          %4114 = vmatprep.subr.mxu0 0.0
          %4115 = vmatpush1.msra.mxu0 0.0
          %4116 = vmatprep.subr.mxu0 0.0
          %4117 = vmatpush1.msra.mxu0 0.0
          %4118 = vmatprep.subr.mxu0 0.0
          %4119 = vmatpush1.msra.mxu0 0.0
          %4120 = vmatprep.subr.mxu0 0.0
          %4121 = vmatpush1.msra.mxu0 0.0
          %4122 = vmatprep.subr.mxu0 0.0
          %4123 = vmatpush1.msra.mxu0 0.0
          %4124 = vmatprep.subr.mxu0 0.0
          %4125 = vmatpush1.msra.mxu0 0.0
          %4126 = vmatprep.subr.mxu0 0.0
          %4127 = vmatpush1.msra.mxu0 0.0
          %4128 = vmatprep.subr.mxu0 0.0
          %4129 = vmatpush1.msra.mxu0 0.0
          %4130 = vmatprep.subr.mxu0 0.0
          %4131 = vmatpush1.msra.mxu0 0.0
          %4132 = vmatprep.subr.mxu0 0.0
          %4133 = vmatpush1.msra.mxu0 0.0
          %4134 = vmatprep.subr.mxu0 0.0
          %4135 = vmatpush1.msra.mxu0 0.0
          %4136 = vmatprep.subr.mxu0 0.0
          %4137 = vmatpush1.msra.mxu0 0.0
          %4138 = vmatprep.subr.mxu0 0.0
          %4139 = vmatpush1.msra.mxu0 0.0
          %4140 = vmatprep.subr.mxu0 0.0
          %4141 = vmatpush1.msra.mxu0 0.0
          %4142 = vmatprep.subr.mxu0 0.0
          %4143 = vmatpush1.msra.mxu0 0.0
          %4144 = vmatprep.subr.mxu0 0.0
          %4145 = vmatpush1.msra.mxu0 0.0
          %4146 = vmatprep.subr.mxu0 0.0
          %4147 = vmatpush1.msra.mxu0 0.0
          %4148 = vmatprep.subr.mxu0 0.0
          %4149 = vmatpush1.msra.mxu0 0.0
          %4150 = vmatprep.subr.mxu0 0.0
          %4151 = vmatpush1.msra.mxu0 0.0
          %4152 = vmatprep.subr.mxu0 0.0
          %4153 = vmatpush1.msra.mxu0 0.0
          %4154 = vmatprep.subr.mxu0 0.0
          %4155 = vmatpush1.msra.mxu0 0.0
          %4156 = vmatprep.subr.mxu0 0.0
          %4157 = vmatpush1.msra.mxu0 0.0
          %4158 = vmatprep.subr.mxu0 0.0
          %4159 = vmatpush1.msra.mxu0 0.0
          %4160 = vmatprep.subr.mxu0 0.0
          %4161 = vmatpush1.msra.mxu0 0.0
          %4162 = vmatprep.subr.mxu0 0.0
          %4163 = vmatpush1.msra.mxu0 0.0
          %4164 = vmatprep.subr.mxu0 0.0
          %4165 = vmatpush1.msra.mxu0 0.0
          %4166 = vmatprep.subr.mxu0 0.0
          %4167 = vmatpush1.msra.mxu0 0.0
          %4168 = vmatprep.subr.mxu0 0.0
          %4169 = vmatpush1.msra.mxu0 0.0
          %4170 = vmatprep.subr.mxu0 0.0
          %4171 = vmatpush1.msra.mxu0 0.0
          %4172 = vmatprep.mubr.f32.mxu0 0.0
          %v4173 = vand.u32 %v3675, 4294901760
          %4174 = vmatmul.mubr.f32.gmra.mrb[0].mxu0 %v4173
          %v4175 = vpop.f32.mrb[0].mxu0
          %v4176 = vadd.f32 %v4097, %v4175
          %v4177 = vpop.f32.mrb[0].mxu0
          %4178 = vmatprep.mubr.f32.mxu0 0.0
          %v4179 = vand.u32 %v3678, 4294901760
          %4180 = vmatmul.mubr.f32.gmra.mrb[0].mxu0 %v4179
          %v4181 = vpop.f32.mrb[0].mxu0
          %v4182 = vadd.f32 %v4103, %v4181
          %v4183 = vpop.f32.mrb[0].mxu0
          %4184 = vdwg.mxu0
          %v4185 = vld [vmem:[#allocation12] sm:$0xff]
          %v4186 = vld [vmem:[#allocation12 + $0x8] sm:$0x3f]
          %v4188 = vsel %vm332, %v4176, 0
          %v4191 = vsel %vm332, %v4182, 0
          %v4194 = vsel %vm339, %v4186, 0
          %4196 = vmatprep.subr.mxu0 0.0
          %v4197 = vand.u32 %v4185, 4294901760
          %4198 = vmatpush1.msra.mxu0 %v4197
          %4199 = vmatprep.subr.mxu0 0.0
          %v4200 = vand.u32 %v4194, 4294901760
          %4201 = vmatpush1.msra.mxu0 %v4200
          %4202 = vmatprep.subr.mxu0 0.0
          %4203 = vmatpush1.msra.mxu0 0.0
          %4204 = vmatprep.subr.mxu0 0.0
          %4205 = vmatpush1.msra.mxu0 0.0
          %4206 = vmatprep.subr.mxu0 0.0
          %4207 = vmatpush1.msra.mxu0 0.0
          %4208 = vmatprep.subr.mxu0 0.0
          %4209 = vmatpush1.msra.mxu0 0.0
          %4210 = vmatprep.subr.mxu0 0.0
          %4211 = vmatpush1.msra.mxu0 0.0
          %4212 = vmatprep.subr.mxu0 0.0
          %4213 = vmatpush1.msra.mxu0 0.0
          %4214 = vmatprep.subr.mxu0 0.0
          %4215 = vmatpush1.msra.mxu0 0.0
          %4216 = vmatprep.subr.mxu0 0.0
          %4217 = vmatpush1.msra.mxu0 0.0
          %4218 = vmatprep.subr.mxu0 0.0
          %4219 = vmatpush1.msra.mxu0 0.0
          %4220 = vmatprep.subr.mxu0 0.0
          %4221 = vmatpush1.msra.mxu0 0.0
          %4222 = vmatprep.subr.mxu0 0.0
          %4223 = vmatpush1.msra.mxu0 0.0
          %4224 = vmatprep.subr.mxu0 0.0
          %4225 = vmatpush1.msra.mxu0 0.0
          %4226 = vmatprep.subr.mxu0 0.0
          %4227 = vmatpush1.msra.mxu0 0.0
          %4228 = vmatprep.subr.mxu0 0.0
          %4229 = vmatpush1.msra.mxu0 0.0
          %4230 = vmatprep.subr.mxu0 0.0
          %4231 = vmatpush1.msra.mxu0 0.0
          %4232 = vmatprep.subr.mxu0 0.0
          %4233 = vmatpush1.msra.mxu0 0.0
          %4234 = vmatprep.subr.mxu0 0.0
          %4235 = vmatpush1.msra.mxu0 0.0
          %4236 = vmatprep.subr.mxu0 0.0
          %4237 = vmatpush1.msra.mxu0 0.0
          %4238 = vmatprep.subr.mxu0 0.0
          %4239 = vmatpush1.msra.mxu0 0.0
          %4240 = vmatprep.subr.mxu0 0.0
          %4241 = vmatpush1.msra.mxu0 0.0
          %4242 = vmatprep.subr.mxu0 0.0
          %4243 = vmatpush1.msra.mxu0 0.0
          %4244 = vmatprep.subr.mxu0 0.0
          %4245 = vmatpush1.msra.mxu0 0.0
          %4246 = vmatprep.subr.mxu0 0.0
          %4247 = vmatpush1.msra.mxu0 0.0
          %4248 = vmatprep.subr.mxu0 0.0
          %4249 = vmatpush1.msra.mxu0 0.0
          %4250 = vmatprep.subr.mxu0 0.0
          %4251 = vmatpush1.msra.mxu0 0.0
          %4252 = vmatprep.subr.mxu0 0.0
          %4253 = vmatpush1.msra.mxu0 0.0
          %4254 = vmatprep.subr.mxu0 0.0
          %4255 = vmatpush1.msra.mxu0 0.0
          %4256 = vmatprep.subr.mxu0 0.0
          %4257 = vmatpush1.msra.mxu0 0.0
          %4258 = vmatprep.subr.mxu0 0.0
          %4259 = vmatpush1.msra.mxu0 0.0
          %4260 = vmatprep.subr.mxu0 0.0
          %4261 = vmatpush1.msra.mxu0 0.0
          %4262 = vmatprep.mubr.f32.mxu0 0.0
          %v4263 = vand.u32 %v4188, 4294901760
          %v4264 = vsub.f32 %v4188, %v4263
          %v4265 = vand.u32 %v4264, 4294901760
          %v4266 = vsub.f32 %v4264, %v4265
          %v4267 = vand.u32 %v4266, 4294901760
          %4268 = vmatmul.mubr.f32.gmra.mrb[0].mxu0 %v4267
          %v4269 = vpop.f32.mrb[0].mxu0
          %v4270 = vadd.f32 0.0, %v4269
          %v4271 = vpop.f32.mrb[0].mxu0
          %4272 = vmatprep.mubr.f32.mxu0 0.0
          %v4273 = vand.u32 %v4191, 4294901760
          %v4274 = vsub.f32 %v4191, %v4273
          %v4275 = vand.u32 %v4274, 4294901760
          %v4276 = vsub.f32 %v4274, %v4275
          %v4277 = vand.u32 %v4276, 4294901760
          %4278 = vmatmul.mubr.f32.gmra.mrb[0].mxu0 %v4277
          %v4279 = vpop.f32.mrb[0].mxu0
          %v4280 = vadd.f32 0.0, %v4279
          %v4281 = vpop.f32.mrb[0].mxu0
          %4282 = vdwg.mxu0
          %4283 = vmatprep.subr.mxu0 0.0
          %v4284 = vand.u32 %v4185, 4294901760
          %v4285 = vsub.f32 %v4185, %v4284
          %v4286 = vand.u32 %v4285, 4294901760
          %v4287 = vsub.f32 %v4285, %v4286
          %v4288 = vand.u32 %v4287, 4294901760
          %4289 = vmatpush1.msra.mxu0 %v4288
          %4290 = vmatprep.subr.mxu0 0.0
          %v4291 = vand.u32 %v4194, 4294901760
          %v4292 = vsub.f32 %v4194, %v4291
          %v4293 = vand.u32 %v4292, 4294901760
          %v4294 = vsub.f32 %v4292, %v4293
          %v4295 = vand.u32 %v4294, 4294901760
          %4296 = vmatpush1.msra.mxu0 %v4295
          %4297 = vmatprep.subr.mxu0 0.0
          %4298 = vmatpush1.msra.mxu0 0.0
          %4299 = vmatprep.subr.mxu0 0.0
          %4300 = vmatpush1.msra.mxu0 0.0
          %4301 = vmatprep.subr.mxu0 0.0
          %4302 = vmatpush1.msra.mxu0 0.0
          %4303 = vmatprep.subr.mxu0 0.0
          %4304 = vmatpush1.msra.mxu0 0.0
          %4305 = vmatprep.subr.mxu0 0.0
          %4306 = vmatpush1.msra.mxu0 0.0
          %4307 = vmatprep.subr.mxu0 0.0
          %4308 = vmatpush1.msra.mxu0 0.0
          %4309 = vmatprep.subr.mxu0 0.0
          %4310 = vmatpush1.msra.mxu0 0.0
          %4311 = vmatprep.subr.mxu0 0.0
          %4312 = vmatpush1.msra.mxu0 0.0
          %4313 = vmatprep.subr.mxu0 0.0
          %4314 = vmatpush1.msra.mxu0 0.0
          %4315 = vmatprep.subr.mxu0 0.0
          %4316 = vmatpush1.msra.mxu0 0.0
          %4317 = vmatprep.subr.mxu0 0.0
          %4318 = vmatpush1.msra.mxu0 0.0
          %4319 = vmatprep.subr.mxu0 0.0
          %4320 = vmatpush1.msra.mxu0 0.0
          %4321 = vmatprep.subr.mxu0 0.0
          %4322 = vmatpush1.msra.mxu0 0.0
          %4323 = vmatprep.subr.mxu0 0.0
          %4324 = vmatpush1.msra.mxu0 0.0
          %4325 = vmatprep.subr.mxu0 0.0
          %4326 = vmatpush1.msra.mxu0 0.0
          %4327 = vmatprep.subr.mxu0 0.0
          %4328 = vmatpush1.msra.mxu0 0.0
          %4329 = vmatprep.subr.mxu0 0.0
          %4330 = vmatpush1.msra.mxu0 0.0
          %4331 = vmatprep.subr.mxu0 0.0
          %4332 = vmatpush1.msra.mxu0 0.0
          %4333 = vmatprep.subr.mxu0 0.0
          %4334 = vmatpush1.msra.mxu0 0.0
          %4335 = vmatprep.subr.mxu0 0.0
          %4336 = vmatpush1.msra.mxu0 0.0
          %4337 = vmatprep.subr.mxu0 0.0
          %4338 = vmatpush1.msra.mxu0 0.0
          %4339 = vmatprep.subr.mxu0 0.0
          %4340 = vmatpush1.msra.mxu0 0.0
          %4341 = vmatprep.subr.mxu0 0.0
          %4342 = vmatpush1.msra.mxu0 0.0
          %4343 = vmatprep.subr.mxu0 0.0
          %4344 = vmatpush1.msra.mxu0 0.0
          %4345 = vmatprep.subr.mxu0 0.0
          %4346 = vmatpush1.msra.mxu0 0.0
          %4347 = vmatprep.subr.mxu0 0.0
          %4348 = vmatpush1.msra.mxu0 0.0
          %4349 = vmatprep.subr.mxu0 0.0
          %4350 = vmatpush1.msra.mxu0 0.0
          %4351 = vmatprep.subr.mxu0 0.0
          %4352 = vmatpush1.msra.mxu0 0.0
          %4353 = vmatprep.subr.mxu0 0.0
          %4354 = vmatpush1.msra.mxu0 0.0
          %4355 = vmatprep.subr.mxu0 0.0
          %4356 = vmatpush1.msra.mxu0 0.0
          %4357 = vmatprep.mubr.f32.mxu0 0.0
          %v4358 = vand.u32 %v4188, 4294901760
          %4359 = vmatmul.mubr.f32.gmra.mrb[0].mxu0 %v4358
          %v4360 = vpop.f32.mrb[0].mxu0
          %v4361 = vadd.f32 %v4270, %v4360
          %v4362 = vpop.f32.mrb[0].mxu0
          %4363 = vmatprep.mubr.f32.mxu0 0.0
          %v4364 = vand.u32 %v4191, 4294901760
          %4365 = vmatmul.mubr.f32.gmra.mrb[0].mxu0 %v4364
          %v4366 = vpop.f32.mrb[0].mxu0
          %v4367 = vadd.f32 %v4280, %v4366
          %v4368 = vpop.f32.mrb[0].mxu0
          %4369 = vdwg.mxu0
          %4370 = vmatprep.subr.mxu0 0.0
          %v4371 = vand.u32 %v4185, 4294901760
          %v4372 = vsub.f32 %v4185, %v4371
          %4373 = vmatpush1.msra.mxu0 %v4372
          %4374 = vmatprep.subr.mxu0 0.0
          %v4375 = vand.u32 %v4194, 4294901760
          %v4376 = vsub.f32 %v4194, %v4375
          %4377 = vmatpush1.msra.mxu0 %v4376
          %4378 = vmatprep.subr.mxu0 0.0
          %4379 = vmatpush1.msra.mxu0 0.0
          %4380 = vmatprep.subr.mxu0 0.0
          %4381 = vmatpush1.msra.mxu0 0.0
          %4382 = vmatprep.subr.mxu0 0.0
          %4383 = vmatpush1.msra.mxu0 0.0
          %4384 = vmatprep.subr.mxu0 0.0
          %4385 = vmatpush1.msra.mxu0 0.0
          %4386 = vmatprep.subr.mxu0 0.0
          %4387 = vmatpush1.msra.mxu0 0.0
          %4388 = vmatprep.subr.mxu0 0.0
          %4389 = vmatpush1.msra.mxu0 0.0
          %4390 = vmatprep.subr.mxu0 0.0
          %4391 = vmatpush1.msra.mxu0 0.0
          %4392 = vmatprep.subr.mxu0 0.0
          %4393 = vmatpush1.msra.mxu0 0.0
          %4394 = vmatprep.subr.mxu0 0.0
          %4395 = vmatpush1.msra.mxu0 0.0
          %4396 = vmatprep.subr.mxu0 0.0
          %4397 = vmatpush1.msra.mxu0 0.0
          %4398 = vmatprep.subr.mxu0 0.0
          %4399 = vmatpush1.msra.mxu0 0.0
          %4400 = vmatprep.subr.mxu0 0.0
          %4401 = vmatpush1.msra.mxu0 0.0
          %4402 = vmatprep.subr.mxu0 0.0
          %4403 = vmatpush1.msra.mxu0 0.0
          %4404 = vmatprep.subr.mxu0 0.0
          %4405 = vmatpush1.msra.mxu0 0.0
          %4406 = vmatprep.subr.mxu0 0.0
          %4407 = vmatpush1.msra.mxu0 0.0
          %4408 = vmatprep.subr.mxu0 0.0
          %4409 = vmatpush1.msra.mxu0 0.0
          %4410 = vmatprep.subr.mxu0 0.0
          %4411 = vmatpush1.msra.mxu0 0.0
          %4412 = vmatprep.subr.mxu0 0.0
          %4413 = vmatpush1.msra.mxu0 0.0
          %4414 = vmatprep.subr.mxu0 0.0
          %4415 = vmatpush1.msra.mxu0 0.0
          %4416 = vmatprep.subr.mxu0 0.0
          %4417 = vmatpush1.msra.mxu0 0.0
          %4418 = vmatprep.subr.mxu0 0.0
          %4419 = vmatpush1.msra.mxu0 0.0
          %4420 = vmatprep.subr.mxu0 0.0
          %4421 = vmatpush1.msra.mxu0 0.0
          %4422 = vmatprep.subr.mxu0 0.0
          %4423 = vmatpush1.msra.mxu0 0.0
          %4424 = vmatprep.subr.mxu0 0.0
          %4425 = vmatpush1.msra.mxu0 0.0
          %4426 = vmatprep.subr.mxu0 0.0
          %4427 = vmatpush1.msra.mxu0 0.0
          %4428 = vmatprep.subr.mxu0 0.0
          %4429 = vmatpush1.msra.mxu0 0.0
          %4430 = vmatprep.subr.mxu0 0.0
          %4431 = vmatpush1.msra.mxu0 0.0
          %4432 = vmatprep.subr.mxu0 0.0
          %4433 = vmatpush1.msra.mxu0 0.0
          %4434 = vmatprep.subr.mxu0 0.0
          %4435 = vmatpush1.msra.mxu0 0.0
          %4436 = vmatprep.subr.mxu0 0.0
          %4437 = vmatpush1.msra.mxu0 0.0
          %4438 = vmatprep.mubr.f32.mxu0 0.0
          %v4439 = vand.u32 %v4188, 4294901760
          %v4440 = vsub.f32 %v4188, %v4439
          %4441 = vmatmul.mubr.f32.gmra.mrb[0].mxu0 %v4440
          %v4442 = vpop.f32.mrb[0].mxu0
          %v4443 = vadd.f32 %v4361, %v4442
          %v4444 = vpop.f32.mrb[0].mxu0
          %4445 = vmatprep.mubr.f32.mxu0 0.0
          %v4446 = vand.u32 %v4191, 4294901760
          %v4447 = vsub.f32 %v4191, %v4446
          %4448 = vmatmul.mubr.f32.gmra.mrb[0].mxu0 %v4447
          %v4449 = vpop.f32.mrb[0].mxu0
          %v4450 = vadd.f32 %v4367, %v4449
          %v4451 = vpop.f32.mrb[0].mxu0
          %4452 = vdwg.mxu0
          %4453 = vmatprep.subr.mxu0 0.0
          %v4454 = vand.u32 %v4185, 4294901760
          %4455 = vmatpush1.msra.mxu0 %v4454
          %4456 = vmatprep.subr.mxu0 0.0
          %v4457 = vand.u32 %v4194, 4294901760
          %4458 = vmatpush1.msra.mxu0 %v4457
          %4459 = vmatprep.subr.mxu0 0.0
          %4460 = vmatpush1.msra.mxu0 0.0
          %4461 = vmatprep.subr.mxu0 0.0
          %4462 = vmatpush1.msra.mxu0 0.0
          %4463 = vmatprep.subr.mxu0 0.0
          %4464 = vmatpush1.msra.mxu0 0.0
          %4465 = vmatprep.subr.mxu0 0.0
          %4466 = vmatpush1.msra.mxu0 0.0
          %4467 = vmatprep.subr.mxu0 0.0
          %4468 = vmatpush1.msra.mxu0 0.0
          %4469 = vmatprep.subr.mxu0 0.0
          %4470 = vmatpush1.msra.mxu0 0.0
          %4471 = vmatprep.subr.mxu0 0.0
          %4472 = vmatpush1.msra.mxu0 0.0
          %4473 = vmatprep.subr.mxu0 0.0
          %4474 = vmatpush1.msra.mxu0 0.0
          %4475 = vmatprep.subr.mxu0 0.0
          %4476 = vmatpush1.msra.mxu0 0.0
          %4477 = vmatprep.subr.mxu0 0.0
          %4478 = vmatpush1.msra.mxu0 0.0
          %4479 = vmatprep.subr.mxu0 0.0
          %4480 = vmatpush1.msra.mxu0 0.0
          %4481 = vmatprep.subr.mxu0 0.0
          %4482 = vmatpush1.msra.mxu0 0.0
          %4483 = vmatprep.subr.mxu0 0.0
          %4484 = vmatpush1.msra.mxu0 0.0
          %4485 = vmatprep.subr.mxu0 0.0
          %4486 = vmatpush1.msra.mxu0 0.0
          %4487 = vmatprep.subr.mxu0 0.0
          %4488 = vmatpush1.msra.mxu0 0.0
          %4489 = vmatprep.subr.mxu0 0.0
          %4490 = vmatpush1.msra.mxu0 0.0
          %4491 = vmatprep.subr.mxu0 0.0
          %4492 = vmatpush1.msra.mxu0 0.0
          %4493 = vmatprep.subr.mxu0 0.0
          %4494 = vmatpush1.msra.mxu0 0.0
          %4495 = vmatprep.subr.mxu0 0.0
          %4496 = vmatpush1.msra.mxu0 0.0
          %4497 = vmatprep.subr.mxu0 0.0
          %4498 = vmatpush1.msra.mxu0 0.0
          %4499 = vmatprep.subr.mxu0 0.0
          %4500 = vmatpush1.msra.mxu0 0.0
          %4501 = vmatprep.subr.mxu0 0.0
          %4502 = vmatpush1.msra.mxu0 0.0
          %4503 = vmatprep.subr.mxu0 0.0
          %4504 = vmatpush1.msra.mxu0 0.0
          %4505 = vmatprep.subr.mxu0 0.0
          %4506 = vmatpush1.msra.mxu0 0.0
          %4507 = vmatprep.subr.mxu0 0.0
          %4508 = vmatpush1.msra.mxu0 0.0
          %4509 = vmatprep.subr.mxu0 0.0
          %4510 = vmatpush1.msra.mxu0 0.0
          %4511 = vmatprep.subr.mxu0 0.0
          %4512 = vmatpush1.msra.mxu0 0.0
          %4513 = vmatprep.subr.mxu0 0.0
          %4514 = vmatpush1.msra.mxu0 0.0
          %4515 = vmatprep.subr.mxu0 0.0
          %4516 = vmatpush1.msra.mxu0 0.0
          %4517 = vmatprep.subr.mxu0 0.0
          %4518 = vmatpush1.msra.mxu0 0.0
          %4519 = vmatprep.mubr.f32.mxu0 0.0
          %v4520 = vand.u32 %v4188, 4294901760
          %v4521 = vsub.f32 %v4188, %v4520
          %v4522 = vand.u32 %v4521, 4294901760
          %4523 = vmatmul.mubr.f32.gmra.mrb[0].mxu0 %v4522
          %v4524 = vpop.f32.mrb[0].mxu0
          %v4525 = vadd.f32 %v4443, %v4524
          %v4526 = vpop.f32.mrb[0].mxu0
          %4527 = vmatprep.mubr.f32.mxu0 0.0
          %v4528 = vand.u32 %v4191, 4294901760
          %v4529 = vsub.f32 %v4191, %v4528
          %v4530 = vand.u32 %v4529, 4294901760
          %4531 = vmatmul.mubr.f32.gmra.mrb[0].mxu0 %v4530
          %v4532 = vpop.f32.mrb[0].mxu0
          %v4533 = vadd.f32 %v4450, %v4532
          %v4534 = vpop.f32.mrb[0].mxu0
          %4535 = vdwg.mxu0
          %4536 = vmatprep.subr.mxu0 0.0
          %v4537 = vand.u32 %v4185, 4294901760
          %v4538 = vsub.f32 %v4185, %v4537
          %v4539 = vand.u32 %v4538, 4294901760
          %4540 = vmatpush1.msra.mxu0 %v4539
          %4541 = vmatprep.subr.mxu0 0.0
          %v4542 = vand.u32 %v4194, 4294901760
          %v4543 = vsub.f32 %v4194, %v4542
          %v4544 = vand.u32 %v4543, 4294901760
          %4545 = vmatpush1.msra.mxu0 %v4544
          %4546 = vmatprep.subr.mxu0 0.0
          %4547 = vmatpush1.msra.mxu0 0.0
          %4548 = vmatprep.subr.mxu0 0.0
          %4549 = vmatpush1.msra.mxu0 0.0
          %4550 = vmatprep.subr.mxu0 0.0
          %4551 = vmatpush1.msra.mxu0 0.0
          %4552 = vmatprep.subr.mxu0 0.0
          %4553 = vmatpush1.msra.mxu0 0.0
          %4554 = vmatprep.subr.mxu0 0.0
          %4555 = vmatpush1.msra.mxu0 0.0
          %4556 = vmatprep.subr.mxu0 0.0
          %4557 = vmatpush1.msra.mxu0 0.0
          %4558 = vmatprep.subr.mxu0 0.0
          %4559 = vmatpush1.msra.mxu0 0.0
          %4560 = vmatprep.subr.mxu0 0.0
          %4561 = vmatpush1.msra.mxu0 0.0
          %4562 = vmatprep.subr.mxu0 0.0
          %4563 = vmatpush1.msra.mxu0 0.0
          %4564 = vmatprep.subr.mxu0 0.0
          %4565 = vmatpush1.msra.mxu0 0.0
          %4566 = vmatprep.subr.mxu0 0.0
          %4567 = vmatpush1.msra.mxu0 0.0
          %4568 = vmatprep.subr.mxu0 0.0
          %4569 = vmatpush1.msra.mxu0 0.0
          %4570 = vmatprep.subr.mxu0 0.0
          %4571 = vmatpush1.msra.mxu0 0.0
          %4572 = vmatprep.subr.mxu0 0.0
          %4573 = vmatpush1.msra.mxu0 0.0
          %4574 = vmatprep.subr.mxu0 0.0
          %4575 = vmatpush1.msra.mxu0 0.0
          %4576 = vmatprep.subr.mxu0 0.0
          %4577 = vmatpush1.msra.mxu0 0.0
          %4578 = vmatprep.subr.mxu0 0.0
          %4579 = vmatpush1.msra.mxu0 0.0
          %4580 = vmatprep.subr.mxu0 0.0
          %4581 = vmatpush1.msra.mxu0 0.0
          %4582 = vmatprep.subr.mxu0 0.0
          %4583 = vmatpush1.msra.mxu0 0.0
          %4584 = vmatprep.subr.mxu0 0.0
          %4585 = vmatpush1.msra.mxu0 0.0
          %4586 = vmatprep.subr.mxu0 0.0
          %4587 = vmatpush1.msra.mxu0 0.0
          %4588 = vmatprep.subr.mxu0 0.0
          %4589 = vmatpush1.msra.mxu0 0.0
          %4590 = vmatprep.subr.mxu0 0.0
          %4591 = vmatpush1.msra.mxu0 0.0
          %4592 = vmatprep.subr.mxu0 0.0
          %4593 = vmatpush1.msra.mxu0 0.0
          %4594 = vmatprep.subr.mxu0 0.0
          %4595 = vmatpush1.msra.mxu0 0.0
          %4596 = vmatprep.subr.mxu0 0.0
          %4597 = vmatpush1.msra.mxu0 0.0
          %4598 = vmatprep.subr.mxu0 0.0
          %4599 = vmatpush1.msra.mxu0 0.0
          %4600 = vmatprep.subr.mxu0 0.0
          %4601 = vmatpush1.msra.mxu0 0.0
          %4602 = vmatprep.subr.mxu0 0.0
          %4603 = vmatpush1.msra.mxu0 0.0
          %4604 = vmatprep.subr.mxu0 0.0
          %4605 = vmatpush1.msra.mxu0 0.0
          %4606 = vmatprep.mubr.f32.mxu0 0.0
          %v4607 = vand.u32 %v4188, 4294901760
          %4608 = vmatmul.mubr.f32.gmra.mrb[0].mxu0 %v4607
          %v4609 = vpop.f32.mrb[0].mxu0
          %v4610 = vadd.f32 %v4525, %v4609
          %v4611 = vpop.f32.mrb[0].mxu0
          %4612 = vmatprep.mubr.f32.mxu0 0.0
          %v4613 = vand.u32 %v4191, 4294901760
          %4614 = vmatmul.mubr.f32.gmra.mrb[0].mxu0 %v4613
          %v4615 = vpop.f32.mrb[0].mxu0
          %v4616 = vadd.f32 %v4533, %v4615
          %v4617 = vpop.f32.mrb[0].mxu0
          %4618 = vdwg.mxu0
          %4619 = vmatprep.subr.mxu0 0.0
          %v4620 = vand.u32 %v4185, 4294901760
          %4621 = vmatpush1.msra.mxu0 %v4620
          %4622 = vmatprep.subr.mxu0 0.0
          %v4623 = vand.u32 %v4194, 4294901760
          %4624 = vmatpush1.msra.mxu0 %v4623
          %4625 = vmatprep.subr.mxu0 0.0
          %4626 = vmatpush1.msra.mxu0 0.0
          %4627 = vmatprep.subr.mxu0 0.0
          %4628 = vmatpush1.msra.mxu0 0.0
          %4629 = vmatprep.subr.mxu0 0.0
          %4630 = vmatpush1.msra.mxu0 0.0
          %4631 = vmatprep.subr.mxu0 0.0
          %4632 = vmatpush1.msra.mxu0 0.0
          %4633 = vmatprep.subr.mxu0 0.0
          %4634 = vmatpush1.msra.mxu0 0.0
          %4635 = vmatprep.subr.mxu0 0.0
          %4636 = vmatpush1.msra.mxu0 0.0
          %4637 = vmatprep.subr.mxu0 0.0
          %4638 = vmatpush1.msra.mxu0 0.0
          %4639 = vmatprep.subr.mxu0 0.0
          %4640 = vmatpush1.msra.mxu0 0.0
          %4641 = vmatprep.subr.mxu0 0.0
          %4642 = vmatpush1.msra.mxu0 0.0
          %4643 = vmatprep.subr.mxu0 0.0
          %4644 = vmatpush1.msra.mxu0 0.0
          %4645 = vmatprep.subr.mxu0 0.0
          %4646 = vmatpush1.msra.mxu0 0.0
          %4647 = vmatprep.subr.mxu0 0.0
          %4648 = vmatpush1.msra.mxu0 0.0
          %4649 = vmatprep.subr.mxu0 0.0
          %4650 = vmatpush1.msra.mxu0 0.0
          %4651 = vmatprep.subr.mxu0 0.0
          %4652 = vmatpush1.msra.mxu0 0.0
          %4653 = vmatprep.subr.mxu0 0.0
          %4654 = vmatpush1.msra.mxu0 0.0
          %4655 = vmatprep.subr.mxu0 0.0
          %4656 = vmatpush1.msra.mxu0 0.0
          %4657 = vmatprep.subr.mxu0 0.0
          %4658 = vmatpush1.msra.mxu0 0.0
          %4659 = vmatprep.subr.mxu0 0.0
          %4660 = vmatpush1.msra.mxu0 0.0
          %4661 = vmatprep.subr.mxu0 0.0
          %4662 = vmatpush1.msra.mxu0 0.0
          %4663 = vmatprep.subr.mxu0 0.0
          %4664 = vmatpush1.msra.mxu0 0.0
          %4665 = vmatprep.subr.mxu0 0.0
          %4666 = vmatpush1.msra.mxu0 0.0
          %4667 = vmatprep.subr.mxu0 0.0
          %4668 = vmatpush1.msra.mxu0 0.0
          %4669 = vmatprep.subr.mxu0 0.0
          %4670 = vmatpush1.msra.mxu0 0.0
          %4671 = vmatprep.subr.mxu0 0.0
          %4672 = vmatpush1.msra.mxu0 0.0
          %4673 = vmatprep.subr.mxu0 0.0
          %4674 = vmatpush1.msra.mxu0 0.0
          %4675 = vmatprep.subr.mxu0 0.0
          %4676 = vmatpush1.msra.mxu0 0.0
          %4677 = vmatprep.subr.mxu0 0.0
          %4678 = vmatpush1.msra.mxu0 0.0
          %4679 = vmatprep.subr.mxu0 0.0
          %4680 = vmatpush1.msra.mxu0 0.0
          %4681 = vmatprep.subr.mxu0 0.0
          %4682 = vmatpush1.msra.mxu0 0.0
          %4683 = vmatprep.subr.mxu0 0.0
          %4684 = vmatpush1.msra.mxu0 0.0
          %4685 = vmatprep.mubr.f32.mxu0 0.0
          %v4686 = vand.u32 %v4188, 4294901760
          %4687 = vmatmul.mubr.f32.gmra.mrb[0].mxu0 %v4686
          %v4688 = vpop.f32.mrb[0].mxu0
          %v4689 = vadd.f32 %v4610, %v4688
          %v4690 = vpop.f32.mrb[0].mxu0
          %4691 = vmatprep.mubr.f32.mxu0 0.0
          %v4692 = vand.u32 %v4191, 4294901760
          %4693 = vmatmul.mubr.f32.gmra.mrb[0].mxu0 %v4692
          %v4694 = vpop.f32.mrb[0].mxu0
          %v4695 = vadd.f32 %v4616, %v4694
          %v4696 = vpop.f32.mrb[0].mxu0
          %4697 = vdwg.mxu0
          %v4698 = vmax.f32 %v3584, %v4689
          %v4699 = vmax.f32 %v3585, %v4695
          %s4700 = sadd.s32 64, %s236
          %s4701 = scalar_lea.vmem %s185, %s4700 [#allocation8]
          %v4702 = vld [vmem:[%s4701] sm:$0xff]
          %v4703 = vld [vmem:[%s4701 + $0x8] sm:$0xff]
          %4706 = vrot.lane.b32.xlu0 %v4702, 2
          %v4707 = vpop.permute.xlu0 %4706
          %4708 = vrot.lane.b32.xlu0 %v4703, 2
          %v4709 = vpop.permute.xlu0 %4708
          %4712 = vst.msk [vmem:[#allocation2 + $0x2] sm:$0xff] %vm248, %v4707
          %4713 = vst.msk [vmem:[#allocation2 + $0xa] sm:$0xff] %vm248, %v4709
          %v4714 = vld [vmem:[#allocation2] sm:$0xff]
          %v4715 = vld [vmem:[#allocation2 + $0x8] sm:$0xff]
          %v4716 = vld [vmem:[#allocation2 + $0x10] sm:$0x7]
          %v4717 = vld [vmem:[#allocation2 + $0x1] sm:$0xff]
          %v4718 = vld [vmem:[#allocation2 + $0x9] sm:$0xff]
          %v4719 = vld [vmem:[#allocation2 + $0x11] sm:$0x7]
          %v4720 = vmax.f32 %v4714, %v4717
          %v4721 = vmax.f32 %v4715, %v4718
          %v4722 = vmax.f32 %v4716, %v4719
          %4723 = vst.msk [vmem:[#allocation3] sm:$0xff] %vm225, %v4720
          %4724 = vst.msk [vmem:[#allocation3 + $0x8] sm:$0xff] %vm225, %v4721
          %4725 = vst.msk [vmem:[#allocation3 + $0x10] sm:$0x7] %vm262, %v4722
          %v4726 = vld [vmem:[#allocation3] sm:$0xff]
          %v4727 = vld [vmem:[#allocation3 + $0x8] sm:$0xff]
          %v4728 = vld [vmem:[#allocation3 + $0x10] sm:$0x1]
          %v4729 = vld [vmem:[#allocation3 + $0x2] sm:$0xff]
          %v4730 = vld [vmem:[#allocation3 + $0xa] sm:$0xff]
          %v4731 = vld [vmem:[#allocation3 + $0x12] sm:$0x1]
          %v4732 = vmax.f32 %v4726, %v4729
          %v4733 = vmax.f32 %v4727, %v4730
          %v4734 = vmax.f32 %v4728, %v4731
          %4735 = vst.msk [vmem:[#allocation4] sm:$0xff] %vm225, %v4732
          %4736 = vst.msk [vmem:[#allocation4 + $0x8] sm:$0xff] %vm225, %v4733
          %4737 = vst.msk [vmem:[#allocation4 + $0x10] sm:$0x1] %vm275, %v4734
          %v4738 = vld [vmem:[#allocation4] sm:$0xff]
          %v4739 = vld [vmem:[#allocation4 + $0x8] sm:$0x3f]
          %v4740 = vld [vmem:[#allocation4 + $0x3] sm:$0xff]
          %v4741 = vld [vmem:[#allocation4 + $0xb] sm:$0x3f]
          %v4742 = vmax.f32 %v4738, %v4740
          %v4743 = vmax.f32 %v4739, %v4741
          %4744 = vst.msk [vmem:[#allocation5] sm:$0xff] %vm225, %v4742
          %4745 = vst.msk [vmem:[#allocation5 + $0x8] sm:$0x3f] %vm284, %v4743
          %v4746 = vld [vmem:[#allocation5] sm:$0xff]
          %v4747 = vld [vmem:[#allocation5 + $0x8] sm:$0x3f]
          %4750 = vrot.lane.b32.xlu0 %v4746, 127
          %v4751 = vpop.permute.xlu0 %4750
          %4752 = vrot.lane.b32.xlu0 %v4747, 127
          %v4753 = vpop.permute.xlu0 %4752
          %v4756 = vmax.f32 %v4746, %v4751
          %v4757 = vmax.f32 %v4747, %v4753
          %4758 = vst.msk [vmem:[#allocation6] sm:$0xff] %vm298, %v4756
          %4759 = vst.msk [vmem:[#allocation6 + $0x8] sm:$0x3f] %vm300, %v4757
          %v4760 = vld [vmem:[#allocation6] sm:$0xff]
          %v4761 = vld [vmem:[#allocation6 + $0x8] sm:$0x3f]
          %4764 = vrot.lane.b32.xlu0 %v4760, 126
          %v4765 = vpop.permute.xlu0 %4764
          %4766 = vrot.lane.b32.xlu0 %v4761, 126
          %v4767 = vpop.permute.xlu0 %4766
          %v4770 = vmax.f32 %v4760, %v4765
          %v4771 = vmax.f32 %v4761, %v4767
          %4772 = vst.msk [vmem:[#allocation7] sm:$0xff] %vm314, %v4770
          %4773 = vst.msk [vmem:[#allocation7 + $0x8] sm:$0x3f] %vm316, %v4771
          %v4774 = vld [vmem:[#allocation7] sm:$0xff]
          %v4775 = vld [vmem:[#allocation7 + $0x8] sm:$0x3f]
          %4778 = vrot.lane.b32.xlu0 %v4774, 125
          %v4779 = vpop.permute.xlu0 %4778
          %4780 = vrot.lane.b32.xlu0 %v4775, 125
          %v4781 = vpop.permute.xlu0 %4780
          %v4784 = vmax.f32 %v4774, %v4779
          %v4785 = vmax.f32 %v4775, %v4781
          %v4786 = vld [vmem:[#allocation10] sm:$0xff]
          %v4787 = vld [vmem:[#allocation10 + $0x8] sm:$0x3f]
          %v4789 = vsel %vm332, %v4786, 0
          %v4792 = vsel %vm332, %v4787, 0
          %v4795 = vsel %vm339, %v4785, 0
          %4797 = vmatprep.subr.mxu0 0.0
          %v4798 = vand.u32 %v4784, 4294901760
          %4799 = vmatpush1.msra.mxu0 %v4798
          %4800 = vmatprep.subr.mxu0 0.0
          %v4801 = vand.u32 %v4795, 4294901760
          %4802 = vmatpush1.msra.mxu0 %v4801
          %4803 = vmatprep.subr.mxu0 0.0
          %4804 = vmatpush1.msra.mxu0 0.0
          %4805 = vmatprep.subr.mxu0 0.0
          %4806 = vmatpush1.msra.mxu0 0.0
          %4807 = vmatprep.subr.mxu0 0.0
          %4808 = vmatpush1.msra.mxu0 0.0
          %4809 = vmatprep.subr.mxu0 0.0
          %4810 = vmatpush1.msra.mxu0 0.0
          %4811 = vmatprep.subr.mxu0 0.0
          %4812 = vmatpush1.msra.mxu0 0.0
          %4813 = vmatprep.subr.mxu0 0.0
          %4814 = vmatpush1.msra.mxu0 0.0
          %4815 = vmatprep.subr.mxu0 0.0
          %4816 = vmatpush1.msra.mxu0 0.0
          %4817 = vmatprep.subr.mxu0 0.0
          %4818 = vmatpush1.msra.mxu0 0.0
          %4819 = vmatprep.subr.mxu0 0.0
          %4820 = vmatpush1.msra.mxu0 0.0
          %4821 = vmatprep.subr.mxu0 0.0
          %4822 = vmatpush1.msra.mxu0 0.0
          %4823 = vmatprep.subr.mxu0 0.0
          %4824 = vmatpush1.msra.mxu0 0.0
          %4825 = vmatprep.subr.mxu0 0.0
          %4826 = vmatpush1.msra.mxu0 0.0
          %4827 = vmatprep.subr.mxu0 0.0
          %4828 = vmatpush1.msra.mxu0 0.0
          %4829 = vmatprep.subr.mxu0 0.0
          %4830 = vmatpush1.msra.mxu0 0.0
          %4831 = vmatprep.subr.mxu0 0.0
          %4832 = vmatpush1.msra.mxu0 0.0
          %4833 = vmatprep.subr.mxu0 0.0
          %4834 = vmatpush1.msra.mxu0 0.0
          %4835 = vmatprep.subr.mxu0 0.0
          %4836 = vmatpush1.msra.mxu0 0.0
          %4837 = vmatprep.subr.mxu0 0.0
          %4838 = vmatpush1.msra.mxu0 0.0
          %4839 = vmatprep.subr.mxu0 0.0
          %4840 = vmatpush1.msra.mxu0 0.0
          %4841 = vmatprep.subr.mxu0 0.0
          %4842 = vmatpush1.msra.mxu0 0.0
          %4843 = vmatprep.subr.mxu0 0.0
          %4844 = vmatpush1.msra.mxu0 0.0
          %4845 = vmatprep.subr.mxu0 0.0
          %4846 = vmatpush1.msra.mxu0 0.0
          %4847 = vmatprep.subr.mxu0 0.0
          %4848 = vmatpush1.msra.mxu0 0.0
          %4849 = vmatprep.subr.mxu0 0.0
          %4850 = vmatpush1.msra.mxu0 0.0
          %4851 = vmatprep.subr.mxu0 0.0
          %4852 = vmatpush1.msra.mxu0 0.0
          %4853 = vmatprep.subr.mxu0 0.0
          %4854 = vmatpush1.msra.mxu0 0.0
          %4855 = vmatprep.subr.mxu0 0.0
          %4856 = vmatpush1.msra.mxu0 0.0
          %4857 = vmatprep.subr.mxu0 0.0
          %4858 = vmatpush1.msra.mxu0 0.0
          %4859 = vmatprep.subr.mxu0 0.0
          %4860 = vmatpush1.msra.mxu0 0.0
          %4861 = vmatprep.subr.mxu0 0.0
          %4862 = vmatpush1.msra.mxu0 0.0
          %4863 = vmatprep.mubr.f32.mxu0 0.0
          %v4864 = vand.u32 %v4789, 4294901760
          %v4865 = vsub.f32 %v4789, %v4864
          %v4866 = vand.u32 %v4865, 4294901760
          %v4867 = vsub.f32 %v4865, %v4866
          %v4868 = vand.u32 %v4867, 4294901760
          %4869 = vmatmul.mubr.f32.gmra.mrb[0].mxu0 %v4868
          %v4870 = vpop.f32.mrb[0].mxu0
          %v4871 = vadd.f32 0.0, %v4870
          %v4872 = vpop.f32.mrb[0].mxu0
          %4873 = vmatprep.mubr.f32.mxu0 0.0
          %v4874 = vand.u32 %v4792, 4294901760
          %v4875 = vsub.f32 %v4792, %v4874
          %v4876 = vand.u32 %v4875, 4294901760
          %v4877 = vsub.f32 %v4875, %v4876
          %v4878 = vand.u32 %v4877, 4294901760
          %4879 = vmatmul.mubr.f32.gmra.mrb[0].mxu0 %v4878
          %v4880 = vpop.f32.mrb[0].mxu0
          %v4881 = vadd.f32 0.0, %v4880
          %v4882 = vpop.f32.mrb[0].mxu0
          %4883 = vdwg.mxu0
          %4884 = vmatprep.subr.mxu0 0.0
          %v4885 = vand.u32 %v4784, 4294901760
          %v4886 = vsub.f32 %v4784, %v4885
          %v4887 = vand.u32 %v4886, 4294901760
          %v4888 = vsub.f32 %v4886, %v4887
          %v4889 = vand.u32 %v4888, 4294901760
          %4890 = vmatpush1.msra.mxu0 %v4889
          %4891 = vmatprep.subr.mxu0 0.0
          %v4892 = vand.u32 %v4795, 4294901760
          %v4893 = vsub.f32 %v4795, %v4892
          %v4894 = vand.u32 %v4893, 4294901760
          %v4895 = vsub.f32 %v4893, %v4894
          %v4896 = vand.u32 %v4895, 4294901760
          %4897 = vmatpush1.msra.mxu0 %v4896
          %4898 = vmatprep.subr.mxu0 0.0
          %4899 = vmatpush1.msra.mxu0 0.0
          %4900 = vmatprep.subr.mxu0 0.0
          %4901 = vmatpush1.msra.mxu0 0.0
          %4902 = vmatprep.subr.mxu0 0.0
          %4903 = vmatpush1.msra.mxu0 0.0
          %4904 = vmatprep.subr.mxu0 0.0
          %4905 = vmatpush1.msra.mxu0 0.0
          %4906 = vmatprep.subr.mxu0 0.0
          %4907 = vmatpush1.msra.mxu0 0.0
          %4908 = vmatprep.subr.mxu0 0.0
          %4909 = vmatpush1.msra.mxu0 0.0
          %4910 = vmatprep.subr.mxu0 0.0
          %4911 = vmatpush1.msra.mxu0 0.0
          %4912 = vmatprep.subr.mxu0 0.0
          %4913 = vmatpush1.msra.mxu0 0.0
          %4914 = vmatprep.subr.mxu0 0.0
          %4915 = vmatpush1.msra.mxu0 0.0
          %4916 = vmatprep.subr.mxu0 0.0
          %4917 = vmatpush1.msra.mxu0 0.0
          %4918 = vmatprep.subr.mxu0 0.0
          %4919 = vmatpush1.msra.mxu0 0.0
          %4920 = vmatprep.subr.mxu0 0.0
          %4921 = vmatpush1.msra.mxu0 0.0
          %4922 = vmatprep.subr.mxu0 0.0
          %4923 = vmatpush1.msra.mxu0 0.0
          %4924 = vmatprep.subr.mxu0 0.0
          %4925 = vmatpush1.msra.mxu0 0.0
          %4926 = vmatprep.subr.mxu0 0.0
          %4927 = vmatpush1.msra.mxu0 0.0
          %4928 = vmatprep.subr.mxu0 0.0
          %4929 = vmatpush1.msra.mxu0 0.0
          %4930 = vmatprep.subr.mxu0 0.0
          %4931 = vmatpush1.msra.mxu0 0.0
          %4932 = vmatprep.subr.mxu0 0.0
          %4933 = vmatpush1.msra.mxu0 0.0
          %4934 = vmatprep.subr.mxu0 0.0
          %4935 = vmatpush1.msra.mxu0 0.0
          %4936 = vmatprep.subr.mxu0 0.0
          %4937 = vmatpush1.msra.mxu0 0.0
          %4938 = vmatprep.subr.mxu0 0.0
          %4939 = vmatpush1.msra.mxu0 0.0
          %4940 = vmatprep.subr.mxu0 0.0
          %4941 = vmatpush1.msra.mxu0 0.0
          %4942 = vmatprep.subr.mxu0 0.0
          %4943 = vmatpush1.msra.mxu0 0.0
          %4944 = vmatprep.subr.mxu0 0.0
          %4945 = vmatpush1.msra.mxu0 0.0
          %4946 = vmatprep.subr.mxu0 0.0
          %4947 = vmatpush1.msra.mxu0 0.0
          %4948 = vmatprep.subr.mxu0 0.0
          %4949 = vmatpush1.msra.mxu0 0.0
          %4950 = vmatprep.subr.mxu0 0.0
          %4951 = vmatpush1.msra.mxu0 0.0
          %4952 = vmatprep.subr.mxu0 0.0
          %4953 = vmatpush1.msra.mxu0 0.0
          %4954 = vmatprep.subr.mxu0 0.0
          %4955 = vmatpush1.msra.mxu0 0.0
          %4956 = vmatprep.subr.mxu0 0.0
          %4957 = vmatpush1.msra.mxu0 0.0
          %4958 = vmatprep.mubr.f32.mxu0 0.0
          %v4959 = vand.u32 %v4789, 4294901760
          %4960 = vmatmul.mubr.f32.gmra.mrb[0].mxu0 %v4959
          %v4961 = vpop.f32.mrb[0].mxu0
          %v4962 = vadd.f32 %v4871, %v4961
          %v4963 = vpop.f32.mrb[0].mxu0
          %4964 = vmatprep.mubr.f32.mxu0 0.0
          %v4965 = vand.u32 %v4792, 4294901760
          %4966 = vmatmul.mubr.f32.gmra.mrb[0].mxu0 %v4965
          %v4967 = vpop.f32.mrb[0].mxu0
          %v4968 = vadd.f32 %v4881, %v4967
          %v4969 = vpop.f32.mrb[0].mxu0
          %4970 = vdwg.mxu0
          %4971 = vmatprep.subr.mxu0 0.0
          %v4972 = vand.u32 %v4784, 4294901760
          %v4973 = vsub.f32 %v4784, %v4972
          %4974 = vmatpush1.msra.mxu0 %v4973
          %4975 = vmatprep.subr.mxu0 0.0
          %v4976 = vand.u32 %v4795, 4294901760
          %v4977 = vsub.f32 %v4795, %v4976
          %4978 = vmatpush1.msra.mxu0 %v4977
          %4979 = vmatprep.subr.mxu0 0.0
          %4980 = vmatpush1.msra.mxu0 0.0
          %4981 = vmatprep.subr.mxu0 0.0
          %4982 = vmatpush1.msra.mxu0 0.0
          %4983 = vmatprep.subr.mxu0 0.0
          %4984 = vmatpush1.msra.mxu0 0.0
          %4985 = vmatprep.subr.mxu0 0.0
          %4986 = vmatpush1.msra.mxu0 0.0
          %4987 = vmatprep.subr.mxu0 0.0
          %4988 = vmatpush1.msra.mxu0 0.0
          %4989 = vmatprep.subr.mxu0 0.0
          %4990 = vmatpush1.msra.mxu0 0.0
          %4991 = vmatprep.subr.mxu0 0.0
          %4992 = vmatpush1.msra.mxu0 0.0
          %4993 = vmatprep.subr.mxu0 0.0
          %4994 = vmatpush1.msra.mxu0 0.0
          %4995 = vmatprep.subr.mxu0 0.0
          %4996 = vmatpush1.msra.mxu0 0.0
          %4997 = vmatprep.subr.mxu0 0.0
          %4998 = vmatpush1.msra.mxu0 0.0
          %4999 = vmatprep.subr.mxu0 0.0
          %5000 = vmatpush1.msra.mxu0 0.0
          %5001 = vmatprep.subr.mxu0 0.0
          %5002 = vmatpush1.msra.mxu0 0.0
          %5003 = vmatprep.subr.mxu0 0.0
          %5004 = vmatpush1.msra.mxu0 0.0
          %5005 = vmatprep.subr.mxu0 0.0
          %5006 = vmatpush1.msra.mxu0 0.0
          %5007 = vmatprep.subr.mxu0 0.0
          %5008 = vmatpush1.msra.mxu0 0.0
          %5009 = vmatprep.subr.mxu0 0.0
          %5010 = vmatpush1.msra.mxu0 0.0
          %5011 = vmatprep.subr.mxu0 0.0
          %5012 = vmatpush1.msra.mxu0 0.0
          %5013 = vmatprep.subr.mxu0 0.0
          %5014 = vmatpush1.msra.mxu0 0.0
          %5015 = vmatprep.subr.mxu0 0.0
          %5016 = vmatpush1.msra.mxu0 0.0
          %5017 = vmatprep.subr.mxu0 0.0
          %5018 = vmatpush1.msra.mxu0 0.0
          %5019 = vmatprep.subr.mxu0 0.0
          %5020 = vmatpush1.msra.mxu0 0.0
          %5021 = vmatprep.subr.mxu0 0.0
          %5022 = vmatpush1.msra.mxu0 0.0
          %5023 = vmatprep.subr.mxu0 0.0
          %5024 = vmatpush1.msra.mxu0 0.0
          %5025 = vmatprep.subr.mxu0 0.0
          %5026 = vmatpush1.msra.mxu0 0.0
          %5027 = vmatprep.subr.mxu0 0.0
          %5028 = vmatpush1.msra.mxu0 0.0
          %5029 = vmatprep.subr.mxu0 0.0
          %5030 = vmatpush1.msra.mxu0 0.0
          %5031 = vmatprep.subr.mxu0 0.0
          %5032 = vmatpush1.msra.mxu0 0.0
          %5033 = vmatprep.subr.mxu0 0.0
          %5034 = vmatpush1.msra.mxu0 0.0
          %5035 = vmatprep.subr.mxu0 0.0
          %5036 = vmatpush1.msra.mxu0 0.0
          %5037 = vmatprep.subr.mxu0 0.0
          %5038 = vmatpush1.msra.mxu0 0.0
          %5039 = vmatprep.mubr.f32.mxu0 0.0
          %v5040 = vand.u32 %v4789, 4294901760
          %v5041 = vsub.f32 %v4789, %v5040
          %5042 = vmatmul.mubr.f32.gmra.mrb[0].mxu0 %v5041
          %v5043 = vpop.f32.mrb[0].mxu0
          %v5044 = vadd.f32 %v4962, %v5043
          %v5045 = vpop.f32.mrb[0].mxu0
          %5046 = vmatprep.mubr.f32.mxu0 0.0
          %v5047 = vand.u32 %v4792, 4294901760
          %v5048 = vsub.f32 %v4792, %v5047
          %5049 = vmatmul.mubr.f32.gmra.mrb[0].mxu0 %v5048
          %v5050 = vpop.f32.mrb[0].mxu0
          %v5051 = vadd.f32 %v4968, %v5050
          %v5052 = vpop.f32.mrb[0].mxu0
          %5053 = vdwg.mxu0
          %5054 = vmatprep.subr.mxu0 0.0
          %v5055 = vand.u32 %v4784, 4294901760
          %5056 = vmatpush1.msra.mxu0 %v5055
          %5057 = vmatprep.subr.mxu0 0.0
          %v5058 = vand.u32 %v4795, 4294901760
          %5059 = vmatpush1.msra.mxu0 %v5058
          %5060 = vmatprep.subr.mxu0 0.0
          %5061 = vmatpush1.msra.mxu0 0.0
          %5062 = vmatprep.subr.mxu0 0.0
          %5063 = vmatpush1.msra.mxu0 0.0
          %5064 = vmatprep.subr.mxu0 0.0
          %5065 = vmatpush1.msra.mxu0 0.0
          %5066 = vmatprep.subr.mxu0 0.0
          %5067 = vmatpush1.msra.mxu0 0.0
          %5068 = vmatprep.subr.mxu0 0.0
          %5069 = vmatpush1.msra.mxu0 0.0
          %5070 = vmatprep.subr.mxu0 0.0
          %5071 = vmatpush1.msra.mxu0 0.0
          %5072 = vmatprep.subr.mxu0 0.0
          %5073 = vmatpush1.msra.mxu0 0.0
          %5074 = vmatprep.subr.mxu0 0.0
          %5075 = vmatpush1.msra.mxu0 0.0
          %5076 = vmatprep.subr.mxu0 0.0
          %5077 = vmatpush1.msra.mxu0 0.0
          %5078 = vmatprep.subr.mxu0 0.0
          %5079 = vmatpush1.msra.mxu0 0.0
          %5080 = vmatprep.subr.mxu0 0.0
          %5081 = vmatpush1.msra.mxu0 0.0
          %5082 = vmatprep.subr.mxu0 0.0
          %5083 = vmatpush1.msra.mxu0 0.0
          %5084 = vmatprep.subr.mxu0 0.0
          %5085 = vmatpush1.msra.mxu0 0.0
          %5086 = vmatprep.subr.mxu0 0.0
          %5087 = vmatpush1.msra.mxu0 0.0
          %5088 = vmatprep.subr.mxu0 0.0
          %5089 = vmatpush1.msra.mxu0 0.0
          %5090 = vmatprep.subr.mxu0 0.0
          %5091 = vmatpush1.msra.mxu0 0.0
          %5092 = vmatprep.subr.mxu0 0.0
          %5093 = vmatpush1.msra.mxu0 0.0
          %5094 = vmatprep.subr.mxu0 0.0
          %5095 = vmatpush1.msra.mxu0 0.0
          %5096 = vmatprep.subr.mxu0 0.0
          %5097 = vmatpush1.msra.mxu0 0.0
          %5098 = vmatprep.subr.mxu0 0.0
          %5099 = vmatpush1.msra.mxu0 0.0
          %5100 = vmatprep.subr.mxu0 0.0
          %5101 = vmatpush1.msra.mxu0 0.0
          %5102 = vmatprep.subr.mxu0 0.0
          %5103 = vmatpush1.msra.mxu0 0.0
          %5104 = vmatprep.subr.mxu0 0.0
          %5105 = vmatpush1.msra.mxu0 0.0
          %5106 = vmatprep.subr.mxu0 0.0
          %5107 = vmatpush1.msra.mxu0 0.0
          %5108 = vmatprep.subr.mxu0 0.0
          %5109 = vmatpush1.msra.mxu0 0.0
          %5110 = vmatprep.subr.mxu0 0.0
          %5111 = vmatpush1.msra.mxu0 0.0
          %5112 = vmatprep.subr.mxu0 0.0
          %5113 = vmatpush1.msra.mxu0 0.0
          %5114 = vmatprep.subr.mxu0 0.0
          %5115 = vmatpush1.msra.mxu0 0.0
          %5116 = vmatprep.subr.mxu0 0.0
          %5117 = vmatpush1.msra.mxu0 0.0
          %5118 = vmatprep.subr.mxu0 0.0
          %5119 = vmatpush1.msra.mxu0 0.0
          %5120 = vmatprep.mubr.f32.mxu0 0.0
          %v5121 = vand.u32 %v4789, 4294901760
          %v5122 = vsub.f32 %v4789, %v5121
          %v5123 = vand.u32 %v5122, 4294901760
          %5124 = vmatmul.mubr.f32.gmra.mrb[0].mxu0 %v5123
          %v5125 = vpop.f32.mrb[0].mxu0
          %v5126 = vadd.f32 %v5044, %v5125
          %v5127 = vpop.f32.mrb[0].mxu0
          %5128 = vmatprep.mubr.f32.mxu0 0.0
          %v5129 = vand.u32 %v4792, 4294901760
          %v5130 = vsub.f32 %v4792, %v5129
          %v5131 = vand.u32 %v5130, 4294901760
          %5132 = vmatmul.mubr.f32.gmra.mrb[0].mxu0 %v5131
          %v5133 = vpop.f32.mrb[0].mxu0
          %v5134 = vadd.f32 %v5051, %v5133
          %v5135 = vpop.f32.mrb[0].mxu0
          %5136 = vdwg.mxu0
          %5137 = vmatprep.subr.mxu0 0.0
          %v5138 = vand.u32 %v4784, 4294901760
          %v5139 = vsub.f32 %v4784, %v5138
          %v5140 = vand.u32 %v5139, 4294901760
          %5141 = vmatpush1.msra.mxu0 %v5140
          %5142 = vmatprep.subr.mxu0 0.0
          %v5143 = vand.u32 %v4795, 4294901760
          %v5144 = vsub.f32 %v4795, %v5143
          %v5145 = vand.u32 %v5144, 4294901760
          %5146 = vmatpush1.msra.mxu0 %v5145
          %5147 = vmatprep.subr.mxu0 0.0
          %5148 = vmatpush1.msra.mxu0 0.0
          %5149 = vmatprep.subr.mxu0 0.0
          %5150 = vmatpush1.msra.mxu0 0.0
          %5151 = vmatprep.subr.mxu0 0.0
          %5152 = vmatpush1.msra.mxu0 0.0
          %5153 = vmatprep.subr.mxu0 0.0
          %5154 = vmatpush1.msra.mxu0 0.0
          %5155 = vmatprep.subr.mxu0 0.0
          %5156 = vmatpush1.msra.mxu0 0.0
          %5157 = vmatprep.subr.mxu0 0.0
          %5158 = vmatpush1.msra.mxu0 0.0
          %5159 = vmatprep.subr.mxu0 0.0
          %5160 = vmatpush1.msra.mxu0 0.0
          %5161 = vmatprep.subr.mxu0 0.0
          %5162 = vmatpush1.msra.mxu0 0.0
          %5163 = vmatprep.subr.mxu0 0.0
          %5164 = vmatpush1.msra.mxu0 0.0
          %5165 = vmatprep.subr.mxu0 0.0
          %5166 = vmatpush1.msra.mxu0 0.0
          %5167 = vmatprep.subr.mxu0 0.0
          %5168 = vmatpush1.msra.mxu0 0.0
          %5169 = vmatprep.subr.mxu0 0.0
          %5170 = vmatpush1.msra.mxu0 0.0
          %5171 = vmatprep.subr.mxu0 0.0
          %5172 = vmatpush1.msra.mxu0 0.0
          %5173 = vmatprep.subr.mxu0 0.0
          %5174 = vmatpush1.msra.mxu0 0.0
          %5175 = vmatprep.subr.mxu0 0.0
          %5176 = vmatpush1.msra.mxu0 0.0
          %5177 = vmatprep.subr.mxu0 0.0
          %5178 = vmatpush1.msra.mxu0 0.0
          %5179 = vmatprep.subr.mxu0 0.0
          %5180 = vmatpush1.msra.mxu0 0.0
          %5181 = vmatprep.subr.mxu0 0.0
          %5182 = vmatpush1.msra.mxu0 0.0
          %5183 = vmatprep.subr.mxu0 0.0
          %5184 = vmatpush1.msra.mxu0 0.0
          %5185 = vmatprep.subr.mxu0 0.0
          %5186 = vmatpush1.msra.mxu0 0.0
          %5187 = vmatprep.subr.mxu0 0.0
          %5188 = vmatpush1.msra.mxu0 0.0
          %5189 = vmatprep.subr.mxu0 0.0
          %5190 = vmatpush1.msra.mxu0 0.0
          %5191 = vmatprep.subr.mxu0 0.0
          %5192 = vmatpush1.msra.mxu0 0.0
          %5193 = vmatprep.subr.mxu0 0.0
          %5194 = vmatpush1.msra.mxu0 0.0
          %5195 = vmatprep.subr.mxu0 0.0
          %5196 = vmatpush1.msra.mxu0 0.0
          %5197 = vmatprep.subr.mxu0 0.0
          %5198 = vmatpush1.msra.mxu0 0.0
          %5199 = vmatprep.subr.mxu0 0.0
          %5200 = vmatpush1.msra.mxu0 0.0
          %5201 = vmatprep.subr.mxu0 0.0
          %5202 = vmatpush1.msra.mxu0 0.0
          %5203 = vmatprep.subr.mxu0 0.0
          %5204 = vmatpush1.msra.mxu0 0.0
          %5205 = vmatprep.subr.mxu0 0.0
          %5206 = vmatpush1.msra.mxu0 0.0
          %5207 = vmatprep.mubr.f32.mxu0 0.0
          %v5208 = vand.u32 %v4789, 4294901760
          %5209 = vmatmul.mubr.f32.gmra.mrb[0].mxu0 %v5208
          %v5210 = vpop.f32.mrb[0].mxu0
          %v5211 = vadd.f32 %v5126, %v5210
          %v5212 = vpop.f32.mrb[0].mxu0
          %5213 = vmatprep.mubr.f32.mxu0 0.0
          %v5214 = vand.u32 %v4792, 4294901760
          %5215 = vmatmul.mubr.f32.gmra.mrb[0].mxu0 %v5214
          %v5216 = vpop.f32.mrb[0].mxu0
          %v5217 = vadd.f32 %v5134, %v5216
          %v5218 = vpop.f32.mrb[0].mxu0
          %5219 = vdwg.mxu0
          %5220 = vmatprep.subr.mxu0 0.0
          %v5221 = vand.u32 %v4784, 4294901760
          %5222 = vmatpush1.msra.mxu0 %v5221
          %5223 = vmatprep.subr.mxu0 0.0
          %v5224 = vand.u32 %v4795, 4294901760
          %5225 = vmatpush1.msra.mxu0 %v5224
          %5226 = vmatprep.subr.mxu0 0.0
          %5227 = vmatpush1.msra.mxu0 0.0
          %5228 = vmatprep.subr.mxu0 0.0
          %5229 = vmatpush1.msra.mxu0 0.0
          %5230 = vmatprep.subr.mxu0 0.0
          %5231 = vmatpush1.msra.mxu0 0.0
          %5232 = vmatprep.subr.mxu0 0.0
          %5233 = vmatpush1.msra.mxu0 0.0
          %5234 = vmatprep.subr.mxu0 0.0
          %5235 = vmatpush1.msra.mxu0 0.0
          %5236 = vmatprep.subr.mxu0 0.0
          %5237 = vmatpush1.msra.mxu0 0.0
          %5238 = vmatprep.subr.mxu0 0.0
          %5239 = vmatpush1.msra.mxu0 0.0
          %5240 = vmatprep.subr.mxu0 0.0
          %5241 = vmatpush1.msra.mxu0 0.0
          %5242 = vmatprep.subr.mxu0 0.0
          %5243 = vmatpush1.msra.mxu0 0.0
          %5244 = vmatprep.subr.mxu0 0.0
          %5245 = vmatpush1.msra.mxu0 0.0
          %5246 = vmatprep.subr.mxu0 0.0
          %5247 = vmatpush1.msra.mxu0 0.0
          %5248 = vmatprep.subr.mxu0 0.0
          %5249 = vmatpush1.msra.mxu0 0.0
          %5250 = vmatprep.subr.mxu0 0.0
          %5251 = vmatpush1.msra.mxu0 0.0
          %5252 = vmatprep.subr.mxu0 0.0
          %5253 = vmatpush1.msra.mxu0 0.0
          %5254 = vmatprep.subr.mxu0 0.0
          %5255 = vmatpush1.msra.mxu0 0.0
          %5256 = vmatprep.subr.mxu0 0.0
          %5257 = vmatpush1.msra.mxu0 0.0
          %5258 = vmatprep.subr.mxu0 0.0
          %5259 = vmatpush1.msra.mxu0 0.0
          %5260 = vmatprep.subr.mxu0 0.0
          %5261 = vmatpush1.msra.mxu0 0.0
          %5262 = vmatprep.subr.mxu0 0.0
          %5263 = vmatpush1.msra.mxu0 0.0
          %5264 = vmatprep.subr.mxu0 0.0
          %5265 = vmatpush1.msra.mxu0 0.0
          %5266 = vmatprep.subr.mxu0 0.0
          %5267 = vmatpush1.msra.mxu0 0.0
          %5268 = vmatprep.subr.mxu0 0.0
          %5269 = vmatpush1.msra.mxu0 0.0
          %5270 = vmatprep.subr.mxu0 0.0
          %5271 = vmatpush1.msra.mxu0 0.0
          %5272 = vmatprep.subr.mxu0 0.0
          %5273 = vmatpush1.msra.mxu0 0.0
          %5274 = vmatprep.subr.mxu0 0.0
          %5275 = vmatpush1.msra.mxu0 0.0
          %5276 = vmatprep.subr.mxu0 0.0
          %5277 = vmatpush1.msra.mxu0 0.0
          %5278 = vmatprep.subr.mxu0 0.0
          %5279 = vmatpush1.msra.mxu0 0.0
          %5280 = vmatprep.subr.mxu0 0.0
          %5281 = vmatpush1.msra.mxu0 0.0
          %5282 = vmatprep.subr.mxu0 0.0
          %5283 = vmatpush1.msra.mxu0 0.0
          %5284 = vmatprep.subr.mxu0 0.0
          %5285 = vmatpush1.msra.mxu0 0.0
          %5286 = vmatprep.mubr.f32.mxu0 0.0
          %v5287 = vand.u32 %v4789, 4294901760
          %5288 = vmatmul.mubr.f32.gmra.mrb[0].mxu0 %v5287
          %v5289 = vpop.f32.mrb[0].mxu0
          %v5290 = vadd.f32 %v5211, %v5289
          %v5291 = vpop.f32.mrb[0].mxu0
          %5292 = vmatprep.mubr.f32.mxu0 0.0
          %v5293 = vand.u32 %v4792, 4294901760
          %5294 = vmatmul.mubr.f32.gmra.mrb[0].mxu0 %v5293
          %v5295 = vpop.f32.mrb[0].mxu0
          %v5296 = vadd.f32 %v5217, %v5295
          %v5297 = vpop.f32.mrb[0].mxu0
          %5298 = vdwg.mxu0
          %v5299 = vld [vmem:[#allocation12] sm:$0xff]
          %v5300 = vld [vmem:[#allocation12 + $0x8] sm:$0x3f]
          %v5302 = vsel %vm332, %v5290, 0
          %v5305 = vsel %vm332, %v5296, 0
          %v5308 = vsel %vm339, %v5300, 0
          %5310 = vmatprep.subr.mxu0 0.0
          %v5311 = vand.u32 %v5299, 4294901760
          %5312 = vmatpush1.msra.mxu0 %v5311
          %5313 = vmatprep.subr.mxu0 0.0
          %v5314 = vand.u32 %v5308, 4294901760
          %5315 = vmatpush1.msra.mxu0 %v5314
          %5316 = vmatprep.subr.mxu0 0.0
          %5317 = vmatpush1.msra.mxu0 0.0
          %5318 = vmatprep.subr.mxu0 0.0
          %5319 = vmatpush1.msra.mxu0 0.0
          %5320 = vmatprep.subr.mxu0 0.0
          %5321 = vmatpush1.msra.mxu0 0.0
          %5322 = vmatprep.subr.mxu0 0.0
          %5323 = vmatpush1.msra.mxu0 0.0
          %5324 = vmatprep.subr.mxu0 0.0
          %5325 = vmatpush1.msra.mxu0 0.0
          %5326 = vmatprep.subr.mxu0 0.0
          %5327 = vmatpush1.msra.mxu0 0.0
          %5328 = vmatprep.subr.mxu0 0.0
          %5329 = vmatpush1.msra.mxu0 0.0
          %5330 = vmatprep.subr.mxu0 0.0
          %5331 = vmatpush1.msra.mxu0 0.0
          %5332 = vmatprep.subr.mxu0 0.0
          %5333 = vmatpush1.msra.mxu0 0.0
          %5334 = vmatprep.subr.mxu0 0.0
          %5335 = vmatpush1.msra.mxu0 0.0
          %5336 = vmatprep.subr.mxu0 0.0
          %5337 = vmatpush1.msra.mxu0 0.0
          %5338 = vmatprep.subr.mxu0 0.0
          %5339 = vmatpush1.msra.mxu0 0.0
          %5340 = vmatprep.subr.mxu0 0.0
          %5341 = vmatpush1.msra.mxu0 0.0
          %5342 = vmatprep.subr.mxu0 0.0
          %5343 = vmatpush1.msra.mxu0 0.0
          %5344 = vmatprep.subr.mxu0 0.0
          %5345 = vmatpush1.msra.mxu0 0.0
          %5346 = vmatprep.subr.mxu0 0.0
          %5347 = vmatpush1.msra.mxu0 0.0
          %5348 = vmatprep.subr.mxu0 0.0
          %5349 = vmatpush1.msra.mxu0 0.0
          %5350 = vmatprep.subr.mxu0 0.0
          %5351 = vmatpush1.msra.mxu0 0.0
          %5352 = vmatprep.subr.mxu0 0.0
          %5353 = vmatpush1.msra.mxu0 0.0
          %5354 = vmatprep.subr.mxu0 0.0
          %5355 = vmatpush1.msra.mxu0 0.0
          %5356 = vmatprep.subr.mxu0 0.0
          %5357 = vmatpush1.msra.mxu0 0.0
          %5358 = vmatprep.subr.mxu0 0.0
          %5359 = vmatpush1.msra.mxu0 0.0
          %5360 = vmatprep.subr.mxu0 0.0
          %5361 = vmatpush1.msra.mxu0 0.0
          %5362 = vmatprep.subr.mxu0 0.0
          %5363 = vmatpush1.msra.mxu0 0.0
          %5364 = vmatprep.subr.mxu0 0.0
          %5365 = vmatpush1.msra.mxu0 0.0
          %5366 = vmatprep.subr.mxu0 0.0
          %5367 = vmatpush1.msra.mxu0 0.0
          %5368 = vmatprep.subr.mxu0 0.0
          %5369 = vmatpush1.msra.mxu0 0.0
          %5370 = vmatprep.subr.mxu0 0.0
          %5371 = vmatpush1.msra.mxu0 0.0
          %5372 = vmatprep.subr.mxu0 0.0
          %5373 = vmatpush1.msra.mxu0 0.0
          %5374 = vmatprep.subr.mxu0 0.0
          %5375 = vmatpush1.msra.mxu0 0.0
          %5376 = vmatprep.mubr.f32.mxu0 0.0
          %v5377 = vand.u32 %v5302, 4294901760
          %v5378 = vsub.f32 %v5302, %v5377
          %v5379 = vand.u32 %v5378, 4294901760
          %v5380 = vsub.f32 %v5378, %v5379
          %v5381 = vand.u32 %v5380, 4294901760
          %5382 = vmatmul.mubr.f32.gmra.mrb[0].mxu0 %v5381
          %v5383 = vpop.f32.mrb[0].mxu0
          %v5384 = vadd.f32 0.0, %v5383
          %v5385 = vpop.f32.mrb[0].mxu0
          %5386 = vmatprep.mubr.f32.mxu0 0.0
          %v5387 = vand.u32 %v5305, 4294901760
          %v5388 = vsub.f32 %v5305, %v5387
          %v5389 = vand.u32 %v5388, 4294901760
          %v5390 = vsub.f32 %v5388, %v5389
          %v5391 = vand.u32 %v5390, 4294901760
          %5392 = vmatmul.mubr.f32.gmra.mrb[0].mxu0 %v5391
          %v5393 = vpop.f32.mrb[0].mxu0
          %v5394 = vadd.f32 0.0, %v5393
          %v5395 = vpop.f32.mrb[0].mxu0
          %5396 = vdwg.mxu0
          %5397 = vmatprep.subr.mxu0 0.0
          %v5398 = vand.u32 %v5299, 4294901760
          %v5399 = vsub.f32 %v5299, %v5398
          %v5400 = vand.u32 %v5399, 4294901760
          %v5401 = vsub.f32 %v5399, %v5400
          %v5402 = vand.u32 %v5401, 4294901760
          %5403 = vmatpush1.msra.mxu0 %v5402
          %5404 = vmatprep.subr.mxu0 0.0
          %v5405 = vand.u32 %v5308, 4294901760
          %v5406 = vsub.f32 %v5308, %v5405
          %v5407 = vand.u32 %v5406, 4294901760
          %v5408 = vsub.f32 %v5406, %v5407
          %v5409 = vand.u32 %v5408, 4294901760
          %5410 = vmatpush1.msra.mxu0 %v5409
          %5411 = vmatprep.subr.mxu0 0.0
          %5412 = vmatpush1.msra.mxu0 0.0
          %5413 = vmatprep.subr.mxu0 0.0
          %5414 = vmatpush1.msra.mxu0 0.0
          %5415 = vmatprep.subr.mxu0 0.0
          %5416 = vmatpush1.msra.mxu0 0.0
          %5417 = vmatprep.subr.mxu0 0.0
          %5418 = vmatpush1.msra.mxu0 0.0
          %5419 = vmatprep.subr.mxu0 0.0
          %5420 = vmatpush1.msra.mxu0 0.0
          %5421 = vmatprep.subr.mxu0 0.0
          %5422 = vmatpush1.msra.mxu0 0.0
          %5423 = vmatprep.subr.mxu0 0.0
          %5424 = vmatpush1.msra.mxu0 0.0
          %5425 = vmatprep.subr.mxu0 0.0
          %5426 = vmatpush1.msra.mxu0 0.0
          %5427 = vmatprep.subr.mxu0 0.0
          %5428 = vmatpush1.msra.mxu0 0.0
          %5429 = vmatprep.subr.mxu0 0.0
          %5430 = vmatpush1.msra.mxu0 0.0
          %5431 = vmatprep.subr.mxu0 0.0
          %5432 = vmatpush1.msra.mxu0 0.0
          %5433 = vmatprep.subr.mxu0 0.0
          %5434 = vmatpush1.msra.mxu0 0.0
          %5435 = vmatprep.subr.mxu0 0.0
          %5436 = vmatpush1.msra.mxu0 0.0
          %5437 = vmatprep.subr.mxu0 0.0
          %5438 = vmatpush1.msra.mxu0 0.0
          %5439 = vmatprep.subr.mxu0 0.0
          %5440 = vmatpush1.msra.mxu0 0.0
          %5441 = vmatprep.subr.mxu0 0.0
          %5442 = vmatpush1.msra.mxu0 0.0
          %5443 = vmatprep.subr.mxu0 0.0
          %5444 = vmatpush1.msra.mxu0 0.0
          %5445 = vmatprep.subr.mxu0 0.0
          %5446 = vmatpush1.msra.mxu0 0.0
          %5447 = vmatprep.subr.mxu0 0.0
          %5448 = vmatpush1.msra.mxu0 0.0
          %5449 = vmatprep.subr.mxu0 0.0
          %5450 = vmatpush1.msra.mxu0 0.0
          %5451 = vmatprep.subr.mxu0 0.0
          %5452 = vmatpush1.msra.mxu0 0.0
          %5453 = vmatprep.subr.mxu0 0.0
          %5454 = vmatpush1.msra.mxu0 0.0
          %5455 = vmatprep.subr.mxu0 0.0
          %5456 = vmatpush1.msra.mxu0 0.0
          %5457 = vmatprep.subr.mxu0 0.0
          %5458 = vmatpush1.msra.mxu0 0.0
          %5459 = vmatprep.subr.mxu0 0.0
          %5460 = vmatpush1.msra.mxu0 0.0
          %5461 = vmatprep.subr.mxu0 0.0
          %5462 = vmatpush1.msra.mxu0 0.0
          %5463 = vmatprep.subr.mxu0 0.0
          %5464 = vmatpush1.msra.mxu0 0.0
          %5465 = vmatprep.subr.mxu0 0.0
          %5466 = vmatpush1.msra.mxu0 0.0
          %5467 = vmatprep.subr.mxu0 0.0
          %5468 = vmatpush1.msra.mxu0 0.0
          %5469 = vmatprep.subr.mxu0 0.0
          %5470 = vmatpush1.msra.mxu0 0.0
          %5471 = vmatprep.mubr.f32.mxu0 0.0
          %v5472 = vand.u32 %v5302, 4294901760
          %5473 = vmatmul.mubr.f32.gmra.mrb[0].mxu0 %v5472
          %v5474 = vpop.f32.mrb[0].mxu0
          %v5475 = vadd.f32 %v5384, %v5474
          %v5476 = vpop.f32.mrb[0].mxu0
          %5477 = vmatprep.mubr.f32.mxu0 0.0
          %v5478 = vand.u32 %v5305, 4294901760
          %5479 = vmatmul.mubr.f32.gmra.mrb[0].mxu0 %v5478
          %v5480 = vpop.f32.mrb[0].mxu0
          %v5481 = vadd.f32 %v5394, %v5480
          %v5482 = vpop.f32.mrb[0].mxu0
          %5483 = vdwg.mxu0
          %5484 = vmatprep.subr.mxu0 0.0
          %v5485 = vand.u32 %v5299, 4294901760
          %v5486 = vsub.f32 %v5299, %v5485
          %5487 = vmatpush1.msra.mxu0 %v5486
          %5488 = vmatprep.subr.mxu0 0.0
          %v5489 = vand.u32 %v5308, 4294901760
          %v5490 = vsub.f32 %v5308, %v5489
          %5491 = vmatpush1.msra.mxu0 %v5490
          %5492 = vmatprep.subr.mxu0 0.0
          %5493 = vmatpush1.msra.mxu0 0.0
          %5494 = vmatprep.subr.mxu0 0.0
          %5495 = vmatpush1.msra.mxu0 0.0
          %5496 = vmatprep.subr.mxu0 0.0
          %5497 = vmatpush1.msra.mxu0 0.0
          %5498 = vmatprep.subr.mxu0 0.0
          %5499 = vmatpush1.msra.mxu0 0.0
          %5500 = vmatprep.subr.mxu0 0.0
          %5501 = vmatpush1.msra.mxu0 0.0
          %5502 = vmatprep.subr.mxu0 0.0
          %5503 = vmatpush1.msra.mxu0 0.0
          %5504 = vmatprep.subr.mxu0 0.0
          %5505 = vmatpush1.msra.mxu0 0.0
          %5506 = vmatprep.subr.mxu0 0.0
          %5507 = vmatpush1.msra.mxu0 0.0
          %5508 = vmatprep.subr.mxu0 0.0
          %5509 = vmatpush1.msra.mxu0 0.0
          %5510 = vmatprep.subr.mxu0 0.0
          %5511 = vmatpush1.msra.mxu0 0.0
          %5512 = vmatprep.subr.mxu0 0.0
          %5513 = vmatpush1.msra.mxu0 0.0
          %5514 = vmatprep.subr.mxu0 0.0
          %5515 = vmatpush1.msra.mxu0 0.0
          %5516 = vmatprep.subr.mxu0 0.0
          %5517 = vmatpush1.msra.mxu0 0.0
          %5518 = vmatprep.subr.mxu0 0.0
          %5519 = vmatpush1.msra.mxu0 0.0
          %5520 = vmatprep.subr.mxu0 0.0
          %5521 = vmatpush1.msra.mxu0 0.0
          %5522 = vmatprep.subr.mxu0 0.0
          %5523 = vmatpush1.msra.mxu0 0.0
          %5524 = vmatprep.subr.mxu0 0.0
          %5525 = vmatpush1.msra.mxu0 0.0
          %5526 = vmatprep.subr.mxu0 0.0
          %5527 = vmatpush1.msra.mxu0 0.0
          %5528 = vmatprep.subr.mxu0 0.0
          %5529 = vmatpush1.msra.mxu0 0.0
          %5530 = vmatprep.subr.mxu0 0.0
          %5531 = vmatpush1.msra.mxu0 0.0
          %5532 = vmatprep.subr.mxu0 0.0
          %5533 = vmatpush1.msra.mxu0 0.0
          %5534 = vmatprep.subr.mxu0 0.0
          %5535 = vmatpush1.msra.mxu0 0.0
          %5536 = vmatprep.subr.mxu0 0.0
          %5537 = vmatpush1.msra.mxu0 0.0
          %5538 = vmatprep.subr.mxu0 0.0
          %5539 = vmatpush1.msra.mxu0 0.0
          %5540 = vmatprep.subr.mxu0 0.0
          %5541 = vmatpush1.msra.mxu0 0.0
          %5542 = vmatprep.subr.mxu0 0.0
          %5543 = vmatpush1.msra.mxu0 0.0
          %5544 = vmatprep.subr.mxu0 0.0
          %5545 = vmatpush1.msra.mxu0 0.0
          %5546 = vmatprep.subr.mxu0 0.0
          %5547 = vmatpush1.msra.mxu0 0.0
          %5548 = vmatprep.subr.mxu0 0.0
          %5549 = vmatpush1.msra.mxu0 0.0
          %5550 = vmatprep.subr.mxu0 0.0
          %5551 = vmatpush1.msra.mxu0 0.0
          %5552 = vmatprep.mubr.f32.mxu0 0.0
          %v5553 = vand.u32 %v5302, 4294901760
          %v5554 = vsub.f32 %v5302, %v5553
          %5555 = vmatmul.mubr.f32.gmra.mrb[0].mxu0 %v5554
          %v5556 = vpop.f32.mrb[0].mxu0
          %v5557 = vadd.f32 %v5475, %v5556
          %v5558 = vpop.f32.mrb[0].mxu0
          %5559 = vmatprep.mubr.f32.mxu0 0.0
          %v5560 = vand.u32 %v5305, 4294901760
          %v5561 = vsub.f32 %v5305, %v5560
          %5562 = vmatmul.mubr.f32.gmra.mrb[0].mxu0 %v5561
          %v5563 = vpop.f32.mrb[0].mxu0
          %v5564 = vadd.f32 %v5481, %v5563
          %v5565 = vpop.f32.mrb[0].mxu0
          %5566 = vdwg.mxu0
          %5567 = vmatprep.subr.mxu0 0.0
          %v5568 = vand.u32 %v5299, 4294901760
          %5569 = vmatpush1.msra.mxu0 %v5568
          %5570 = vmatprep.subr.mxu0 0.0
          %v5571 = vand.u32 %v5308, 4294901760
          %5572 = vmatpush1.msra.mxu0 %v5571
          %5573 = vmatprep.subr.mxu0 0.0
          %5574 = vmatpush1.msra.mxu0 0.0
          %5575 = vmatprep.subr.mxu0 0.0
          %5576 = vmatpush1.msra.mxu0 0.0
          %5577 = vmatprep.subr.mxu0 0.0
          %5578 = vmatpush1.msra.mxu0 0.0
          %5579 = vmatprep.subr.mxu0 0.0
          %5580 = vmatpush1.msra.mxu0 0.0
          %5581 = vmatprep.subr.mxu0 0.0
          %5582 = vmatpush1.msra.mxu0 0.0
          %5583 = vmatprep.subr.mxu0 0.0
          %5584 = vmatpush1.msra.mxu0 0.0
          %5585 = vmatprep.subr.mxu0 0.0
          %5586 = vmatpush1.msra.mxu0 0.0
          %5587 = vmatprep.subr.mxu0 0.0
          %5588 = vmatpush1.msra.mxu0 0.0
          %5589 = vmatprep.subr.mxu0 0.0
          %5590 = vmatpush1.msra.mxu0 0.0
          %5591 = vmatprep.subr.mxu0 0.0
          %5592 = vmatpush1.msra.mxu0 0.0
          %5593 = vmatprep.subr.mxu0 0.0
          %5594 = vmatpush1.msra.mxu0 0.0
          %5595 = vmatprep.subr.mxu0 0.0
          %5596 = vmatpush1.msra.mxu0 0.0
          %5597 = vmatprep.subr.mxu0 0.0
          %5598 = vmatpush1.msra.mxu0 0.0
          %5599 = vmatprep.subr.mxu0 0.0
          %5600 = vmatpush1.msra.mxu0 0.0
          %5601 = vmatprep.subr.mxu0 0.0
          %5602 = vmatpush1.msra.mxu0 0.0
          %5603 = vmatprep.subr.mxu0 0.0
          %5604 = vmatpush1.msra.mxu0 0.0
          %5605 = vmatprep.subr.mxu0 0.0
          %5606 = vmatpush1.msra.mxu0 0.0
          %5607 = vmatprep.subr.mxu0 0.0
          %5608 = vmatpush1.msra.mxu0 0.0
          %5609 = vmatprep.subr.mxu0 0.0
          %5610 = vmatpush1.msra.mxu0 0.0
          %5611 = vmatprep.subr.mxu0 0.0
          %5612 = vmatpush1.msra.mxu0 0.0
          %5613 = vmatprep.subr.mxu0 0.0
          %5614 = vmatpush1.msra.mxu0 0.0
          %5615 = vmatprep.subr.mxu0 0.0
          %5616 = vmatpush1.msra.mxu0 0.0
          %5617 = vmatprep.subr.mxu0 0.0
          %5618 = vmatpush1.msra.mxu0 0.0
          %5619 = vmatprep.subr.mxu0 0.0
          %5620 = vmatpush1.msra.mxu0 0.0
          %5621 = vmatprep.subr.mxu0 0.0
          %5622 = vmatpush1.msra.mxu0 0.0
          %5623 = vmatprep.subr.mxu0 0.0
          %5624 = vmatpush1.msra.mxu0 0.0
          %5625 = vmatprep.subr.mxu0 0.0
          %5626 = vmatpush1.msra.mxu0 0.0
          %5627 = vmatprep.subr.mxu0 0.0
          %5628 = vmatpush1.msra.mxu0 0.0
          %5629 = vmatprep.subr.mxu0 0.0
          %5630 = vmatpush1.msra.mxu0 0.0
          %5631 = vmatprep.subr.mxu0 0.0
          %5632 = vmatpush1.msra.mxu0 0.0
          %5633 = vmatprep.mubr.f32.mxu0 0.0
          %v5634 = vand.u32 %v5302, 4294901760
          %v5635 = vsub.f32 %v5302, %v5634
          %v5636 = vand.u32 %v5635, 4294901760
          %5637 = vmatmul.mubr.f32.gmra.mrb[0].mxu0 %v5636
          %v5638 = vpop.f32.mrb[0].mxu0
          %v5639 = vadd.f32 %v5557, %v5638
          %v5640 = vpop.f32.mrb[0].mxu0
          %5641 = vmatprep.mubr.f32.mxu0 0.0
          %v5642 = vand.u32 %v5305, 4294901760
          %v5643 = vsub.f32 %v5305, %v5642
          %v5644 = vand.u32 %v5643, 4294901760
          %5645 = vmatmul.mubr.f32.gmra.mrb[0].mxu0 %v5644
          %v5646 = vpop.f32.mrb[0].mxu0
          %v5647 = vadd.f32 %v5564, %v5646
          %v5648 = vpop.f32.mrb[0].mxu0
          %5649 = vdwg.mxu0
          %5650 = vmatprep.subr.mxu0 0.0
          %v5651 = vand.u32 %v5299, 4294901760
          %v5652 = vsub.f32 %v5299, %v5651
          %v5653 = vand.u32 %v5652, 4294901760
          %5654 = vmatpush1.msra.mxu0 %v5653
          %5655 = vmatprep.subr.mxu0 0.0
          %v5656 = vand.u32 %v5308, 4294901760
          %v5657 = vsub.f32 %v5308, %v5656
          %v5658 = vand.u32 %v5657, 4294901760
          %5659 = vmatpush1.msra.mxu0 %v5658
          %5660 = vmatprep.subr.mxu0 0.0
          %5661 = vmatpush1.msra.mxu0 0.0
          %5662 = vmatprep.subr.mxu0 0.0
          %5663 = vmatpush1.msra.mxu0 0.0
          %5664 = vmatprep.subr.mxu0 0.0
          %5665 = vmatpush1.msra.mxu0 0.0
          %5666 = vmatprep.subr.mxu0 0.0
          %5667 = vmatpush1.msra.mxu0 0.0
          %5668 = vmatprep.subr.mxu0 0.0
          %5669 = vmatpush1.msra.mxu0 0.0
          %5670 = vmatprep.subr.mxu0 0.0
          %5671 = vmatpush1.msra.mxu0 0.0
          %5672 = vmatprep.subr.mxu0 0.0
          %5673 = vmatpush1.msra.mxu0 0.0
          %5674 = vmatprep.subr.mxu0 0.0
          %5675 = vmatpush1.msra.mxu0 0.0
          %5676 = vmatprep.subr.mxu0 0.0
          %5677 = vmatpush1.msra.mxu0 0.0
          %5678 = vmatprep.subr.mxu0 0.0
          %5679 = vmatpush1.msra.mxu0 0.0
          %5680 = vmatprep.subr.mxu0 0.0
          %5681 = vmatpush1.msra.mxu0 0.0
          %5682 = vmatprep.subr.mxu0 0.0
          %5683 = vmatpush1.msra.mxu0 0.0
          %5684 = vmatprep.subr.mxu0 0.0
          %5685 = vmatpush1.msra.mxu0 0.0
          %5686 = vmatprep.subr.mxu0 0.0
          %5687 = vmatpush1.msra.mxu0 0.0
          %5688 = vmatprep.subr.mxu0 0.0
          %5689 = vmatpush1.msra.mxu0 0.0
          %5690 = vmatprep.subr.mxu0 0.0
          %5691 = vmatpush1.msra.mxu0 0.0
          %5692 = vmatprep.subr.mxu0 0.0
          %5693 = vmatpush1.msra.mxu0 0.0
          %5694 = vmatprep.subr.mxu0 0.0
          %5695 = vmatpush1.msra.mxu0 0.0
          %5696 = vmatprep.subr.mxu0 0.0
          %5697 = vmatpush1.msra.mxu0 0.0
          %5698 = vmatprep.subr.mxu0 0.0
          %5699 = vmatpush1.msra.mxu0 0.0
          %5700 = vmatprep.subr.mxu0 0.0
          %5701 = vmatpush1.msra.mxu0 0.0
          %5702 = vmatprep.subr.mxu0 0.0
          %5703 = vmatpush1.msra.mxu0 0.0
          %5704 = vmatprep.subr.mxu0 0.0
          %5705 = vmatpush1.msra.mxu0 0.0
          %5706 = vmatprep.subr.mxu0 0.0
          %5707 = vmatpush1.msra.mxu0 0.0
          %5708 = vmatprep.subr.mxu0 0.0
          %5709 = vmatpush1.msra.mxu0 0.0
          %5710 = vmatprep.subr.mxu0 0.0
          %5711 = vmatpush1.msra.mxu0 0.0
          %5712 = vmatprep.subr.mxu0 0.0
          %5713 = vmatpush1.msra.mxu0 0.0
          %5714 = vmatprep.subr.mxu0 0.0
          %5715 = vmatpush1.msra.mxu0 0.0
          %5716 = vmatprep.subr.mxu0 0.0
          %5717 = vmatpush1.msra.mxu0 0.0
          %5718 = vmatprep.subr.mxu0 0.0
          %5719 = vmatpush1.msra.mxu0 0.0
          %5720 = vmatprep.mubr.f32.mxu0 0.0
          %v5721 = vand.u32 %v5302, 4294901760
          %5722 = vmatmul.mubr.f32.gmra.mrb[0].mxu0 %v5721
          %v5723 = vpop.f32.mrb[0].mxu0
          %v5724 = vadd.f32 %v5639, %v5723
          %v5725 = vpop.f32.mrb[0].mxu0
          %5726 = vmatprep.mubr.f32.mxu0 0.0
          %v5727 = vand.u32 %v5305, 4294901760
          %5728 = vmatmul.mubr.f32.gmra.mrb[0].mxu0 %v5727
          %v5729 = vpop.f32.mrb[0].mxu0
          %v5730 = vadd.f32 %v5647, %v5729
          %v5731 = vpop.f32.mrb[0].mxu0
          %5732 = vdwg.mxu0
          %5733 = vmatprep.subr.mxu0 0.0
          %v5734 = vand.u32 %v5299, 4294901760
          %5735 = vmatpush1.msra.mxu0 %v5734
          %5736 = vmatprep.subr.mxu0 0.0
          %v5737 = vand.u32 %v5308, 4294901760
          %5738 = vmatpush1.msra.mxu0 %v5737
          %5739 = vmatprep.subr.mxu0 0.0
          %5740 = vmatpush1.msra.mxu0 0.0
          %5741 = vmatprep.subr.mxu0 0.0
          %5742 = vmatpush1.msra.mxu0 0.0
          %5743 = vmatprep.subr.mxu0 0.0
          %5744 = vmatpush1.msra.mxu0 0.0
          %5745 = vmatprep.subr.mxu0 0.0
          %5746 = vmatpush1.msra.mxu0 0.0
          %5747 = vmatprep.subr.mxu0 0.0
          %5748 = vmatpush1.msra.mxu0 0.0
          %5749 = vmatprep.subr.mxu0 0.0
          %5750 = vmatpush1.msra.mxu0 0.0
          %5751 = vmatprep.subr.mxu0 0.0
          %5752 = vmatpush1.msra.mxu0 0.0
          %5753 = vmatprep.subr.mxu0 0.0
          %5754 = vmatpush1.msra.mxu0 0.0
          %5755 = vmatprep.subr.mxu0 0.0
          %5756 = vmatpush1.msra.mxu0 0.0
          %5757 = vmatprep.subr.mxu0 0.0
          %5758 = vmatpush1.msra.mxu0 0.0
          %5759 = vmatprep.subr.mxu0 0.0
          %5760 = vmatpush1.msra.mxu0 0.0
          %5761 = vmatprep.subr.mxu0 0.0
          %5762 = vmatpush1.msra.mxu0 0.0
          %5763 = vmatprep.subr.mxu0 0.0
          %5764 = vmatpush1.msra.mxu0 0.0
          %5765 = vmatprep.subr.mxu0 0.0
          %5766 = vmatpush1.msra.mxu0 0.0
          %5767 = vmatprep.subr.mxu0 0.0
          %5768 = vmatpush1.msra.mxu0 0.0
          %5769 = vmatprep.subr.mxu0 0.0
          %5770 = vmatpush1.msra.mxu0 0.0
          %5771 = vmatprep.subr.mxu0 0.0
          %5772 = vmatpush1.msra.mxu0 0.0
          %5773 = vmatprep.subr.mxu0 0.0
          %5774 = vmatpush1.msra.mxu0 0.0
          %5775 = vmatprep.subr.mxu0 0.0
          %5776 = vmatpush1.msra.mxu0 0.0
          %5777 = vmatprep.subr.mxu0 0.0
          %5778 = vmatpush1.msra.mxu0 0.0
          %5779 = vmatprep.subr.mxu0 0.0
          %5780 = vmatpush1.msra.mxu0 0.0
          %5781 = vmatprep.subr.mxu0 0.0
          %5782 = vmatpush1.msra.mxu0 0.0
          %5783 = vmatprep.subr.mxu0 0.0
          %5784 = vmatpush1.msra.mxu0 0.0
          %5785 = vmatprep.subr.mxu0 0.0
          %5786 = vmatpush1.msra.mxu0 0.0
          %5787 = vmatprep.subr.mxu0 0.0
          %5788 = vmatpush1.msra.mxu0 0.0
          %5789 = vmatprep.subr.mxu0 0.0
          %5790 = vmatpush1.msra.mxu0 0.0
          %5791 = vmatprep.subr.mxu0 0.0
          %5792 = vmatpush1.msra.mxu0 0.0
          %5793 = vmatprep.subr.mxu0 0.0
          %5794 = vmatpush1.msra.mxu0 0.0
          %5795 = vmatprep.subr.mxu0 0.0
          %5796 = vmatpush1.msra.mxu0 0.0
          %5797 = vmatprep.subr.mxu0 0.0
          %5798 = vmatpush1.msra.mxu0 0.0
          %5799 = vmatprep.mubr.f32.mxu0 0.0
          %v5800 = vand.u32 %v5302, 4294901760
          %5801 = vmatmul.mubr.f32.gmra.mrb[0].mxu0 %v5800
          %v5802 = vpop.f32.mrb[0].mxu0
          %v5803 = vadd.f32 %v5724, %v5802
          %v5804 = vpop.f32.mrb[0].mxu0
          %5805 = vmatprep.mubr.f32.mxu0 0.0
          %v5806 = vand.u32 %v5305, 4294901760
          %5807 = vmatmul.mubr.f32.gmra.mrb[0].mxu0 %v5806
          %v5808 = vpop.f32.mrb[0].mxu0
          %v5809 = vadd.f32 %v5730, %v5808
          %v5810 = vpop.f32.mrb[0].mxu0
          %5811 = vdwg.mxu0
          %v5812 = vmax.f32 %v4698, %v5803
          %v5813 = vmax.f32 %v4699, %v5809
          %s5814 = sadd.s32 80, %s236
          %s5815 = scalar_lea.vmem %s185, %s5814 [#allocation8]
          %v5816 = vld [vmem:[%s5815] sm:$0xff]
          %v5817 = vld [vmem:[%s5815 + $0x8] sm:$0xff]
          %5820 = vrot.lane.b32.xlu0 %v5816, 2
          %v5821 = vpop.permute.xlu0 %5820
          %5822 = vrot.lane.b32.xlu0 %v5817, 2
          %v5823 = vpop.permute.xlu0 %5822
          %5826 = vst.msk [vmem:[#allocation2 + $0x2] sm:$0xff] %vm248, %v5821
          %5827 = vst.msk [vmem:[#allocation2 + $0xa] sm:$0xff] %vm248, %v5823
          %v5828 = vld [vmem:[#allocation2] sm:$0xff]
          %v5829 = vld [vmem:[#allocation2 + $0x8] sm:$0xff]
          %v5830 = vld [vmem:[#allocation2 + $0x10] sm:$0x7]
          %v5831 = vld [vmem:[#allocation2 + $0x1] sm:$0xff]
          %v5832 = vld [vmem:[#allocation2 + $0x9] sm:$0xff]
          %v5833 = vld [vmem:[#allocation2 + $0x11] sm:$0x7]
          %v5834 = vmax.f32 %v5828, %v5831
          %v5835 = vmax.f32 %v5829, %v5832
          %v5836 = vmax.f32 %v5830, %v5833
          %5837 = vst.msk [vmem:[#allocation3] sm:$0xff] %vm225, %v5834
          %5838 = vst.msk [vmem:[#allocation3 + $0x8] sm:$0xff] %vm225, %v5835
          %5839 = vst.msk [vmem:[#allocation3 + $0x10] sm:$0x7] %vm262, %v5836
          %v5840 = vld [vmem:[#allocation3] sm:$0xff]
          %v5841 = vld [vmem:[#allocation3 + $0x8] sm:$0xff]
          %v5842 = vld [vmem:[#allocation3 + $0x10] sm:$0x1]
          %v5843 = vld [vmem:[#allocation3 + $0x2] sm:$0xff]
          %v5844 = vld [vmem:[#allocation3 + $0xa] sm:$0xff]
          %v5845 = vld [vmem:[#allocation3 + $0x12] sm:$0x1]
          %v5846 = vmax.f32 %v5840, %v5843
          %v5847 = vmax.f32 %v5841, %v5844
          %v5848 = vmax.f32 %v5842, %v5845
          %5849 = vst.msk [vmem:[#allocation4] sm:$0xff] %vm225, %v5846
          %5850 = vst.msk [vmem:[#allocation4 + $0x8] sm:$0xff] %vm225, %v5847
          %5851 = vst.msk [vmem:[#allocation4 + $0x10] sm:$0x1] %vm275, %v5848
          %v5852 = vld [vmem:[#allocation4] sm:$0xff]
          %v5853 = vld [vmem:[#allocation4 + $0x8] sm:$0x3f]
          %v5854 = vld [vmem:[#allocation4 + $0x3] sm:$0xff]
          %v5855 = vld [vmem:[#allocation4 + $0xb] sm:$0x3f]
          %v5856 = vmax.f32 %v5852, %v5854
          %v5857 = vmax.f32 %v5853, %v5855
          %5858 = vst.msk [vmem:[#allocation5] sm:$0xff] %vm225, %v5856
          %5859 = vst.msk [vmem:[#allocation5 + $0x8] sm:$0x3f] %vm284, %v5857
          %v5860 = vld [vmem:[#allocation5] sm:$0xff]
          %v5861 = vld [vmem:[#allocation5 + $0x8] sm:$0x3f]
          %5864 = vrot.lane.b32.xlu0 %v5860, 127
          %v5865 = vpop.permute.xlu0 %5864
          %5866 = vrot.lane.b32.xlu0 %v5861, 127
          %v5867 = vpop.permute.xlu0 %5866
          %v5870 = vmax.f32 %v5860, %v5865
          %v5871 = vmax.f32 %v5861, %v5867
          %5872 = vst.msk [vmem:[#allocation6] sm:$0xff] %vm298, %v5870
          %5873 = vst.msk [vmem:[#allocation6 + $0x8] sm:$0x3f] %vm300, %v5871
          %v5874 = vld [vmem:[#allocation6] sm:$0xff]
          %v5875 = vld [vmem:[#allocation6 + $0x8] sm:$0x3f]
          %5878 = vrot.lane.b32.xlu0 %v5874, 126
          %v5879 = vpop.permute.xlu0 %5878
          %5880 = vrot.lane.b32.xlu0 %v5875, 126
          %v5881 = vpop.permute.xlu0 %5880
          %v5884 = vmax.f32 %v5874, %v5879
          %v5885 = vmax.f32 %v5875, %v5881
          %5886 = vst.msk [vmem:[#allocation7] sm:$0xff] %vm314, %v5884
          %5887 = vst.msk [vmem:[#allocation7 + $0x8] sm:$0x3f] %vm316, %v5885
          %v5888 = vld [vmem:[#allocation7] sm:$0xff]
          %v5889 = vld [vmem:[#allocation7 + $0x8] sm:$0x3f]
          %5892 = vrot.lane.b32.xlu0 %v5888, 125
          %v5893 = vpop.permute.xlu0 %5892
          %5894 = vrot.lane.b32.xlu0 %v5889, 125
          %v5895 = vpop.permute.xlu0 %5894
          %v5898 = vmax.f32 %v5888, %v5893
          %v5899 = vmax.f32 %v5889, %v5895
          %v5900 = vld [vmem:[#allocation10] sm:$0xff]
          %v5901 = vld [vmem:[#allocation10 + $0x8] sm:$0x3f]
          %v5903 = vsel %vm332, %v5900, 0
          %v5906 = vsel %vm332, %v5901, 0
          %v5909 = vsel %vm339, %v5899, 0
          %5911 = vmatprep.subr.mxu0 0.0
          %v5912 = vand.u32 %v5898, 4294901760
          %5913 = vmatpush1.msra.mxu0 %v5912
          %5914 = vmatprep.subr.mxu0 0.0
          %v5915 = vand.u32 %v5909, 4294901760
          %5916 = vmatpush1.msra.mxu0 %v5915
          %5917 = vmatprep.subr.mxu0 0.0
          %5918 = vmatpush1.msra.mxu0 0.0
          %5919 = vmatprep.subr.mxu0 0.0
          %5920 = vmatpush1.msra.mxu0 0.0
          %5921 = vmatprep.subr.mxu0 0.0
          %5922 = vmatpush1.msra.mxu0 0.0
          %5923 = vmatprep.subr.mxu0 0.0
          %5924 = vmatpush1.msra.mxu0 0.0
          %5925 = vmatprep.subr.mxu0 0.0
          %5926 = vmatpush1.msra.mxu0 0.0
          %5927 = vmatprep.subr.mxu0 0.0
          %5928 = vmatpush1.msra.mxu0 0.0
          %5929 = vmatprep.subr.mxu0 0.0
          %5930 = vmatpush1.msra.mxu0 0.0
          %5931 = vmatprep.subr.mxu0 0.0
          %5932 = vmatpush1.msra.mxu0 0.0
          %5933 = vmatprep.subr.mxu0 0.0
          %5934 = vmatpush1.msra.mxu0 0.0
          %5935 = vmatprep.subr.mxu0 0.0
          %5936 = vmatpush1.msra.mxu0 0.0
          %5937 = vmatprep.subr.mxu0 0.0
          %5938 = vmatpush1.msra.mxu0 0.0
          %5939 = vmatprep.subr.mxu0 0.0
          %5940 = vmatpush1.msra.mxu0 0.0
          %5941 = vmatprep.subr.mxu0 0.0
          %5942 = vmatpush1.msra.mxu0 0.0
          %5943 = vmatprep.subr.mxu0 0.0
          %5944 = vmatpush1.msra.mxu0 0.0
          %5945 = vmatprep.subr.mxu0 0.0
          %5946 = vmatpush1.msra.mxu0 0.0
          %5947 = vmatprep.subr.mxu0 0.0
          %5948 = vmatpush1.msra.mxu0 0.0
          %5949 = vmatprep.subr.mxu0 0.0
          %5950 = vmatpush1.msra.mxu0 0.0
          %5951 = vmatprep.subr.mxu0 0.0
          %5952 = vmatpush1.msra.mxu0 0.0
          %5953 = vmatprep.subr.mxu0 0.0
          %5954 = vmatpush1.msra.mxu0 0.0
          %5955 = vmatprep.subr.mxu0 0.0
          %5956 = vmatpush1.msra.mxu0 0.0
          %5957 = vmatprep.subr.mxu0 0.0
          %5958 = vmatpush1.msra.mxu0 0.0
          %5959 = vmatprep.subr.mxu0 0.0
          %5960 = vmatpush1.msra.mxu0 0.0
          %5961 = vmatprep.subr.mxu0 0.0
          %5962 = vmatpush1.msra.mxu0 0.0
          %5963 = vmatprep.subr.mxu0 0.0
          %5964 = vmatpush1.msra.mxu0 0.0
          %5965 = vmatprep.subr.mxu0 0.0
          %5966 = vmatpush1.msra.mxu0 0.0
          %5967 = vmatprep.subr.mxu0 0.0
          %5968 = vmatpush1.msra.mxu0 0.0
          %5969 = vmatprep.subr.mxu0 0.0
          %5970 = vmatpush1.msra.mxu0 0.0
          %5971 = vmatprep.subr.mxu0 0.0
          %5972 = vmatpush1.msra.mxu0 0.0
          %5973 = vmatprep.subr.mxu0 0.0
          %5974 = vmatpush1.msra.mxu0 0.0
          %5975 = vmatprep.subr.mxu0 0.0
          %5976 = vmatpush1.msra.mxu0 0.0
          %5977 = vmatprep.mubr.f32.mxu0 0.0
          %v5978 = vand.u32 %v5903, 4294901760
          %v5979 = vsub.f32 %v5903, %v5978
          %v5980 = vand.u32 %v5979, 4294901760
          %v5981 = vsub.f32 %v5979, %v5980
          %v5982 = vand.u32 %v5981, 4294901760
          %5983 = vmatmul.mubr.f32.gmra.mrb[0].mxu0 %v5982
          %v5984 = vpop.f32.mrb[0].mxu0
          %v5985 = vadd.f32 0.0, %v5984
          %v5986 = vpop.f32.mrb[0].mxu0
          %5987 = vmatprep.mubr.f32.mxu0 0.0
          %v5988 = vand.u32 %v5906, 4294901760
          %v5989 = vsub.f32 %v5906, %v5988
          %v5990 = vand.u32 %v5989, 4294901760
          %v5991 = vsub.f32 %v5989, %v5990
          %v5992 = vand.u32 %v5991, 4294901760
          %5993 = vmatmul.mubr.f32.gmra.mrb[0].mxu0 %v5992
          %v5994 = vpop.f32.mrb[0].mxu0
          %v5995 = vadd.f32 0.0, %v5994
          %v5996 = vpop.f32.mrb[0].mxu0
          %5997 = vdwg.mxu0
          %5998 = vmatprep.subr.mxu0 0.0
          %v5999 = vand.u32 %v5898, 4294901760
          %v6000 = vsub.f32 %v5898, %v5999
          %v6001 = vand.u32 %v6000, 4294901760
          %v6002 = vsub.f32 %v6000, %v6001
          %v6003 = vand.u32 %v6002, 4294901760
          %6004 = vmatpush1.msra.mxu0 %v6003
          %6005 = vmatprep.subr.mxu0 0.0
          %v6006 = vand.u32 %v5909, 4294901760
          %v6007 = vsub.f32 %v5909, %v6006
          %v6008 = vand.u32 %v6007, 4294901760
          %v6009 = vsub.f32 %v6007, %v6008
          %v6010 = vand.u32 %v6009, 4294901760
          %6011 = vmatpush1.msra.mxu0 %v6010
          %6012 = vmatprep.subr.mxu0 0.0
          %6013 = vmatpush1.msra.mxu0 0.0
          %6014 = vmatprep.subr.mxu0 0.0
          %6015 = vmatpush1.msra.mxu0 0.0
          %6016 = vmatprep.subr.mxu0 0.0
          %6017 = vmatpush1.msra.mxu0 0.0
          %6018 = vmatprep.subr.mxu0 0.0
          %6019 = vmatpush1.msra.mxu0 0.0
          %6020 = vmatprep.subr.mxu0 0.0
          %6021 = vmatpush1.msra.mxu0 0.0
          %6022 = vmatprep.subr.mxu0 0.0
          %6023 = vmatpush1.msra.mxu0 0.0
          %6024 = vmatprep.subr.mxu0 0.0
          %6025 = vmatpush1.msra.mxu0 0.0
          %6026 = vmatprep.subr.mxu0 0.0
          %6027 = vmatpush1.msra.mxu0 0.0
          %6028 = vmatprep.subr.mxu0 0.0
          %6029 = vmatpush1.msra.mxu0 0.0
          %6030 = vmatprep.subr.mxu0 0.0
          %6031 = vmatpush1.msra.mxu0 0.0
          %6032 = vmatprep.subr.mxu0 0.0
          %6033 = vmatpush1.msra.mxu0 0.0
          %6034 = vmatprep.subr.mxu0 0.0
          %6035 = vmatpush1.msra.mxu0 0.0
          %6036 = vmatprep.subr.mxu0 0.0
          %6037 = vmatpush1.msra.mxu0 0.0
          %6038 = vmatprep.subr.mxu0 0.0
          %6039 = vmatpush1.msra.mxu0 0.0
          %6040 = vmatprep.subr.mxu0 0.0
          %6041 = vmatpush1.msra.mxu0 0.0
          %6042 = vmatprep.subr.mxu0 0.0
          %6043 = vmatpush1.msra.mxu0 0.0
          %6044 = vmatprep.subr.mxu0 0.0
          %6045 = vmatpush1.msra.mxu0 0.0
          %6046 = vmatprep.subr.mxu0 0.0
          %6047 = vmatpush1.msra.mxu0 0.0
          %6048 = vmatprep.subr.mxu0 0.0
          %6049 = vmatpush1.msra.mxu0 0.0
          %6050 = vmatprep.subr.mxu0 0.0
          %6051 = vmatpush1.msra.mxu0 0.0
          %6052 = vmatprep.subr.mxu0 0.0
          %6053 = vmatpush1.msra.mxu0 0.0
          %6054 = vmatprep.subr.mxu0 0.0
          %6055 = vmatpush1.msra.mxu0 0.0
          %6056 = vmatprep.subr.mxu0 0.0
          %6057 = vmatpush1.msra.mxu0 0.0
          %6058 = vmatprep.subr.mxu0 0.0
          %6059 = vmatpush1.msra.mxu0 0.0
          %6060 = vmatprep.subr.mxu0 0.0
          %6061 = vmatpush1.msra.mxu0 0.0
          %6062 = vmatprep.subr.mxu0 0.0
          %6063 = vmatpush1.msra.mxu0 0.0
          %6064 = vmatprep.subr.mxu0 0.0
          %6065 = vmatpush1.msra.mxu0 0.0
          %6066 = vmatprep.subr.mxu0 0.0
          %6067 = vmatpush1.msra.mxu0 0.0
          %6068 = vmatprep.subr.mxu0 0.0
          %6069 = vmatpush1.msra.mxu0 0.0
          %6070 = vmatprep.subr.mxu0 0.0
          %6071 = vmatpush1.msra.mxu0 0.0
          %6072 = vmatprep.mubr.f32.mxu0 0.0
          %v6073 = vand.u32 %v5903, 4294901760
          %6074 = vmatmul.mubr.f32.gmra.mrb[0].mxu0 %v6073
          %v6075 = vpop.f32.mrb[0].mxu0
          %v6076 = vadd.f32 %v5985, %v6075
          %v6077 = vpop.f32.mrb[0].mxu0
          %6078 = vmatprep.mubr.f32.mxu0 0.0
          %v6079 = vand.u32 %v5906, 4294901760
          %6080 = vmatmul.mubr.f32.gmra.mrb[0].mxu0 %v6079
          %v6081 = vpop.f32.mrb[0].mxu0
          %v6082 = vadd.f32 %v5995, %v6081
          %v6083 = vpop.f32.mrb[0].mxu0
          %6084 = vdwg.mxu0
          %6085 = vmatprep.subr.mxu0 0.0
          %v6086 = vand.u32 %v5898, 4294901760
          %v6087 = vsub.f32 %v5898, %v6086
          %6088 = vmatpush1.msra.mxu0 %v6087
          %6089 = vmatprep.subr.mxu0 0.0
          %v6090 = vand.u32 %v5909, 4294901760
          %v6091 = vsub.f32 %v5909, %v6090
          %6092 = vmatpush1.msra.mxu0 %v6091
          %6093 = vmatprep.subr.mxu0 0.0
          %6094 = vmatpush1.msra.mxu0 0.0
          %6095 = vmatprep.subr.mxu0 0.0
          %6096 = vmatpush1.msra.mxu0 0.0
          %6097 = vmatprep.subr.mxu0 0.0
          %6098 = vmatpush1.msra.mxu0 0.0
          %6099 = vmatprep.subr.mxu0 0.0
          %6100 = vmatpush1.msra.mxu0 0.0
          %6101 = vmatprep.subr.mxu0 0.0
          %6102 = vmatpush1.msra.mxu0 0.0
          %6103 = vmatprep.subr.mxu0 0.0
          %6104 = vmatpush1.msra.mxu0 0.0
          %6105 = vmatprep.subr.mxu0 0.0
          %6106 = vmatpush1.msra.mxu0 0.0
          %6107 = vmatprep.subr.mxu0 0.0
          %6108 = vmatpush1.msra.mxu0 0.0
          %6109 = vmatprep.subr.mxu0 0.0
          %6110 = vmatpush1.msra.mxu0 0.0
          %6111 = vmatprep.subr.mxu0 0.0
          %6112 = vmatpush1.msra.mxu0 0.0
          %6113 = vmatprep.subr.mxu0 0.0
          %6114 = vmatpush1.msra.mxu0 0.0
          %6115 = vmatprep.subr.mxu0 0.0
          %6116 = vmatpush1.msra.mxu0 0.0
          %6117 = vmatprep.subr.mxu0 0.0
          %6118 = vmatpush1.msra.mxu0 0.0
          %6119 = vmatprep.subr.mxu0 0.0
          %6120 = vmatpush1.msra.mxu0 0.0
          %6121 = vmatprep.subr.mxu0 0.0
          %6122 = vmatpush1.msra.mxu0 0.0
          %6123 = vmatprep.subr.mxu0 0.0
          %6124 = vmatpush1.msra.mxu0 0.0
          %6125 = vmatprep.subr.mxu0 0.0
          %6126 = vmatpush1.msra.mxu0 0.0
          %6127 = vmatprep.subr.mxu0 0.0
          %6128 = vmatpush1.msra.mxu0 0.0
          %6129 = vmatprep.subr.mxu0 0.0
          %6130 = vmatpush1.msra.mxu0 0.0
          %6131 = vmatprep.subr.mxu0 0.0
          %6132 = vmatpush1.msra.mxu0 0.0
          %6133 = vmatprep.subr.mxu0 0.0
          %6134 = vmatpush1.msra.mxu0 0.0
          %6135 = vmatprep.subr.mxu0 0.0
          %6136 = vmatpush1.msra.mxu0 0.0
          %6137 = vmatprep.subr.mxu0 0.0
          %6138 = vmatpush1.msra.mxu0 0.0
          %6139 = vmatprep.subr.mxu0 0.0
          %6140 = vmatpush1.msra.mxu0 0.0
          %6141 = vmatprep.subr.mxu0 0.0
          %6142 = vmatpush1.msra.mxu0 0.0
          %6143 = vmatprep.subr.mxu0 0.0
          %6144 = vmatpush1.msra.mxu0 0.0
          %6145 = vmatprep.subr.mxu0 0.0
          %6146 = vmatpush1.msra.mxu0 0.0
          %6147 = vmatprep.subr.mxu0 0.0
          %6148 = vmatpush1.msra.mxu0 0.0
          %6149 = vmatprep.subr.mxu0 0.0
          %6150 = vmatpush1.msra.mxu0 0.0
          %6151 = vmatprep.subr.mxu0 0.0
          %6152 = vmatpush1.msra.mxu0 0.0
          %6153 = vmatprep.mubr.f32.mxu0 0.0
          %v6154 = vand.u32 %v5903, 4294901760
          %v6155 = vsub.f32 %v5903, %v6154
          %6156 = vmatmul.mubr.f32.gmra.mrb[0].mxu0 %v6155
          %v6157 = vpop.f32.mrb[0].mxu0
          %v6158 = vadd.f32 %v6076, %v6157
          %v6159 = vpop.f32.mrb[0].mxu0
          %6160 = vmatprep.mubr.f32.mxu0 0.0
          %v6161 = vand.u32 %v5906, 4294901760
          %v6162 = vsub.f32 %v5906, %v6161
          %6163 = vmatmul.mubr.f32.gmra.mrb[0].mxu0 %v6162
          %v6164 = vpop.f32.mrb[0].mxu0
          %v6165 = vadd.f32 %v6082, %v6164
          %v6166 = vpop.f32.mrb[0].mxu0
          %6167 = vdwg.mxu0
          %6168 = vmatprep.subr.mxu0 0.0
          %v6169 = vand.u32 %v5898, 4294901760
          %6170 = vmatpush1.msra.mxu0 %v6169
          %6171 = vmatprep.subr.mxu0 0.0
          %v6172 = vand.u32 %v5909, 4294901760
          %6173 = vmatpush1.msra.mxu0 %v6172
          %6174 = vmatprep.subr.mxu0 0.0
          %6175 = vmatpush1.msra.mxu0 0.0
          %6176 = vmatprep.subr.mxu0 0.0
          %6177 = vmatpush1.msra.mxu0 0.0
          %6178 = vmatprep.subr.mxu0 0.0
          %6179 = vmatpush1.msra.mxu0 0.0
          %6180 = vmatprep.subr.mxu0 0.0
          %6181 = vmatpush1.msra.mxu0 0.0
          %6182 = vmatprep.subr.mxu0 0.0
          %6183 = vmatpush1.msra.mxu0 0.0
          %6184 = vmatprep.subr.mxu0 0.0
          %6185 = vmatpush1.msra.mxu0 0.0
          %6186 = vmatprep.subr.mxu0 0.0
          %6187 = vmatpush1.msra.mxu0 0.0
          %6188 = vmatprep.subr.mxu0 0.0
          %6189 = vmatpush1.msra.mxu0 0.0
          %6190 = vmatprep.subr.mxu0 0.0
          %6191 = vmatpush1.msra.mxu0 0.0
          %6192 = vmatprep.subr.mxu0 0.0
          %6193 = vmatpush1.msra.mxu0 0.0
          %6194 = vmatprep.subr.mxu0 0.0
          %6195 = vmatpush1.msra.mxu0 0.0
          %6196 = vmatprep.subr.mxu0 0.0
          %6197 = vmatpush1.msra.mxu0 0.0
          %6198 = vmatprep.subr.mxu0 0.0
          %6199 = vmatpush1.msra.mxu0 0.0
          %6200 = vmatprep.subr.mxu0 0.0
          %6201 = vmatpush1.msra.mxu0 0.0
          %6202 = vmatprep.subr.mxu0 0.0
          %6203 = vmatpush1.msra.mxu0 0.0
          %6204 = vmatprep.subr.mxu0 0.0
          %6205 = vmatpush1.msra.mxu0 0.0
          %6206 = vmatprep.subr.mxu0 0.0
          %6207 = vmatpush1.msra.mxu0 0.0
          %6208 = vmatprep.subr.mxu0 0.0
          %6209 = vmatpush1.msra.mxu0 0.0
          %6210 = vmatprep.subr.mxu0 0.0
          %6211 = vmatpush1.msra.mxu0 0.0
          %6212 = vmatprep.subr.mxu0 0.0
          %6213 = vmatpush1.msra.mxu0 0.0
          %6214 = vmatprep.subr.mxu0 0.0
          %6215 = vmatpush1.msra.mxu0 0.0
          %6216 = vmatprep.subr.mxu0 0.0
          %6217 = vmatpush1.msra.mxu0 0.0
          %6218 = vmatprep.subr.mxu0 0.0
          %6219 = vmatpush1.msra.mxu0 0.0
          %6220 = vmatprep.subr.mxu0 0.0
          %6221 = vmatpush1.msra.mxu0 0.0
          %6222 = vmatprep.subr.mxu0 0.0
          %6223 = vmatpush1.msra.mxu0 0.0
          %6224 = vmatprep.subr.mxu0 0.0
          %6225 = vmatpush1.msra.mxu0 0.0
          %6226 = vmatprep.subr.mxu0 0.0
          %6227 = vmatpush1.msra.mxu0 0.0
          %6228 = vmatprep.subr.mxu0 0.0
          %6229 = vmatpush1.msra.mxu0 0.0
          %6230 = vmatprep.subr.mxu0 0.0
          %6231 = vmatpush1.msra.mxu0 0.0
          %6232 = vmatprep.subr.mxu0 0.0
          %6233 = vmatpush1.msra.mxu0 0.0
          %6234 = vmatprep.mubr.f32.mxu0 0.0
          %v6235 = vand.u32 %v5903, 4294901760
          %v6236 = vsub.f32 %v5903, %v6235
          %v6237 = vand.u32 %v6236, 4294901760
          %6238 = vmatmul.mubr.f32.gmra.mrb[0].mxu0 %v6237
          %v6239 = vpop.f32.mrb[0].mxu0
          %v6240 = vadd.f32 %v6158, %v6239
          %v6241 = vpop.f32.mrb[0].mxu0
          %6242 = vmatprep.mubr.f32.mxu0 0.0
          %v6243 = vand.u32 %v5906, 4294901760
          %v6244 = vsub.f32 %v5906, %v6243
          %v6245 = vand.u32 %v6244, 4294901760
          %6246 = vmatmul.mubr.f32.gmra.mrb[0].mxu0 %v6245
          %v6247 = vpop.f32.mrb[0].mxu0
          %v6248 = vadd.f32 %v6165, %v6247
          %v6249 = vpop.f32.mrb[0].mxu0
          %6250 = vdwg.mxu0
          %6251 = vmatprep.subr.mxu0 0.0
          %v6252 = vand.u32 %v5898, 4294901760
          %v6253 = vsub.f32 %v5898, %v6252
          %v6254 = vand.u32 %v6253, 4294901760
          %6255 = vmatpush1.msra.mxu0 %v6254
          %6256 = vmatprep.subr.mxu0 0.0
          %v6257 = vand.u32 %v5909, 4294901760
          %v6258 = vsub.f32 %v5909, %v6257
          %v6259 = vand.u32 %v6258, 4294901760
          %6260 = vmatpush1.msra.mxu0 %v6259
          %6261 = vmatprep.subr.mxu0 0.0
          %6262 = vmatpush1.msra.mxu0 0.0
          %6263 = vmatprep.subr.mxu0 0.0
          %6264 = vmatpush1.msra.mxu0 0.0
          %6265 = vmatprep.subr.mxu0 0.0
          %6266 = vmatpush1.msra.mxu0 0.0
          %6267 = vmatprep.subr.mxu0 0.0
          %6268 = vmatpush1.msra.mxu0 0.0
          %6269 = vmatprep.subr.mxu0 0.0
          %6270 = vmatpush1.msra.mxu0 0.0
          %6271 = vmatprep.subr.mxu0 0.0
          %6272 = vmatpush1.msra.mxu0 0.0
          %6273 = vmatprep.subr.mxu0 0.0
          %6274 = vmatpush1.msra.mxu0 0.0
          %6275 = vmatprep.subr.mxu0 0.0
          %6276 = vmatpush1.msra.mxu0 0.0
          %6277 = vmatprep.subr.mxu0 0.0
          %6278 = vmatpush1.msra.mxu0 0.0
          %6279 = vmatprep.subr.mxu0 0.0
          %6280 = vmatpush1.msra.mxu0 0.0
          %6281 = vmatprep.subr.mxu0 0.0
          %6282 = vmatpush1.msra.mxu0 0.0
          %6283 = vmatprep.subr.mxu0 0.0
          %6284 = vmatpush1.msra.mxu0 0.0
          %6285 = vmatprep.subr.mxu0 0.0
          %6286 = vmatpush1.msra.mxu0 0.0
          %6287 = vmatprep.subr.mxu0 0.0
          %6288 = vmatpush1.msra.mxu0 0.0
          %6289 = vmatprep.subr.mxu0 0.0
          %6290 = vmatpush1.msra.mxu0 0.0
          %6291 = vmatprep.subr.mxu0 0.0
          %6292 = vmatpush1.msra.mxu0 0.0
          %6293 = vmatprep.subr.mxu0 0.0
          %6294 = vmatpush1.msra.mxu0 0.0
          %6295 = vmatprep.subr.mxu0 0.0
          %6296 = vmatpush1.msra.mxu0 0.0
          %6297 = vmatprep.subr.mxu0 0.0
          %6298 = vmatpush1.msra.mxu0 0.0
          %6299 = vmatprep.subr.mxu0 0.0
          %6300 = vmatpush1.msra.mxu0 0.0
          %6301 = vmatprep.subr.mxu0 0.0
          %6302 = vmatpush1.msra.mxu0 0.0
          %6303 = vmatprep.subr.mxu0 0.0
          %6304 = vmatpush1.msra.mxu0 0.0
          %6305 = vmatprep.subr.mxu0 0.0
          %6306 = vmatpush1.msra.mxu0 0.0
          %6307 = vmatprep.subr.mxu0 0.0
          %6308 = vmatpush1.msra.mxu0 0.0
          %6309 = vmatprep.subr.mxu0 0.0
          %6310 = vmatpush1.msra.mxu0 0.0
          %6311 = vmatprep.subr.mxu0 0.0
          %6312 = vmatpush1.msra.mxu0 0.0
          %6313 = vmatprep.subr.mxu0 0.0
          %6314 = vmatpush1.msra.mxu0 0.0
          %6315 = vmatprep.subr.mxu0 0.0
          %6316 = vmatpush1.msra.mxu0 0.0
          %6317 = vmatprep.subr.mxu0 0.0
          %6318 = vmatpush1.msra.mxu0 0.0
          %6319 = vmatprep.subr.mxu0 0.0
          %6320 = vmatpush1.msra.mxu0 0.0
          %6321 = vmatprep.mubr.f32.mxu0 0.0
          %v6322 = vand.u32 %v5903, 4294901760
          %6323 = vmatmul.mubr.f32.gmra.mrb[0].mxu0 %v6322
          %v6324 = vpop.f32.mrb[0].mxu0
          %v6325 = vadd.f32 %v6240, %v6324
          %v6326 = vpop.f32.mrb[0].mxu0
          %6327 = vmatprep.mubr.f32.mxu0 0.0
          %v6328 = vand.u32 %v5906, 4294901760
          %6329 = vmatmul.mubr.f32.gmra.mrb[0].mxu0 %v6328
          %v6330 = vpop.f32.mrb[0].mxu0
          %v6331 = vadd.f32 %v6248, %v6330
          %v6332 = vpop.f32.mrb[0].mxu0
          %6333 = vdwg.mxu0
          %6334 = vmatprep.subr.mxu0 0.0
          %v6335 = vand.u32 %v5898, 4294901760
          %6336 = vmatpush1.msra.mxu0 %v6335
          %6337 = vmatprep.subr.mxu0 0.0
          %v6338 = vand.u32 %v5909, 4294901760
          %6339 = vmatpush1.msra.mxu0 %v6338
          %6340 = vmatprep.subr.mxu0 0.0
          %6341 = vmatpush1.msra.mxu0 0.0
          %6342 = vmatprep.subr.mxu0 0.0
          %6343 = vmatpush1.msra.mxu0 0.0
          %6344 = vmatprep.subr.mxu0 0.0
          %6345 = vmatpush1.msra.mxu0 0.0
          %6346 = vmatprep.subr.mxu0 0.0
          %6347 = vmatpush1.msra.mxu0 0.0
          %6348 = vmatprep.subr.mxu0 0.0
          %6349 = vmatpush1.msra.mxu0 0.0
          %6350 = vmatprep.subr.mxu0 0.0
          %6351 = vmatpush1.msra.mxu0 0.0
          %6352 = vmatprep.subr.mxu0 0.0
          %6353 = vmatpush1.msra.mxu0 0.0
          %6354 = vmatprep.subr.mxu0 0.0
          %6355 = vmatpush1.msra.mxu0 0.0
          %6356 = vmatprep.subr.mxu0 0.0
          %6357 = vmatpush1.msra.mxu0 0.0
          %6358 = vmatprep.subr.mxu0 0.0
          %6359 = vmatpush1.msra.mxu0 0.0
          %6360 = vmatprep.subr.mxu0 0.0
          %6361 = vmatpush1.msra.mxu0 0.0
          %6362 = vmatprep.subr.mxu0 0.0
          %6363 = vmatpush1.msra.mxu0 0.0
          %6364 = vmatprep.subr.mxu0 0.0
          %6365 = vmatpush1.msra.mxu0 0.0
          %6366 = vmatprep.subr.mxu0 0.0
          %6367 = vmatpush1.msra.mxu0 0.0
          %6368 = vmatprep.subr.mxu0 0.0
          %6369 = vmatpush1.msra.mxu0 0.0
          %6370 = vmatprep.subr.mxu0 0.0
          %6371 = vmatpush1.msra.mxu0 0.0
          %6372 = vmatprep.subr.mxu0 0.0
          %6373 = vmatpush1.msra.mxu0 0.0
          %6374 = vmatprep.subr.mxu0 0.0
          %6375 = vmatpush1.msra.mxu0 0.0
          %6376 = vmatprep.subr.mxu0 0.0
          %6377 = vmatpush1.msra.mxu0 0.0
          %6378 = vmatprep.subr.mxu0 0.0
          %6379 = vmatpush1.msra.mxu0 0.0
          %6380 = vmatprep.subr.mxu0 0.0
          %6381 = vmatpush1.msra.mxu0 0.0
          %6382 = vmatprep.subr.mxu0 0.0
          %6383 = vmatpush1.msra.mxu0 0.0
          %6384 = vmatprep.subr.mxu0 0.0
          %6385 = vmatpush1.msra.mxu0 0.0
          %6386 = vmatprep.subr.mxu0 0.0
          %6387 = vmatpush1.msra.mxu0 0.0
          %6388 = vmatprep.subr.mxu0 0.0
          %6389 = vmatpush1.msra.mxu0 0.0
          %6390 = vmatprep.subr.mxu0 0.0
          %6391 = vmatpush1.msra.mxu0 0.0
          %6392 = vmatprep.subr.mxu0 0.0
          %6393 = vmatpush1.msra.mxu0 0.0
          %6394 = vmatprep.subr.mxu0 0.0
          %6395 = vmatpush1.msra.mxu0 0.0
          %6396 = vmatprep.subr.mxu0 0.0
          %6397 = vmatpush1.msra.mxu0 0.0
          %6398 = vmatprep.subr.mxu0 0.0
          %6399 = vmatpush1.msra.mxu0 0.0
          %6400 = vmatprep.mubr.f32.mxu0 0.0
          %v6401 = vand.u32 %v5903, 4294901760
          %6402 = vmatmul.mubr.f32.gmra.mrb[0].mxu0 %v6401
          %v6403 = vpop.f32.mrb[0].mxu0
          %v6404 = vadd.f32 %v6325, %v6403
          %v6405 = vpop.f32.mrb[0].mxu0
          %6406 = vmatprep.mubr.f32.mxu0 0.0
          %v6407 = vand.u32 %v5906, 4294901760
          %6408 = vmatmul.mubr.f32.gmra.mrb[0].mxu0 %v6407
          %v6409 = vpop.f32.mrb[0].mxu0
          %v6410 = vadd.f32 %v6331, %v6409
          %v6411 = vpop.f32.mrb[0].mxu0
          %6412 = vdwg.mxu0
          %v6413 = vld [vmem:[#allocation12] sm:$0xff]
          %v6414 = vld [vmem:[#allocation12 + $0x8] sm:$0x3f]
          %v6416 = vsel %vm332, %v6404, 0
          %v6419 = vsel %vm332, %v6410, 0
          %v6422 = vsel %vm339, %v6414, 0
          %6424 = vmatprep.subr.mxu0 0.0
          %v6425 = vand.u32 %v6413, 4294901760
          %6426 = vmatpush1.msra.mxu0 %v6425
          %6427 = vmatprep.subr.mxu0 0.0
          %v6428 = vand.u32 %v6422, 4294901760
          %6429 = vmatpush1.msra.mxu0 %v6428
          %6430 = vmatprep.subr.mxu0 0.0
          %6431 = vmatpush1.msra.mxu0 0.0
          %6432 = vmatprep.subr.mxu0 0.0
          %6433 = vmatpush1.msra.mxu0 0.0
          %6434 = vmatprep.subr.mxu0 0.0
          %6435 = vmatpush1.msra.mxu0 0.0
          %6436 = vmatprep.subr.mxu0 0.0
          %6437 = vmatpush1.msra.mxu0 0.0
          %6438 = vmatprep.subr.mxu0 0.0
          %6439 = vmatpush1.msra.mxu0 0.0
          %6440 = vmatprep.subr.mxu0 0.0
          %6441 = vmatpush1.msra.mxu0 0.0
          %6442 = vmatprep.subr.mxu0 0.0
          %6443 = vmatpush1.msra.mxu0 0.0
          %6444 = vmatprep.subr.mxu0 0.0
          %6445 = vmatpush1.msra.mxu0 0.0
          %6446 = vmatprep.subr.mxu0 0.0
          %6447 = vmatpush1.msra.mxu0 0.0
          %6448 = vmatprep.subr.mxu0 0.0
          %6449 = vmatpush1.msra.mxu0 0.0
          %6450 = vmatprep.subr.mxu0 0.0
          %6451 = vmatpush1.msra.mxu0 0.0
          %6452 = vmatprep.subr.mxu0 0.0
          %6453 = vmatpush1.msra.mxu0 0.0
          %6454 = vmatprep.subr.mxu0 0.0
          %6455 = vmatpush1.msra.mxu0 0.0
          %6456 = vmatprep.subr.mxu0 0.0
          %6457 = vmatpush1.msra.mxu0 0.0
          %6458 = vmatprep.subr.mxu0 0.0
          %6459 = vmatpush1.msra.mxu0 0.0
          %6460 = vmatprep.subr.mxu0 0.0
          %6461 = vmatpush1.msra.mxu0 0.0
          %6462 = vmatprep.subr.mxu0 0.0
          %6463 = vmatpush1.msra.mxu0 0.0
          %6464 = vmatprep.subr.mxu0 0.0
          %6465 = vmatpush1.msra.mxu0 0.0
          %6466 = vmatprep.subr.mxu0 0.0
          %6467 = vmatpush1.msra.mxu0 0.0
          %6468 = vmatprep.subr.mxu0 0.0
          %6469 = vmatpush1.msra.mxu0 0.0
          %6470 = vmatprep.subr.mxu0 0.0
          %6471 = vmatpush1.msra.mxu0 0.0
          %6472 = vmatprep.subr.mxu0 0.0
          %6473 = vmatpush1.msra.mxu0 0.0
          %6474 = vmatprep.subr.mxu0 0.0
          %6475 = vmatpush1.msra.mxu0 0.0
          %6476 = vmatprep.subr.mxu0 0.0
          %6477 = vmatpush1.msra.mxu0 0.0
          %6478 = vmatprep.subr.mxu0 0.0
          %6479 = vmatpush1.msra.mxu0 0.0
          %6480 = vmatprep.subr.mxu0 0.0
          %6481 = vmatpush1.msra.mxu0 0.0
          %6482 = vmatprep.subr.mxu0 0.0
          %6483 = vmatpush1.msra.mxu0 0.0
          %6484 = vmatprep.subr.mxu0 0.0
          %6485 = vmatpush1.msra.mxu0 0.0
          %6486 = vmatprep.subr.mxu0 0.0
          %6487 = vmatpush1.msra.mxu0 0.0
          %6488 = vmatprep.subr.mxu0 0.0
          %6489 = vmatpush1.msra.mxu0 0.0
          %6490 = vmatprep.mubr.f32.mxu0 0.0
          %v6491 = vand.u32 %v6416, 4294901760
          %v6492 = vsub.f32 %v6416, %v6491
          %v6493 = vand.u32 %v6492, 4294901760
          %v6494 = vsub.f32 %v6492, %v6493
          %v6495 = vand.u32 %v6494, 4294901760
          %6496 = vmatmul.mubr.f32.gmra.mrb[0].mxu0 %v6495
          %v6497 = vpop.f32.mrb[0].mxu0
          %v6498 = vadd.f32 0.0, %v6497
          %v6499 = vpop.f32.mrb[0].mxu0
          %6500 = vmatprep.mubr.f32.mxu0 0.0
          %v6501 = vand.u32 %v6419, 4294901760
          %v6502 = vsub.f32 %v6419, %v6501
          %v6503 = vand.u32 %v6502, 4294901760
          %v6504 = vsub.f32 %v6502, %v6503
          %v6505 = vand.u32 %v6504, 4294901760
          %6506 = vmatmul.mubr.f32.gmra.mrb[0].mxu0 %v6505
          %v6507 = vpop.f32.mrb[0].mxu0
          %v6508 = vadd.f32 0.0, %v6507
          %v6509 = vpop.f32.mrb[0].mxu0
          %6510 = vdwg.mxu0
          %6511 = vmatprep.subr.mxu0 0.0
          %v6512 = vand.u32 %v6413, 4294901760
          %v6513 = vsub.f32 %v6413, %v6512
          %v6514 = vand.u32 %v6513, 4294901760
          %v6515 = vsub.f32 %v6513, %v6514
          %v6516 = vand.u32 %v6515, 4294901760
          %6517 = vmatpush1.msra.mxu0 %v6516
          %6518 = vmatprep.subr.mxu0 0.0
          %v6519 = vand.u32 %v6422, 4294901760
          %v6520 = vsub.f32 %v6422, %v6519
          %v6521 = vand.u32 %v6520, 4294901760
          %v6522 = vsub.f32 %v6520, %v6521
          %v6523 = vand.u32 %v6522, 4294901760
          %6524 = vmatpush1.msra.mxu0 %v6523
          %6525 = vmatprep.subr.mxu0 0.0
          %6526 = vmatpush1.msra.mxu0 0.0
          %6527 = vmatprep.subr.mxu0 0.0
          %6528 = vmatpush1.msra.mxu0 0.0
          %6529 = vmatprep.subr.mxu0 0.0
          %6530 = vmatpush1.msra.mxu0 0.0
          %6531 = vmatprep.subr.mxu0 0.0
          %6532 = vmatpush1.msra.mxu0 0.0
          %6533 = vmatprep.subr.mxu0 0.0
          %6534 = vmatpush1.msra.mxu0 0.0
          %6535 = vmatprep.subr.mxu0 0.0
          %6536 = vmatpush1.msra.mxu0 0.0
          %6537 = vmatprep.subr.mxu0 0.0
          %6538 = vmatpush1.msra.mxu0 0.0
          %6539 = vmatprep.subr.mxu0 0.0
          %6540 = vmatpush1.msra.mxu0 0.0
          %6541 = vmatprep.subr.mxu0 0.0
          %6542 = vmatpush1.msra.mxu0 0.0
          %6543 = vmatprep.subr.mxu0 0.0
          %6544 = vmatpush1.msra.mxu0 0.0
          %6545 = vmatprep.subr.mxu0 0.0
          %6546 = vmatpush1.msra.mxu0 0.0
          %6547 = vmatprep.subr.mxu0 0.0
          %6548 = vmatpush1.msra.mxu0 0.0
          %6549 = vmatprep.subr.mxu0 0.0
          %6550 = vmatpush1.msra.mxu0 0.0
          %6551 = vmatprep.subr.mxu0 0.0
          %6552 = vmatpush1.msra.mxu0 0.0
          %6553 = vmatprep.subr.mxu0 0.0
          %6554 = vmatpush1.msra.mxu0 0.0
          %6555 = vmatprep.subr.mxu0 0.0
          %6556 = vmatpush1.msra.mxu0 0.0
          %6557 = vmatprep.subr.mxu0 0.0
          %6558 = vmatpush1.msra.mxu0 0.0
          %6559 = vmatprep.subr.mxu0 0.0
          %6560 = vmatpush1.msra.mxu0 0.0
          %6561 = vmatprep.subr.mxu0 0.0
          %6562 = vmatpush1.msra.mxu0 0.0
          %6563 = vmatprep.subr.mxu0 0.0
          %6564 = vmatpush1.msra.mxu0 0.0
          %6565 = vmatprep.subr.mxu0 0.0
          %6566 = vmatpush1.msra.mxu0 0.0
          %6567 = vmatprep.subr.mxu0 0.0
          %6568 = vmatpush1.msra.mxu0 0.0
          %6569 = vmatprep.subr.mxu0 0.0
          %6570 = vmatpush1.msra.mxu0 0.0
          %6571 = vmatprep.subr.mxu0 0.0
          %6572 = vmatpush1.msra.mxu0 0.0
          %6573 = vmatprep.subr.mxu0 0.0
          %6574 = vmatpush1.msra.mxu0 0.0
          %6575 = vmatprep.subr.mxu0 0.0
          %6576 = vmatpush1.msra.mxu0 0.0
          %6577 = vmatprep.subr.mxu0 0.0
          %6578 = vmatpush1.msra.mxu0 0.0
          %6579 = vmatprep.subr.mxu0 0.0
          %6580 = vmatpush1.msra.mxu0 0.0
          %6581 = vmatprep.subr.mxu0 0.0
          %6582 = vmatpush1.msra.mxu0 0.0
          %6583 = vmatprep.subr.mxu0 0.0
          %6584 = vmatpush1.msra.mxu0 0.0
          %6585 = vmatprep.mubr.f32.mxu0 0.0
          %v6586 = vand.u32 %v6416, 4294901760
          %6587 = vmatmul.mubr.f32.gmra.mrb[0].mxu0 %v6586
          %v6588 = vpop.f32.mrb[0].mxu0
          %v6589 = vadd.f32 %v6498, %v6588
          %v6590 = vpop.f32.mrb[0].mxu0
          %6591 = vmatprep.mubr.f32.mxu0 0.0
          %v6592 = vand.u32 %v6419, 4294901760
          %6593 = vmatmul.mubr.f32.gmra.mrb[0].mxu0 %v6592
          %v6594 = vpop.f32.mrb[0].mxu0
          %v6595 = vadd.f32 %v6508, %v6594
          %v6596 = vpop.f32.mrb[0].mxu0
          %6597 = vdwg.mxu0
          %6598 = vmatprep.subr.mxu0 0.0
          %v6599 = vand.u32 %v6413, 4294901760
          %v6600 = vsub.f32 %v6413, %v6599
          %6601 = vmatpush1.msra.mxu0 %v6600
          %6602 = vmatprep.subr.mxu0 0.0
          %v6603 = vand.u32 %v6422, 4294901760
          %v6604 = vsub.f32 %v6422, %v6603
          %6605 = vmatpush1.msra.mxu0 %v6604
          %6606 = vmatprep.subr.mxu0 0.0
          %6607 = vmatpush1.msra.mxu0 0.0
          %6608 = vmatprep.subr.mxu0 0.0
          %6609 = vmatpush1.msra.mxu0 0.0
          %6610 = vmatprep.subr.mxu0 0.0
          %6611 = vmatpush1.msra.mxu0 0.0
          %6612 = vmatprep.subr.mxu0 0.0
          %6613 = vmatpush1.msra.mxu0 0.0
          %6614 = vmatprep.subr.mxu0 0.0
          %6615 = vmatpush1.msra.mxu0 0.0
          %6616 = vmatprep.subr.mxu0 0.0
          %6617 = vmatpush1.msra.mxu0 0.0
          %6618 = vmatprep.subr.mxu0 0.0
          %6619 = vmatpush1.msra.mxu0 0.0
          %6620 = vmatprep.subr.mxu0 0.0
          %6621 = vmatpush1.msra.mxu0 0.0
          %6622 = vmatprep.subr.mxu0 0.0
          %6623 = vmatpush1.msra.mxu0 0.0
          %6624 = vmatprep.subr.mxu0 0.0
          %6625 = vmatpush1.msra.mxu0 0.0
          %6626 = vmatprep.subr.mxu0 0.0
          %6627 = vmatpush1.msra.mxu0 0.0
          %6628 = vmatprep.subr.mxu0 0.0
          %6629 = vmatpush1.msra.mxu0 0.0
          %6630 = vmatprep.subr.mxu0 0.0
          %6631 = vmatpush1.msra.mxu0 0.0
          %6632 = vmatprep.subr.mxu0 0.0
          %6633 = vmatpush1.msra.mxu0 0.0
          %6634 = vmatprep.subr.mxu0 0.0
          %6635 = vmatpush1.msra.mxu0 0.0
          %6636 = vmatprep.subr.mxu0 0.0
          %6637 = vmatpush1.msra.mxu0 0.0
          %6638 = vmatprep.subr.mxu0 0.0
          %6639 = vmatpush1.msra.mxu0 0.0
          %6640 = vmatprep.subr.mxu0 0.0
          %6641 = vmatpush1.msra.mxu0 0.0
          %6642 = vmatprep.subr.mxu0 0.0
          %6643 = vmatpush1.msra.mxu0 0.0
          %6644 = vmatprep.subr.mxu0 0.0
          %6645 = vmatpush1.msra.mxu0 0.0
          %6646 = vmatprep.subr.mxu0 0.0
          %6647 = vmatpush1.msra.mxu0 0.0
          %6648 = vmatprep.subr.mxu0 0.0
          %6649 = vmatpush1.msra.mxu0 0.0
          %6650 = vmatprep.subr.mxu0 0.0
          %6651 = vmatpush1.msra.mxu0 0.0
          %6652 = vmatprep.subr.mxu0 0.0
          %6653 = vmatpush1.msra.mxu0 0.0
          %6654 = vmatprep.subr.mxu0 0.0
          %6655 = vmatpush1.msra.mxu0 0.0
          %6656 = vmatprep.subr.mxu0 0.0
          %6657 = vmatpush1.msra.mxu0 0.0
          %6658 = vmatprep.subr.mxu0 0.0
          %6659 = vmatpush1.msra.mxu0 0.0
          %6660 = vmatprep.subr.mxu0 0.0
          %6661 = vmatpush1.msra.mxu0 0.0
          %6662 = vmatprep.subr.mxu0 0.0
          %6663 = vmatpush1.msra.mxu0 0.0
          %6664 = vmatprep.subr.mxu0 0.0
          %6665 = vmatpush1.msra.mxu0 0.0
          %6666 = vmatprep.mubr.f32.mxu0 0.0
          %v6667 = vand.u32 %v6416, 4294901760
          %v6668 = vsub.f32 %v6416, %v6667
          %6669 = vmatmul.mubr.f32.gmra.mrb[0].mxu0 %v6668
          %v6670 = vpop.f32.mrb[0].mxu0
          %v6671 = vadd.f32 %v6589, %v6670
          %v6672 = vpop.f32.mrb[0].mxu0
          %6673 = vmatprep.mubr.f32.mxu0 0.0
          %v6674 = vand.u32 %v6419, 4294901760
          %v6675 = vsub.f32 %v6419, %v6674
          %6676 = vmatmul.mubr.f32.gmra.mrb[0].mxu0 %v6675
          %v6677 = vpop.f32.mrb[0].mxu0
          %v6678 = vadd.f32 %v6595, %v6677
          %v6679 = vpop.f32.mrb[0].mxu0
          %6680 = vdwg.mxu0
          %6681 = vmatprep.subr.mxu0 0.0
          %v6682 = vand.u32 %v6413, 4294901760
          %6683 = vmatpush1.msra.mxu0 %v6682
          %6684 = vmatprep.subr.mxu0 0.0
          %v6685 = vand.u32 %v6422, 4294901760
          %6686 = vmatpush1.msra.mxu0 %v6685
          %6687 = vmatprep.subr.mxu0 0.0
          %6688 = vmatpush1.msra.mxu0 0.0
          %6689 = vmatprep.subr.mxu0 0.0
          %6690 = vmatpush1.msra.mxu0 0.0
          %6691 = vmatprep.subr.mxu0 0.0
          %6692 = vmatpush1.msra.mxu0 0.0
          %6693 = vmatprep.subr.mxu0 0.0
          %6694 = vmatpush1.msra.mxu0 0.0
          %6695 = vmatprep.subr.mxu0 0.0
          %6696 = vmatpush1.msra.mxu0 0.0
          %6697 = vmatprep.subr.mxu0 0.0
          %6698 = vmatpush1.msra.mxu0 0.0
          %6699 = vmatprep.subr.mxu0 0.0
          %6700 = vmatpush1.msra.mxu0 0.0
          %6701 = vmatprep.subr.mxu0 0.0
          %6702 = vmatpush1.msra.mxu0 0.0
          %6703 = vmatprep.subr.mxu0 0.0
          %6704 = vmatpush1.msra.mxu0 0.0
          %6705 = vmatprep.subr.mxu0 0.0
          %6706 = vmatpush1.msra.mxu0 0.0
          %6707 = vmatprep.subr.mxu0 0.0
          %6708 = vmatpush1.msra.mxu0 0.0
          %6709 = vmatprep.subr.mxu0 0.0
          %6710 = vmatpush1.msra.mxu0 0.0
          %6711 = vmatprep.subr.mxu0 0.0
          %6712 = vmatpush1.msra.mxu0 0.0
          %6713 = vmatprep.subr.mxu0 0.0
          %6714 = vmatpush1.msra.mxu0 0.0
          %6715 = vmatprep.subr.mxu0 0.0
          %6716 = vmatpush1.msra.mxu0 0.0
          %6717 = vmatprep.subr.mxu0 0.0
          %6718 = vmatpush1.msra.mxu0 0.0
          %6719 = vmatprep.subr.mxu0 0.0
          %6720 = vmatpush1.msra.mxu0 0.0
          %6721 = vmatprep.subr.mxu0 0.0
          %6722 = vmatpush1.msra.mxu0 0.0
          %6723 = vmatprep.subr.mxu0 0.0
          %6724 = vmatpush1.msra.mxu0 0.0
          %6725 = vmatprep.subr.mxu0 0.0
          %6726 = vmatpush1.msra.mxu0 0.0
          %6727 = vmatprep.subr.mxu0 0.0
          %6728 = vmatpush1.msra.mxu0 0.0
          %6729 = vmatprep.subr.mxu0 0.0
          %6730 = vmatpush1.msra.mxu0 0.0
          %6731 = vmatprep.subr.mxu0 0.0
          %6732 = vmatpush1.msra.mxu0 0.0
          %6733 = vmatprep.subr.mxu0 0.0
          %6734 = vmatpush1.msra.mxu0 0.0
          %6735 = vmatprep.subr.mxu0 0.0
          %6736 = vmatpush1.msra.mxu0 0.0
          %6737 = vmatprep.subr.mxu0 0.0
          %6738 = vmatpush1.msra.mxu0 0.0
          %6739 = vmatprep.subr.mxu0 0.0
          %6740 = vmatpush1.msra.mxu0 0.0
          %6741 = vmatprep.subr.mxu0 0.0
          %6742 = vmatpush1.msra.mxu0 0.0
          %6743 = vmatprep.subr.mxu0 0.0
          %6744 = vmatpush1.msra.mxu0 0.0
          %6745 = vmatprep.subr.mxu0 0.0
          %6746 = vmatpush1.msra.mxu0 0.0
          %6747 = vmatprep.mubr.f32.mxu0 0.0
          %v6748 = vand.u32 %v6416, 4294901760
          %v6749 = vsub.f32 %v6416, %v6748
          %v6750 = vand.u32 %v6749, 4294901760
          %6751 = vmatmul.mubr.f32.gmra.mrb[0].mxu0 %v6750
          %v6752 = vpop.f32.mrb[0].mxu0
          %v6753 = vadd.f32 %v6671, %v6752
          %v6754 = vpop.f32.mrb[0].mxu0
          %6755 = vmatprep.mubr.f32.mxu0 0.0
          %v6756 = vand.u32 %v6419, 4294901760
          %v6757 = vsub.f32 %v6419, %v6756
          %v6758 = vand.u32 %v6757, 4294901760
          %6759 = vmatmul.mubr.f32.gmra.mrb[0].mxu0 %v6758
          %v6760 = vpop.f32.mrb[0].mxu0
          %v6761 = vadd.f32 %v6678, %v6760
          %v6762 = vpop.f32.mrb[0].mxu0
          %6763 = vdwg.mxu0
          %6764 = vmatprep.subr.mxu0 0.0
          %v6765 = vand.u32 %v6413, 4294901760
          %v6766 = vsub.f32 %v6413, %v6765
          %v6767 = vand.u32 %v6766, 4294901760
          %6768 = vmatpush1.msra.mxu0 %v6767
          %6769 = vmatprep.subr.mxu0 0.0
          %v6770 = vand.u32 %v6422, 4294901760
          %v6771 = vsub.f32 %v6422, %v6770
          %v6772 = vand.u32 %v6771, 4294901760
          %6773 = vmatpush1.msra.mxu0 %v6772
          %6774 = vmatprep.subr.mxu0 0.0
          %6775 = vmatpush1.msra.mxu0 0.0
          %6776 = vmatprep.subr.mxu0 0.0
          %6777 = vmatpush1.msra.mxu0 0.0
          %6778 = vmatprep.subr.mxu0 0.0
          %6779 = vmatpush1.msra.mxu0 0.0
          %6780 = vmatprep.subr.mxu0 0.0
          %6781 = vmatpush1.msra.mxu0 0.0
          %6782 = vmatprep.subr.mxu0 0.0
          %6783 = vmatpush1.msra.mxu0 0.0
          %6784 = vmatprep.subr.mxu0 0.0
          %6785 = vmatpush1.msra.mxu0 0.0
          %6786 = vmatprep.subr.mxu0 0.0
          %6787 = vmatpush1.msra.mxu0 0.0
          %6788 = vmatprep.subr.mxu0 0.0
          %6789 = vmatpush1.msra.mxu0 0.0
          %6790 = vmatprep.subr.mxu0 0.0
          %6791 = vmatpush1.msra.mxu0 0.0
          %6792 = vmatprep.subr.mxu0 0.0
          %6793 = vmatpush1.msra.mxu0 0.0
          %6794 = vmatprep.subr.mxu0 0.0
          %6795 = vmatpush1.msra.mxu0 0.0
          %6796 = vmatprep.subr.mxu0 0.0
          %6797 = vmatpush1.msra.mxu0 0.0
          %6798 = vmatprep.subr.mxu0 0.0
          %6799 = vmatpush1.msra.mxu0 0.0
          %6800 = vmatprep.subr.mxu0 0.0
          %6801 = vmatpush1.msra.mxu0 0.0
          %6802 = vmatprep.subr.mxu0 0.0
          %6803 = vmatpush1.msra.mxu0 0.0
          %6804 = vmatprep.subr.mxu0 0.0
          %6805 = vmatpush1.msra.mxu0 0.0
          %6806 = vmatprep.subr.mxu0 0.0
          %6807 = vmatpush1.msra.mxu0 0.0
          %6808 = vmatprep.subr.mxu0 0.0
          %6809 = vmatpush1.msra.mxu0 0.0
          %6810 = vmatprep.subr.mxu0 0.0
          %6811 = vmatpush1.msra.mxu0 0.0
          %6812 = vmatprep.subr.mxu0 0.0
          %6813 = vmatpush1.msra.mxu0 0.0
          %6814 = vmatprep.subr.mxu0 0.0
          %6815 = vmatpush1.msra.mxu0 0.0
          %6816 = vmatprep.subr.mxu0 0.0
          %6817 = vmatpush1.msra.mxu0 0.0
          %6818 = vmatprep.subr.mxu0 0.0
          %6819 = vmatpush1.msra.mxu0 0.0
          %6820 = vmatprep.subr.mxu0 0.0
          %6821 = vmatpush1.msra.mxu0 0.0
          %6822 = vmatprep.subr.mxu0 0.0
          %6823 = vmatpush1.msra.mxu0 0.0
          %6824 = vmatprep.subr.mxu0 0.0
          %6825 = vmatpush1.msra.mxu0 0.0
          %6826 = vmatprep.subr.mxu0 0.0
          %6827 = vmatpush1.msra.mxu0 0.0
          %6828 = vmatprep.subr.mxu0 0.0
          %6829 = vmatpush1.msra.mxu0 0.0
          %6830 = vmatprep.subr.mxu0 0.0
          %6831 = vmatpush1.msra.mxu0 0.0
          %6832 = vmatprep.subr.mxu0 0.0
          %6833 = vmatpush1.msra.mxu0 0.0
          %6834 = vmatprep.mubr.f32.mxu0 0.0
          %v6835 = vand.u32 %v6416, 4294901760
          %6836 = vmatmul.mubr.f32.gmra.mrb[0].mxu0 %v6835
          %v6837 = vpop.f32.mrb[0].mxu0
          %v6838 = vadd.f32 %v6753, %v6837
          %v6839 = vpop.f32.mrb[0].mxu0
          %6840 = vmatprep.mubr.f32.mxu0 0.0
          %v6841 = vand.u32 %v6419, 4294901760
          %6842 = vmatmul.mubr.f32.gmra.mrb[0].mxu0 %v6841
          %v6843 = vpop.f32.mrb[0].mxu0
          %v6844 = vadd.f32 %v6761, %v6843
          %v6845 = vpop.f32.mrb[0].mxu0
          %6846 = vdwg.mxu0
          %6847 = vmatprep.subr.mxu0 0.0
          %v6848 = vand.u32 %v6413, 4294901760
          %6849 = vmatpush1.msra.mxu0 %v6848
          %6850 = vmatprep.subr.mxu0 0.0
          %v6851 = vand.u32 %v6422, 4294901760
          %6852 = vmatpush1.msra.mxu0 %v6851
          %6853 = vmatprep.subr.mxu0 0.0
          %6854 = vmatpush1.msra.mxu0 0.0
          %6855 = vmatprep.subr.mxu0 0.0
          %6856 = vmatpush1.msra.mxu0 0.0
          %6857 = vmatprep.subr.mxu0 0.0
          %6858 = vmatpush1.msra.mxu0 0.0
          %6859 = vmatprep.subr.mxu0 0.0
          %6860 = vmatpush1.msra.mxu0 0.0
          %6861 = vmatprep.subr.mxu0 0.0
          %6862 = vmatpush1.msra.mxu0 0.0
          %6863 = vmatprep.subr.mxu0 0.0
          %6864 = vmatpush1.msra.mxu0 0.0
          %6865 = vmatprep.subr.mxu0 0.0
          %6866 = vmatpush1.msra.mxu0 0.0
          %6867 = vmatprep.subr.mxu0 0.0
          %6868 = vmatpush1.msra.mxu0 0.0
          %6869 = vmatprep.subr.mxu0 0.0
          %6870 = vmatpush1.msra.mxu0 0.0
          %6871 = vmatprep.subr.mxu0 0.0
          %6872 = vmatpush1.msra.mxu0 0.0
          %6873 = vmatprep.subr.mxu0 0.0
          %6874 = vmatpush1.msra.mxu0 0.0
          %6875 = vmatprep.subr.mxu0 0.0
          %6876 = vmatpush1.msra.mxu0 0.0
          %6877 = vmatprep.subr.mxu0 0.0
          %6878 = vmatpush1.msra.mxu0 0.0
          %6879 = vmatprep.subr.mxu0 0.0
          %6880 = vmatpush1.msra.mxu0 0.0
          %6881 = vmatprep.subr.mxu0 0.0
          %6882 = vmatpush1.msra.mxu0 0.0
          %6883 = vmatprep.subr.mxu0 0.0
          %6884 = vmatpush1.msra.mxu0 0.0
          %6885 = vmatprep.subr.mxu0 0.0
          %6886 = vmatpush1.msra.mxu0 0.0
          %6887 = vmatprep.subr.mxu0 0.0
          %6888 = vmatpush1.msra.mxu0 0.0
          %6889 = vmatprep.subr.mxu0 0.0
          %6890 = vmatpush1.msra.mxu0 0.0
          %6891 = vmatprep.subr.mxu0 0.0
          %6892 = vmatpush1.msra.mxu0 0.0
          %6893 = vmatprep.subr.mxu0 0.0
          %6894 = vmatpush1.msra.mxu0 0.0
          %6895 = vmatprep.subr.mxu0 0.0
          %6896 = vmatpush1.msra.mxu0 0.0
          %6897 = vmatprep.subr.mxu0 0.0
          %6898 = vmatpush1.msra.mxu0 0.0
          %6899 = vmatprep.subr.mxu0 0.0
          %6900 = vmatpush1.msra.mxu0 0.0
          %6901 = vmatprep.subr.mxu0 0.0
          %6902 = vmatpush1.msra.mxu0 0.0
          %6903 = vmatprep.subr.mxu0 0.0
          %6904 = vmatpush1.msra.mxu0 0.0
          %6905 = vmatprep.subr.mxu0 0.0
          %6906 = vmatpush1.msra.mxu0 0.0
          %6907 = vmatprep.subr.mxu0 0.0
          %6908 = vmatpush1.msra.mxu0 0.0
          %6909 = vmatprep.subr.mxu0 0.0
          %6910 = vmatpush1.msra.mxu0 0.0
          %6911 = vmatprep.subr.mxu0 0.0
          %6912 = vmatpush1.msra.mxu0 0.0
          %6913 = vmatprep.mubr.f32.mxu0 0.0
          %v6914 = vand.u32 %v6416, 4294901760
          %6915 = vmatmul.mubr.f32.gmra.mrb[0].mxu0 %v6914
          %v6916 = vpop.f32.mrb[0].mxu0
          %v6917 = vadd.f32 %v6838, %v6916
          %v6918 = vpop.f32.mrb[0].mxu0
          %6919 = vmatprep.mubr.f32.mxu0 0.0
          %v6920 = vand.u32 %v6419, 4294901760
          %6921 = vmatmul.mubr.f32.gmra.mrb[0].mxu0 %v6920
          %v6922 = vpop.f32.mrb[0].mxu0
          %v6923 = vadd.f32 %v6844, %v6922
          %v6924 = vpop.f32.mrb[0].mxu0
          %6925 = vdwg.mxu0
          %v6926 = vmax.f32 %v5812, %v6917
          %v6927 = vmax.f32 %v5813, %v6923
          %s6928 = sadd.s32 96, %s236
          %s6929 = scalar_lea.vmem %s185, %s6928 [#allocation8]
          %v6930 = vld [vmem:[%s6929] sm:$0xff]
          %v6931 = vld [vmem:[%s6929 + $0x8] sm:$0xff]
          %6934 = vrot.lane.b32.xlu0 %v6930, 2
          %v6935 = vpop.permute.xlu0 %6934
          %6936 = vrot.lane.b32.xlu0 %v6931, 2
          %v6937 = vpop.permute.xlu0 %6936
          %6940 = vst.msk [vmem:[#allocation2 + $0x2] sm:$0xff] %vm248, %v6935
          %6941 = vst.msk [vmem:[#allocation2 + $0xa] sm:$0xff] %vm248, %v6937
          %v6942 = vld [vmem:[#allocation2] sm:$0xff]
          %v6943 = vld [vmem:[#allocation2 + $0x8] sm:$0xff]
          %v6944 = vld [vmem:[#allocation2 + $0x10] sm:$0x7]
          %v6945 = vld [vmem:[#allocation2 + $0x1] sm:$0xff]
          %v6946 = vld [vmem:[#allocation2 + $0x9] sm:$0xff]
          %v6947 = vld [vmem:[#allocation2 + $0x11] sm:$0x7]
          %v6948 = vmax.f32 %v6942, %v6945
          %v6949 = vmax.f32 %v6943, %v6946
          %v6950 = vmax.f32 %v6944, %v6947
          %6951 = vst.msk [vmem:[#allocation3] sm:$0xff] %vm225, %v6948
          %6952 = vst.msk [vmem:[#allocation3 + $0x8] sm:$0xff] %vm225, %v6949
          %6953 = vst.msk [vmem:[#allocation3 + $0x10] sm:$0x7] %vm262, %v6950
          %v6954 = vld [vmem:[#allocation3] sm:$0xff]
          %v6955 = vld [vmem:[#allocation3 + $0x8] sm:$0xff]
          %v6956 = vld [vmem:[#allocation3 + $0x10] sm:$0x1]
          %v6957 = vld [vmem:[#allocation3 + $0x2] sm:$0xff]
          %v6958 = vld [vmem:[#allocation3 + $0xa] sm:$0xff]
          %v6959 = vld [vmem:[#allocation3 + $0x12] sm:$0x1]
          %v6960 = vmax.f32 %v6954, %v6957
          %v6961 = vmax.f32 %v6955, %v6958
          %v6962 = vmax.f32 %v6956, %v6959
          %6963 = vst.msk [vmem:[#allocation4] sm:$0xff] %vm225, %v6960
          %6964 = vst.msk [vmem:[#allocation4 + $0x8] sm:$0xff] %vm225, %v6961
          %6965 = vst.msk [vmem:[#allocation4 + $0x10] sm:$0x1] %vm275, %v6962
          %v6966 = vld [vmem:[#allocation4] sm:$0xff]
          %v6967 = vld [vmem:[#allocation4 + $0x8] sm:$0x3f]
          %v6968 = vld [vmem:[#allocation4 + $0x3] sm:$0xff]
          %v6969 = vld [vmem:[#allocation4 + $0xb] sm:$0x3f]
          %v6970 = vmax.f32 %v6966, %v6968
          %v6971 = vmax.f32 %v6967, %v6969
          %6972 = vst.msk [vmem:[#allocation5] sm:$0xff] %vm225, %v6970
          %6973 = vst.msk [vmem:[#allocation5 + $0x8] sm:$0x3f] %vm284, %v6971
          %v6974 = vld [vmem:[#allocation5] sm:$0xff]
          %v6975 = vld [vmem:[#allocation5 + $0x8] sm:$0x3f]
          %6978 = vrot.lane.b32.xlu0 %v6974, 127
          %v6979 = vpop.permute.xlu0 %6978
          %6980 = vrot.lane.b32.xlu0 %v6975, 127
          %v6981 = vpop.permute.xlu0 %6980
          %v6984 = vmax.f32 %v6974, %v6979
          %v6985 = vmax.f32 %v6975, %v6981
          %6986 = vst.msk [vmem:[#allocation6] sm:$0xff] %vm298, %v6984
          %6987 = vst.msk [vmem:[#allocation6 + $0x8] sm:$0x3f] %vm300, %v6985
          %v6988 = vld [vmem:[#allocation6] sm:$0xff]
          %v6989 = vld [vmem:[#allocation6 + $0x8] sm:$0x3f]
          %6992 = vrot.lane.b32.xlu0 %v6988, 126
          %v6993 = vpop.permute.xlu0 %6992
          %6994 = vrot.lane.b32.xlu0 %v6989, 126
          %v6995 = vpop.permute.xlu0 %6994
          %v6998 = vmax.f32 %v6988, %v6993
          %v6999 = vmax.f32 %v6989, %v6995
          %7000 = vst.msk [vmem:[#allocation7] sm:$0xff] %vm314, %v6998
          %7001 = vst.msk [vmem:[#allocation7 + $0x8] sm:$0x3f] %vm316, %v6999
          %v7002 = vld [vmem:[#allocation7] sm:$0xff]
          %v7003 = vld [vmem:[#allocation7 + $0x8] sm:$0x3f]
          %7006 = vrot.lane.b32.xlu0 %v7002, 125
          %v7007 = vpop.permute.xlu0 %7006
          %7008 = vrot.lane.b32.xlu0 %v7003, 125
          %v7009 = vpop.permute.xlu0 %7008
          %v7012 = vmax.f32 %v7002, %v7007
          %v7013 = vmax.f32 %v7003, %v7009
          %v7014 = vld [vmem:[#allocation10] sm:$0xff]
          %v7015 = vld [vmem:[#allocation10 + $0x8] sm:$0x3f]
          %v7017 = vsel %vm332, %v7014, 0
          %v7020 = vsel %vm332, %v7015, 0
          %v7023 = vsel %vm339, %v7013, 0
          %7025 = vmatprep.subr.mxu0 0.0
          %v7026 = vand.u32 %v7012, 4294901760
          %7027 = vmatpush1.msra.mxu0 %v7026
          %7028 = vmatprep.subr.mxu0 0.0
          %v7029 = vand.u32 %v7023, 4294901760
          %7030 = vmatpush1.msra.mxu0 %v7029
          %7031 = vmatprep.subr.mxu0 0.0
          %7032 = vmatpush1.msra.mxu0 0.0
          %7033 = vmatprep.subr.mxu0 0.0
          %7034 = vmatpush1.msra.mxu0 0.0
          %7035 = vmatprep.subr.mxu0 0.0
          %7036 = vmatpush1.msra.mxu0 0.0
          %7037 = vmatprep.subr.mxu0 0.0
          %7038 = vmatpush1.msra.mxu0 0.0
          %7039 = vmatprep.subr.mxu0 0.0
          %7040 = vmatpush1.msra.mxu0 0.0
          %7041 = vmatprep.subr.mxu0 0.0
          %7042 = vmatpush1.msra.mxu0 0.0
          %7043 = vmatprep.subr.mxu0 0.0
          %7044 = vmatpush1.msra.mxu0 0.0
          %7045 = vmatprep.subr.mxu0 0.0
          %7046 = vmatpush1.msra.mxu0 0.0
          %7047 = vmatprep.subr.mxu0 0.0
          %7048 = vmatpush1.msra.mxu0 0.0
          %7049 = vmatprep.subr.mxu0 0.0
          %7050 = vmatpush1.msra.mxu0 0.0
          %7051 = vmatprep.subr.mxu0 0.0
          %7052 = vmatpush1.msra.mxu0 0.0
          %7053 = vmatprep.subr.mxu0 0.0
          %7054 = vmatpush1.msra.mxu0 0.0
          %7055 = vmatprep.subr.mxu0 0.0
          %7056 = vmatpush1.msra.mxu0 0.0
          %7057 = vmatprep.subr.mxu0 0.0
          %7058 = vmatpush1.msra.mxu0 0.0
          %7059 = vmatprep.subr.mxu0 0.0
          %7060 = vmatpush1.msra.mxu0 0.0
          %7061 = vmatprep.subr.mxu0 0.0
          %7062 = vmatpush1.msra.mxu0 0.0
          %7063 = vmatprep.subr.mxu0 0.0
          %7064 = vmatpush1.msra.mxu0 0.0
          %7065 = vmatprep.subr.mxu0 0.0
          %7066 = vmatpush1.msra.mxu0 0.0
          %7067 = vmatprep.subr.mxu0 0.0
          %7068 = vmatpush1.msra.mxu0 0.0
          %7069 = vmatprep.subr.mxu0 0.0
          %7070 = vmatpush1.msra.mxu0 0.0
          %7071 = vmatprep.subr.mxu0 0.0
          %7072 = vmatpush1.msra.mxu0 0.0
          %7073 = vmatprep.subr.mxu0 0.0
          %7074 = vmatpush1.msra.mxu0 0.0
          %7075 = vmatprep.subr.mxu0 0.0
          %7076 = vmatpush1.msra.mxu0 0.0
          %7077 = vmatprep.subr.mxu0 0.0
          %7078 = vmatpush1.msra.mxu0 0.0
          %7079 = vmatprep.subr.mxu0 0.0
          %7080 = vmatpush1.msra.mxu0 0.0
          %7081 = vmatprep.subr.mxu0 0.0
          %7082 = vmatpush1.msra.mxu0 0.0
          %7083 = vmatprep.subr.mxu0 0.0
          %7084 = vmatpush1.msra.mxu0 0.0
          %7085 = vmatprep.subr.mxu0 0.0
          %7086 = vmatpush1.msra.mxu0 0.0
          %7087 = vmatprep.subr.mxu0 0.0
          %7088 = vmatpush1.msra.mxu0 0.0
          %7089 = vmatprep.subr.mxu0 0.0
          %7090 = vmatpush1.msra.mxu0 0.0
          %7091 = vmatprep.mubr.f32.mxu0 0.0
          %v7092 = vand.u32 %v7017, 4294901760
          %v7093 = vsub.f32 %v7017, %v7092
          %v7094 = vand.u32 %v7093, 4294901760
          %v7095 = vsub.f32 %v7093, %v7094
          %v7096 = vand.u32 %v7095, 4294901760
          %7097 = vmatmul.mubr.f32.gmra.mrb[0].mxu0 %v7096
          %v7098 = vpop.f32.mrb[0].mxu0
          %v7099 = vadd.f32 0.0, %v7098
          %v7100 = vpop.f32.mrb[0].mxu0
          %7101 = vmatprep.mubr.f32.mxu0 0.0
          %v7102 = vand.u32 %v7020, 4294901760
          %v7103 = vsub.f32 %v7020, %v7102
          %v7104 = vand.u32 %v7103, 4294901760
          %v7105 = vsub.f32 %v7103, %v7104
          %v7106 = vand.u32 %v7105, 4294901760
          %7107 = vmatmul.mubr.f32.gmra.mrb[0].mxu0 %v7106
          %v7108 = vpop.f32.mrb[0].mxu0
          %v7109 = vadd.f32 0.0, %v7108
          %v7110 = vpop.f32.mrb[0].mxu0
          %7111 = vdwg.mxu0
          %7112 = vmatprep.subr.mxu0 0.0
          %v7113 = vand.u32 %v7012, 4294901760
          %v7114 = vsub.f32 %v7012, %v7113
          %v7115 = vand.u32 %v7114, 4294901760
          %v7116 = vsub.f32 %v7114, %v7115
          %v7117 = vand.u32 %v7116, 4294901760
          %7118 = vmatpush1.msra.mxu0 %v7117
          %7119 = vmatprep.subr.mxu0 0.0
          %v7120 = vand.u32 %v7023, 4294901760
          %v7121 = vsub.f32 %v7023, %v7120
          %v7122 = vand.u32 %v7121, 4294901760
          %v7123 = vsub.f32 %v7121, %v7122
          %v7124 = vand.u32 %v7123, 4294901760
          %7125 = vmatpush1.msra.mxu0 %v7124
          %7126 = vmatprep.subr.mxu0 0.0
          %7127 = vmatpush1.msra.mxu0 0.0
          %7128 = vmatprep.subr.mxu0 0.0
          %7129 = vmatpush1.msra.mxu0 0.0
          %7130 = vmatprep.subr.mxu0 0.0
          %7131 = vmatpush1.msra.mxu0 0.0
          %7132 = vmatprep.subr.mxu0 0.0
          %7133 = vmatpush1.msra.mxu0 0.0
          %7134 = vmatprep.subr.mxu0 0.0
          %7135 = vmatpush1.msra.mxu0 0.0
          %7136 = vmatprep.subr.mxu0 0.0
          %7137 = vmatpush1.msra.mxu0 0.0
          %7138 = vmatprep.subr.mxu0 0.0
          %7139 = vmatpush1.msra.mxu0 0.0
          %7140 = vmatprep.subr.mxu0 0.0
          %7141 = vmatpush1.msra.mxu0 0.0
          %7142 = vmatprep.subr.mxu0 0.0
          %7143 = vmatpush1.msra.mxu0 0.0
          %7144 = vmatprep.subr.mxu0 0.0
          %7145 = vmatpush1.msra.mxu0 0.0
          %7146 = vmatprep.subr.mxu0 0.0
          %7147 = vmatpush1.msra.mxu0 0.0
          %7148 = vmatprep.subr.mxu0 0.0
          %7149 = vmatpush1.msra.mxu0 0.0
          %7150 = vmatprep.subr.mxu0 0.0
          %7151 = vmatpush1.msra.mxu0 0.0
          %7152 = vmatprep.subr.mxu0 0.0
          %7153 = vmatpush1.msra.mxu0 0.0
          %7154 = vmatprep.subr.mxu0 0.0
          %7155 = vmatpush1.msra.mxu0 0.0
          %7156 = vmatprep.subr.mxu0 0.0
          %7157 = vmatpush1.msra.mxu0 0.0
          %7158 = vmatprep.subr.mxu0 0.0
          %7159 = vmatpush1.msra.mxu0 0.0
          %7160 = vmatprep.subr.mxu0 0.0
          %7161 = vmatpush1.msra.mxu0 0.0
          %7162 = vmatprep.subr.mxu0 0.0
          %7163 = vmatpush1.msra.mxu0 0.0
          %7164 = vmatprep.subr.mxu0 0.0
          %7165 = vmatpush1.msra.mxu0 0.0
          %7166 = vmatprep.subr.mxu0 0.0
          %7167 = vmatpush1.msra.mxu0 0.0
          %7168 = vmatprep.subr.mxu0 0.0
          %7169 = vmatpush1.msra.mxu0 0.0
          %7170 = vmatprep.subr.mxu0 0.0
          %7171 = vmatpush1.msra.mxu0 0.0
          %7172 = vmatprep.subr.mxu0 0.0
          %7173 = vmatpush1.msra.mxu0 0.0
          %7174 = vmatprep.subr.mxu0 0.0
          %7175 = vmatpush1.msra.mxu0 0.0
          %7176 = vmatprep.subr.mxu0 0.0
          %7177 = vmatpush1.msra.mxu0 0.0
          %7178 = vmatprep.subr.mxu0 0.0
          %7179 = vmatpush1.msra.mxu0 0.0
          %7180 = vmatprep.subr.mxu0 0.0
          %7181 = vmatpush1.msra.mxu0 0.0
          %7182 = vmatprep.subr.mxu0 0.0
          %7183 = vmatpush1.msra.mxu0 0.0
          %7184 = vmatprep.subr.mxu0 0.0
          %7185 = vmatpush1.msra.mxu0 0.0
          %7186 = vmatprep.mubr.f32.mxu0 0.0
          %v7187 = vand.u32 %v7017, 4294901760
          %7188 = vmatmul.mubr.f32.gmra.mrb[0].mxu0 %v7187
          %v7189 = vpop.f32.mrb[0].mxu0
          %v7190 = vadd.f32 %v7099, %v7189
          %v7191 = vpop.f32.mrb[0].mxu0
          %7192 = vmatprep.mubr.f32.mxu0 0.0
          %v7193 = vand.u32 %v7020, 4294901760
          %7194 = vmatmul.mubr.f32.gmra.mrb[0].mxu0 %v7193
          %v7195 = vpop.f32.mrb[0].mxu0
          %v7196 = vadd.f32 %v7109, %v7195
          %v7197 = vpop.f32.mrb[0].mxu0
          %7198 = vdwg.mxu0
          %7199 = vmatprep.subr.mxu0 0.0
          %v7200 = vand.u32 %v7012, 4294901760
          %v7201 = vsub.f32 %v7012, %v7200
          %7202 = vmatpush1.msra.mxu0 %v7201
          %7203 = vmatprep.subr.mxu0 0.0
          %v7204 = vand.u32 %v7023, 4294901760
          %v7205 = vsub.f32 %v7023, %v7204
          %7206 = vmatpush1.msra.mxu0 %v7205
          %7207 = vmatprep.subr.mxu0 0.0
          %7208 = vmatpush1.msra.mxu0 0.0
          %7209 = vmatprep.subr.mxu0 0.0
          %7210 = vmatpush1.msra.mxu0 0.0
          %7211 = vmatprep.subr.mxu0 0.0
          %7212 = vmatpush1.msra.mxu0 0.0
          %7213 = vmatprep.subr.mxu0 0.0
          %7214 = vmatpush1.msra.mxu0 0.0
          %7215 = vmatprep.subr.mxu0 0.0
          %7216 = vmatpush1.msra.mxu0 0.0
          %7217 = vmatprep.subr.mxu0 0.0
          %7218 = vmatpush1.msra.mxu0 0.0
          %7219 = vmatprep.subr.mxu0 0.0
          %7220 = vmatpush1.msra.mxu0 0.0
          %7221 = vmatprep.subr.mxu0 0.0
          %7222 = vmatpush1.msra.mxu0 0.0
          %7223 = vmatprep.subr.mxu0 0.0
          %7224 = vmatpush1.msra.mxu0 0.0
          %7225 = vmatprep.subr.mxu0 0.0
          %7226 = vmatpush1.msra.mxu0 0.0
          %7227 = vmatprep.subr.mxu0 0.0
          %7228 = vmatpush1.msra.mxu0 0.0
          %7229 = vmatprep.subr.mxu0 0.0
          %7230 = vmatpush1.msra.mxu0 0.0
          %7231 = vmatprep.subr.mxu0 0.0
          %7232 = vmatpush1.msra.mxu0 0.0
          %7233 = vmatprep.subr.mxu0 0.0
          %7234 = vmatpush1.msra.mxu0 0.0
          %7235 = vmatprep.subr.mxu0 0.0
          %7236 = vmatpush1.msra.mxu0 0.0
          %7237 = vmatprep.subr.mxu0 0.0
          %7238 = vmatpush1.msra.mxu0 0.0
          %7239 = vmatprep.subr.mxu0 0.0
          %7240 = vmatpush1.msra.mxu0 0.0
          %7241 = vmatprep.subr.mxu0 0.0
          %7242 = vmatpush1.msra.mxu0 0.0
          %7243 = vmatprep.subr.mxu0 0.0
          %7244 = vmatpush1.msra.mxu0 0.0
          %7245 = vmatprep.subr.mxu0 0.0
          %7246 = vmatpush1.msra.mxu0 0.0
          %7247 = vmatprep.subr.mxu0 0.0
          %7248 = vmatpush1.msra.mxu0 0.0
          %7249 = vmatprep.subr.mxu0 0.0
          %7250 = vmatpush1.msra.mxu0 0.0
          %7251 = vmatprep.subr.mxu0 0.0
          %7252 = vmatpush1.msra.mxu0 0.0
          %7253 = vmatprep.subr.mxu0 0.0
          %7254 = vmatpush1.msra.mxu0 0.0
          %7255 = vmatprep.subr.mxu0 0.0
          %7256 = vmatpush1.msra.mxu0 0.0
          %7257 = vmatprep.subr.mxu0 0.0
          %7258 = vmatpush1.msra.mxu0 0.0
          %7259 = vmatprep.subr.mxu0 0.0
          %7260 = vmatpush1.msra.mxu0 0.0
          %7261 = vmatprep.subr.mxu0 0.0
          %7262 = vmatpush1.msra.mxu0 0.0
          %7263 = vmatprep.subr.mxu0 0.0
          %7264 = vmatpush1.msra.mxu0 0.0
          %7265 = vmatprep.subr.mxu0 0.0
          %7266 = vmatpush1.msra.mxu0 0.0
          %7267 = vmatprep.mubr.f32.mxu0 0.0
          %v7268 = vand.u32 %v7017, 4294901760
          %v7269 = vsub.f32 %v7017, %v7268
          %7270 = vmatmul.mubr.f32.gmra.mrb[0].mxu0 %v7269
          %v7271 = vpop.f32.mrb[0].mxu0
          %v7272 = vadd.f32 %v7190, %v7271
          %v7273 = vpop.f32.mrb[0].mxu0
          %7274 = vmatprep.mubr.f32.mxu0 0.0
          %v7275 = vand.u32 %v7020, 4294901760
          %v7276 = vsub.f32 %v7020, %v7275
          %7277 = vmatmul.mubr.f32.gmra.mrb[0].mxu0 %v7276
          %v7278 = vpop.f32.mrb[0].mxu0
          %v7279 = vadd.f32 %v7196, %v7278
          %v7280 = vpop.f32.mrb[0].mxu0
          %7281 = vdwg.mxu0
          %7282 = vmatprep.subr.mxu0 0.0
          %v7283 = vand.u32 %v7012, 4294901760
          %7284 = vmatpush1.msra.mxu0 %v7283
          %7285 = vmatprep.subr.mxu0 0.0
          %v7286 = vand.u32 %v7023, 4294901760
          %7287 = vmatpush1.msra.mxu0 %v7286
          %7288 = vmatprep.subr.mxu0 0.0
          %7289 = vmatpush1.msra.mxu0 0.0
          %7290 = vmatprep.subr.mxu0 0.0
          %7291 = vmatpush1.msra.mxu0 0.0
          %7292 = vmatprep.subr.mxu0 0.0
          %7293 = vmatpush1.msra.mxu0 0.0
          %7294 = vmatprep.subr.mxu0 0.0
          %7295 = vmatpush1.msra.mxu0 0.0
          %7296 = vmatprep.subr.mxu0 0.0
          %7297 = vmatpush1.msra.mxu0 0.0
          %7298 = vmatprep.subr.mxu0 0.0
          %7299 = vmatpush1.msra.mxu0 0.0
          %7300 = vmatprep.subr.mxu0 0.0
          %7301 = vmatpush1.msra.mxu0 0.0
          %7302 = vmatprep.subr.mxu0 0.0
          %7303 = vmatpush1.msra.mxu0 0.0
          %7304 = vmatprep.subr.mxu0 0.0
          %7305 = vmatpush1.msra.mxu0 0.0
          %7306 = vmatprep.subr.mxu0 0.0
          %7307 = vmatpush1.msra.mxu0 0.0
          %7308 = vmatprep.subr.mxu0 0.0
          %7309 = vmatpush1.msra.mxu0 0.0
          %7310 = vmatprep.subr.mxu0 0.0
          %7311 = vmatpush1.msra.mxu0 0.0
          %7312 = vmatprep.subr.mxu0 0.0
          %7313 = vmatpush1.msra.mxu0 0.0
          %7314 = vmatprep.subr.mxu0 0.0
          %7315 = vmatpush1.msra.mxu0 0.0
          %7316 = vmatprep.subr.mxu0 0.0
          %7317 = vmatpush1.msra.mxu0 0.0
          %7318 = vmatprep.subr.mxu0 0.0
          %7319 = vmatpush1.msra.mxu0 0.0
          %7320 = vmatprep.subr.mxu0 0.0
          %7321 = vmatpush1.msra.mxu0 0.0
          %7322 = vmatprep.subr.mxu0 0.0
          %7323 = vmatpush1.msra.mxu0 0.0
          %7324 = vmatprep.subr.mxu0 0.0
          %7325 = vmatpush1.msra.mxu0 0.0
          %7326 = vmatprep.subr.mxu0 0.0
          %7327 = vmatpush1.msra.mxu0 0.0
          %7328 = vmatprep.subr.mxu0 0.0
          %7329 = vmatpush1.msra.mxu0 0.0
          %7330 = vmatprep.subr.mxu0 0.0
          %7331 = vmatpush1.msra.mxu0 0.0
          %7332 = vmatprep.subr.mxu0 0.0
          %7333 = vmatpush1.msra.mxu0 0.0
          %7334 = vmatprep.subr.mxu0 0.0
          %7335 = vmatpush1.msra.mxu0 0.0
          %7336 = vmatprep.subr.mxu0 0.0
          %7337 = vmatpush1.msra.mxu0 0.0
          %7338 = vmatprep.subr.mxu0 0.0
          %7339 = vmatpush1.msra.mxu0 0.0
          %7340 = vmatprep.subr.mxu0 0.0
          %7341 = vmatpush1.msra.mxu0 0.0
          %7342 = vmatprep.subr.mxu0 0.0
          %7343 = vmatpush1.msra.mxu0 0.0
          %7344 = vmatprep.subr.mxu0 0.0
          %7345 = vmatpush1.msra.mxu0 0.0
          %7346 = vmatprep.subr.mxu0 0.0
          %7347 = vmatpush1.msra.mxu0 0.0
          %7348 = vmatprep.mubr.f32.mxu0 0.0
          %v7349 = vand.u32 %v7017, 4294901760
          %v7350 = vsub.f32 %v7017, %v7349
          %v7351 = vand.u32 %v7350, 4294901760
          %7352 = vmatmul.mubr.f32.gmra.mrb[0].mxu0 %v7351
          %v7353 = vpop.f32.mrb[0].mxu0
          %v7354 = vadd.f32 %v7272, %v7353
          %v7355 = vpop.f32.mrb[0].mxu0
          %7356 = vmatprep.mubr.f32.mxu0 0.0
          %v7357 = vand.u32 %v7020, 4294901760
          %v7358 = vsub.f32 %v7020, %v7357
          %v7359 = vand.u32 %v7358, 4294901760
          %7360 = vmatmul.mubr.f32.gmra.mrb[0].mxu0 %v7359
          %v7361 = vpop.f32.mrb[0].mxu0
          %v7362 = vadd.f32 %v7279, %v7361
          %v7363 = vpop.f32.mrb[0].mxu0
          %7364 = vdwg.mxu0
          %7365 = vmatprep.subr.mxu0 0.0
          %v7366 = vand.u32 %v7012, 4294901760
          %v7367 = vsub.f32 %v7012, %v7366
          %v7368 = vand.u32 %v7367, 4294901760
          %7369 = vmatpush1.msra.mxu0 %v7368
          %7370 = vmatprep.subr.mxu0 0.0
          %v7371 = vand.u32 %v7023, 4294901760
          %v7372 = vsub.f32 %v7023, %v7371
          %v7373 = vand.u32 %v7372, 4294901760
          %7374 = vmatpush1.msra.mxu0 %v7373
          %7375 = vmatprep.subr.mxu0 0.0
          %7376 = vmatpush1.msra.mxu0 0.0
          %7377 = vmatprep.subr.mxu0 0.0
          %7378 = vmatpush1.msra.mxu0 0.0
          %7379 = vmatprep.subr.mxu0 0.0
          %7380 = vmatpush1.msra.mxu0 0.0
          %7381 = vmatprep.subr.mxu0 0.0
          %7382 = vmatpush1.msra.mxu0 0.0
          %7383 = vmatprep.subr.mxu0 0.0
          %7384 = vmatpush1.msra.mxu0 0.0
          %7385 = vmatprep.subr.mxu0 0.0
          %7386 = vmatpush1.msra.mxu0 0.0
          %7387 = vmatprep.subr.mxu0 0.0
          %7388 = vmatpush1.msra.mxu0 0.0
          %7389 = vmatprep.subr.mxu0 0.0
          %7390 = vmatpush1.msra.mxu0 0.0
          %7391 = vmatprep.subr.mxu0 0.0
          %7392 = vmatpush1.msra.mxu0 0.0
          %7393 = vmatprep.subr.mxu0 0.0
          %7394 = vmatpush1.msra.mxu0 0.0
          %7395 = vmatprep.subr.mxu0 0.0
          %7396 = vmatpush1.msra.mxu0 0.0
          %7397 = vmatprep.subr.mxu0 0.0
          %7398 = vmatpush1.msra.mxu0 0.0
          %7399 = vmatprep.subr.mxu0 0.0
          %7400 = vmatpush1.msra.mxu0 0.0
          %7401 = vmatprep.subr.mxu0 0.0
          %7402 = vmatpush1.msra.mxu0 0.0
          %7403 = vmatprep.subr.mxu0 0.0
          %7404 = vmatpush1.msra.mxu0 0.0
          %7405 = vmatprep.subr.mxu0 0.0
          %7406 = vmatpush1.msra.mxu0 0.0
          %7407 = vmatprep.subr.mxu0 0.0
          %7408 = vmatpush1.msra.mxu0 0.0
          %7409 = vmatprep.subr.mxu0 0.0
          %7410 = vmatpush1.msra.mxu0 0.0
          %7411 = vmatprep.subr.mxu0 0.0
          %7412 = vmatpush1.msra.mxu0 0.0
          %7413 = vmatprep.subr.mxu0 0.0
          %7414 = vmatpush1.msra.mxu0 0.0
          %7415 = vmatprep.subr.mxu0 0.0
          %7416 = vmatpush1.msra.mxu0 0.0
          %7417 = vmatprep.subr.mxu0 0.0
          %7418 = vmatpush1.msra.mxu0 0.0
          %7419 = vmatprep.subr.mxu0 0.0
          %7420 = vmatpush1.msra.mxu0 0.0
          %7421 = vmatprep.subr.mxu0 0.0
          %7422 = vmatpush1.msra.mxu0 0.0
          %7423 = vmatprep.subr.mxu0 0.0
          %7424 = vmatpush1.msra.mxu0 0.0
          %7425 = vmatprep.subr.mxu0 0.0
          %7426 = vmatpush1.msra.mxu0 0.0
          %7427 = vmatprep.subr.mxu0 0.0
          %7428 = vmatpush1.msra.mxu0 0.0
          %7429 = vmatprep.subr.mxu0 0.0
          %7430 = vmatpush1.msra.mxu0 0.0
          %7431 = vmatprep.subr.mxu0 0.0
          %7432 = vmatpush1.msra.mxu0 0.0
          %7433 = vmatprep.subr.mxu0 0.0
          %7434 = vmatpush1.msra.mxu0 0.0
          %7435 = vmatprep.mubr.f32.mxu0 0.0
          %v7436 = vand.u32 %v7017, 4294901760
          %7437 = vmatmul.mubr.f32.gmra.mrb[0].mxu0 %v7436
          %v7438 = vpop.f32.mrb[0].mxu0
          %v7439 = vadd.f32 %v7354, %v7438
          %v7440 = vpop.f32.mrb[0].mxu0
          %7441 = vmatprep.mubr.f32.mxu0 0.0
          %v7442 = vand.u32 %v7020, 4294901760
          %7443 = vmatmul.mubr.f32.gmra.mrb[0].mxu0 %v7442
          %v7444 = vpop.f32.mrb[0].mxu0
          %v7445 = vadd.f32 %v7362, %v7444
          %v7446 = vpop.f32.mrb[0].mxu0
          %7447 = vdwg.mxu0
          %7448 = vmatprep.subr.mxu0 0.0
          %v7449 = vand.u32 %v7012, 4294901760
          %7450 = vmatpush1.msra.mxu0 %v7449
          %7451 = vmatprep.subr.mxu0 0.0
          %v7452 = vand.u32 %v7023, 4294901760
          %7453 = vmatpush1.msra.mxu0 %v7452
          %7454 = vmatprep.subr.mxu0 0.0
          %7455 = vmatpush1.msra.mxu0 0.0
          %7456 = vmatprep.subr.mxu0 0.0
          %7457 = vmatpush1.msra.mxu0 0.0
          %7458 = vmatprep.subr.mxu0 0.0
          %7459 = vmatpush1.msra.mxu0 0.0
          %7460 = vmatprep.subr.mxu0 0.0
          %7461 = vmatpush1.msra.mxu0 0.0
          %7462 = vmatprep.subr.mxu0 0.0
          %7463 = vmatpush1.msra.mxu0 0.0
          %7464 = vmatprep.subr.mxu0 0.0
          %7465 = vmatpush1.msra.mxu0 0.0
          %7466 = vmatprep.subr.mxu0 0.0
          %7467 = vmatpush1.msra.mxu0 0.0
          %7468 = vmatprep.subr.mxu0 0.0
          %7469 = vmatpush1.msra.mxu0 0.0
          %7470 = vmatprep.subr.mxu0 0.0
          %7471 = vmatpush1.msra.mxu0 0.0
          %7472 = vmatprep.subr.mxu0 0.0
          %7473 = vmatpush1.msra.mxu0 0.0
          %7474 = vmatprep.subr.mxu0 0.0
          %7475 = vmatpush1.msra.mxu0 0.0
          %7476 = vmatprep.subr.mxu0 0.0
          %7477 = vmatpush1.msra.mxu0 0.0
          %7478 = vmatprep.subr.mxu0 0.0
          %7479 = vmatpush1.msra.mxu0 0.0
          %7480 = vmatprep.subr.mxu0 0.0
          %7481 = vmatpush1.msra.mxu0 0.0
          %7482 = vmatprep.subr.mxu0 0.0
          %7483 = vmatpush1.msra.mxu0 0.0
          %7484 = vmatprep.subr.mxu0 0.0
          %7485 = vmatpush1.msra.mxu0 0.0
          %7486 = vmatprep.subr.mxu0 0.0
          %7487 = vmatpush1.msra.mxu0 0.0
          %7488 = vmatprep.subr.mxu0 0.0
          %7489 = vmatpush1.msra.mxu0 0.0
          %7490 = vmatprep.subr.mxu0 0.0
          %7491 = vmatpush1.msra.mxu0 0.0
          %7492 = vmatprep.subr.mxu0 0.0
          %7493 = vmatpush1.msra.mxu0 0.0
          %7494 = vmatprep.subr.mxu0 0.0
          %7495 = vmatpush1.msra.mxu0 0.0
          %7496 = vmatprep.subr.mxu0 0.0
          %7497 = vmatpush1.msra.mxu0 0.0
          %7498 = vmatprep.subr.mxu0 0.0
          %7499 = vmatpush1.msra.mxu0 0.0
          %7500 = vmatprep.subr.mxu0 0.0
          %7501 = vmatpush1.msra.mxu0 0.0
          %7502 = vmatprep.subr.mxu0 0.0
          %7503 = vmatpush1.msra.mxu0 0.0
          %7504 = vmatprep.subr.mxu0 0.0
          %7505 = vmatpush1.msra.mxu0 0.0
          %7506 = vmatprep.subr.mxu0 0.0
          %7507 = vmatpush1.msra.mxu0 0.0
          %7508 = vmatprep.subr.mxu0 0.0
          %7509 = vmatpush1.msra.mxu0 0.0
          %7510 = vmatprep.subr.mxu0 0.0
          %7511 = vmatpush1.msra.mxu0 0.0
          %7512 = vmatprep.subr.mxu0 0.0
          %7513 = vmatpush1.msra.mxu0 0.0
          %7514 = vmatprep.mubr.f32.mxu0 0.0
          %v7515 = vand.u32 %v7017, 4294901760
          %7516 = vmatmul.mubr.f32.gmra.mrb[0].mxu0 %v7515
          %v7517 = vpop.f32.mrb[0].mxu0
          %v7518 = vadd.f32 %v7439, %v7517
          %v7519 = vpop.f32.mrb[0].mxu0
          %7520 = vmatprep.mubr.f32.mxu0 0.0
          %v7521 = vand.u32 %v7020, 4294901760
          %7522 = vmatmul.mubr.f32.gmra.mrb[0].mxu0 %v7521
          %v7523 = vpop.f32.mrb[0].mxu0
          %v7524 = vadd.f32 %v7445, %v7523
          %v7525 = vpop.f32.mrb[0].mxu0
          %7526 = vdwg.mxu0
          %v7527 = vld [vmem:[#allocation12] sm:$0xff]
          %v7528 = vld [vmem:[#allocation12 + $0x8] sm:$0x3f]
          %v7530 = vsel %vm332, %v7518, 0
          %v7533 = vsel %vm332, %v7524, 0
          %v7536 = vsel %vm339, %v7528, 0
          %7538 = vmatprep.subr.mxu0 0.0
          %v7539 = vand.u32 %v7527, 4294901760
          %7540 = vmatpush1.msra.mxu0 %v7539
          %7541 = vmatprep.subr.mxu0 0.0
          %v7542 = vand.u32 %v7536, 4294901760
          %7543 = vmatpush1.msra.mxu0 %v7542
          %7544 = vmatprep.subr.mxu0 0.0
          %7545 = vmatpush1.msra.mxu0 0.0
          %7546 = vmatprep.subr.mxu0 0.0
          %7547 = vmatpush1.msra.mxu0 0.0
          %7548 = vmatprep.subr.mxu0 0.0
          %7549 = vmatpush1.msra.mxu0 0.0
          %7550 = vmatprep.subr.mxu0 0.0
          %7551 = vmatpush1.msra.mxu0 0.0
          %7552 = vmatprep.subr.mxu0 0.0
          %7553 = vmatpush1.msra.mxu0 0.0
          %7554 = vmatprep.subr.mxu0 0.0
          %7555 = vmatpush1.msra.mxu0 0.0
          %7556 = vmatprep.subr.mxu0 0.0
          %7557 = vmatpush1.msra.mxu0 0.0
          %7558 = vmatprep.subr.mxu0 0.0
          %7559 = vmatpush1.msra.mxu0 0.0
          %7560 = vmatprep.subr.mxu0 0.0
          %7561 = vmatpush1.msra.mxu0 0.0
          %7562 = vmatprep.subr.mxu0 0.0
          %7563 = vmatpush1.msra.mxu0 0.0
          %7564 = vmatprep.subr.mxu0 0.0
          %7565 = vmatpush1.msra.mxu0 0.0
          %7566 = vmatprep.subr.mxu0 0.0
          %7567 = vmatpush1.msra.mxu0 0.0
          %7568 = vmatprep.subr.mxu0 0.0
          %7569 = vmatpush1.msra.mxu0 0.0
          %7570 = vmatprep.subr.mxu0 0.0
          %7571 = vmatpush1.msra.mxu0 0.0
          %7572 = vmatprep.subr.mxu0 0.0
          %7573 = vmatpush1.msra.mxu0 0.0
          %7574 = vmatprep.subr.mxu0 0.0
          %7575 = vmatpush1.msra.mxu0 0.0
          %7576 = vmatprep.subr.mxu0 0.0
          %7577 = vmatpush1.msra.mxu0 0.0
          %7578 = vmatprep.subr.mxu0 0.0
          %7579 = vmatpush1.msra.mxu0 0.0
          %7580 = vmatprep.subr.mxu0 0.0
          %7581 = vmatpush1.msra.mxu0 0.0
          %7582 = vmatprep.subr.mxu0 0.0
          %7583 = vmatpush1.msra.mxu0 0.0
          %7584 = vmatprep.subr.mxu0 0.0
          %7585 = vmatpush1.msra.mxu0 0.0
          %7586 = vmatprep.subr.mxu0 0.0
          %7587 = vmatpush1.msra.mxu0 0.0
          %7588 = vmatprep.subr.mxu0 0.0
          %7589 = vmatpush1.msra.mxu0 0.0
          %7590 = vmatprep.subr.mxu0 0.0
          %7591 = vmatpush1.msra.mxu0 0.0
          %7592 = vmatprep.subr.mxu0 0.0
          %7593 = vmatpush1.msra.mxu0 0.0
          %7594 = vmatprep.subr.mxu0 0.0
          %7595 = vmatpush1.msra.mxu0 0.0
          %7596 = vmatprep.subr.mxu0 0.0
          %7597 = vmatpush1.msra.mxu0 0.0
          %7598 = vmatprep.subr.mxu0 0.0
          %7599 = vmatpush1.msra.mxu0 0.0
          %7600 = vmatprep.subr.mxu0 0.0
          %7601 = vmatpush1.msra.mxu0 0.0
          %7602 = vmatprep.subr.mxu0 0.0
          %7603 = vmatpush1.msra.mxu0 0.0
          %7604 = vmatprep.mubr.f32.mxu0 0.0
          %v7605 = vand.u32 %v7530, 4294901760
          %v7606 = vsub.f32 %v7530, %v7605
          %v7607 = vand.u32 %v7606, 4294901760
          %v7608 = vsub.f32 %v7606, %v7607
          %v7609 = vand.u32 %v7608, 4294901760
          %7610 = vmatmul.mubr.f32.gmra.mrb[0].mxu0 %v7609
          %v7611 = vpop.f32.mrb[0].mxu0
          %v7612 = vadd.f32 0.0, %v7611
          %v7613 = vpop.f32.mrb[0].mxu0
          %7614 = vmatprep.mubr.f32.mxu0 0.0
          %v7615 = vand.u32 %v7533, 4294901760
          %v7616 = vsub.f32 %v7533, %v7615
          %v7617 = vand.u32 %v7616, 4294901760
          %v7618 = vsub.f32 %v7616, %v7617
          %v7619 = vand.u32 %v7618, 4294901760
          %7620 = vmatmul.mubr.f32.gmra.mrb[0].mxu0 %v7619
          %v7621 = vpop.f32.mrb[0].mxu0
          %v7622 = vadd.f32 0.0, %v7621
          %v7623 = vpop.f32.mrb[0].mxu0
          %7624 = vdwg.mxu0
          %7625 = vmatprep.subr.mxu0 0.0
          %v7626 = vand.u32 %v7527, 4294901760
          %v7627 = vsub.f32 %v7527, %v7626
          %v7628 = vand.u32 %v7627, 4294901760
          %v7629 = vsub.f32 %v7627, %v7628
          %v7630 = vand.u32 %v7629, 4294901760
          %7631 = vmatpush1.msra.mxu0 %v7630
          %7632 = vmatprep.subr.mxu0 0.0
          %v7633 = vand.u32 %v7536, 4294901760
          %v7634 = vsub.f32 %v7536, %v7633
          %v7635 = vand.u32 %v7634, 4294901760
          %v7636 = vsub.f32 %v7634, %v7635
          %v7637 = vand.u32 %v7636, 4294901760
          %7638 = vmatpush1.msra.mxu0 %v7637
          %7639 = vmatprep.subr.mxu0 0.0
          %7640 = vmatpush1.msra.mxu0 0.0
          %7641 = vmatprep.subr.mxu0 0.0
          %7642 = vmatpush1.msra.mxu0 0.0
          %7643 = vmatprep.subr.mxu0 0.0
          %7644 = vmatpush1.msra.mxu0 0.0
          %7645 = vmatprep.subr.mxu0 0.0
          %7646 = vmatpush1.msra.mxu0 0.0
          %7647 = vmatprep.subr.mxu0 0.0
          %7648 = vmatpush1.msra.mxu0 0.0
          %7649 = vmatprep.subr.mxu0 0.0
          %7650 = vmatpush1.msra.mxu0 0.0
          %7651 = vmatprep.subr.mxu0 0.0
          %7652 = vmatpush1.msra.mxu0 0.0
          %7653 = vmatprep.subr.mxu0 0.0
          %7654 = vmatpush1.msra.mxu0 0.0
          %7655 = vmatprep.subr.mxu0 0.0
          %7656 = vmatpush1.msra.mxu0 0.0
          %7657 = vmatprep.subr.mxu0 0.0
          %7658 = vmatpush1.msra.mxu0 0.0
          %7659 = vmatprep.subr.mxu0 0.0
          %7660 = vmatpush1.msra.mxu0 0.0
          %7661 = vmatprep.subr.mxu0 0.0
          %7662 = vmatpush1.msra.mxu0 0.0
          %7663 = vmatprep.subr.mxu0 0.0
          %7664 = vmatpush1.msra.mxu0 0.0
          %7665 = vmatprep.subr.mxu0 0.0
          %7666 = vmatpush1.msra.mxu0 0.0
          %7667 = vmatprep.subr.mxu0 0.0
          %7668 = vmatpush1.msra.mxu0 0.0
          %7669 = vmatprep.subr.mxu0 0.0
          %7670 = vmatpush1.msra.mxu0 0.0
          %7671 = vmatprep.subr.mxu0 0.0
          %7672 = vmatpush1.msra.mxu0 0.0
          %7673 = vmatprep.subr.mxu0 0.0
          %7674 = vmatpush1.msra.mxu0 0.0
          %7675 = vmatprep.subr.mxu0 0.0
          %7676 = vmatpush1.msra.mxu0 0.0
          %7677 = vmatprep.subr.mxu0 0.0
          %7678 = vmatpush1.msra.mxu0 0.0
          %7679 = vmatprep.subr.mxu0 0.0
          %7680 = vmatpush1.msra.mxu0 0.0
          %7681 = vmatprep.subr.mxu0 0.0
          %7682 = vmatpush1.msra.mxu0 0.0
          %7683 = vmatprep.subr.mxu0 0.0
          %7684 = vmatpush1.msra.mxu0 0.0
          %7685 = vmatprep.subr.mxu0 0.0
          %7686 = vmatpush1.msra.mxu0 0.0
          %7687 = vmatprep.subr.mxu0 0.0
          %7688 = vmatpush1.msra.mxu0 0.0
          %7689 = vmatprep.subr.mxu0 0.0
          %7690 = vmatpush1.msra.mxu0 0.0
          %7691 = vmatprep.subr.mxu0 0.0
          %7692 = vmatpush1.msra.mxu0 0.0
          %7693 = vmatprep.subr.mxu0 0.0
          %7694 = vmatpush1.msra.mxu0 0.0
          %7695 = vmatprep.subr.mxu0 0.0
          %7696 = vmatpush1.msra.mxu0 0.0
          %7697 = vmatprep.subr.mxu0 0.0
          %7698 = vmatpush1.msra.mxu0 0.0
          %7699 = vmatprep.mubr.f32.mxu0 0.0
          %v7700 = vand.u32 %v7530, 4294901760
          %7701 = vmatmul.mubr.f32.gmra.mrb[0].mxu0 %v7700
          %v7702 = vpop.f32.mrb[0].mxu0
          %v7703 = vadd.f32 %v7612, %v7702
          %v7704 = vpop.f32.mrb[0].mxu0
          %7705 = vmatprep.mubr.f32.mxu0 0.0
          %v7706 = vand.u32 %v7533, 4294901760
          %7707 = vmatmul.mubr.f32.gmra.mrb[0].mxu0 %v7706
          %v7708 = vpop.f32.mrb[0].mxu0
          %v7709 = vadd.f32 %v7622, %v7708
          %v7710 = vpop.f32.mrb[0].mxu0
          %7711 = vdwg.mxu0
          %7712 = vmatprep.subr.mxu0 0.0
          %v7713 = vand.u32 %v7527, 4294901760
          %v7714 = vsub.f32 %v7527, %v7713
          %7715 = vmatpush1.msra.mxu0 %v7714
          %7716 = vmatprep.subr.mxu0 0.0
          %v7717 = vand.u32 %v7536, 4294901760
          %v7718 = vsub.f32 %v7536, %v7717
          %7719 = vmatpush1.msra.mxu0 %v7718
          %7720 = vmatprep.subr.mxu0 0.0
          %7721 = vmatpush1.msra.mxu0 0.0
          %7722 = vmatprep.subr.mxu0 0.0
          %7723 = vmatpush1.msra.mxu0 0.0
          %7724 = vmatprep.subr.mxu0 0.0
          %7725 = vmatpush1.msra.mxu0 0.0
          %7726 = vmatprep.subr.mxu0 0.0
          %7727 = vmatpush1.msra.mxu0 0.0
          %7728 = vmatprep.subr.mxu0 0.0
          %7729 = vmatpush1.msra.mxu0 0.0
          %7730 = vmatprep.subr.mxu0 0.0
          %7731 = vmatpush1.msra.mxu0 0.0
          %7732 = vmatprep.subr.mxu0 0.0
          %7733 = vmatpush1.msra.mxu0 0.0
          %7734 = vmatprep.subr.mxu0 0.0
          %7735 = vmatpush1.msra.mxu0 0.0
          %7736 = vmatprep.subr.mxu0 0.0
          %7737 = vmatpush1.msra.mxu0 0.0
          %7738 = vmatprep.subr.mxu0 0.0
          %7739 = vmatpush1.msra.mxu0 0.0
          %7740 = vmatprep.subr.mxu0 0.0
          %7741 = vmatpush1.msra.mxu0 0.0
          %7742 = vmatprep.subr.mxu0 0.0
          %7743 = vmatpush1.msra.mxu0 0.0
          %7744 = vmatprep.subr.mxu0 0.0
          %7745 = vmatpush1.msra.mxu0 0.0
          %7746 = vmatprep.subr.mxu0 0.0
          %7747 = vmatpush1.msra.mxu0 0.0
          %7748 = vmatprep.subr.mxu0 0.0
          %7749 = vmatpush1.msra.mxu0 0.0
          %7750 = vmatprep.subr.mxu0 0.0
          %7751 = vmatpush1.msra.mxu0 0.0
          %7752 = vmatprep.subr.mxu0 0.0
          %7753 = vmatpush1.msra.mxu0 0.0
          %7754 = vmatprep.subr.mxu0 0.0
          %7755 = vmatpush1.msra.mxu0 0.0
          %7756 = vmatprep.subr.mxu0 0.0
          %7757 = vmatpush1.msra.mxu0 0.0
          %7758 = vmatprep.subr.mxu0 0.0
          %7759 = vmatpush1.msra.mxu0 0.0
          %7760 = vmatprep.subr.mxu0 0.0
          %7761 = vmatpush1.msra.mxu0 0.0
          %7762 = vmatprep.subr.mxu0 0.0
          %7763 = vmatpush1.msra.mxu0 0.0
          %7764 = vmatprep.subr.mxu0 0.0
          %7765 = vmatpush1.msra.mxu0 0.0
          %7766 = vmatprep.subr.mxu0 0.0
          %7767 = vmatpush1.msra.mxu0 0.0
          %7768 = vmatprep.subr.mxu0 0.0
          %7769 = vmatpush1.msra.mxu0 0.0
          %7770 = vmatprep.subr.mxu0 0.0
          %7771 = vmatpush1.msra.mxu0 0.0
          %7772 = vmatprep.subr.mxu0 0.0
          %7773 = vmatpush1.msra.mxu0 0.0
          %7774 = vmatprep.subr.mxu0 0.0
          %7775 = vmatpush1.msra.mxu0 0.0
          %7776 = vmatprep.subr.mxu0 0.0
          %7777 = vmatpush1.msra.mxu0 0.0
          %7778 = vmatprep.subr.mxu0 0.0
          %7779 = vmatpush1.msra.mxu0 0.0
          %7780 = vmatprep.mubr.f32.mxu0 0.0
          %v7781 = vand.u32 %v7530, 4294901760
          %v7782 = vsub.f32 %v7530, %v7781
          %7783 = vmatmul.mubr.f32.gmra.mrb[0].mxu0 %v7782
          %v7784 = vpop.f32.mrb[0].mxu0
          %v7785 = vadd.f32 %v7703, %v7784
          %v7786 = vpop.f32.mrb[0].mxu0
          %7787 = vmatprep.mubr.f32.mxu0 0.0
          %v7788 = vand.u32 %v7533, 4294901760
          %v7789 = vsub.f32 %v7533, %v7788
          %7790 = vmatmul.mubr.f32.gmra.mrb[0].mxu0 %v7789
          %v7791 = vpop.f32.mrb[0].mxu0
          %v7792 = vadd.f32 %v7709, %v7791
          %v7793 = vpop.f32.mrb[0].mxu0
          %7794 = vdwg.mxu0
          %7795 = vmatprep.subr.mxu0 0.0
          %v7796 = vand.u32 %v7527, 4294901760
          %7797 = vmatpush1.msra.mxu0 %v7796
          %7798 = vmatprep.subr.mxu0 0.0
          %v7799 = vand.u32 %v7536, 4294901760
          %7800 = vmatpush1.msra.mxu0 %v7799
          %7801 = vmatprep.subr.mxu0 0.0
          %7802 = vmatpush1.msra.mxu0 0.0
          %7803 = vmatprep.subr.mxu0 0.0
          %7804 = vmatpush1.msra.mxu0 0.0
          %7805 = vmatprep.subr.mxu0 0.0
          %7806 = vmatpush1.msra.mxu0 0.0
          %7807 = vmatprep.subr.mxu0 0.0
          %7808 = vmatpush1.msra.mxu0 0.0
          %7809 = vmatprep.subr.mxu0 0.0
          %7810 = vmatpush1.msra.mxu0 0.0
          %7811 = vmatprep.subr.mxu0 0.0
          %7812 = vmatpush1.msra.mxu0 0.0
          %7813 = vmatprep.subr.mxu0 0.0
          %7814 = vmatpush1.msra.mxu0 0.0
          %7815 = vmatprep.subr.mxu0 0.0
          %7816 = vmatpush1.msra.mxu0 0.0
          %7817 = vmatprep.subr.mxu0 0.0
          %7818 = vmatpush1.msra.mxu0 0.0
          %7819 = vmatprep.subr.mxu0 0.0
          %7820 = vmatpush1.msra.mxu0 0.0
          %7821 = vmatprep.subr.mxu0 0.0
          %7822 = vmatpush1.msra.mxu0 0.0
          %7823 = vmatprep.subr.mxu0 0.0
          %7824 = vmatpush1.msra.mxu0 0.0
          %7825 = vmatprep.subr.mxu0 0.0
          %7826 = vmatpush1.msra.mxu0 0.0
          %7827 = vmatprep.subr.mxu0 0.0
          %7828 = vmatpush1.msra.mxu0 0.0
          %7829 = vmatprep.subr.mxu0 0.0
          %7830 = vmatpush1.msra.mxu0 0.0
          %7831 = vmatprep.subr.mxu0 0.0
          %7832 = vmatpush1.msra.mxu0 0.0
          %7833 = vmatprep.subr.mxu0 0.0
          %7834 = vmatpush1.msra.mxu0 0.0
          %7835 = vmatprep.subr.mxu0 0.0
          %7836 = vmatpush1.msra.mxu0 0.0
          %7837 = vmatprep.subr.mxu0 0.0
          %7838 = vmatpush1.msra.mxu0 0.0
          %7839 = vmatprep.subr.mxu0 0.0
          %7840 = vmatpush1.msra.mxu0 0.0
          %7841 = vmatprep.subr.mxu0 0.0
          %7842 = vmatpush1.msra.mxu0 0.0
          %7843 = vmatprep.subr.mxu0 0.0
          %7844 = vmatpush1.msra.mxu0 0.0
          %7845 = vmatprep.subr.mxu0 0.0
          %7846 = vmatpush1.msra.mxu0 0.0
          %7847 = vmatprep.subr.mxu0 0.0
          %7848 = vmatpush1.msra.mxu0 0.0
          %7849 = vmatprep.subr.mxu0 0.0
          %7850 = vmatpush1.msra.mxu0 0.0
          %7851 = vmatprep.subr.mxu0 0.0
          %7852 = vmatpush1.msra.mxu0 0.0
          %7853 = vmatprep.subr.mxu0 0.0
          %7854 = vmatpush1.msra.mxu0 0.0
          %7855 = vmatprep.subr.mxu0 0.0
          %7856 = vmatpush1.msra.mxu0 0.0
          %7857 = vmatprep.subr.mxu0 0.0
          %7858 = vmatpush1.msra.mxu0 0.0
          %7859 = vmatprep.subr.mxu0 0.0
          %7860 = vmatpush1.msra.mxu0 0.0
          %7861 = vmatprep.mubr.f32.mxu0 0.0
          %v7862 = vand.u32 %v7530, 4294901760
          %v7863 = vsub.f32 %v7530, %v7862
          %v7864 = vand.u32 %v7863, 4294901760
          %7865 = vmatmul.mubr.f32.gmra.mrb[0].mxu0 %v7864
          %v7866 = vpop.f32.mrb[0].mxu0
          %v7867 = vadd.f32 %v7785, %v7866
          %v7868 = vpop.f32.mrb[0].mxu0
          %7869 = vmatprep.mubr.f32.mxu0 0.0
          %v7870 = vand.u32 %v7533, 4294901760
          %v7871 = vsub.f32 %v7533, %v7870
          %v7872 = vand.u32 %v7871, 4294901760
          %7873 = vmatmul.mubr.f32.gmra.mrb[0].mxu0 %v7872
          %v7874 = vpop.f32.mrb[0].mxu0
          %v7875 = vadd.f32 %v7792, %v7874
          %v7876 = vpop.f32.mrb[0].mxu0
          %7877 = vdwg.mxu0
          %7878 = vmatprep.subr.mxu0 0.0
          %v7879 = vand.u32 %v7527, 4294901760
          %v7880 = vsub.f32 %v7527, %v7879
          %v7881 = vand.u32 %v7880, 4294901760
          %7882 = vmatpush1.msra.mxu0 %v7881
          %7883 = vmatprep.subr.mxu0 0.0
          %v7884 = vand.u32 %v7536, 4294901760
          %v7885 = vsub.f32 %v7536, %v7884
          %v7886 = vand.u32 %v7885, 4294901760
          %7887 = vmatpush1.msra.mxu0 %v7886
          %7888 = vmatprep.subr.mxu0 0.0
          %7889 = vmatpush1.msra.mxu0 0.0
          %7890 = vmatprep.subr.mxu0 0.0
          %7891 = vmatpush1.msra.mxu0 0.0
          %7892 = vmatprep.subr.mxu0 0.0
          %7893 = vmatpush1.msra.mxu0 0.0
          %7894 = vmatprep.subr.mxu0 0.0
          %7895 = vmatpush1.msra.mxu0 0.0
          %7896 = vmatprep.subr.mxu0 0.0
          %7897 = vmatpush1.msra.mxu0 0.0
          %7898 = vmatprep.subr.mxu0 0.0
          %7899 = vmatpush1.msra.mxu0 0.0
          %7900 = vmatprep.subr.mxu0 0.0
          %7901 = vmatpush1.msra.mxu0 0.0
          %7902 = vmatprep.subr.mxu0 0.0
          %7903 = vmatpush1.msra.mxu0 0.0
          %7904 = vmatprep.subr.mxu0 0.0
          %7905 = vmatpush1.msra.mxu0 0.0
          %7906 = vmatprep.subr.mxu0 0.0
          %7907 = vmatpush1.msra.mxu0 0.0
          %7908 = vmatprep.subr.mxu0 0.0
          %7909 = vmatpush1.msra.mxu0 0.0
          %7910 = vmatprep.subr.mxu0 0.0
          %7911 = vmatpush1.msra.mxu0 0.0
          %7912 = vmatprep.subr.mxu0 0.0
          %7913 = vmatpush1.msra.mxu0 0.0
          %7914 = vmatprep.subr.mxu0 0.0
          %7915 = vmatpush1.msra.mxu0 0.0
          %7916 = vmatprep.subr.mxu0 0.0
          %7917 = vmatpush1.msra.mxu0 0.0
          %7918 = vmatprep.subr.mxu0 0.0
          %7919 = vmatpush1.msra.mxu0 0.0
          %7920 = vmatprep.subr.mxu0 0.0
          %7921 = vmatpush1.msra.mxu0 0.0
          %7922 = vmatprep.subr.mxu0 0.0
          %7923 = vmatpush1.msra.mxu0 0.0
          %7924 = vmatprep.subr.mxu0 0.0
          %7925 = vmatpush1.msra.mxu0 0.0
          %7926 = vmatprep.subr.mxu0 0.0
          %7927 = vmatpush1.msra.mxu0 0.0
          %7928 = vmatprep.subr.mxu0 0.0
          %7929 = vmatpush1.msra.mxu0 0.0
          %7930 = vmatprep.subr.mxu0 0.0
          %7931 = vmatpush1.msra.mxu0 0.0
          %7932 = vmatprep.subr.mxu0 0.0
          %7933 = vmatpush1.msra.mxu0 0.0
          %7934 = vmatprep.subr.mxu0 0.0
          %7935 = vmatpush1.msra.mxu0 0.0
          %7936 = vmatprep.subr.mxu0 0.0
          %7937 = vmatpush1.msra.mxu0 0.0
          %7938 = vmatprep.subr.mxu0 0.0
          %7939 = vmatpush1.msra.mxu0 0.0
          %7940 = vmatprep.subr.mxu0 0.0
          %7941 = vmatpush1.msra.mxu0 0.0
          %7942 = vmatprep.subr.mxu0 0.0
          %7943 = vmatpush1.msra.mxu0 0.0
          %7944 = vmatprep.subr.mxu0 0.0
          %7945 = vmatpush1.msra.mxu0 0.0
          %7946 = vmatprep.subr.mxu0 0.0
          %7947 = vmatpush1.msra.mxu0 0.0
          %7948 = vmatprep.mubr.f32.mxu0 0.0
          %v7949 = vand.u32 %v7530, 4294901760
          %7950 = vmatmul.mubr.f32.gmra.mrb[0].mxu0 %v7949
          %v7951 = vpop.f32.mrb[0].mxu0
          %v7952 = vadd.f32 %v7867, %v7951
          %v7953 = vpop.f32.mrb[0].mxu0
          %7954 = vmatprep.mubr.f32.mxu0 0.0
          %v7955 = vand.u32 %v7533, 4294901760
          %7956 = vmatmul.mubr.f32.gmra.mrb[0].mxu0 %v7955
          %v7957 = vpop.f32.mrb[0].mxu0
          %v7958 = vadd.f32 %v7875, %v7957
          %v7959 = vpop.f32.mrb[0].mxu0
          %7960 = vdwg.mxu0
          %7961 = vmatprep.subr.mxu0 0.0
          %v7962 = vand.u32 %v7527, 4294901760
          %7963 = vmatpush1.msra.mxu0 %v7962
          %7964 = vmatprep.subr.mxu0 0.0
          %v7965 = vand.u32 %v7536, 4294901760
          %7966 = vmatpush1.msra.mxu0 %v7965
          %7967 = vmatprep.subr.mxu0 0.0
          %7968 = vmatpush1.msra.mxu0 0.0
          %7969 = vmatprep.subr.mxu0 0.0
          %7970 = vmatpush1.msra.mxu0 0.0
          %7971 = vmatprep.subr.mxu0 0.0
          %7972 = vmatpush1.msra.mxu0 0.0
          %7973 = vmatprep.subr.mxu0 0.0
          %7974 = vmatpush1.msra.mxu0 0.0
          %7975 = vmatprep.subr.mxu0 0.0
          %7976 = vmatpush1.msra.mxu0 0.0
          %7977 = vmatprep.subr.mxu0 0.0
          %7978 = vmatpush1.msra.mxu0 0.0
          %7979 = vmatprep.subr.mxu0 0.0
          %7980 = vmatpush1.msra.mxu0 0.0
          %7981 = vmatprep.subr.mxu0 0.0
          %7982 = vmatpush1.msra.mxu0 0.0
          %7983 = vmatprep.subr.mxu0 0.0
          %7984 = vmatpush1.msra.mxu0 0.0
          %7985 = vmatprep.subr.mxu0 0.0
          %7986 = vmatpush1.msra.mxu0 0.0
          %7987 = vmatprep.subr.mxu0 0.0
          %7988 = vmatpush1.msra.mxu0 0.0
          %7989 = vmatprep.subr.mxu0 0.0
          %7990 = vmatpush1.msra.mxu0 0.0
          %7991 = vmatprep.subr.mxu0 0.0
          %7992 = vmatpush1.msra.mxu0 0.0
          %7993 = vmatprep.subr.mxu0 0.0
          %7994 = vmatpush1.msra.mxu0 0.0
          %7995 = vmatprep.subr.mxu0 0.0
          %7996 = vmatpush1.msra.mxu0 0.0
          %7997 = vmatprep.subr.mxu0 0.0
          %7998 = vmatpush1.msra.mxu0 0.0
          %7999 = vmatprep.subr.mxu0 0.0
          %8000 = vmatpush1.msra.mxu0 0.0
          %8001 = vmatprep.subr.mxu0 0.0
          %8002 = vmatpush1.msra.mxu0 0.0
          %8003 = vmatprep.subr.mxu0 0.0
          %8004 = vmatpush1.msra.mxu0 0.0
          %8005 = vmatprep.subr.mxu0 0.0
          %8006 = vmatpush1.msra.mxu0 0.0
          %8007 = vmatprep.subr.mxu0 0.0
          %8008 = vmatpush1.msra.mxu0 0.0
          %8009 = vmatprep.subr.mxu0 0.0
          %8010 = vmatpush1.msra.mxu0 0.0
          %8011 = vmatprep.subr.mxu0 0.0
          %8012 = vmatpush1.msra.mxu0 0.0
          %8013 = vmatprep.subr.mxu0 0.0
          %8014 = vmatpush1.msra.mxu0 0.0
          %8015 = vmatprep.subr.mxu0 0.0
          %8016 = vmatpush1.msra.mxu0 0.0
          %8017 = vmatprep.subr.mxu0 0.0
          %8018 = vmatpush1.msra.mxu0 0.0
          %8019 = vmatprep.subr.mxu0 0.0
          %8020 = vmatpush1.msra.mxu0 0.0
          %8021 = vmatprep.subr.mxu0 0.0
          %8022 = vmatpush1.msra.mxu0 0.0
          %8023 = vmatprep.subr.mxu0 0.0
          %8024 = vmatpush1.msra.mxu0 0.0
          %8025 = vmatprep.subr.mxu0 0.0
          %8026 = vmatpush1.msra.mxu0 0.0
          %8027 = vmatprep.mubr.f32.mxu0 0.0
          %v8028 = vand.u32 %v7530, 4294901760
          %8029 = vmatmul.mubr.f32.gmra.mrb[0].mxu0 %v8028
          %v8030 = vpop.f32.mrb[0].mxu0
          %v8031 = vadd.f32 %v7952, %v8030
          %v8032 = vpop.f32.mrb[0].mxu0
          %8033 = vmatprep.mubr.f32.mxu0 0.0
          %v8034 = vand.u32 %v7533, 4294901760
          %8035 = vmatmul.mubr.f32.gmra.mrb[0].mxu0 %v8034
          %v8036 = vpop.f32.mrb[0].mxu0
          %v8037 = vadd.f32 %v7958, %v8036
          %v8038 = vpop.f32.mrb[0].mxu0
          %8039 = vdwg.mxu0
          %v8040 = vmax.f32 %v6926, %v8031
          %v8041 = vmax.f32 %v6927, %v8037
          %s8042 = sadd.s32 112, %s236
          %s8043 = scalar_lea.vmem %s185, %s8042 [#allocation8]
          %v8044 = vld [vmem:[%s8043] sm:$0xff]
          %v8045 = vld [vmem:[%s8043 + $0x8] sm:$0xff]
          %8048 = vrot.lane.b32.xlu0 %v8044, 2
          %v8049 = vpop.permute.xlu0 %8048
          %8050 = vrot.lane.b32.xlu0 %v8045, 2
          %v8051 = vpop.permute.xlu0 %8050
          %8054 = vst.msk [vmem:[#allocation2 + $0x2] sm:$0xff] %vm248, %v8049
          %8055 = vst.msk [vmem:[#allocation2 + $0xa] sm:$0xff] %vm248, %v8051
          %v8056 = vld [vmem:[#allocation2] sm:$0xff]
          %v8057 = vld [vmem:[#allocation2 + $0x8] sm:$0xff]
          %v8058 = vld [vmem:[#allocation2 + $0x10] sm:$0x7]
          %v8059 = vld [vmem:[#allocation2 + $0x1] sm:$0xff]
          %v8060 = vld [vmem:[#allocation2 + $0x9] sm:$0xff]
          %v8061 = vld [vmem:[#allocation2 + $0x11] sm:$0x7]
          %v8062 = vmax.f32 %v8056, %v8059
          %v8063 = vmax.f32 %v8057, %v8060
          %v8064 = vmax.f32 %v8058, %v8061
          %8065 = vst.msk [vmem:[#allocation3] sm:$0xff] %vm225, %v8062
          %8066 = vst.msk [vmem:[#allocation3 + $0x8] sm:$0xff] %vm225, %v8063
          %8067 = vst.msk [vmem:[#allocation3 + $0x10] sm:$0x7] %vm262, %v8064
          %v8068 = vld [vmem:[#allocation3] sm:$0xff]
          %v8069 = vld [vmem:[#allocation3 + $0x8] sm:$0xff]
          %v8070 = vld [vmem:[#allocation3 + $0x10] sm:$0x1]
          %v8071 = vld [vmem:[#allocation3 + $0x2] sm:$0xff]
          %v8072 = vld [vmem:[#allocation3 + $0xa] sm:$0xff]
          %v8073 = vld [vmem:[#allocation3 + $0x12] sm:$0x1]
          %v8074 = vmax.f32 %v8068, %v8071
          %v8075 = vmax.f32 %v8069, %v8072
          %v8076 = vmax.f32 %v8070, %v8073
          %8077 = vst.msk [vmem:[#allocation4] sm:$0xff] %vm225, %v8074
          %8078 = vst.msk [vmem:[#allocation4 + $0x8] sm:$0xff] %vm225, %v8075
          %8079 = vst.msk [vmem:[#allocation4 + $0x10] sm:$0x1] %vm275, %v8076
          %v8080 = vld [vmem:[#allocation4] sm:$0xff]
          %v8081 = vld [vmem:[#allocation4 + $0x8] sm:$0x3f]
          %v8082 = vld [vmem:[#allocation4 + $0x3] sm:$0xff]
          %v8083 = vld [vmem:[#allocation4 + $0xb] sm:$0x3f]
          %v8084 = vmax.f32 %v8080, %v8082
          %v8085 = vmax.f32 %v8081, %v8083
          %8086 = vst.msk [vmem:[#allocation5] sm:$0xff] %vm225, %v8084
          %8087 = vst.msk [vmem:[#allocation5 + $0x8] sm:$0x3f] %vm284, %v8085
          %v8088 = vld [vmem:[#allocation5] sm:$0xff]
          %v8089 = vld [vmem:[#allocation5 + $0x8] sm:$0x3f]
          %8092 = vrot.lane.b32.xlu0 %v8088, 127
          %v8093 = vpop.permute.xlu0 %8092
          %8094 = vrot.lane.b32.xlu0 %v8089, 127
          %v8095 = vpop.permute.xlu0 %8094
          %v8098 = vmax.f32 %v8088, %v8093
          %v8099 = vmax.f32 %v8089, %v8095
          %8100 = vst.msk [vmem:[#allocation6] sm:$0xff] %vm298, %v8098
          %8101 = vst.msk [vmem:[#allocation6 + $0x8] sm:$0x3f] %vm300, %v8099
          %v8102 = vld [vmem:[#allocation6] sm:$0xff]
          %v8103 = vld [vmem:[#allocation6 + $0x8] sm:$0x3f]
          %8106 = vrot.lane.b32.xlu0 %v8102, 126
          %v8107 = vpop.permute.xlu0 %8106
          %8108 = vrot.lane.b32.xlu0 %v8103, 126
          %v8109 = vpop.permute.xlu0 %8108
          %v8112 = vmax.f32 %v8102, %v8107
          %v8113 = vmax.f32 %v8103, %v8109
          %8114 = vst.msk [vmem:[#allocation7] sm:$0xff] %vm314, %v8112
          %8115 = vst.msk [vmem:[#allocation7 + $0x8] sm:$0x3f] %vm316, %v8113
          %v8116 = vld [vmem:[#allocation7] sm:$0xff]
          %v8117 = vld [vmem:[#allocation7 + $0x8] sm:$0x3f]
          %8120 = vrot.lane.b32.xlu0 %v8116, 125
          %v8121 = vpop.permute.xlu0 %8120
          %8122 = vrot.lane.b32.xlu0 %v8117, 125
          %v8123 = vpop.permute.xlu0 %8122
          %v8126 = vmax.f32 %v8116, %v8121
          %v8127 = vmax.f32 %v8117, %v8123
          %v8128 = vld [vmem:[#allocation10] sm:$0xff]
          %v8129 = vld [vmem:[#allocation10 + $0x8] sm:$0x3f]
          %v8131 = vsel %vm332, %v8128, 0
          %v8134 = vsel %vm332, %v8129, 0
          %v8137 = vsel %vm339, %v8127, 0
          %8139 = vmatprep.subr.mxu0 0.0
          %v8140 = vand.u32 %v8126, 4294901760
          %8141 = vmatpush1.msra.mxu0 %v8140
          %8142 = vmatprep.subr.mxu0 0.0
          %v8143 = vand.u32 %v8137, 4294901760
          %8144 = vmatpush1.msra.mxu0 %v8143
          %8145 = vmatprep.subr.mxu0 0.0
          %8146 = vmatpush1.msra.mxu0 0.0
          %8147 = vmatprep.subr.mxu0 0.0
          %8148 = vmatpush1.msra.mxu0 0.0
          %8149 = vmatprep.subr.mxu0 0.0
          %8150 = vmatpush1.msra.mxu0 0.0
          %8151 = vmatprep.subr.mxu0 0.0
          %8152 = vmatpush1.msra.mxu0 0.0
          %8153 = vmatprep.subr.mxu0 0.0
          %8154 = vmatpush1.msra.mxu0 0.0
          %8155 = vmatprep.subr.mxu0 0.0
          %8156 = vmatpush1.msra.mxu0 0.0
          %8157 = vmatprep.subr.mxu0 0.0
          %8158 = vmatpush1.msra.mxu0 0.0
          %8159 = vmatprep.subr.mxu0 0.0
          %8160 = vmatpush1.msra.mxu0 0.0
          %8161 = vmatprep.subr.mxu0 0.0
          %8162 = vmatpush1.msra.mxu0 0.0
          %8163 = vmatprep.subr.mxu0 0.0
          %8164 = vmatpush1.msra.mxu0 0.0
          %8165 = vmatprep.subr.mxu0 0.0
          %8166 = vmatpush1.msra.mxu0 0.0
          %8167 = vmatprep.subr.mxu0 0.0
          %8168 = vmatpush1.msra.mxu0 0.0
          %8169 = vmatprep.subr.mxu0 0.0
          %8170 = vmatpush1.msra.mxu0 0.0
          %8171 = vmatprep.subr.mxu0 0.0
          %8172 = vmatpush1.msra.mxu0 0.0
          %8173 = vmatprep.subr.mxu0 0.0
          %8174 = vmatpush1.msra.mxu0 0.0
          %8175 = vmatprep.subr.mxu0 0.0
          %8176 = vmatpush1.msra.mxu0 0.0
          %8177 = vmatprep.subr.mxu0 0.0
          %8178 = vmatpush1.msra.mxu0 0.0
          %8179 = vmatprep.subr.mxu0 0.0
          %8180 = vmatpush1.msra.mxu0 0.0
          %8181 = vmatprep.subr.mxu0 0.0
          %8182 = vmatpush1.msra.mxu0 0.0
          %8183 = vmatprep.subr.mxu0 0.0
          %8184 = vmatpush1.msra.mxu0 0.0
          %8185 = vmatprep.subr.mxu0 0.0
          %8186 = vmatpush1.msra.mxu0 0.0
          %8187 = vmatprep.subr.mxu0 0.0
          %8188 = vmatpush1.msra.mxu0 0.0
          %8189 = vmatprep.subr.mxu0 0.0
          %8190 = vmatpush1.msra.mxu0 0.0
          %8191 = vmatprep.subr.mxu0 0.0
          %8192 = vmatpush1.msra.mxu0 0.0
          %8193 = vmatprep.subr.mxu0 0.0
          %8194 = vmatpush1.msra.mxu0 0.0
          %8195 = vmatprep.subr.mxu0 0.0
          %8196 = vmatpush1.msra.mxu0 0.0
          %8197 = vmatprep.subr.mxu0 0.0
          %8198 = vmatpush1.msra.mxu0 0.0
          %8199 = vmatprep.subr.mxu0 0.0
          %8200 = vmatpush1.msra.mxu0 0.0
          %8201 = vmatprep.subr.mxu0 0.0
          %8202 = vmatpush1.msra.mxu0 0.0
          %8203 = vmatprep.subr.mxu0 0.0
          %8204 = vmatpush1.msra.mxu0 0.0
          %8205 = vmatprep.mubr.f32.mxu0 0.0
          %v8206 = vand.u32 %v8131, 4294901760
          %v8207 = vsub.f32 %v8131, %v8206
          %v8208 = vand.u32 %v8207, 4294901760
          %v8209 = vsub.f32 %v8207, %v8208
          %v8210 = vand.u32 %v8209, 4294901760
          %8211 = vmatmul.mubr.f32.gmra.mrb[0].mxu0 %v8210
          %v8212 = vpop.f32.mrb[0].mxu0
          %v8213 = vadd.f32 0.0, %v8212
          %v8214 = vpop.f32.mrb[0].mxu0
          %8215 = vmatprep.mubr.f32.mxu0 0.0
          %v8216 = vand.u32 %v8134, 4294901760
          %v8217 = vsub.f32 %v8134, %v8216
          %v8218 = vand.u32 %v8217, 4294901760
          %v8219 = vsub.f32 %v8217, %v8218
          %v8220 = vand.u32 %v8219, 4294901760
          %8221 = vmatmul.mubr.f32.gmra.mrb[0].mxu0 %v8220
          %v8222 = vpop.f32.mrb[0].mxu0
          %v8223 = vadd.f32 0.0, %v8222
          %v8224 = vpop.f32.mrb[0].mxu0
          %8225 = vdwg.mxu0
          %8226 = vmatprep.subr.mxu0 0.0
          %v8227 = vand.u32 %v8126, 4294901760
          %v8228 = vsub.f32 %v8126, %v8227
          %v8229 = vand.u32 %v8228, 4294901760
          %v8230 = vsub.f32 %v8228, %v8229
          %v8231 = vand.u32 %v8230, 4294901760
          %8232 = vmatpush1.msra.mxu0 %v8231
          %8233 = vmatprep.subr.mxu0 0.0
          %v8234 = vand.u32 %v8137, 4294901760
          %v8235 = vsub.f32 %v8137, %v8234
          %v8236 = vand.u32 %v8235, 4294901760
          %v8237 = vsub.f32 %v8235, %v8236
          %v8238 = vand.u32 %v8237, 4294901760
          %8239 = vmatpush1.msra.mxu0 %v8238
          %8240 = vmatprep.subr.mxu0 0.0
          %8241 = vmatpush1.msra.mxu0 0.0
          %8242 = vmatprep.subr.mxu0 0.0
          %8243 = vmatpush1.msra.mxu0 0.0
          %8244 = vmatprep.subr.mxu0 0.0
          %8245 = vmatpush1.msra.mxu0 0.0
          %8246 = vmatprep.subr.mxu0 0.0
          %8247 = vmatpush1.msra.mxu0 0.0
          %8248 = vmatprep.subr.mxu0 0.0
          %8249 = vmatpush1.msra.mxu0 0.0
          %8250 = vmatprep.subr.mxu0 0.0
          %8251 = vmatpush1.msra.mxu0 0.0
          %8252 = vmatprep.subr.mxu0 0.0
          %8253 = vmatpush1.msra.mxu0 0.0
          %8254 = vmatprep.subr.mxu0 0.0
          %8255 = vmatpush1.msra.mxu0 0.0
          %8256 = vmatprep.subr.mxu0 0.0
          %8257 = vmatpush1.msra.mxu0 0.0
          %8258 = vmatprep.subr.mxu0 0.0
          %8259 = vmatpush1.msra.mxu0 0.0
          %8260 = vmatprep.subr.mxu0 0.0
          %8261 = vmatpush1.msra.mxu0 0.0
          %8262 = vmatprep.subr.mxu0 0.0
          %8263 = vmatpush1.msra.mxu0 0.0
          %8264 = vmatprep.subr.mxu0 0.0
          %8265 = vmatpush1.msra.mxu0 0.0
          %8266 = vmatprep.subr.mxu0 0.0
          %8267 = vmatpush1.msra.mxu0 0.0
          %8268 = vmatprep.subr.mxu0 0.0
          %8269 = vmatpush1.msra.mxu0 0.0
          %8270 = vmatprep.subr.mxu0 0.0
          %8271 = vmatpush1.msra.mxu0 0.0
          %8272 = vmatprep.subr.mxu0 0.0
          %8273 = vmatpush1.msra.mxu0 0.0
          %8274 = vmatprep.subr.mxu0 0.0
          %8275 = vmatpush1.msra.mxu0 0.0
          %8276 = vmatprep.subr.mxu0 0.0
          %8277 = vmatpush1.msra.mxu0 0.0
          %8278 = vmatprep.subr.mxu0 0.0
          %8279 = vmatpush1.msra.mxu0 0.0
          %8280 = vmatprep.subr.mxu0 0.0
          %8281 = vmatpush1.msra.mxu0 0.0
          %8282 = vmatprep.subr.mxu0 0.0
          %8283 = vmatpush1.msra.mxu0 0.0
          %8284 = vmatprep.subr.mxu0 0.0
          %8285 = vmatpush1.msra.mxu0 0.0
          %8286 = vmatprep.subr.mxu0 0.0
          %8287 = vmatpush1.msra.mxu0 0.0
          %8288 = vmatprep.subr.mxu0 0.0
          %8289 = vmatpush1.msra.mxu0 0.0
          %8290 = vmatprep.subr.mxu0 0.0
          %8291 = vmatpush1.msra.mxu0 0.0
          %8292 = vmatprep.subr.mxu0 0.0
          %8293 = vmatpush1.msra.mxu0 0.0
          %8294 = vmatprep.subr.mxu0 0.0
          %8295 = vmatpush1.msra.mxu0 0.0
          %8296 = vmatprep.subr.mxu0 0.0
          %8297 = vmatpush1.msra.mxu0 0.0
          %8298 = vmatprep.subr.mxu0 0.0
          %8299 = vmatpush1.msra.mxu0 0.0
          %8300 = vmatprep.mubr.f32.mxu0 0.0
          %v8301 = vand.u32 %v8131, 4294901760
          %8302 = vmatmul.mubr.f32.gmra.mrb[0].mxu0 %v8301
          %v8303 = vpop.f32.mrb[0].mxu0
          %v8304 = vadd.f32 %v8213, %v8303
          %v8305 = vpop.f32.mrb[0].mxu0
          %8306 = vmatprep.mubr.f32.mxu0 0.0
          %v8307 = vand.u32 %v8134, 4294901760
          %8308 = vmatmul.mubr.f32.gmra.mrb[0].mxu0 %v8307
          %v8309 = vpop.f32.mrb[0].mxu0
          %v8310 = vadd.f32 %v8223, %v8309
          %v8311 = vpop.f32.mrb[0].mxu0
          %8312 = vdwg.mxu0
          %8313 = vmatprep.subr.mxu0 0.0
          %v8314 = vand.u32 %v8126, 4294901760
          %v8315 = vsub.f32 %v8126, %v8314
          %8316 = vmatpush1.msra.mxu0 %v8315
          %8317 = vmatprep.subr.mxu0 0.0
          %v8318 = vand.u32 %v8137, 4294901760
          %v8319 = vsub.f32 %v8137, %v8318
          %8320 = vmatpush1.msra.mxu0 %v8319
          %8321 = vmatprep.subr.mxu0 0.0
          %8322 = vmatpush1.msra.mxu0 0.0
          %8323 = vmatprep.subr.mxu0 0.0
          %8324 = vmatpush1.msra.mxu0 0.0
          %8325 = vmatprep.subr.mxu0 0.0
          %8326 = vmatpush1.msra.mxu0 0.0
          %8327 = vmatprep.subr.mxu0 0.0
          %8328 = vmatpush1.msra.mxu0 0.0
          %8329 = vmatprep.subr.mxu0 0.0
          %8330 = vmatpush1.msra.mxu0 0.0
          %8331 = vmatprep.subr.mxu0 0.0
          %8332 = vmatpush1.msra.mxu0 0.0
          %8333 = vmatprep.subr.mxu0 0.0
          %8334 = vmatpush1.msra.mxu0 0.0
          %8335 = vmatprep.subr.mxu0 0.0
          %8336 = vmatpush1.msra.mxu0 0.0
          %8337 = vmatprep.subr.mxu0 0.0
          %8338 = vmatpush1.msra.mxu0 0.0
          %8339 = vmatprep.subr.mxu0 0.0
          %8340 = vmatpush1.msra.mxu0 0.0
          %8341 = vmatprep.subr.mxu0 0.0
          %8342 = vmatpush1.msra.mxu0 0.0
          %8343 = vmatprep.subr.mxu0 0.0
          %8344 = vmatpush1.msra.mxu0 0.0
          %8345 = vmatprep.subr.mxu0 0.0
          %8346 = vmatpush1.msra.mxu0 0.0
          %8347 = vmatprep.subr.mxu0 0.0
          %8348 = vmatpush1.msra.mxu0 0.0
          %8349 = vmatprep.subr.mxu0 0.0
          %8350 = vmatpush1.msra.mxu0 0.0
          %8351 = vmatprep.subr.mxu0 0.0
          %8352 = vmatpush1.msra.mxu0 0.0
          %8353 = vmatprep.subr.mxu0 0.0
          %8354 = vmatpush1.msra.mxu0 0.0
          %8355 = vmatprep.subr.mxu0 0.0
          %8356 = vmatpush1.msra.mxu0 0.0
          %8357 = vmatprep.subr.mxu0 0.0
          %8358 = vmatpush1.msra.mxu0 0.0
          %8359 = vmatprep.subr.mxu0 0.0
          %8360 = vmatpush1.msra.mxu0 0.0
          %8361 = vmatprep.subr.mxu0 0.0
          %8362 = vmatpush1.msra.mxu0 0.0
          %8363 = vmatprep.subr.mxu0 0.0
          %8364 = vmatpush1.msra.mxu0 0.0
          %8365 = vmatprep.subr.mxu0 0.0
          %8366 = vmatpush1.msra.mxu0 0.0
          %8367 = vmatprep.subr.mxu0 0.0
          %8368 = vmatpush1.msra.mxu0 0.0
          %8369 = vmatprep.subr.mxu0 0.0
          %8370 = vmatpush1.msra.mxu0 0.0
          %8371 = vmatprep.subr.mxu0 0.0
          %8372 = vmatpush1.msra.mxu0 0.0
          %8373 = vmatprep.subr.mxu0 0.0
          %8374 = vmatpush1.msra.mxu0 0.0
          %8375 = vmatprep.subr.mxu0 0.0
          %8376 = vmatpush1.msra.mxu0 0.0
          %8377 = vmatprep.subr.mxu0 0.0
          %8378 = vmatpush1.msra.mxu0 0.0
          %8379 = vmatprep.subr.mxu0 0.0
          %8380 = vmatpush1.msra.mxu0 0.0
          %8381 = vmatprep.mubr.f32.mxu0 0.0
          %v8382 = vand.u32 %v8131, 4294901760
          %v8383 = vsub.f32 %v8131, %v8382
          %8384 = vmatmul.mubr.f32.gmra.mrb[0].mxu0 %v8383
          %v8385 = vpop.f32.mrb[0].mxu0
          %v8386 = vadd.f32 %v8304, %v8385
          %v8387 = vpop.f32.mrb[0].mxu0
          %8388 = vmatprep.mubr.f32.mxu0 0.0
          %v8389 = vand.u32 %v8134, 4294901760
          %v8390 = vsub.f32 %v8134, %v8389
          %8391 = vmatmul.mubr.f32.gmra.mrb[0].mxu0 %v8390
          %v8392 = vpop.f32.mrb[0].mxu0
          %v8393 = vadd.f32 %v8310, %v8392
          %v8394 = vpop.f32.mrb[0].mxu0
          %8395 = vdwg.mxu0
          %8396 = vmatprep.subr.mxu0 0.0
          %v8397 = vand.u32 %v8126, 4294901760
          %8398 = vmatpush1.msra.mxu0 %v8397
          %8399 = vmatprep.subr.mxu0 0.0
          %v8400 = vand.u32 %v8137, 4294901760
          %8401 = vmatpush1.msra.mxu0 %v8400
          %8402 = vmatprep.subr.mxu0 0.0
          %8403 = vmatpush1.msra.mxu0 0.0
          %8404 = vmatprep.subr.mxu0 0.0
          %8405 = vmatpush1.msra.mxu0 0.0
          %8406 = vmatprep.subr.mxu0 0.0
          %8407 = vmatpush1.msra.mxu0 0.0
          %8408 = vmatprep.subr.mxu0 0.0
          %8409 = vmatpush1.msra.mxu0 0.0
          %8410 = vmatprep.subr.mxu0 0.0
          %8411 = vmatpush1.msra.mxu0 0.0
          %8412 = vmatprep.subr.mxu0 0.0
          %8413 = vmatpush1.msra.mxu0 0.0
          %8414 = vmatprep.subr.mxu0 0.0
          %8415 = vmatpush1.msra.mxu0 0.0
          %8416 = vmatprep.subr.mxu0 0.0
          %8417 = vmatpush1.msra.mxu0 0.0
          %8418 = vmatprep.subr.mxu0 0.0
          %8419 = vmatpush1.msra.mxu0 0.0
          %8420 = vmatprep.subr.mxu0 0.0
          %8421 = vmatpush1.msra.mxu0 0.0
          %8422 = vmatprep.subr.mxu0 0.0
          %8423 = vmatpush1.msra.mxu0 0.0
          %8424 = vmatprep.subr.mxu0 0.0
          %8425 = vmatpush1.msra.mxu0 0.0
          %8426 = vmatprep.subr.mxu0 0.0
          %8427 = vmatpush1.msra.mxu0 0.0
          %8428 = vmatprep.subr.mxu0 0.0
          %8429 = vmatpush1.msra.mxu0 0.0
          %8430 = vmatprep.subr.mxu0 0.0
          %8431 = vmatpush1.msra.mxu0 0.0
          %8432 = vmatprep.subr.mxu0 0.0
          %8433 = vmatpush1.msra.mxu0 0.0
          %8434 = vmatprep.subr.mxu0 0.0
          %8435 = vmatpush1.msra.mxu0 0.0
          %8436 = vmatprep.subr.mxu0 0.0
          %8437 = vmatpush1.msra.mxu0 0.0
          %8438 = vmatprep.subr.mxu0 0.0
          %8439 = vmatpush1.msra.mxu0 0.0
          %8440 = vmatprep.subr.mxu0 0.0
          %8441 = vmatpush1.msra.mxu0 0.0
          %8442 = vmatprep.subr.mxu0 0.0
          %8443 = vmatpush1.msra.mxu0 0.0
          %8444 = vmatprep.subr.mxu0 0.0
          %8445 = vmatpush1.msra.mxu0 0.0
          %8446 = vmatprep.subr.mxu0 0.0
          %8447 = vmatpush1.msra.mxu0 0.0
          %8448 = vmatprep.subr.mxu0 0.0
          %8449 = vmatpush1.msra.mxu0 0.0
          %8450 = vmatprep.subr.mxu0 0.0
          %8451 = vmatpush1.msra.mxu0 0.0
          %8452 = vmatprep.subr.mxu0 0.0
          %8453 = vmatpush1.msra.mxu0 0.0
          %8454 = vmatprep.subr.mxu0 0.0
          %8455 = vmatpush1.msra.mxu0 0.0
          %8456 = vmatprep.subr.mxu0 0.0
          %8457 = vmatpush1.msra.mxu0 0.0
          %8458 = vmatprep.subr.mxu0 0.0
          %8459 = vmatpush1.msra.mxu0 0.0
          %8460 = vmatprep.subr.mxu0 0.0
          %8461 = vmatpush1.msra.mxu0 0.0
          %8462 = vmatprep.mubr.f32.mxu0 0.0
          %v8463 = vand.u32 %v8131, 4294901760
          %v8464 = vsub.f32 %v8131, %v8463
          %v8465 = vand.u32 %v8464, 4294901760
          %8466 = vmatmul.mubr.f32.gmra.mrb[0].mxu0 %v8465
          %v8467 = vpop.f32.mrb[0].mxu0
          %v8468 = vadd.f32 %v8386, %v8467
          %v8469 = vpop.f32.mrb[0].mxu0
          %8470 = vmatprep.mubr.f32.mxu0 0.0
          %v8471 = vand.u32 %v8134, 4294901760
          %v8472 = vsub.f32 %v8134, %v8471
          %v8473 = vand.u32 %v8472, 4294901760
          %8474 = vmatmul.mubr.f32.gmra.mrb[0].mxu0 %v8473
          %v8475 = vpop.f32.mrb[0].mxu0
          %v8476 = vadd.f32 %v8393, %v8475
          %v8477 = vpop.f32.mrb[0].mxu0
          %8478 = vdwg.mxu0
          %8479 = vmatprep.subr.mxu0 0.0
          %v8480 = vand.u32 %v8126, 4294901760
          %v8481 = vsub.f32 %v8126, %v8480
          %v8482 = vand.u32 %v8481, 4294901760
          %8483 = vmatpush1.msra.mxu0 %v8482
          %8484 = vmatprep.subr.mxu0 0.0
          %v8485 = vand.u32 %v8137, 4294901760
          %v8486 = vsub.f32 %v8137, %v8485
          %v8487 = vand.u32 %v8486, 4294901760
          %8488 = vmatpush1.msra.mxu0 %v8487
          %8489 = vmatprep.subr.mxu0 0.0
          %8490 = vmatpush1.msra.mxu0 0.0
          %8491 = vmatprep.subr.mxu0 0.0
          %8492 = vmatpush1.msra.mxu0 0.0
          %8493 = vmatprep.subr.mxu0 0.0
          %8494 = vmatpush1.msra.mxu0 0.0
          %8495 = vmatprep.subr.mxu0 0.0
          %8496 = vmatpush1.msra.mxu0 0.0
          %8497 = vmatprep.subr.mxu0 0.0
          %8498 = vmatpush1.msra.mxu0 0.0
          %8499 = vmatprep.subr.mxu0 0.0
          %8500 = vmatpush1.msra.mxu0 0.0
          %8501 = vmatprep.subr.mxu0 0.0
          %8502 = vmatpush1.msra.mxu0 0.0
          %8503 = vmatprep.subr.mxu0 0.0
          %8504 = vmatpush1.msra.mxu0 0.0
          %8505 = vmatprep.subr.mxu0 0.0
          %8506 = vmatpush1.msra.mxu0 0.0
          %8507 = vmatprep.subr.mxu0 0.0
          %8508 = vmatpush1.msra.mxu0 0.0
          %8509 = vmatprep.subr.mxu0 0.0
          %8510 = vmatpush1.msra.mxu0 0.0
          %8511 = vmatprep.subr.mxu0 0.0
          %8512 = vmatpush1.msra.mxu0 0.0
          %8513 = vmatprep.subr.mxu0 0.0
          %8514 = vmatpush1.msra.mxu0 0.0
          %8515 = vmatprep.subr.mxu0 0.0
          %8516 = vmatpush1.msra.mxu0 0.0
          %8517 = vmatprep.subr.mxu0 0.0
          %8518 = vmatpush1.msra.mxu0 0.0
          %8519 = vmatprep.subr.mxu0 0.0
          %8520 = vmatpush1.msra.mxu0 0.0
          %8521 = vmatprep.subr.mxu0 0.0
          %8522 = vmatpush1.msra.mxu0 0.0
          %8523 = vmatprep.subr.mxu0 0.0
          %8524 = vmatpush1.msra.mxu0 0.0
          %8525 = vmatprep.subr.mxu0 0.0
          %8526 = vmatpush1.msra.mxu0 0.0
          %8527 = vmatprep.subr.mxu0 0.0
          %8528 = vmatpush1.msra.mxu0 0.0
          %8529 = vmatprep.subr.mxu0 0.0
          %8530 = vmatpush1.msra.mxu0 0.0
          %8531 = vmatprep.subr.mxu0 0.0
          %8532 = vmatpush1.msra.mxu0 0.0
          %8533 = vmatprep.subr.mxu0 0.0
          %8534 = vmatpush1.msra.mxu0 0.0
          %8535 = vmatprep.subr.mxu0 0.0
          %8536 = vmatpush1.msra.mxu0 0.0
          %8537 = vmatprep.subr.mxu0 0.0
          %8538 = vmatpush1.msra.mxu0 0.0
          %8539 = vmatprep.subr.mxu0 0.0
          %8540 = vmatpush1.msra.mxu0 0.0
          %8541 = vmatprep.subr.mxu0 0.0
          %8542 = vmatpush1.msra.mxu0 0.0
          %8543 = vmatprep.subr.mxu0 0.0
          %8544 = vmatpush1.msra.mxu0 0.0
          %8545 = vmatprep.subr.mxu0 0.0
          %8546 = vmatpush1.msra.mxu0 0.0
          %8547 = vmatprep.subr.mxu0 0.0
          %8548 = vmatpush1.msra.mxu0 0.0
          %8549 = vmatprep.mubr.f32.mxu0 0.0
          %v8550 = vand.u32 %v8131, 4294901760
          %8551 = vmatmul.mubr.f32.gmra.mrb[0].mxu0 %v8550
          %v8552 = vpop.f32.mrb[0].mxu0
          %v8553 = vadd.f32 %v8468, %v8552
          %v8554 = vpop.f32.mrb[0].mxu0
          %8555 = vmatprep.mubr.f32.mxu0 0.0
          %v8556 = vand.u32 %v8134, 4294901760
          %8557 = vmatmul.mubr.f32.gmra.mrb[0].mxu0 %v8556
          %v8558 = vpop.f32.mrb[0].mxu0
          %v8559 = vadd.f32 %v8476, %v8558
          %v8560 = vpop.f32.mrb[0].mxu0
          %8561 = vdwg.mxu0
          %8562 = vmatprep.subr.mxu0 0.0
          %v8563 = vand.u32 %v8126, 4294901760
          %8564 = vmatpush1.msra.mxu0 %v8563
          %8565 = vmatprep.subr.mxu0 0.0
          %v8566 = vand.u32 %v8137, 4294901760
          %8567 = vmatpush1.msra.mxu0 %v8566
          %8568 = vmatprep.subr.mxu0 0.0
          %8569 = vmatpush1.msra.mxu0 0.0
          %8570 = vmatprep.subr.mxu0 0.0
          %8571 = vmatpush1.msra.mxu0 0.0
          %8572 = vmatprep.subr.mxu0 0.0
          %8573 = vmatpush1.msra.mxu0 0.0
          %8574 = vmatprep.subr.mxu0 0.0
          %8575 = vmatpush1.msra.mxu0 0.0
          %8576 = vmatprep.subr.mxu0 0.0
          %8577 = vmatpush1.msra.mxu0 0.0
          %8578 = vmatprep.subr.mxu0 0.0
          %8579 = vmatpush1.msra.mxu0 0.0
          %8580 = vmatprep.subr.mxu0 0.0
          %8581 = vmatpush1.msra.mxu0 0.0
          %8582 = vmatprep.subr.mxu0 0.0
          %8583 = vmatpush1.msra.mxu0 0.0
          %8584 = vmatprep.subr.mxu0 0.0
          %8585 = vmatpush1.msra.mxu0 0.0
          %8586 = vmatprep.subr.mxu0 0.0
          %8587 = vmatpush1.msra.mxu0 0.0
          %8588 = vmatprep.subr.mxu0 0.0
          %8589 = vmatpush1.msra.mxu0 0.0
          %8590 = vmatprep.subr.mxu0 0.0
          %8591 = vmatpush1.msra.mxu0 0.0
          %8592 = vmatprep.subr.mxu0 0.0
          %8593 = vmatpush1.msra.mxu0 0.0
          %8594 = vmatprep.subr.mxu0 0.0
          %8595 = vmatpush1.msra.mxu0 0.0
          %8596 = vmatprep.subr.mxu0 0.0
          %8597 = vmatpush1.msra.mxu0 0.0
          %8598 = vmatprep.subr.mxu0 0.0
          %8599 = vmatpush1.msra.mxu0 0.0
          %8600 = vmatprep.subr.mxu0 0.0
          %8601 = vmatpush1.msra.mxu0 0.0
          %8602 = vmatprep.subr.mxu0 0.0
          %8603 = vmatpush1.msra.mxu0 0.0
          %8604 = vmatprep.subr.mxu0 0.0
          %8605 = vmatpush1.msra.mxu0 0.0
          %8606 = vmatprep.subr.mxu0 0.0
          %8607 = vmatpush1.msra.mxu0 0.0
          %8608 = vmatprep.subr.mxu0 0.0
          %8609 = vmatpush1.msra.mxu0 0.0
          %8610 = vmatprep.subr.mxu0 0.0
          %8611 = vmatpush1.msra.mxu0 0.0
          %8612 = vmatprep.subr.mxu0 0.0
          %8613 = vmatpush1.msra.mxu0 0.0
          %8614 = vmatprep.subr.mxu0 0.0
          %8615 = vmatpush1.msra.mxu0 0.0
          %8616 = vmatprep.subr.mxu0 0.0
          %8617 = vmatpush1.msra.mxu0 0.0
          %8618 = vmatprep.subr.mxu0 0.0
          %8619 = vmatpush1.msra.mxu0 0.0
          %8620 = vmatprep.subr.mxu0 0.0
          %8621 = vmatpush1.msra.mxu0 0.0
          %8622 = vmatprep.subr.mxu0 0.0
          %8623 = vmatpush1.msra.mxu0 0.0
          %8624 = vmatprep.subr.mxu0 0.0
          %8625 = vmatpush1.msra.mxu0 0.0
          %8626 = vmatprep.subr.mxu0 0.0
          %8627 = vmatpush1.msra.mxu0 0.0
          %8628 = vmatprep.mubr.f32.mxu0 0.0
          %v8629 = vand.u32 %v8131, 4294901760
          %8630 = vmatmul.mubr.f32.gmra.mrb[0].mxu0 %v8629
          %v8631 = vpop.f32.mrb[0].mxu0
          %v8632 = vadd.f32 %v8553, %v8631
          %v8633 = vpop.f32.mrb[0].mxu0
          %8634 = vmatprep.mubr.f32.mxu0 0.0
          %v8635 = vand.u32 %v8134, 4294901760
          %8636 = vmatmul.mubr.f32.gmra.mrb[0].mxu0 %v8635
          %v8637 = vpop.f32.mrb[0].mxu0
          %v8638 = vadd.f32 %v8559, %v8637
          %v8639 = vpop.f32.mrb[0].mxu0
          %8640 = vdwg.mxu0
          %v8641 = vld [vmem:[#allocation12] sm:$0xff]
          %v8642 = vld [vmem:[#allocation12 + $0x8] sm:$0x3f]
          %v8644 = vsel %vm332, %v8632, 0
          %v8647 = vsel %vm332, %v8638, 0
          %v8650 = vsel %vm339, %v8642, 0
          %8652 = vmatprep.subr.mxu0 0.0
          %v8653 = vand.u32 %v8641, 4294901760
          %8654 = vmatpush1.msra.mxu0 %v8653
          %8655 = vmatprep.subr.mxu0 0.0
          %v8656 = vand.u32 %v8650, 4294901760
          %8657 = vmatpush1.msra.mxu0 %v8656
          %8658 = vmatprep.subr.mxu0 0.0
          %8659 = vmatpush1.msra.mxu0 0.0
          %8660 = vmatprep.subr.mxu0 0.0
          %8661 = vmatpush1.msra.mxu0 0.0
          %8662 = vmatprep.subr.mxu0 0.0
          %8663 = vmatpush1.msra.mxu0 0.0
          %8664 = vmatprep.subr.mxu0 0.0
          %8665 = vmatpush1.msra.mxu0 0.0
          %8666 = vmatprep.subr.mxu0 0.0
          %8667 = vmatpush1.msra.mxu0 0.0
          %8668 = vmatprep.subr.mxu0 0.0
          %8669 = vmatpush1.msra.mxu0 0.0
          %8670 = vmatprep.subr.mxu0 0.0
          %8671 = vmatpush1.msra.mxu0 0.0
          %8672 = vmatprep.subr.mxu0 0.0
          %8673 = vmatpush1.msra.mxu0 0.0
          %8674 = vmatprep.subr.mxu0 0.0
          %8675 = vmatpush1.msra.mxu0 0.0
          %8676 = vmatprep.subr.mxu0 0.0
          %8677 = vmatpush1.msra.mxu0 0.0
          %8678 = vmatprep.subr.mxu0 0.0
          %8679 = vmatpush1.msra.mxu0 0.0
          %8680 = vmatprep.subr.mxu0 0.0
          %8681 = vmatpush1.msra.mxu0 0.0
          %8682 = vmatprep.subr.mxu0 0.0
          %8683 = vmatpush1.msra.mxu0 0.0
          %8684 = vmatprep.subr.mxu0 0.0
          %8685 = vmatpush1.msra.mxu0 0.0
          %8686 = vmatprep.subr.mxu0 0.0
          %8687 = vmatpush1.msra.mxu0 0.0
          %8688 = vmatprep.subr.mxu0 0.0
          %8689 = vmatpush1.msra.mxu0 0.0
          %8690 = vmatprep.subr.mxu0 0.0
          %8691 = vmatpush1.msra.mxu0 0.0
          %8692 = vmatprep.subr.mxu0 0.0
          %8693 = vmatpush1.msra.mxu0 0.0
          %8694 = vmatprep.subr.mxu0 0.0
          %8695 = vmatpush1.msra.mxu0 0.0
          %8696 = vmatprep.subr.mxu0 0.0
          %8697 = vmatpush1.msra.mxu0 0.0
          %8698 = vmatprep.subr.mxu0 0.0
          %8699 = vmatpush1.msra.mxu0 0.0
          %8700 = vmatprep.subr.mxu0 0.0
          %8701 = vmatpush1.msra.mxu0 0.0
          %8702 = vmatprep.subr.mxu0 0.0
          %8703 = vmatpush1.msra.mxu0 0.0
          %8704 = vmatprep.subr.mxu0 0.0
          %8705 = vmatpush1.msra.mxu0 0.0
          %8706 = vmatprep.subr.mxu0 0.0
          %8707 = vmatpush1.msra.mxu0 0.0
          %8708 = vmatprep.subr.mxu0 0.0
          %8709 = vmatpush1.msra.mxu0 0.0
          %8710 = vmatprep.subr.mxu0 0.0
          %8711 = vmatpush1.msra.mxu0 0.0
          %8712 = vmatprep.subr.mxu0 0.0
          %8713 = vmatpush1.msra.mxu0 0.0
          %8714 = vmatprep.subr.mxu0 0.0
          %8715 = vmatpush1.msra.mxu0 0.0
          %8716 = vmatprep.subr.mxu0 0.0
          %8717 = vmatpush1.msra.mxu0 0.0
          %8718 = vmatprep.mubr.f32.mxu0 0.0
          %v8719 = vand.u32 %v8644, 4294901760
          %v8720 = vsub.f32 %v8644, %v8719
          %v8721 = vand.u32 %v8720, 4294901760
          %v8722 = vsub.f32 %v8720, %v8721
          %v8723 = vand.u32 %v8722, 4294901760
          %8724 = vmatmul.mubr.f32.gmra.mrb[0].mxu0 %v8723
          %v8725 = vpop.f32.mrb[0].mxu0
          %v8726 = vadd.f32 0.0, %v8725
          %v8727 = vpop.f32.mrb[0].mxu0
          %8728 = vmatprep.mubr.f32.mxu0 0.0
          %v8729 = vand.u32 %v8647, 4294901760
          %v8730 = vsub.f32 %v8647, %v8729
          %v8731 = vand.u32 %v8730, 4294901760
          %v8732 = vsub.f32 %v8730, %v8731
          %v8733 = vand.u32 %v8732, 4294901760
          %8734 = vmatmul.mubr.f32.gmra.mrb[0].mxu0 %v8733
          %v8735 = vpop.f32.mrb[0].mxu0
          %v8736 = vadd.f32 0.0, %v8735
          %v8737 = vpop.f32.mrb[0].mxu0
          %8738 = vdwg.mxu0
          %8739 = vmatprep.subr.mxu0 0.0
          %v8740 = vand.u32 %v8641, 4294901760
          %v8741 = vsub.f32 %v8641, %v8740
          %v8742 = vand.u32 %v8741, 4294901760
          %v8743 = vsub.f32 %v8741, %v8742
          %v8744 = vand.u32 %v8743, 4294901760
          %8745 = vmatpush1.msra.mxu0 %v8744
          %8746 = vmatprep.subr.mxu0 0.0
          %v8747 = vand.u32 %v8650, 4294901760
          %v8748 = vsub.f32 %v8650, %v8747
          %v8749 = vand.u32 %v8748, 4294901760
          %v8750 = vsub.f32 %v8748, %v8749
          %v8751 = vand.u32 %v8750, 4294901760
          %8752 = vmatpush1.msra.mxu0 %v8751
          %8753 = vmatprep.subr.mxu0 0.0
          %8754 = vmatpush1.msra.mxu0 0.0
          %8755 = vmatprep.subr.mxu0 0.0
          %8756 = vmatpush1.msra.mxu0 0.0
          %8757 = vmatprep.subr.mxu0 0.0
          %8758 = vmatpush1.msra.mxu0 0.0
          %8759 = vmatprep.subr.mxu0 0.0
          %8760 = vmatpush1.msra.mxu0 0.0
          %8761 = vmatprep.subr.mxu0 0.0
          %8762 = vmatpush1.msra.mxu0 0.0
          %8763 = vmatprep.subr.mxu0 0.0
          %8764 = vmatpush1.msra.mxu0 0.0
          %8765 = vmatprep.subr.mxu0 0.0
          %8766 = vmatpush1.msra.mxu0 0.0
          %8767 = vmatprep.subr.mxu0 0.0
          %8768 = vmatpush1.msra.mxu0 0.0
          %8769 = vmatprep.subr.mxu0 0.0
          %8770 = vmatpush1.msra.mxu0 0.0
          %8771 = vmatprep.subr.mxu0 0.0
          %8772 = vmatpush1.msra.mxu0 0.0
          %8773 = vmatprep.subr.mxu0 0.0
          %8774 = vmatpush1.msra.mxu0 0.0
          %8775 = vmatprep.subr.mxu0 0.0
          %8776 = vmatpush1.msra.mxu0 0.0
          %8777 = vmatprep.subr.mxu0 0.0
          %8778 = vmatpush1.msra.mxu0 0.0
          %8779 = vmatprep.subr.mxu0 0.0
          %8780 = vmatpush1.msra.mxu0 0.0
          %8781 = vmatprep.subr.mxu0 0.0
          %8782 = vmatpush1.msra.mxu0 0.0
          %8783 = vmatprep.subr.mxu0 0.0
          %8784 = vmatpush1.msra.mxu0 0.0
          %8785 = vmatprep.subr.mxu0 0.0
          %8786 = vmatpush1.msra.mxu0 0.0
          %8787 = vmatprep.subr.mxu0 0.0
          %8788 = vmatpush1.msra.mxu0 0.0
          %8789 = vmatprep.subr.mxu0 0.0
          %8790 = vmatpush1.msra.mxu0 0.0
          %8791 = vmatprep.subr.mxu0 0.0
          %8792 = vmatpush1.msra.mxu0 0.0
          %8793 = vmatprep.subr.mxu0 0.0
          %8794 = vmatpush1.msra.mxu0 0.0
          %8795 = vmatprep.subr.mxu0 0.0
          %8796 = vmatpush1.msra.mxu0 0.0
          %8797 = vmatprep.subr.mxu0 0.0
          %8798 = vmatpush1.msra.mxu0 0.0
          %8799 = vmatprep.subr.mxu0 0.0
          %8800 = vmatpush1.msra.mxu0 0.0
          %8801 = vmatprep.subr.mxu0 0.0
          %8802 = vmatpush1.msra.mxu0 0.0
          %8803 = vmatprep.subr.mxu0 0.0
          %8804 = vmatpush1.msra.mxu0 0.0
          %8805 = vmatprep.subr.mxu0 0.0
          %8806 = vmatpush1.msra.mxu0 0.0
          %8807 = vmatprep.subr.mxu0 0.0
          %8808 = vmatpush1.msra.mxu0 0.0
          %8809 = vmatprep.subr.mxu0 0.0
          %8810 = vmatpush1.msra.mxu0 0.0
          %8811 = vmatprep.subr.mxu0 0.0
          %8812 = vmatpush1.msra.mxu0 0.0
          %8813 = vmatprep.mubr.f32.mxu0 0.0
          %v8814 = vand.u32 %v8644, 4294901760
          %8815 = vmatmul.mubr.f32.gmra.mrb[0].mxu0 %v8814
          %v8816 = vpop.f32.mrb[0].mxu0
          %v8817 = vadd.f32 %v8726, %v8816
          %v8818 = vpop.f32.mrb[0].mxu0
          %8819 = vmatprep.mubr.f32.mxu0 0.0
          %v8820 = vand.u32 %v8647, 4294901760
          %8821 = vmatmul.mubr.f32.gmra.mrb[0].mxu0 %v8820
          %v8822 = vpop.f32.mrb[0].mxu0
          %v8823 = vadd.f32 %v8736, %v8822
          %v8824 = vpop.f32.mrb[0].mxu0
          %8825 = vdwg.mxu0
          %8826 = vmatprep.subr.mxu0 0.0
          %v8827 = vand.u32 %v8641, 4294901760
          %v8828 = vsub.f32 %v8641, %v8827
          %8829 = vmatpush1.msra.mxu0 %v8828
          %8830 = vmatprep.subr.mxu0 0.0
          %v8831 = vand.u32 %v8650, 4294901760
          %v8832 = vsub.f32 %v8650, %v8831
          %8833 = vmatpush1.msra.mxu0 %v8832
          %8834 = vmatprep.subr.mxu0 0.0
          %8835 = vmatpush1.msra.mxu0 0.0
          %8836 = vmatprep.subr.mxu0 0.0
          %8837 = vmatpush1.msra.mxu0 0.0
          %8838 = vmatprep.subr.mxu0 0.0
          %8839 = vmatpush1.msra.mxu0 0.0
          %8840 = vmatprep.subr.mxu0 0.0
          %8841 = vmatpush1.msra.mxu0 0.0
          %8842 = vmatprep.subr.mxu0 0.0
          %8843 = vmatpush1.msra.mxu0 0.0
          %8844 = vmatprep.subr.mxu0 0.0
          %8845 = vmatpush1.msra.mxu0 0.0
          %8846 = vmatprep.subr.mxu0 0.0
          %8847 = vmatpush1.msra.mxu0 0.0
          %8848 = vmatprep.subr.mxu0 0.0
          %8849 = vmatpush1.msra.mxu0 0.0
          %8850 = vmatprep.subr.mxu0 0.0
          %8851 = vmatpush1.msra.mxu0 0.0
          %8852 = vmatprep.subr.mxu0 0.0
          %8853 = vmatpush1.msra.mxu0 0.0
          %8854 = vmatprep.subr.mxu0 0.0
          %8855 = vmatpush1.msra.mxu0 0.0
          %8856 = vmatprep.subr.mxu0 0.0
          %8857 = vmatpush1.msra.mxu0 0.0
          %8858 = vmatprep.subr.mxu0 0.0
          %8859 = vmatpush1.msra.mxu0 0.0
          %8860 = vmatprep.subr.mxu0 0.0
          %8861 = vmatpush1.msra.mxu0 0.0
          %8862 = vmatprep.subr.mxu0 0.0
          %8863 = vmatpush1.msra.mxu0 0.0
          %8864 = vmatprep.subr.mxu0 0.0
          %8865 = vmatpush1.msra.mxu0 0.0
          %8866 = vmatprep.subr.mxu0 0.0
          %8867 = vmatpush1.msra.mxu0 0.0
          %8868 = vmatprep.subr.mxu0 0.0
          %8869 = vmatpush1.msra.mxu0 0.0
          %8870 = vmatprep.subr.mxu0 0.0
          %8871 = vmatpush1.msra.mxu0 0.0
          %8872 = vmatprep.subr.mxu0 0.0
          %8873 = vmatpush1.msra.mxu0 0.0
          %8874 = vmatprep.subr.mxu0 0.0
          %8875 = vmatpush1.msra.mxu0 0.0
          %8876 = vmatprep.subr.mxu0 0.0
          %8877 = vmatpush1.msra.mxu0 0.0
          %8878 = vmatprep.subr.mxu0 0.0
          %8879 = vmatpush1.msra.mxu0 0.0
          %8880 = vmatprep.subr.mxu0 0.0
          %8881 = vmatpush1.msra.mxu0 0.0
          %8882 = vmatprep.subr.mxu0 0.0
          %8883 = vmatpush1.msra.mxu0 0.0
          %8884 = vmatprep.subr.mxu0 0.0
          %8885 = vmatpush1.msra.mxu0 0.0
          %8886 = vmatprep.subr.mxu0 0.0
          %8887 = vmatpush1.msra.mxu0 0.0
          %8888 = vmatprep.subr.mxu0 0.0
          %8889 = vmatpush1.msra.mxu0 0.0
          %8890 = vmatprep.subr.mxu0 0.0
          %8891 = vmatpush1.msra.mxu0 0.0
          %8892 = vmatprep.subr.mxu0 0.0
          %8893 = vmatpush1.msra.mxu0 0.0
          %8894 = vmatprep.mubr.f32.mxu0 0.0
          %v8895 = vand.u32 %v8644, 4294901760
          %v8896 = vsub.f32 %v8644, %v8895
          %8897 = vmatmul.mubr.f32.gmra.mrb[0].mxu0 %v8896
          %v8898 = vpop.f32.mrb[0].mxu0
          %v8899 = vadd.f32 %v8817, %v8898
          %v8900 = vpop.f32.mrb[0].mxu0
          %8901 = vmatprep.mubr.f32.mxu0 0.0
          %v8902 = vand.u32 %v8647, 4294901760
          %v8903 = vsub.f32 %v8647, %v8902
          %8904 = vmatmul.mubr.f32.gmra.mrb[0].mxu0 %v8903
          %v8905 = vpop.f32.mrb[0].mxu0
          %v8906 = vadd.f32 %v8823, %v8905
          %v8907 = vpop.f32.mrb[0].mxu0
          %8908 = vdwg.mxu0
          %8909 = vmatprep.subr.mxu0 0.0
          %v8910 = vand.u32 %v8641, 4294901760
          %8911 = vmatpush1.msra.mxu0 %v8910
          %8912 = vmatprep.subr.mxu0 0.0
          %v8913 = vand.u32 %v8650, 4294901760
          %8914 = vmatpush1.msra.mxu0 %v8913
          %8915 = vmatprep.subr.mxu0 0.0
          %8916 = vmatpush1.msra.mxu0 0.0
          %8917 = vmatprep.subr.mxu0 0.0
          %8918 = vmatpush1.msra.mxu0 0.0
          %8919 = vmatprep.subr.mxu0 0.0
          %8920 = vmatpush1.msra.mxu0 0.0
          %8921 = vmatprep.subr.mxu0 0.0
          %8922 = vmatpush1.msra.mxu0 0.0
          %8923 = vmatprep.subr.mxu0 0.0
          %8924 = vmatpush1.msra.mxu0 0.0
          %8925 = vmatprep.subr.mxu0 0.0
          %8926 = vmatpush1.msra.mxu0 0.0
          %8927 = vmatprep.subr.mxu0 0.0
          %8928 = vmatpush1.msra.mxu0 0.0
          %8929 = vmatprep.subr.mxu0 0.0
          %8930 = vmatpush1.msra.mxu0 0.0
          %8931 = vmatprep.subr.mxu0 0.0
          %8932 = vmatpush1.msra.mxu0 0.0
          %8933 = vmatprep.subr.mxu0 0.0
          %8934 = vmatpush1.msra.mxu0 0.0
          %8935 = vmatprep.subr.mxu0 0.0
          %8936 = vmatpush1.msra.mxu0 0.0
          %8937 = vmatprep.subr.mxu0 0.0
          %8938 = vmatpush1.msra.mxu0 0.0
          %8939 = vmatprep.subr.mxu0 0.0
          %8940 = vmatpush1.msra.mxu0 0.0
          %8941 = vmatprep.subr.mxu0 0.0
          %8942 = vmatpush1.msra.mxu0 0.0
          %8943 = vmatprep.subr.mxu0 0.0
          %8944 = vmatpush1.msra.mxu0 0.0
          %8945 = vmatprep.subr.mxu0 0.0
          %8946 = vmatpush1.msra.mxu0 0.0
          %8947 = vmatprep.subr.mxu0 0.0
          %8948 = vmatpush1.msra.mxu0 0.0
          %8949 = vmatprep.subr.mxu0 0.0
          %8950 = vmatpush1.msra.mxu0 0.0
          %8951 = vmatprep.subr.mxu0 0.0
          %8952 = vmatpush1.msra.mxu0 0.0
          %8953 = vmatprep.subr.mxu0 0.0
          %8954 = vmatpush1.msra.mxu0 0.0
          %8955 = vmatprep.subr.mxu0 0.0
          %8956 = vmatpush1.msra.mxu0 0.0
          %8957 = vmatprep.subr.mxu0 0.0
          %8958 = vmatpush1.msra.mxu0 0.0
          %8959 = vmatprep.subr.mxu0 0.0
          %8960 = vmatpush1.msra.mxu0 0.0
          %8961 = vmatprep.subr.mxu0 0.0
          %8962 = vmatpush1.msra.mxu0 0.0
          %8963 = vmatprep.subr.mxu0 0.0
          %8964 = vmatpush1.msra.mxu0 0.0
          %8965 = vmatprep.subr.mxu0 0.0
          %8966 = vmatpush1.msra.mxu0 0.0
          %8967 = vmatprep.subr.mxu0 0.0
          %8968 = vmatpush1.msra.mxu0 0.0
          %8969 = vmatprep.subr.mxu0 0.0
          %8970 = vmatpush1.msra.mxu0 0.0
          %8971 = vmatprep.subr.mxu0 0.0
          %8972 = vmatpush1.msra.mxu0 0.0
          %8973 = vmatprep.subr.mxu0 0.0
          %8974 = vmatpush1.msra.mxu0 0.0
          %8975 = vmatprep.mubr.f32.mxu0 0.0
          %v8976 = vand.u32 %v8644, 4294901760
          %v8977 = vsub.f32 %v8644, %v8976
          %v8978 = vand.u32 %v8977, 4294901760
          %8979 = vmatmul.mubr.f32.gmra.mrb[0].mxu0 %v8978
          %v8980 = vpop.f32.mrb[0].mxu0
          %v8981 = vadd.f32 %v8899, %v8980
          %v8982 = vpop.f32.mrb[0].mxu0
          %8983 = vmatprep.mubr.f32.mxu0 0.0
          %v8984 = vand.u32 %v8647, 4294901760
          %v8985 = vsub.f32 %v8647, %v8984
          %v8986 = vand.u32 %v8985, 4294901760
          %8987 = vmatmul.mubr.f32.gmra.mrb[0].mxu0 %v8986
          %v8988 = vpop.f32.mrb[0].mxu0
          %v8989 = vadd.f32 %v8906, %v8988
          %v8990 = vpop.f32.mrb[0].mxu0
          %8991 = vdwg.mxu0
          %8992 = vmatprep.subr.mxu0 0.0
          %v8993 = vand.u32 %v8641, 4294901760
          %v8994 = vsub.f32 %v8641, %v8993
          %v8995 = vand.u32 %v8994, 4294901760
          %8996 = vmatpush1.msra.mxu0 %v8995
          %8997 = vmatprep.subr.mxu0 0.0
          %v8998 = vand.u32 %v8650, 4294901760
          %v8999 = vsub.f32 %v8650, %v8998
          %v9000 = vand.u32 %v8999, 4294901760
          %9001 = vmatpush1.msra.mxu0 %v9000
          %9002 = vmatprep.subr.mxu0 0.0
          %9003 = vmatpush1.msra.mxu0 0.0
          %9004 = vmatprep.subr.mxu0 0.0
          %9005 = vmatpush1.msra.mxu0 0.0
          %9006 = vmatprep.subr.mxu0 0.0
          %9007 = vmatpush1.msra.mxu0 0.0
          %9008 = vmatprep.subr.mxu0 0.0
          %9009 = vmatpush1.msra.mxu0 0.0
          %9010 = vmatprep.subr.mxu0 0.0
          %9011 = vmatpush1.msra.mxu0 0.0
          %9012 = vmatprep.subr.mxu0 0.0
          %9013 = vmatpush1.msra.mxu0 0.0
          %9014 = vmatprep.subr.mxu0 0.0
          %9015 = vmatpush1.msra.mxu0 0.0
          %9016 = vmatprep.subr.mxu0 0.0
          %9017 = vmatpush1.msra.mxu0 0.0
          %9018 = vmatprep.subr.mxu0 0.0
          %9019 = vmatpush1.msra.mxu0 0.0
          %9020 = vmatprep.subr.mxu0 0.0
          %9021 = vmatpush1.msra.mxu0 0.0
          %9022 = vmatprep.subr.mxu0 0.0
          %9023 = vmatpush1.msra.mxu0 0.0
          %9024 = vmatprep.subr.mxu0 0.0
          %9025 = vmatpush1.msra.mxu0 0.0
          %9026 = vmatprep.subr.mxu0 0.0
          %9027 = vmatpush1.msra.mxu0 0.0
          %9028 = vmatprep.subr.mxu0 0.0
          %9029 = vmatpush1.msra.mxu0 0.0
          %9030 = vmatprep.subr.mxu0 0.0
          %9031 = vmatpush1.msra.mxu0 0.0
          %9032 = vmatprep.subr.mxu0 0.0
          %9033 = vmatpush1.msra.mxu0 0.0
          %9034 = vmatprep.subr.mxu0 0.0
          %9035 = vmatpush1.msra.mxu0 0.0
          %9036 = vmatprep.subr.mxu0 0.0
          %9037 = vmatpush1.msra.mxu0 0.0
          %9038 = vmatprep.subr.mxu0 0.0
          %9039 = vmatpush1.msra.mxu0 0.0
          %9040 = vmatprep.subr.mxu0 0.0
          %9041 = vmatpush1.msra.mxu0 0.0
          %9042 = vmatprep.subr.mxu0 0.0
          %9043 = vmatpush1.msra.mxu0 0.0
          %9044 = vmatprep.subr.mxu0 0.0
          %9045 = vmatpush1.msra.mxu0 0.0
          %9046 = vmatprep.subr.mxu0 0.0
          %9047 = vmatpush1.msra.mxu0 0.0
          %9048 = vmatprep.subr.mxu0 0.0
          %9049 = vmatpush1.msra.mxu0 0.0
          %9050 = vmatprep.subr.mxu0 0.0
          %9051 = vmatpush1.msra.mxu0 0.0
          %9052 = vmatprep.subr.mxu0 0.0
          %9053 = vmatpush1.msra.mxu0 0.0
          %9054 = vmatprep.subr.mxu0 0.0
          %9055 = vmatpush1.msra.mxu0 0.0
          %9056 = vmatprep.subr.mxu0 0.0
          %9057 = vmatpush1.msra.mxu0 0.0
          %9058 = vmatprep.subr.mxu0 0.0
          %9059 = vmatpush1.msra.mxu0 0.0
          %9060 = vmatprep.subr.mxu0 0.0
          %9061 = vmatpush1.msra.mxu0 0.0
          %9062 = vmatprep.mubr.f32.mxu0 0.0
          %v9063 = vand.u32 %v8644, 4294901760
          %9064 = vmatmul.mubr.f32.gmra.mrb[0].mxu0 %v9063
          %v9065 = vpop.f32.mrb[0].mxu0
          %v9066 = vadd.f32 %v8981, %v9065
          %v9067 = vpop.f32.mrb[0].mxu0
          %9068 = vmatprep.mubr.f32.mxu0 0.0
          %v9069 = vand.u32 %v8647, 4294901760
          %9070 = vmatmul.mubr.f32.gmra.mrb[0].mxu0 %v9069
          %v9071 = vpop.f32.mrb[0].mxu0
          %v9072 = vadd.f32 %v8989, %v9071
          %v9073 = vpop.f32.mrb[0].mxu0
          %9074 = vdwg.mxu0
          %9075 = vmatprep.subr.mxu0 0.0
          %v9076 = vand.u32 %v8641, 4294901760
          %9077 = vmatpush1.msra.mxu0 %v9076
          %9078 = vmatprep.subr.mxu0 0.0
          %v9079 = vand.u32 %v8650, 4294901760
          %9080 = vmatpush1.msra.mxu0 %v9079
          %9081 = vmatprep.subr.mxu0 0.0
          %9082 = vmatpush1.msra.mxu0 0.0
          %9083 = vmatprep.subr.mxu0 0.0
          %9084 = vmatpush1.msra.mxu0 0.0
          %9085 = vmatprep.subr.mxu0 0.0
          %9086 = vmatpush1.msra.mxu0 0.0
          %9087 = vmatprep.subr.mxu0 0.0
          %9088 = vmatpush1.msra.mxu0 0.0
          %9089 = vmatprep.subr.mxu0 0.0
          %9090 = vmatpush1.msra.mxu0 0.0
          %9091 = vmatprep.subr.mxu0 0.0
          %9092 = vmatpush1.msra.mxu0 0.0
          %9093 = vmatprep.subr.mxu0 0.0
          %9094 = vmatpush1.msra.mxu0 0.0
          %9095 = vmatprep.subr.mxu0 0.0
          %9096 = vmatpush1.msra.mxu0 0.0
          %9097 = vmatprep.subr.mxu0 0.0
          %9098 = vmatpush1.msra.mxu0 0.0
          %9099 = vmatprep.subr.mxu0 0.0
          %9100 = vmatpush1.msra.mxu0 0.0
          %9101 = vmatprep.subr.mxu0 0.0
          %9102 = vmatpush1.msra.mxu0 0.0
          %9103 = vmatprep.subr.mxu0 0.0
          %9104 = vmatpush1.msra.mxu0 0.0
          %9105 = vmatprep.subr.mxu0 0.0
          %9106 = vmatpush1.msra.mxu0 0.0
          %9107 = vmatprep.subr.mxu0 0.0
          %9108 = vmatpush1.msra.mxu0 0.0
          %9109 = vmatprep.subr.mxu0 0.0
          %9110 = vmatpush1.msra.mxu0 0.0
          %9111 = vmatprep.subr.mxu0 0.0
          %9112 = vmatpush1.msra.mxu0 0.0
          %9113 = vmatprep.subr.mxu0 0.0
          %9114 = vmatpush1.msra.mxu0 0.0
          %9115 = vmatprep.subr.mxu0 0.0
          %9116 = vmatpush1.msra.mxu0 0.0
          %9117 = vmatprep.subr.mxu0 0.0
          %9118 = vmatpush1.msra.mxu0 0.0
          %9119 = vmatprep.subr.mxu0 0.0
          %9120 = vmatpush1.msra.mxu0 0.0
          %9121 = vmatprep.subr.mxu0 0.0
          %9122 = vmatpush1.msra.mxu0 0.0
          %9123 = vmatprep.subr.mxu0 0.0
          %9124 = vmatpush1.msra.mxu0 0.0
          %9125 = vmatprep.subr.mxu0 0.0
          %9126 = vmatpush1.msra.mxu0 0.0
          %9127 = vmatprep.subr.mxu0 0.0
          %9128 = vmatpush1.msra.mxu0 0.0
          %9129 = vmatprep.subr.mxu0 0.0
          %9130 = vmatpush1.msra.mxu0 0.0
          %9131 = vmatprep.subr.mxu0 0.0
          %9132 = vmatpush1.msra.mxu0 0.0
          %9133 = vmatprep.subr.mxu0 0.0
          %9134 = vmatpush1.msra.mxu0 0.0
          %9135 = vmatprep.subr.mxu0 0.0
          %9136 = vmatpush1.msra.mxu0 0.0
          %9137 = vmatprep.subr.mxu0 0.0
          %9138 = vmatpush1.msra.mxu0 0.0
          %9139 = vmatprep.subr.mxu0 0.0
          %9140 = vmatpush1.msra.mxu0 0.0
          %9141 = vmatprep.mubr.f32.mxu0 0.0
          %v9142 = vand.u32 %v8644, 4294901760
          %9143 = vmatmul.mubr.f32.gmra.mrb[0].mxu0 %v9142
          %v9144 = vpop.f32.mrb[0].mxu0
          %v9145 = vadd.f32 %v9066, %v9144
          %v9146 = vpop.f32.mrb[0].mxu0
          %9147 = vmatprep.mubr.f32.mxu0 0.0
          %v9148 = vand.u32 %v8647, 4294901760
          %9149 = vmatmul.mubr.f32.gmra.mrb[0].mxu0 %v9148
          %v9150 = vpop.f32.mrb[0].mxu0
          %v9151 = vadd.f32 %v9072, %v9150
          %v9152 = vpop.f32.mrb[0].mxu0
          %9153 = vdwg.mxu0
          %v9154 = vmax.f32 %v8040, %v9145
          %v9155 = vmax.f32 %v8041, %v9151
          %v9156 = vsel %vm332, %v9154, -inf
          %vm9157 = vcmask 111616
          %v9158 = vsel %vm9157, %v9155, -inf
          %v9159 = vmax.f32 %v9156, %v9158
          %9160 = vmax.xlane.f32.xlu0 %v9159
          %v9161 = vpop.xlane.xlu0 %9160
          %v9162 = vrot.slane %v9161, 4
          %v9163 = vmax.f32 %v9161, %v9162
          %v9164 = vrot.slane %v9163, 2
          %v9165 = vmax.f32 %v9163, %v9164
          %v9166 = vrot.slane %v9165, 1
          %v9167 = vmax.f32 %v9165, %v9166
          %s9168 = vtos %v9167
          %v9169 = vstv %s9168
          %v9170 = vrcp.pop %v9169
          %s9171 = vtos %v9170
          %v9172 = vstv %s9171
          %v9173 = vmul.f32 %v9154, %v9172
          %v9174 = vmul.f32 %v9155, %v9172
          %v9175 = vsub.f32 1.0, %v9173
          %v9176 = vsub.f32 1.0, %v9174
          %s9177 = smul.u32 %s231, 16
          %s9178 = scalar_lea.vmem %s223, %s9177
          %9179 = vst.msk [vmem:[%s9178] sm:$0xff] %vm332, %v9175
          %9180 = vst.msk [vmem:[%s9178 + $0x8] sm:$0x3f] %vm9157, %v9176
        $region49: #{tpu_custom_call.1} parent=31 // loop_footer
          %s235 = sadd.s32 1, %s231
        $region50: #{tpu_custom_call.1} parent=31 // loop_footer_branch
          %230 = sbr.rel target = $region46
        $region51: #{tpu_custom_call.1} parent=31 // loop_exit
          _
        %s9181 = smul.u32 2, %s18
        %p9182 = scmp.lt.s32.totalorder %s9181, 3
        %s9183 = scalar_select %p9182, %s9181, 3
        %s9184 = smul.addr %s9183, 2
        %s9185 = smul.addr %s9184, 8
        %s9186 = scalar_lea.vmem %s3, %s9185
        // Predicated region
        $region52: #{tpu_custom_call.1} parent=31 // pred_check
          %p9187 = pneg %p104
        $region53: #{tpu_custom_call.1} parent=31 // pred_check_branch
          %9189 = sbr.rel (%p9187) target = $region55
        $region54: #{tpu_custom_call.1} parent=31 // pred_region
          %s9190 = smul.u32 2, %s18
        $region55: #{tpu_custom_call.1} parent=31 // pred_fallthru
          _
      $region32: #{tpu_custom_call.1} parent=5 // pred_fallthru
        _
      %p9191 = scmp.le.s32.totalorder 2, %s13
      // Predicated region
      $region56: #{tpu_custom_call.1} parent=5 // pred_check
        %p9192 = pneg %p9191
      $region57: #{tpu_custom_call.1} parent=5 // pred_check_branch
        %9194 = sbr.rel (%p9192) target = $region59
      $region58: #{tpu_custom_call.1} parent=5 // pred_region
        %s9195 = ssub.s32 %s13, 2
        // Predicated region
        $region60: #{tpu_custom_call.1} parent=58 // pred_check
          %p9196 = pneg %p110
        $region61: #{tpu_custom_call.1} parent=58 // pred_check_branch
          %9198 = sbr.rel (%p9196) target = $region63
        $region62: #{tpu_custom_call.1} parent=58 // pred_region
          %s9199 = smul.u32 2, %s19
          %p9200 = scmp.lt.s32.totalorder %s9199, 3
          %s9201 = scalar_select %p9200, %s9199, 3
          %s9202 = smul.addr %s9201, 2
          %s9203 = smul.addr %s9202, 8
          %s9204 = scalar_lea.vmem %s3, %s9203
        $region63: #{tpu_custom_call.1} parent=58 // pred_fallthru
          _
      $region59: #{tpu_custom_call.1} parent=5 // pred_fallthru
        _
    $region6: #{tpu_custom_call.1} parent=1 // loop_footer
      %s17 = sadd.s32 1, %s13
    $region7: #{tpu_custom_call.1} parent=1 // loop_footer_branch
      %12 = sbr.rel target = $region3
    $region8: #{tpu_custom_call.1} parent=1 // loop_exit
      _
    %9205 = vsyncpa [#allocation9], 1
    %s9206 = scalar_lea.sflag [#allocation9], 1
    %9207 = vsyncpa %s9206, 1
    %9208 = vsyncpa [#allocation11], 1

</llo_original>
